<compile_context>
chip_gen: v7x
topology: tpu7x:2x2x1
jax: 0.10.0
libtpu: 0.0.40
codegen_flags: <defaults>
</compile_context>

<pallas_src>
import functools

import jax
import jax.numpy as jnp
from jax.experimental import pallas as pl
from jax.experimental.pallas import tpu as pltpu


# ----------------------------------------------------------------------------
# helpers
# ----------------------------------------------------------------------------
def _round_up(n, m):
    return -(-n // m) * m


def _pad2(w, rows, cols):
    """Zero-pad a 1D/2D array to (rows, cols)."""
    w = w.reshape(w.shape[0], -1) if w.ndim == 2 else w.reshape(1, -1)
    return jnp.zeros((rows, cols), w.dtype).at[: w.shape[0], : w.shape[1]].set(w)


def _row_block(B):
    """Rows per grid step: keep >=2 grid steps when possible (v7x megacore)."""
    return B // 2 if (B >= 2 and B % 2 == 0) else 1


# ----------------------------------------------------------------------------
# Fused conv backbone: [pad -> conv3x3 (one im2col matmul) -> ReLU -> 2x2 pool] x2
# plus flatten, all in one pallas_call.  Grid over batch blocks (parallel).
# ----------------------------------------------------------------------------
def _conv_pool(xp_ref, w_ref, b_ref, hp_ref):
    """3x3 same-conv as a single im2col matmul + bias + ReLU + 2x2 maxpool.

    xp_ref: (bb, H+2, W+2, cin) zero-padded bf16 input (VMEM scratch)
    w_ref:  (9*cin, cout) bf16, tap order (kh, kw, cin)
    b_ref:  (1, cout) f32
    hp_ref: (bb, H//2, W, cout) f32 scratch holding the H-pooled rows
    returns (bb, H//2, W//2, cout) f32
    """
    f32 = jnp.float32
    bb = xp_ref.shape[0]
    H, W, cin = xp_ref.shape[1] - 2, xp_ref.shape[2] - 2, xp_ref.shape[3]
    cout = w_ref.shape[1]
    Ho, Wo = H // 2, W // 2

    xp = xp_ref[...]                                           # bf16, no f32 round trip
    taps = [xp[:, di:di + H, dj:dj + W, :].reshape(bb * H * W, cin)
            for di in range(3) for dj in range(3)]
    col = jnp.concatenate(taps, axis=-1)                       # (bb*H*W, 9*cin) bf16
    y = jnp.dot(col, w_ref[...], preferred_element_type=f32) + b_ref[...]
    y = jnp.maximum(y, 0.0)                                    # bias + ReLU (f32)

    # 2x2 max pool: H via a leading-dim split, W via strided sublane reads.
    y = y.reshape(bb, Ho, 2, W, cout)
    hp_ref[...] = jnp.maximum(y[:, :, 0], y[:, :, 1])          # (bb, Ho, W, cout)
    p0 = hp_ref[:, :, pl.ds(0, Wo, 2), :]
    p1 = hp_ref[:, :, pl.ds(1, Wo, 2), :]
    return jnp.maximum(p0, p1)                                 # (bb, Ho, Wo, cout)


def _backbone_kernel(x_ref, w1_ref, b1_ref, w2_ref, b2_ref, flat_ref,
                     xp1_ref, xp2_ref, hp1_ref, hp2_ref):
    bf16 = jnp.bfloat16
    bb, Hs, Ws = x_ref.shape[0], x_ref.shape[1], x_ref.shape[2]

    # stage 1: (Hs, Ws, cin) -> (Hs/2, Ws/2, c1), padding built in VMEM (no HBM pad)
    xp1_ref[...] = jnp.zeros_like(xp1_ref)
    xp1_ref[:, 1:Hs + 1, 1:Ws + 1, :] = x_ref[...]
    y1 = _conv_pool(xp1_ref, w1_ref, b1_ref, hp1_ref)

    # stage 2: (Hs/2, Ws/2, c1) -> (Hs/4, Ws/4, c2), intermediate stays in VMEM
    H2, W2 = Hs // 2, Ws // 2
    xp2_ref[...] = jnp.zeros_like(xp2_ref)
    xp2_ref[:, 1:H2 + 1, 1:W2 + 1, :] = y1.astype(bf16)
    y2 = _conv_pool(xp2_ref, w2_ref, b2_ref, hp2_ref)          # (bb, Hs/4, Ws/4, c2)

    # NHWC flatten (h, w, c); the wrapper reshape to (B, HW*C) is a free
    # row-major relabel, and cls_w1 rows are pre-permuted to this order.
    c2 = w2_ref.shape[1]
    flat_ref[...] = y2.reshape(bb, (Hs // 4) * (Ws // 4), c2).astype(flat_ref.dtype)


def pallas_backbone(x_nhwc, p):
    B, Hs, Ws, cin = x_nhwc.shape
    c1 = p["conv1_w"].shape[1]
    c2 = p["conv2_w"].shape[1]
    bb = _row_block(B)
    hw = (Hs // 4) * (Ws // 4)
    weights = (p["conv1_w"], p["conv1_b"], p["conv2_w"], p["conv2_b"])
    w_specs = [pl.BlockSpec(w.shape, lambda i: (0, 0)) for w in weights]
    return pl.pallas_call(
        _backbone_kernel,
        grid=(B // bb,),
        in_specs=[pl.BlockSpec((bb, Hs, Ws, cin), lambda i: (i, 0, 0, 0))] + w_specs,
        out_specs=pl.BlockSpec((bb, hw, c2), lambda i: (i, 0, 0)),
        out_shape=jax.ShapeDtypeStruct((B, hw, c2), jnp.bfloat16),
        scratch_shapes=[
            pltpu.VMEM((bb, Hs + 2, Ws + 2, cin), jnp.bfloat16),          # padded in1
            pltpu.VMEM((bb, Hs // 2 + 2, Ws // 2 + 2, c1), jnp.bfloat16),  # padded in2
            pltpu.VMEM((bb, Hs // 2, Ws, c1), jnp.float32),               # H-pool 1
            pltpu.VMEM((bb, Hs // 4, Ws // 2, c2), jnp.float32),          # H-pool 2
        ],
        compiler_params=pltpu.CompilerParams(
            dimension_semantics=("parallel",),
            vmem_limit_bytes=32 * 1024 * 1024),
    )(x_nhwc, *weights)


# ----------------------------------------------------------------------------
# Fused head: classifier fc1 -> fc2 -> one wide [verb Linear+BN | img transform]
# matmul -> verb output.  Grid over batch rows (parallel).
# ----------------------------------------------------------------------------
def _head_kernel(x_ref, w1_ref, b1_ref, w2_ref, b2_ref, w3_ref, b3_ref,
                 vw2_ref, vb2_ref, hid_ref, verb_ref):
    f32, bf16 = jnp.float32, jnp.bfloat16

    def dense(x, w_r, b_r, relu=True):
        y = jnp.dot(x.astype(bf16), w_r[...], preferred_element_type=f32) + b_r[...]
        return jnp.maximum(y, 0.0) if relu else y

    x = x_ref[:, 0, :]                               # (bb, 8H*... flat features)
    h = dense(x, w1_ref, b1_ref)                     # classifier fc1 + ReLU
    conv = dense(h, w2_ref, b2_ref)                  # classifier fc2 + ReLU
    y = dense(conv, w3_ref, b3_ref)                  # (bb, 128) = [verb_h | img | 0]
    hid_ref[:, 0, :] = y                             # lane-dense store
    # verb_w2 is zero-padded to (128, 128): img/pad lanes contribute nothing.
    verb_ref[:, 0, :] = dense(y, vw2_ref, vb2_ref, relu=False)


def pallas_head(flat3, p):
    B, _, K = flat3.shape
    bb = _row_block(B)
    hidp = p["head_w3"].shape[1]
    nvp = p["verb_w2"].shape[1]
    weights = (p["cls_w1"], p["cls_b1"], p["cls_w2"], p["cls_b2"],
               p["head_w3"], p["head_b3"], p["verb_w2"], p["verb_b2"])
    w_specs = [pl.BlockSpec(w.shape, lambda i: (0, 0)) for w in weights]
    return pl.pallas_call(
        _head_kernel,
        grid=(B // bb,),
        in_specs=[pl.BlockSpec((bb, 1, K), lambda i: (i, 0, 0))] + w_specs,
        out_specs=(pl.BlockSpec((bb, 1, hidp), lambda i: (i, 0, 0)),
                   pl.BlockSpec((bb, 1, nvp), lambda i: (i, 0, 0))),
        out_shape=(jax.ShapeDtypeStruct((B, 1, hidp), jnp.float32),
                   jax.ShapeDtypeStruct((B, 1, nvp), jnp.float32)),
        compiler_params=pltpu.CompilerParams(
            dimension_semantics=("parallel",),
            vmem_limit_bytes=32 * 1024 * 1024),
    )(flat3, *weights)


# ----------------------------------------------------------------------------
# Fused GGNN: embd transform + fusion + n_steps gated propagation + classifier.
# Grid over batch (per-image adjacency), state dim zero-padded to 128 lanes.
# ----------------------------------------------------------------------------
def _ggnn_kernel(q_ref, img_ref, adj_ref,
                 ew_ref, eb_ref, wprop_ref, bprop_ref,
                 wab_ref, bg_ref, wch_ref,
                 wf1_ref, bf1_ref, wf2_ref, bf2_ref,
                 out_ref, *, n_steps):
    f32, bf16 = jnp.float32, jnp.bfloat16
    R = q_ref.shape[1]
    S = wch_ref.shape[0]                              # padded state dim (x128)

    q_bf = q_ref[0].astype(bf16)                      # (R, E)
    adj = adj_ref[0]                                  # (R, 2R) bf16
    a_in, a_out = adj[:, :R], adj[:, R:]
    img = img_ref[0]                                  # (1, S) f32, zero-padded lanes

    # weights hoisted once, resident across propagation steps
    wprop, bprop = wprop_ref[...], bprop_ref[...]
    wab, bg, wch = wab_ref[...], bg_ref[...], wch_ref[...]

    def mm(x, w):
        return jnp.dot(x.astype(bf16), w, preferred_element_type=f32)

    # role-verb embedding transform + fusion with image features (broadcast over R)
    rv = jnp.maximum(mm(q_bf, ew_ref[...]) + eb_ref[...], 0.0)   # (R, S)
    prop0 = rv * img                                             # (R, S)

    def step(_, prop):
        y = mm(prop, wprop) + bprop                   # (R, 4S) = [in | out | c_r | c_z]
        in_s, out_s, crz = y[:, :S], y[:, S:2 * S], y[:, 2 * S:]
        a_i = jnp.dot(a_in, in_s.astype(bf16), preferred_element_type=f32)
        a_o = jnp.dot(a_out, out_s.astype(bf16), preferred_element_type=f32)
        pre = mm(jnp.concatenate([a_i, a_o], axis=-1), wab) + bg  # (R, 3S) = [r|z|h]
        rz = jax.nn.sigmoid(pre[:, :2 * S] + crz)                 # f32 gates
        r, z = rz[:, :S], rz[:, S:]
        h_hat = jnp.tanh(pre[:, 2 * S:] + mm(r * prop, wch))
        return (1.0 - z) * prop + z * h_hat

    prop = jax.lax.fori_loop(0, n_steps, step, prop0, unroll=True)

    # output head: one merged [prop | q] matmul, lane-dense padded vocab output
    pq = jnp.concatenate([prop.astype(bf16), q_bf], axis=-1)     # (R, S+E)
    hid = jnp.tanh(jnp.dot(pq, wf1_ref[...], preferred_element_type=f32) + bf1_ref[...])
    out_ref[0] = mm(hid, wf2_ref[...]) + bf2_ref[...]            # (R, 128)


def pallas_ggnn(rv, img_pad, adj, p, *, n_steps):
    B, R, E = rv.shape
    Sp = p["g_wch"].shape[0]
    vp = p["g_wf2"].shape[1]
    img3 = img_pad.reshape(B, 1, Sp)
    weights = (p["g_embd_w"], p["g_embd_b"], p["g_wprop"], p["g_bprop"],
               p["g_wab"], p["g_bg"], p["g_wch"],
               p["g_wf1"], p["g_bf1"], p["g_wf2"], p["g_bf2"])
    w_specs = [pl.BlockSpec(w.shape, lambda b: (0, 0)) for w in weights]
    return pl.pallas_call(
        functools.partial(_ggnn_kernel, n_steps=n_steps),
        grid=(B,),
        in_specs=[pl.BlockSpec((1, R, E), lambda b: (b, 0, 0)),
                  pl.BlockSpec((1, 1, Sp), lambda b: (b, 0, 0)),
                  pl.BlockSpec((1, R, 2 * R), lambda b: (b, 0, 0))] + w_specs,
        out_specs=pl.BlockSpec((1, R, vp), lambda b: (b, 0, 0)),
        out_shape=jax.ShapeDtypeStruct((B, R, vp), jnp.float32),
        compiler_params=pltpu.CompilerParams(
            dimension_semantics=("parallel",),
            vmem_limit_bytes=32 * 1024 * 1024),
    )(rv, img3, adj, *weights)


# ----------------------------------------------------------------------------
# Parameters (deterministic, synthetic) + fused-layout preparation
# ----------------------------------------------------------------------------
def init_params(key, *, mlp_hidden, embed_hidden, n_verbs, n_roles, vocab, max_roles):
    H, E, R = mlp_hidden, embed_hidden, max_roles
    keys = iter(jax.random.split(key, 64))

    def xav(shape):
        lim = (6.0 / (shape[0] + shape[-1])) ** 0.5
        return jax.random.uniform(next(keys), shape, jnp.float32, -lim, lim)

    z = lambda n: jnp.zeros((n,), jnp.float32)
    p = {}
    # synthetic "vgg16_modified" backbone: 2 convs + 2-layer classifier
    p["conv1_w"], p["conv1_b"] = xav((9 * 3, 16)), z(16)
    p["conv2_w"], p["conv2_b"] = xav((9 * 16, H)), z(H)
    flat_dim = H * 4 * 4
    p["cls_w1"], p["cls_b1"] = xav((flat_dim, 8 * H)), z(8 * H)
    p["cls_w2"], p["cls_b2"] = xav((8 * H, 8 * H)), z(8 * H)
    # verb head: Linear(8H,2H) + BN + ReLU + Dropout + Linear(2H,n_verbs)
    p["verb_w1"], p["verb_b1"] = xav((8 * H, 2 * H)), z(2 * H)
    p["bn_gamma"], p["bn_beta"] = jnp.ones((2 * H,), jnp.float32), z(2 * H)
    p["bn_mean"], p["bn_var"] = z(2 * H), jnp.ones((2 * H,), jnp.float32)
    p["verb_w2"], p["verb_b2"] = xav((2 * H, n_verbs)), z(n_verbs)
    # embeddings (role_lookup padding_idx = n_roles)
    p["verb_emb"] = jax.random.normal(next(keys), (n_verbs, E), jnp.float32)
    role_emb = jax.random.normal(next(keys), (n_roles + 1, E), jnp.float32)
    p["role_emb"] = role_emb.at[n_roles].set(0.0)
    # img / embd transforms
    p["img_w"], p["img_b"] = xav((8 * H, H)), z(H)
    p["embd_w"], p["embd_b"] = xav((E, H)), z(H)
    # GGNN (state_dim=H, question_dim=E, n_edge_types=1, n_node=R)
    p["g_wi"], p["g_bi"] = xav((H, H)), z(H)
    p["g_wo"], p["g_bo"] = xav((H, H)), z(H)
    for gate in ("r", "z", "h"):
        p[f"g_w{gate}_a"] = xav((H, H))
        p[f"g_w{gate}_b"] = xav((H, H))
        p[f"g_w{gate}_c"] = xav((H, H))
        p[f"g_b{gate}"] = z(H)
    p["g_wf1_s"], p["g_wf1_q"], p["g_bf1"] = xav((H, H)), xav((E, H)), z(H)
    p["g_wf2"], p["g_bf2"] = xav((H, vocab)), z(vocab)
    # synthetic encoder adjacency table: per-verb (R, 2R) 0/1 matrix
    p["adj_table"] = (jax.random.uniform(next(keys), (n_verbs, R, 2 * R)) > 0.5
                      ).astype(jnp.float32)
    return p


def prepare_params(p, *, mlp_hidden):
    """Fold BN, permute fc1 rows to NHWC, concat/zero-pad weights, cast to bf16."""
    H = mlp_hidden
    Sp = _round_up(H, 128)                        # padded GGNN state dim
    bf16, f32 = jnp.bfloat16, jnp.float32
    r2 = lambda v: v.reshape(1, -1).astype(f32)
    q = {}

    # --- conv backbone: (9*cin, cout), tap order (kh, kw, cin) matching the
    #     in-kernel im2col concat.  Real torchvision (cout,cin,kh,kw) weights
    #     would need .transpose(2, 3, 1, 0).reshape(9*cin, cout).
    q["conv1_w"] = p["conv1_w"].astype(bf16)
    q["conv1_b"] = r2(p["conv1_b"])
    q["conv2_w"] = p["conv2_w"].astype(bf16)
    q["conv2_b"] = r2(p["conv2_b"])

    # --- classifier fc1: rows permuted from the NCHW flatten order to the NHWC
    #     (h, w, c) order the backbone emits (zero-cost offline reorder).
    C, Hs, Ws = H, 4, 4
    nchw = (jnp.arange(C)[None, None, :] * (Hs * Ws)
            + jnp.arange(Hs)[:, None, None] * Ws
            + jnp.arange(Ws)[None, :, None]).reshape(-1)
    q["cls_w1"] = p["cls_w1"][nchw].astype(bf16)
    q["cls_b1"] = r2(p["cls_b1"])
    q["cls_w2"] = p["cls_w2"].astype(bf16)
    q["cls_b2"] = r2(p["cls_b2"])

    # --- verb Linear with eval-mode BN folded in, concatenated with the image
    #     transform so the head does one wide lane-dense matmul.
    scale = p["bn_gamma"] * jax.lax.rsqrt(p["bn_var"] + 1e-5)
    vw1 = p["verb_w1"] * scale[None, :]
    vb1 = (p["verb_b1"] - p["bn_mean"]) * scale + p["bn_beta"]
    w3 = jnp.concatenate([vw1, p["img_w"]], axis=1)              # (8H, 3H)
    hidp = _round_up(w3.shape[1], 128)
    q["head_w3"] = _pad2(w3, w3.shape[0], hidp).astype(bf16)
    q["head_b3"] = _pad2(jnp.concatenate([vb1, p["img_b"]]), 1, hidp).astype(f32)
    n_verbs = p["verb_w2"].shape[1]
    nvp = _round_up(n_verbs, 128)
    vw2 = jnp.zeros((hidp, nvp), f32).at[:p["verb_w2"].shape[0], :n_verbs].set(
        p["verb_w2"])
    q["verb_w2"] = vw2.astype(bf16)
    q["verb_b2"] = _pad2(p["verb_b2"], 1, nvp).astype(f32)

    # embeddings / adjacency (gathered in plain JAX); adjacency stored as bf16
    q["verb_emb"], q["role_emb"] = p["verb_emb"], p["role_emb"]
    q["adj_table"] = p["adj_table"].astype(bf16)

    # --- GGNN: state dim zero-padded to Sp, gate weights concatenated so every
    #     lane slice in the kernel falls on a 128 boundary.
    padS = lambda w: _pad2(w, Sp, Sp)
    q["g_embd_w"] = _pad2(p["embd_w"], p["embd_w"].shape[0], Sp).astype(bf16)
    q["g_embd_b"] = _pad2(p["embd_b"], 1, Sp).astype(f32)
    # prop-source: [w_in | w_out | w_r_c | w_z_c]  (Sp, 4Sp)
    q["g_wprop"] = jnp.concatenate(
        [padS(p["g_wi"]), padS(p["g_wo"]), padS(p["g_wr_c"]), padS(p["g_wz_c"])],
        axis=1).astype(bf16)
    q["g_bprop"] = jnp.concatenate(
        [_pad2(p["g_bi"], 1, Sp), _pad2(p["g_bo"], 1, Sp),
         jnp.zeros((1, 2 * Sp), f32)], axis=1).astype(f32)
    # a/out-source gate weights: [[wr_a|wz_a|wh_a],[wr_b|wz_b|wh_b]]  (2Sp, 3Sp)
    wa = jnp.concatenate([padS(p["g_wr_a"]), padS(p["g_wz_a"]), padS(p["g_wh_a"])], 1)
    wb = jnp.concatenate([padS(p["g_wr_b"]), padS(p["g_wz_b"]), padS(p["g_wh_b"])], 1)
    q["g_wab"] = jnp.concatenate([wa, wb], axis=0).astype(bf16)
    q["g_bg"] = jnp.concatenate(
        [_pad2(p[f"g_b{g}"], 1, Sp) for g in ("r", "z", "h")], axis=1).astype(f32)
    q["g_wch"] = padS(p["g_wh_c"]).astype(bf16)
    # output head: [[wf1_s],[wf1_q]] (Sp+E, Sp); wf2 (Sp, vocab padded to 128)
    E = p["g_wf1_q"].shape[0]
    q["g_wf1"] = jnp.concatenate(
        [padS(p["g_wf1_s"]), _pad2(p["g_wf1_q"], E, Sp)], axis=0).astype(bf16)
    q["g_bf1"] = _pad2(p["g_bf1"], 1, Sp).astype(f32)
    vocab = p["g_wf2"].shape[1]
    vp = _round_up(vocab, 128)
    q["g_wf2"] = _pad2(p["g_wf2"], Sp, vp).astype(bf16)
    q["g_bf2"] = _pad2(p["g_bf2"], 1, vp).astype(f32)
    return q


# ----------------------------------------------------------------------------
# E2ENetwork.forward
# ----------------------------------------------------------------------------
def e2e_forward(p, image_nchw, verbs, roles, *, mlp_hidden, max_roles,
                n_verbs, vocab, n_steps=4):
    B = image_nchw.shape[0]
    H, R = mlp_hidden, max_roles
    Sp = p["g_wch"].shape[0]

    # --- fused conv backbone (synthetic vgg16_modified): NHWC, bf16 ---
    x = jnp.transpose(image_nchw, (0, 2, 3, 1)).astype(jnp.bfloat16)
    flat3 = pallas_backbone(x, p)                         # (B, 16, H) bf16
    flat = flat3.reshape(B, 1, -1)                        # free row-major relabel

    # --- fused classifier + verb head + image transform ---
    hid3, verb3 = pallas_head(flat, p)                    # (B,1,128), (B,1,128)
    verb_pred = verb3[:, 0, :n_verbs]
    img = hid3[:, 0, 2 * H:3 * H]                         # (B, H) image rep
    img_pad = jnp.pad(img, ((0, 0), (0, Sp - H)))         # (B, Sp) zero-padded lanes

    # --- embeddings & adjacency glue (plain JAX gathers) ---
    verb_embd = p["verb_emb"][verbs]                      # (B, E)
    role_embd = p["role_emb"][roles]                      # (B, R, E)
    rv = role_embd * verb_embd[:, None, :]                # (B, R, E)
    adj = p["adj_table"][verbs]                           # (B, R, 2R) bf16

    # --- GGNN role labeller (grid over B, per-image adjacency) ---
    role_pad = pallas_ggnn(rv, img_pad, adj, p, n_steps=n_steps)   # (B, R, 128)
    return verb_pred, role_pad[:, :, :vocab]


# ----------------------------------------------------------------------------
if __name__ == "__main__":
    B = 2
    mlp_hidden = 32
    embed_hidden = 32
    n_verbs = 8
    n_roles = 6
    vocab_size = 16
    max_role_count = 4

    key = jax.random.PRNGKey(0)
    k_img, k_verbs, k_roles, k_params = jax.random.split(key, 4)

    image = jax.random.normal(k_img, (B, 3, 16, 16), jnp.float32)      # NCHW
    verbs = jax.random.randint(k_verbs, (B,), 0, n_verbs)
    roles = jax.random.randint(k_roles, (B, max_role_count), 0, n_roles + 1)

    raw = init_params(k_params, mlp_hidden=mlp_hidden, embed_hidden=embed_hidden,
                      n_verbs=n_verbs, n_roles=n_roles, vocab=vocab_size,
                      max_roles=max_role_count)
    params = prepare_params(raw, mlp_hidden=mlp_hidden)

    fwd = jax.jit(functools.partial(e2e_forward, mlp_hidden=mlp_hidden,
                                    max_roles=max_role_count, n_verbs=n_verbs,
                                    vocab=vocab_size, n_steps=4))
    verb_pred, role_label_pred = fwd(params, image, verbs, roles)
    jax.block_until_ready((verb_pred, role_label_pred))

    assert verb_pred.shape == (B, n_verbs)
    assert role_label_pred.shape == (B, max_role_count, vocab_size)
    assert bool(jnp.all(jnp.isfinite(verb_pred)))
    assert bool(jnp.all(jnp.isfinite(role_label_pred)))
    print("KERNEL_OK")
</pallas_src>

<mosaic_0001>
module attributes {stable_mosaic.version = 11 : i64} {
  func.func @_head_kernel(%arg0: i32, %arg1: memref<1x1x512xbf16, #tpu.memory_space<vmem>>, %arg2: memref<512x256xbf16, #tpu.memory_space<vmem>>, %arg3: memref<1x256xf32, #tpu.memory_space<vmem>>, %arg4: memref<256x256xbf16, #tpu.memory_space<vmem>>, %arg5: memref<1x256xf32, #tpu.memory_space<vmem>>, %arg6: memref<256x128xbf16, #tpu.memory_space<vmem>>, %arg7: memref<1x128xf32, #tpu.memory_space<vmem>>, %arg8: memref<128x128xbf16, #tpu.memory_space<vmem>>, %arg9: memref<1x128xf32, #tpu.memory_space<vmem>>, %arg10: memref<1x1x128xf32, #tpu.memory_space<vmem>>, %arg11: memref<1x1x128xf32, #tpu.memory_space<vmem>>) attributes {dimension_semantics = [#tpu.dimension_semantics<parallel>], iteration_bounds = array<i64: 2>, scalar_prefetch = 0 : i64, scratch_operands = 0 : i64, tpu.core_type = #tpu.core_type<tc>, window_params = [{transform_indices = @transform_0, window_bounds = array<i64: 1, 1, 512>}, {pipeline_mode = #tpu.pipeline_mode<synchronous>, transform_indices = @transform_1, window_bounds = array<i64: 512, 256>}, {pipeline_mode = #tpu.pipeline_mode<synchronous>, transform_indices = @transform_2, window_bounds = array<i64: 1, 256>}, {pipeline_mode = #tpu.pipeline_mode<synchronous>, transform_indices = @transform_3, window_bounds = array<i64: 256, 256>}, {pipeline_mode = #tpu.pipeline_mode<synchronous>, transform_indices = @transform_4, window_bounds = array<i64: 1, 256>}, {pipeline_mode = #tpu.pipeline_mode<synchronous>, transform_indices = @transform_5, window_bounds = array<i64: 256, 128>}, {pipeline_mode = #tpu.pipeline_mode<synchronous>, transform_indices = @transform_6, window_bounds = array<i64: 1, 128>}, {pipeline_mode = #tpu.pipeline_mode<synchronous>, transform_indices = @transform_7, window_bounds = array<i64: 128, 128>}, {pipeline_mode = #tpu.pipeline_mode<synchronous>, transform_indices = @transform_8, window_bounds = array<i64: 1, 128>}, {transform_indices = @transform_9, window_bounds = array<i64: 1, 1, 128>}, {transform_indices = @transform_10, window_bounds = array<i64: 1, 1, 128>}]} {
    %c0 = arith.constant 0 : index
    %c0_0 = arith.constant 0 : index
    %c0_1 = arith.constant 0 : index
    %0 = vector.load %arg1[%c0, %c0_0, %c0_1] : memref<1x1x512xbf16, #tpu.memory_space<vmem>>, vector<1x1x512xbf16>
    %1 = vector.shape_cast %0 : vector<1x1x512xbf16> to vector<1x512xbf16>
    %c0_2 = arith.constant 0 : index
    %c0_3 = arith.constant 0 : index
    %2 = vector.load %arg2[%c0_2, %c0_3] : memref<512x256xbf16, #tpu.memory_space<vmem>>, vector<512x256xbf16>
    %cst = arith.constant dense<0.000000e+00> : vector<1x256xf32>
    %3 = tpu.matmul %1, %2, %cst {dimension_numbers = #tpu.dot_dimension_numbers<[1], [0], [0], [1], [0, 0, 1, 1], [], []>} : vector<1x512xbf16>, vector<512x256xbf16>, vector<1x256xf32> -> vector<1x256xf32>
    %c0_4 = arith.constant 0 : index
    %c0_5 = arith.constant 0 : index
    %4 = vector.load %arg3[%c0_4, %c0_5] : memref<1x256xf32, #tpu.memory_space<vmem>>, vector<1x256xf32>
    %5 = arith.addf %3, %4 : vector<1x256xf32>
    %cst_6 = arith.constant 0.000000e+00 : f32
    %6 = vector.broadcast %cst_6 : f32 to vector<1x256xf32>
    %7 = arith.maximumf %5, %6 : vector<1x256xf32>
    %8 = arith.truncf %7 : vector<1x256xf32> to vector<1x256xbf16>
    %c0_7 = arith.constant 0 : index
    %c0_8 = arith.constant 0 : index
    %9 = vector.load %arg4[%c0_7, %c0_8] : memref<256x256xbf16, #tpu.memory_space<vmem>>, vector<256x256xbf16>
    %cst_9 = arith.constant dense<0.000000e+00> : vector<1x256xf32>
    %10 = tpu.matmul %8, %9, %cst_9 {dimension_numbers = #tpu.dot_dimension_numbers<[1], [0], [0], [1], [0, 0, 1, 1], [], []>} : vector<1x256xbf16>, vector<256x256xbf16>, vector<1x256xf32> -> vector<1x256xf32>
    %c0_10 = arith.constant 0 : index
    %c0_11 = arith.constant 0 : index
    %11 = vector.load %arg5[%c0_10, %c0_11] : memref<1x256xf32, #tpu.memory_space<vmem>>, vector<1x256xf32>
    %12 = arith.addf %10, %11 : vector<1x256xf32>
    %cst_12 = arith.constant 0.000000e+00 : f32
    %13 = vector.broadcast %cst_12 : f32 to vector<1x256xf32>
    %14 = arith.maximumf %12, %13 : vector<1x256xf32>
    %15 = arith.truncf %14 : vector<1x256xf32> to vector<1x256xbf16>
    %c0_13 = arith.constant 0 : index
    %c0_14 = arith.constant 0 : index
    %16 = vector.load %arg6[%c0_13, %c0_14] : memref<256x128xbf16, #tpu.memory_space<vmem>>, vector<256x128xbf16>
    %cst_15 = arith.constant dense<0.000000e+00> : vector<1x128xf32>
    %17 = tpu.matmul %15, %16, %cst_15 {dimension_numbers = #tpu.dot_dimension_numbers<[1], [0], [0], [1], [0, 0, 1, 1], [], []>} : vector<1x256xbf16>, vector<256x128xbf16>, vector<1x128xf32> -> vector<1x128xf32>
    %c0_16 = arith.constant 0 : index
    %c0_17 = arith.constant 0 : index
    %18 = vector.load %arg7[%c0_16, %c0_17] : memref<1x128xf32, #tpu.memory_space<vmem>>, vector<1x128xf32>
    %19 = arith.addf %17, %18 : vector<1x128xf32>
    %cst_18 = arith.constant 0.000000e+00 : f32
    %20 = vector.broadcast %cst_18 : f32 to vector<1x128xf32>
    %21 = arith.maximumf %19, %20 : vector<1x128xf32>
    %c0_19 = arith.constant 0 : index
    %c0_20 = arith.constant 0 : index
    %c0_21 = arith.constant 0 : index
    %22 = vector.load %arg10[%c0_19, %c0_20, %c0_21] : memref<1x1x128xf32, #tpu.memory_space<vmem>>, vector<1x1x128xf32>
    %23 = vector.shape_cast %22 : vector<1x1x128xf32> to vector<1x128xf32>
    %24 = vector.shape_cast %21 : vector<1x128xf32> to vector<1x1x128xf32>
    tpu.vector_store %arg10[%c0_19, %c0_20, %c0_21], %24 {strides = array<i32>} : memref<1x1x128xf32, #tpu.memory_space<vmem>>, vector<1x1x128xf32>,
    %25 = arith.truncf %21 : vector<1x128xf32> to vector<1x128xbf16>
    %c0_22 = arith.constant 0 : index
    %c0_23 = arith.constant 0 : index
    %26 = vector.load %arg8[%c0_22, %c0_23] : memref<128x128xbf16, #tpu.memory_space<vmem>>, vector<128x128xbf16>
    %cst_24 = arith.constant dense<0.000000e+00> : vector<1x128xf32>
    %27 = tpu.matmul %25, %26, %cst_24 {dimension_numbers = #tpu.dot_dimension_numbers<[1], [0], [0], [1], [0, 0, 1, 1], [], []>} : vector<1x128xbf16>, vector<128x128xbf16>, vector<1x128xf32> -> vector<1x128xf32>
    %c0_25 = arith.constant 0 : index
    %c0_26 = arith.constant 0 : index
    %28 = vector.load %arg9[%c0_25, %c0_26] : memref<1x128xf32, #tpu.memory_space<vmem>>, vector<1x128xf32>
    %29 = arith.addf %27, %28 : vector<1x128xf32>
    %c0_27 = arith.constant 0 : index
    %c0_28 = arith.constant 0 : index
    %c0_29 = arith.constant 0 : index
    %30 = vector.load %arg11[%c0_27, %c0_28, %c0_29] : memref<1x1x128xf32, #tpu.memory_space<vmem>>, vector<1x1x128xf32>
    %31 = vector.shape_cast %30 : vector<1x1x128xf32> to vector<1x128xf32>
    %32 = vector.shape_cast %29 : vector<1x128xf32> to vector<1x1x128xf32>
    tpu.vector_store %arg11[%c0_27, %c0_28, %c0_29], %32 {strides = array<i32>} : memref<1x1x128xf32, #tpu.memory_space<vmem>>, vector<1x1x128xf32>,
    return
  }
  func.func @transform_0(%arg0: i32) -> (i32, i32, i32) {
    %c0_i32 = arith.constant 0 : i32
    %c0_i32_0 = arith.constant 0 : i32
    %c0_i32_1 = arith.constant 0 : i32
    return %arg0, %c0_i32, %c0_i32_0 : i32, i32, i32
  }
  func.func @transform_1(%arg0: i32) -> (i32, i32) {
    %c0_i32 = arith.constant 0 : i32
    %c0_i32_0 = arith.constant 0 : i32
    %c0_i32_1 = arith.constant 0 : i32
    return %c0_i32, %c0_i32_0 : i32, i32
  }
  func.func @transform_2(%arg0: i32) -> (i32, i32) {
    %c0_i32 = arith.constant 0 : i32
    %c0_i32_0 = arith.constant 0 : i32
    %c0_i32_1 = arith.constant 0 : i32
    return %c0_i32, %c0_i32_0 : i32, i32
  }
  func.func @transform_3(%arg0: i32) -> (i32, i32) {
    %c0_i32 = arith.constant 0 : i32
    %c0_i32_0 = arith.constant 0 : i32
    %c0_i32_1 = arith.constant 0 : i32
    return %c0_i32, %c0_i32_0 : i32, i32
  }
  func.func @transform_4(%arg0: i32) -> (i32, i32) {
    %c0_i32 = arith.constant 0 : i32
    %c0_i32_0 = arith.constant 0 : i32
    %c0_i32_1 = arith.constant 0 : i32
    return %c0_i32, %c0_i32_0 : i32, i32
  }
  func.func @transform_5(%arg0: i32) -> (i32, i32) {
    %c0_i32 = arith.constant 0 : i32
    %c0_i32_0 = arith.constant 0 : i32
    %c0_i32_1 = arith.constant 0 : i32
    return %c0_i32, %c0_i32_0 : i32, i32
  }
  func.func @transform_6(%arg0: i32) -> (i32, i32) {
    %c0_i32 = arith.constant 0 : i32
    %c0_i32_0 = arith.constant 0 : i32
    %c0_i32_1 = arith.constant 0 : i32
    return %c0_i32, %c0_i32_0 : i32, i32
  }
  func.func @transform_7(%arg0: i32) -> (i32, i32) {
    %c0_i32 = arith.constant 0 : i32
    %c0_i32_0 = arith.constant 0 : i32
    %c0_i32_1 = arith.constant 0 : i32
    return %c0_i32, %c0_i32_0 : i32, i32
  }
  func.func @transform_8(%arg0: i32) -> (i32, i32) {
    %c0_i32 = arith.constant 0 : i32
    %c0_i32_0 = arith.constant 0 : i32
    %c0_i32_1 = arith.constant 0 : i32
    return %c0_i32, %c0_i32_0 : i32, i32
  }
  func.func @transform_9(%arg0: i32) -> (i32, i32, i32) {
    %c0_i32 = arith.constant 0 : i32
    %c0_i32_0 = arith.constant 0 : i32
    %c0_i32_1 = arith.constant 0 : i32
    return %arg0, %c0_i32, %c0_i32_0 : i32, i32, i32
  }
  func.func @transform_10(%arg0: i32) -> (i32, i32, i32) {
    %c0_i32 = arith.constant 0 : i32
    %c0_i32_0 = arith.constant 0 : i32
    %c0_i32_1 = arith.constant 0 : i32
    return %arg0, %c0_i32, %c0_i32_0 : i32, i32, i32
  }
}

module attributes {stable_mosaic.version = 11 : i64} {
  func.func @_backbone_kernel(%arg0: i32, %arg1: memref<1x16x16x3xbf16, #tpu.memory_space<vmem>>, %arg2: memref<27x16xbf16, #tpu.memory_space<vmem>>, %arg3: memref<1x16xf32, #tpu.memory_space<vmem>>, %arg4: memref<144x32xbf16, #tpu.memory_space<vmem>>, %arg5: memref<1x32xf32, #tpu.memory_space<vmem>>, %arg6: memref<1x16x32xbf16, #tpu.memory_space<vmem>>, %arg7: memref<1x18x18x3xbf16, #tpu.memory_space<vmem>>, %arg8: memref<1x10x10x16xbf16, #tpu.memory_space<vmem>>, %arg9: memref<1x8x16x16xf32, #tpu.memory_space<vmem>>, %arg10: memref<1x4x8x32xf32, #tpu.memory_space<vmem>>) attributes {dimension_semantics = [#tpu.dimension_semantics<parallel>], iteration_bounds = array<i64: 2>, scalar_prefetch = 0 : i64, scratch_operands = 4 : i64, tpu.core_type = #tpu.core_type<tc>, window_params = [{transform_indices = @transform_0, window_bounds = array<i64: 1, 16, 16, 3>}, {pipeline_mode = #tpu.pipeline_mode<synchronous>, transform_indices = @transform_1, window_bounds = array<i64: 27, 16>}, {pipeline_mode = #tpu.pipeline_mode<synchronous>, transform_indices = @transform_2, window_bounds = array<i64: 1, 16>}, {pipeline_mode = #tpu.pipeline_mode<synchronous>, transform_indices = @transform_3, window_bounds = array<i64: 144, 32>}, {pipeline_mode = #tpu.pipeline_mode<synchronous>, transform_indices = @transform_4, window_bounds = array<i64: 1, 32>}, {transform_indices = @transform_5, window_bounds = array<i64: 1, 16, 32>}]} {
    %cst = arith.constant 0.000000e+00 : bf16
    %0 = vector.broadcast %cst : bf16 to vector<1x18x18x3xbf16>
    %c0 = arith.constant 0 : index
    %c0_0 = arith.constant 0 : index
    %c0_1 = arith.constant 0 : index
    %c0_2 = arith.constant 0 : index
    %1 = vector.load %arg7[%c0, %c0_0, %c0_1, %c0_2] : memref<1x18x18x3xbf16, #tpu.memory_space<vmem>>, vector<1x18x18x3xbf16>
    tpu.vector_store %arg7[%c0, %c0_0, %c0_1, %c0_2], %0 {strides = array<i32>} : memref<1x18x18x3xbf16, #tpu.memory_space<vmem>>, vector<1x18x18x3xbf16>,
    %c0_3 = arith.constant 0 : index
    %c0_4 = arith.constant 0 : index
    %c0_5 = arith.constant 0 : index
    %c0_6 = arith.constant 0 : index
    %2 = vector.load %arg1[%c0_3, %c0_4, %c0_5, %c0_6] : memref<1x16x16x3xbf16, #tpu.memory_space<vmem>>, vector<1x16x16x3xbf16>
    %c0_7 = arith.constant 0 : index
    %c1 = arith.constant 1 : index
    %c1_8 = arith.constant 1 : index
    %c0_9 = arith.constant 0 : index
    %3 = vector.load %arg7[%c0_7, %c1, %c1_8, %c0_9] : memref<1x18x18x3xbf16, #tpu.memory_space<vmem>>, vector<1x16x16x3xbf16>
    tpu.vector_store %arg7[%c0_7, %c1, %c1_8, %c0_9], %2 {strides = array<i32>} : memref<1x18x18x3xbf16, #tpu.memory_space<vmem>>, vector<1x16x16x3xbf16>,
    %c0_10 = arith.constant 0 : index
    %c0_11 = arith.constant 0 : index
    %c0_12 = arith.constant 0 : index
    %c0_13 = arith.constant 0 : index
    %4 = vector.load %arg7[%c0_10, %c0_11, %c0_12, %c0_13] : memref<1x18x18x3xbf16, #tpu.memory_space<vmem>>, vector<1x18x18x3xbf16>
    %5 = vector.extract_strided_slice %4 {offsets = [0, 0, 0, 0], sizes = [1, 16, 16, 3], strides = [1, 1, 1, 1]} : vector<1x18x18x3xbf16> to vector<1x16x16x3xbf16>
    %6 = vector.shape_cast %5 : vector<1x16x16x3xbf16> to vector<256x3xbf16>
    %7 = vector.extract_strided_slice %4 {offsets = [0, 0, 1, 0], sizes = [1, 16, 16, 3], strides = [1, 1, 1, 1]} : vector<1x18x18x3xbf16> to vector<1x16x16x3xbf16>
    %8 = vector.shape_cast %7 : vector<1x16x16x3xbf16> to vector<256x3xbf16>
    %9 = vector.extract_strided_slice %4 {offsets = [0, 0, 2, 0], sizes = [1, 16, 16, 3], strides = [1, 1, 1, 1]} : vector<1x18x18x3xbf16> to vector<1x16x16x3xbf16>
    %10 = vector.shape_cast %9 : vector<1x16x16x3xbf16> to vector<256x3xbf16>
    %11 = vector.extract_strided_slice %4 {offsets = [0, 1, 0, 0], sizes = [1, 16, 16, 3], strides = [1, 1, 1, 1]} : vector<1x18x18x3xbf16> to vector<1x16x16x3xbf16>
    %12 = vector.shape_cast %11 : vector<1x16x16x3xbf16> to vector<256x3xbf16>
    %13 = vector.extract_strided_slice %4 {offsets = [0, 1, 1, 0], sizes = [1, 16, 16, 3], strides = [1, 1, 1, 1]} : vector<1x18x18x3xbf16> to vector<1x16x16x3xbf16>
    %14 = vector.shape_cast %13 : vector<1x16x16x3xbf16> to vector<256x3xbf16>
    %15 = vector.extract_strided_slice %4 {offsets = [0, 1, 2, 0], sizes = [1, 16, 16, 3], strides = [1, 1, 1, 1]} : vector<1x18x18x3xbf16> to vector<1x16x16x3xbf16>
    %16 = vector.shape_cast %15 : vector<1x16x16x3xbf16> to vector<256x3xbf16>
    %17 = vector.extract_strided_slice %4 {offsets = [0, 2, 0, 0], sizes = [1, 16, 16, 3], strides = [1, 1, 1, 1]} : vector<1x18x18x3xbf16> to vector<1x16x16x3xbf16>
    %18 = vector.shape_cast %17 : vector<1x16x16x3xbf16> to vector<256x3xbf16>
    %19 = vector.extract_strided_slice %4 {offsets = [0, 2, 1, 0], sizes = [1, 16, 16, 3], strides = [1, 1, 1, 1]} : vector<1x18x18x3xbf16> to vector<1x16x16x3xbf16>
    %20 = vector.shape_cast %19 : vector<1x16x16x3xbf16> to vector<256x3xbf16>
    %21 = vector.extract_strided_slice %4 {offsets = [0, 2, 2, 0], sizes = [1, 16, 16, 3], strides = [1, 1, 1, 1]} : vector<1x18x18x3xbf16> to vector<1x16x16x3xbf16>
    %22 = vector.shape_cast %21 : vector<1x16x16x3xbf16> to vector<256x3xbf16>
    %23 = tpu.concatenate %6, %8, %10, %12, %14, %16, %18, %20, %22 in 1 : vector<256x3xbf16>, vector<256x3xbf16>, vector<256x3xbf16>, vector<256x3xbf16>, vector<256x3xbf16>, vector<256x3xbf16>, vector<256x3xbf16>, vector<256x3xbf16>, vector<256x3xbf16> -> vector<256x27xbf16>
    %c0_14 = arith.constant 0 : index
    %c0_15 = arith.constant 0 : index
    %24 = vector.load %arg2[%c0_14, %c0_15] : memref<27x16xbf16, #tpu.memory_space<vmem>>, vector<27x16xbf16>
    %cst_16 = arith.constant dense<0.000000e+00> : vector<256x16xf32>
    %25 = tpu.matmul %23, %24, %cst_16 {dimension_numbers = #tpu.dot_dimension_numbers<[1], [0], [0], [1], [0, 0, 1, 1], [], []>} : vector<256x27xbf16>, vector<27x16xbf16>, vector<256x16xf32> -> vector<256x16xf32>
    %c0_17 = arith.constant 0 : index
    %c0_18 = arith.constant 0 : index
    %26 = vector.load %arg3[%c0_17, %c0_18] : memref<1x16xf32, #tpu.memory_space<vmem>>, vector<1x16xf32>
    %27 = vector.broadcast %26 : vector<1x16xf32> to vector<256x16xf32>
    %28 = arith.addf %25, %27 : vector<256x16xf32>
    %cst_19 = arith.constant 0.000000e+00 : f32
    %29 = vector.broadcast %cst_19 : f32 to vector<256x16xf32>
    %30 = arith.maximumf %28, %29 : vector<256x16xf32>
    %31 = vector.shape_cast %30 : vector<256x16xf32> to vector<1x8x2x16x16xf32>
    %32 = vector.extract_strided_slice %31 {offsets = [0, 0, 0, 0, 0], sizes = [1, 8, 1, 16, 16], strides = [1, 1, 1, 1, 1]} : vector<1x8x2x16x16xf32> to vector<1x8x1x16x16xf32>
    %33 = vector.shape_cast %32 : vector<1x8x1x16x16xf32> to vector<1x8x16x16xf32>
    %34 = vector.extract_strided_slice %31 {offsets = [0, 0, 1, 0, 0], sizes = [1, 8, 1, 16, 16], strides = [1, 1, 1, 1, 1]} : vector<1x8x2x16x16xf32> to vector<1x8x1x16x16xf32>
    %35 = vector.shape_cast %34 : vector<1x8x1x16x16xf32> to vector<1x8x16x16xf32>
    %36 = arith.maximumf %33, %35 : vector<1x8x16x16xf32>
    %c0_20 = arith.constant 0 : index
    %c0_21 = arith.constant 0 : index
    %c0_22 = arith.constant 0 : index
    %c0_23 = arith.constant 0 : index
    %37 = vector.load %arg9[%c0_20, %c0_21, %c0_22, %c0_23] : memref<1x8x16x16xf32, #tpu.memory_space<vmem>>, vector<1x8x16x16xf32>
    tpu.vector_store %arg9[%c0_20, %c0_21, %c0_22, %c0_23], %36 {strides = array<i32>} : memref<1x8x16x16xf32, #tpu.memory_space<vmem>>, vector<1x8x16x16xf32>,
    %c0_24 = arith.constant 0 : index
    %c0_25 = arith.constant 0 : index
    %c0_26 = arith.constant 0 : index
    %c0_27 = arith.constant 0 : index
    %38 = tpu.strided_load %arg9[%c0_24, %c0_25, %c0_26, %c0_27] {strides = array<i32: 1, 1, 2, 1>} : memref<1x8x16x16xf32, #tpu.memory_space<vmem>>, vector<1x8x8x16xf32>
    %c0_28 = arith.constant 0 : index
    %c0_29 = arith.constant 0 : index
    %c1_30 = arith.constant 1 : index
    %c0_31 = arith.constant 0 : index
    %39 = tpu.strided_load %arg9[%c0_28, %c0_29, %c1_30, %c0_31] {strides = array<i32: 1, 1, 2, 1>} : memref<1x8x16x16xf32, #tpu.memory_space<vmem>>, vector<1x8x8x16xf32>
    %40 = arith.maximumf %38, %39 : vector<1x8x8x16xf32>
    %cst_32 = arith.constant 0.000000e+00 : bf16
    %41 = vector.broadcast %cst_32 : bf16 to vector<1x10x10x16xbf16>
    %c0_33 = arith.constant 0 : index
    %c0_34 = arith.constant 0 : index
    %c0_35 = arith.constant 0 : index
    %c0_36 = arith.constant 0 : index
    %42 = vector.load %arg8[%c0_33, %c0_34, %c0_35, %c0_36] : memref<1x10x10x16xbf16, #tpu.memory_space<vmem>>, vector<1x10x10x16xbf16>
    tpu.vector_store %arg8[%c0_33, %c0_34, %c0_35, %c0_36], %41 {strides = array<i32>} : memref<1x10x10x16xbf16, #tpu.memory_space<vmem>>, vector<1x10x10x16xbf16>,
    %43 = arith.truncf %40 : vector<1x8x8x16xf32> to vector<1x8x8x16xbf16>
    %c0_37 = arith.constant 0 : index
    %c1_38 = arith.constant 1 : index
    %c1_39 = arith.constant 1 : index
    %c0_40 = arith.constant 0 : index
    %44 = vector.load %arg8[%c0_37, %c1_38, %c1_39, %c0_40] : memref<1x10x10x16xbf16, #tpu.memory_space<vmem>>, vector<1x8x8x16xbf16>
    tpu.vector_store %arg8[%c0_37, %c1_38, %c1_39, %c0_40], %43 {strides = array<i32>} : memref<1x10x10x16xbf16, #tpu.memory_space<vmem>>, vector<1x8x8x16xbf16>,
    %c0_41 = arith.constant 0 : index
    %c0_42 = arith.constant 0 : index
    %c0_43 = arith.constant 0 : index
    %c0_44 = arith.constant 0 : index
    %45 = vector.load %arg8[%c0_41, %c0_42, %c0_43, %c0_44] : memref<1x10x10x16xbf16, #tpu.memory_space<vmem>>, vector<1x10x10x16xbf16>
    %46 = vector.extract_strided_slice %45 {offsets = [0, 0, 0, 0], sizes = [1, 8, 8, 16], strides = [1, 1, 1, 1]} : vector<1x10x10x16xbf16> to vector<1x8x8x16xbf16>
    %47 = vector.shape_cast %46 : vector<1x8x8x16xbf16> to vector<64x16xbf16>
    %48 = vector.extract_strided_slice %45 {offsets = [0, 0, 1, 0], sizes = [1, 8, 8, 16], strides = [1, 1, 1, 1]} : vector<1x10x10x16xbf16> to vector<1x8x8x16xbf16>
    %49 = vector.shape_cast %48 : vector<1x8x8x16xbf16> to vector<64x16xbf16>
    %50 = vector.extract_strided_slice %45 {offsets = [0, 0, 2, 0], sizes = [1, 8, 8, 16], strides = [1, 1, 1, 1]} : vector<1x10x10x16xbf16> to vector<1x8x8x16xbf16>
    %51 = vector.shape_cast %50 : vector<1x8x8x16xbf16> to vector<64x16xbf16>
    %52 = vector.extract_strided_slice %45 {offsets = [0, 1, 0, 0], sizes = [1, 8, 8, 16], strides = [1, 1, 1, 1]} : vector<1x10x10x16xbf16> to vector<1x8x8x16xbf16>
    %53 = vector.shape_cast %52 : vector<1x8x8x16xbf16> to vector<64x16xbf16>
    %54 = vector.extract_strided_slice %45 {offsets = [0, 1, 1, 0], sizes = [1, 8, 8, 16], strides = [1, 1, 1, 1]} : vector<1x10x10x16xbf16> to vector<1x8x8x16xbf16>
    %55 = vector.shape_cast %54 : vector<1x8x8x16xbf16> to vector<64x16xbf16>
    %56 = vector.extract_strided_slice %45 {offsets = [0, 1, 2, 0], sizes = [1, 8, 8, 16], strides = [1, 1, 1, 1]} : vector<1x10x10x16xbf16> to vector<1x8x8x16xbf16>
    %57 = vector.shape_cast %56 : vector<1x8x8x16xbf16> to vector<64x16xbf16>
    %58 = vector.extract_strided_slice %45 {offsets = [0, 2, 0, 0], sizes = [1, 8, 8, 16], strides = [1, 1, 1, 1]} : vector<1x10x10x16xbf16> to vector<1x8x8x16xbf16>
    %59 = vector.shape_cast %58 : vector<1x8x8x16xbf16> to vector<64x16xbf16>
    %60 = vector.extract_strided_slice %45 {offsets = [0, 2, 1, 0], sizes = [1, 8, 8, 16], strides = [1, 1, 1, 1]} : vector<1x10x10x16xbf16> to vector<1x8x8x16xbf16>
    %61 = vector.shape_cast %60 : vector<1x8x8x16xbf16> to vector<64x16xbf16>
    %62 = vector.extract_strided_slice %45 {offsets = [0, 2, 2, 0], sizes = [1, 8, 8, 16], strides = [1, 1, 1, 1]} : vector<1x10x10x16xbf16> to vector<1x8x8x16xbf16>
    %63 = vector.shape_cast %62 : vector<1x8x8x16xbf16> to vector<64x16xbf16>
    %64 = tpu.concatenate %47, %49, %51, %53, %55, %57, %59, %61, %63 in 1 : vector<64x16xbf16>, vector<64x16xbf16>, vector<64x16xbf16>, vector<64x16xbf16>, vector<64x16xbf16>, vector<64x16xbf16>, vector<64x16xbf16>, vector<64x16xbf16>, vector<64x16xbf16> -> vector<64x144xbf16>
    %c0_45 = arith.constant 0 : index
    %c0_46 = arith.constant 0 : index
    %65 = vector.load %arg4[%c0_45, %c0_46] : memref<144x32xbf16, #tpu.memory_space<vmem>>, vector<144x32xbf16>
    %cst_47 = arith.constant dense<0.000000e+00> : vector<64x32xf32>
    %66 = tpu.matmul %64, %65, %cst_47 {dimension_numbers = #tpu.dot_dimension_numbers<[1], [0], [0], [1], [0, 0, 1, 1], [], []>} : vector<64x144xbf16>, vector<144x32xbf16>, vector<64x32xf32> -> vector<64x32xf32>
    %c0_48 = arith.constant 0 : index
    %c0_49 = arith.constant 0 : index
    %67 = vector.load %arg5[%c0_48, %c0_49] : memref<1x32xf32, #tpu.memory_space<vmem>>, vector<1x32xf32>
    %68 = vector.broadcast %67 : vector<1x32xf32> to vector<64x32xf32>
    %69 = arith.addf %66, %68 : vector<64x32xf32>
    %cst_50 = arith.constant 0.000000e+00 : f32
    %70 = vector.broadcast %cst_50 : f32 to vector<64x32xf32>
    %71 = arith.maximumf %69, %70 : vector<64x32xf32>
    %72 = vector.shape_cast %71 : vector<64x32xf32> to vector<1x4x2x8x32xf32>
    %73 = vector.extract_strided_slice %72 {offsets = [0, 0, 0, 0, 0], sizes = [1, 4, 1, 8, 32], strides = [1, 1, 1, 1, 1]} : vector<1x4x2x8x32xf32> to vector<1x4x1x8x32xf32>
    %74 = vector.shape_cast %73 : vector<1x4x1x8x32xf32> to vector<1x4x8x32xf32>
    %75 = vector.extract_strided_slice %72 {offsets = [0, 0, 1, 0, 0], sizes = [1, 4, 1, 8, 32], strides = [1, 1, 1, 1, 1]} : vector<1x4x2x8x32xf32> to vector<1x4x1x8x32xf32>
    %76 = vector.shape_cast %75 : vector<1x4x1x8x32xf32> to vector<1x4x8x32xf32>
    %77 = arith.maximumf %74, %76 : vector<1x4x8x32xf32>
    %c0_51 = arith.constant 0 : index
    %c0_52 = arith.constant 0 : index
    %c0_53 = arith.constant 0 : index
    %c0_54 = arith.constant 0 : index
    %78 = vector.load %arg10[%c0_51, %c0_52, %c0_53, %c0_54] : memref<1x4x8x32xf32, #tpu.memory_space<vmem>>, vector<1x4x8x32xf32>
    tpu.vector_store %arg10[%c0_51, %c0_52, %c0_53, %c0_54], %77 {strides = array<i32>} : memref<1x4x8x32xf32, #tpu.memory_space<vmem>>, vector<1x4x8x32xf32>,
    %c0_55 = arith.constant 0 : index
    %c0_56 = arith.constant 0 : index
    %c0_57 = arith.constant 0 : index
    %c0_58 = arith.constant 0 : index
    %79 = tpu.strided_load %arg10[%c0_55, %c0_56, %c0_57, %c0_58] {strides = array<i32: 1, 1, 2, 1>} : memref<1x4x8x32xf32, #tpu.memory_space<vmem>>, vector<1x4x4x32xf32>
    %c0_59 = arith.constant 0 : index
    %c0_60 = arith.constant 0 : index
    %c1_61 = arith.constant 1 : index
    %c0_62 = arith.constant 0 : index
    %80 = tpu.strided_load %arg10[%c0_59, %c0_60, %c1_61, %c0_62] {strides = array<i32: 1, 1, 2, 1>} : memref<1x4x8x32xf32, #tpu.memory_space<vmem>>, vector<1x4x4x32xf32>
    %81 = arith.maximumf %79, %80 : vector<1x4x4x32xf32>
    %82 = vector.shape_cast %81 : vector<1x4x4x32xf32> to vector<1x16x32xf32>
    %83 = arith.truncf %82 : vector<1x16x32xf32> to vector<1x16x32xbf16>
    %c0_63 = arith.constant 0 : index
    %c0_64 = arith.constant 0 : index
    %c0_65 = arith.constant 0 : index
    %84 = vector.load %arg6[%c0_63, %c0_64, %c0_65] : memref<1x16x32xbf16, #tpu.memory_space<vmem>>, vector<1x16x32xbf16>
    tpu.vector_store %arg6[%c0_63, %c0_64, %c0_65], %83 {strides = array<i32>} : memref<1x16x32xbf16, #tpu.memory_space<vmem>>, vector<1x16x32xbf16>,
    return
  }
  func.func @transform_0(%arg0: i32) -> (i32, i32, i32, i32) {
    %c0_i32 = arith.constant 0 : i32
    %c0_i32_0 = arith.constant 0 : i32
    %c0_i32_1 = arith.constant 0 : i32
    %c0_i32_2 = arith.constant 0 : i32
    return %arg0, %c0_i32, %c0_i32_0, %c0_i32_1 : i32, i32, i32, i32
  }
  func.func @transform_1(%arg0: i32) -> (i32, i32) {
    %c0_i32 = arith.constant 0 : i32
    %c0_i32_0 = arith.constant 0 : i32
    %c0_i32_1 = arith.constant 0 : i32
    return %c0_i32, %c0_i32_0 : i32, i32
  }
  func.func @transform_2(%arg0: i32) -> (i32, i32) {
    %c0_i32 = arith.constant 0 : i32
    %c0_i32_0 = arith.constant 0 : i32
    %c0_i32_1 = arith.constant 0 : i32
    return %c0_i32, %c0_i32_0 : i32, i32
  }
  func.func @transform_3(%arg0: i32) -> (i32, i32) {
    %c0_i32 = arith.constant 0 : i32
    %c0_i32_0 = arith.constant 0 : i32
    %c0_i32_1 = arith.constant 0 : i32
    return %c0_i32, %c0_i32_0 : i32, i32
  }
  func.func @transform_4(%arg0: i32) -> (i32, i32) {
    %c0_i32 = arith.constant 0 : i32
    %c0_i32_0 = arith.constant 0 : i32
    %c0_i32_1 = arith.constant 0 : i32
    return %c0_i32, %c0_i32_0 : i32, i32
  }
  func.func @transform_5(%arg0: i32) -> (i32, i32, i32) {
    %c0_i32 = arith.constant 0 : i32
    %c0_i32_0 = arith.constant 0 : i32
    %c0_i32_1 = arith.constant 0 : i32
    return %arg0, %c0_i32, %c0_i32_0 : i32, i32, i32
  }
}

module attributes {stable_mosaic.version = 11 : i64} {
  func.func @_ggnn_kernel(%arg0: i32, %arg1: memref<1x4x32xf32, #tpu.memory_space<vmem>>, %arg2: memref<1x1x128xf32, #tpu.memory_space<vmem>>, %arg3: memref<1x4x8xbf16, #tpu.memory_space<vmem>>, %arg4: memref<32x128xbf16, #tpu.memory_space<vmem>>, %arg5: memref<1x128xf32, #tpu.memory_space<vmem>>, %arg6: memref<128x512xbf16, #tpu.memory_space<vmem>>, %arg7: memref<1x512xf32, #tpu.memory_space<vmem>>, %arg8: memref<256x384xbf16, #tpu.memory_space<vmem>>, %arg9: memref<1x384xf32, #tpu.memory_space<vmem>>, %arg10: memref<128x128xbf16, #tpu.memory_space<vmem>>, %arg11: memref<160x128xbf16, #tpu.memory_space<vmem>>, %arg12: memref<1x128xf32, #tpu.memory_space<vmem>>, %arg13: memref<128x128xbf16, #tpu.memory_space<vmem>>, %arg14: memref<1x128xf32, #tpu.memory_space<vmem>>, %arg15: memref<1x4x128xf32, #tpu.memory_space<vmem>>) attributes {dimension_semantics = [#tpu.dimension_semantics<parallel>], iteration_bounds = array<i64: 2>, scalar_prefetch = 0 : i64, scratch_operands = 0 : i64, tpu.core_type = #tpu.core_type<tc>, window_params = [{transform_indices = @transform_0, window_bounds = array<i64: 1, 4, 32>}, {transform_indices = @transform_1, window_bounds = array<i64: 1, 1, 128>}, {transform_indices = @transform_2, window_bounds = array<i64: 1, 4, 8>}, {pipeline_mode = #tpu.pipeline_mode<synchronous>, transform_indices = @transform_3, window_bounds = array<i64: 32, 128>}, {pipeline_mode = #tpu.pipeline_mode<synchronous>, transform_indices = @transform_4, window_bounds = array<i64: 1, 128>}, {pipeline_mode = #tpu.pipeline_mode<synchronous>, transform_indices = @transform_5, window_bounds = array<i64: 128, 512>}, {pipeline_mode = #tpu.pipeline_mode<synchronous>, transform_indices = @transform_6, window_bounds = array<i64: 1, 512>}, {pipeline_mode = #tpu.pipeline_mode<synchronous>, transform_indices = @transform_7, window_bounds = array<i64: 256, 384>}, {pipeline_mode = #tpu.pipeline_mode<synchronous>, transform_indices = @transform_8, window_bounds = array<i64: 1, 384>}, {pipeline_mode = #tpu.pipeline_mode<synchronous>, transform_indices = @transform_9, window_bounds = array<i64: 128, 128>}, {pipeline_mode = #tpu.pipeline_mode<synchronous>, transform_indices = @transform_10, window_bounds = array<i64: 160, 128>}, {pipeline_mode = #tpu.pipeline_mode<synchronous>, transform_indices = @transform_11, window_bounds = array<i64: 1, 128>}, {pipeline_mode = #tpu.pipeline_mode<synchronous>, transform_indices = @transform_12, window_bounds = array<i64: 128, 128>}, {pipeline_mode = #tpu.pipeline_mode<synchronous>, transform_indices = @transform_13, window_bounds = array<i64: 1, 128>}, {transform_indices = @transform_14, window_bounds = array<i64: 1, 4, 128>}]} {
    %c0 = arith.constant 0 : index
    %c0_0 = arith.constant 0 : index
    %c0_1 = arith.constant 0 : index
    %0 = vector.load %arg1[%c0, %c0_0, %c0_1] : memref<1x4x32xf32, #tpu.memory_space<vmem>>, vector<1x4x32xf32>
    %1 = vector.shape_cast %0 : vector<1x4x32xf32> to vector<4x32xf32>
    %2 = arith.truncf %1 : vector<4x32xf32> to vector<4x32xbf16>
    %c0_2 = arith.constant 0 : index
    %c0_3 = arith.constant 0 : index
    %c0_4 = arith.constant 0 : index
    %3 = vector.load %arg3[%c0_2, %c0_3, %c0_4] : memref<1x4x8xbf16, #tpu.memory_space<vmem>>, vector<1x4x8xbf16>
    %4 = vector.shape_cast %3 : vector<1x4x8xbf16> to vector<4x8xbf16>
    %5 = vector.extract_strided_slice %4 {offsets = [0, 0], sizes = [4, 4], strides = [1, 1]} : vector<4x8xbf16> to vector<4x4xbf16>
    %6 = vector.extract_strided_slice %4 {offsets = [0, 4], sizes = [4, 4], strides = [1, 1]} : vector<4x8xbf16> to vector<4x4xbf16>
    %c0_5 = arith.constant 0 : index
    %c0_6 = arith.constant 0 : index
    %c0_7 = arith.constant 0 : index
    %7 = vector.load %arg2[%c0_5, %c0_6, %c0_7] : memref<1x1x128xf32, #tpu.memory_space<vmem>>, vector<1x1x128xf32>
    %8 = vector.shape_cast %7 : vector<1x1x128xf32> to vector<1x128xf32>
    %c0_8 = arith.constant 0 : index
    %c0_9 = arith.constant 0 : index
    %9 = vector.load %arg6[%c0_8, %c0_9] : memref<128x512xbf16, #tpu.memory_space<vmem>>, vector<128x512xbf16>
    %c0_10 = arith.constant 0 : index
    %c0_11 = arith.constant 0 : index
    %10 = vector.load %arg7[%c0_10, %c0_11] : memref<1x512xf32, #tpu.memory_space<vmem>>, vector<1x512xf32>
    %c0_12 = arith.constant 0 : index
    %c0_13 = arith.constant 0 : index
    %11 = vector.load %arg8[%c0_12, %c0_13] : memref<256x384xbf16, #tpu.memory_space<vmem>>, vector<256x384xbf16>
    %c0_14 = arith.constant 0 : index
    %c0_15 = arith.constant 0 : index
    %12 = vector.load %arg9[%c0_14, %c0_15] : memref<1x384xf32, #tpu.memory_space<vmem>>, vector<1x384xf32>
    %c0_16 = arith.constant 0 : index
    %c0_17 = arith.constant 0 : index
    %13 = vector.load %arg10[%c0_16, %c0_17] : memref<128x128xbf16, #tpu.memory_space<vmem>>, vector<128x128xbf16>
    %c0_18 = arith.constant 0 : index
    %c0_19 = arith.constant 0 : index
    %14 = vector.load %arg4[%c0_18, %c0_19] : memref<32x128xbf16, #tpu.memory_space<vmem>>, vector<32x128xbf16>
    %cst = arith.constant dense<0.000000e+00> : vector<4x128xf32>
    %15 = tpu.matmul %2, %14, %cst {dimension_numbers = #tpu.dot_dimension_numbers<[1], [0], [0], [1], [0, 0, 1, 1], [], []>} : vector<4x32xbf16>, vector<32x128xbf16>, vector<4x128xf32> -> vector<4x128xf32>
    %c0_20 = arith.constant 0 : index
    %c0_21 = arith.constant 0 : index
    %16 = vector.load %arg5[%c0_20, %c0_21] : memref<1x128xf32, #tpu.memory_space<vmem>>, vector<1x128xf32>
    %17 = vector.broadcast %16 : vector<1x128xf32> to vector<4x128xf32>
    %18 = arith.addf %15, %17 : vector<4x128xf32>
    %cst_22 = arith.constant 0.000000e+00 : f32
    %19 = vector.broadcast %cst_22 : f32 to vector<4x128xf32>
    %20 = arith.maximumf %18, %19 : vector<4x128xf32>
    %21 = vector.broadcast %8 : vector<1x128xf32> to vector<4x128xf32>
    %22 = arith.mulf %20, %21 : vector<4x128xf32>
    %c0_i32 = arith.constant 0 : i32
    %23 = arith.truncf %22 : vector<4x128xf32> to vector<4x128xbf16>
    %cst_23 = arith.constant dense<0.000000e+00> : vector<4x512xf32>
    %24 = tpu.matmul %23, %9, %cst_23 {dimension_numbers = #tpu.dot_dimension_numbers<[1], [0], [0], [1], [0, 0, 1, 1], [], []>} : vector<4x128xbf16>, vector<128x512xbf16>, vector<4x512xf32> -> vector<4x512xf32>
    %25 = vector.broadcast %10 : vector<1x512xf32> to vector<4x512xf32>
    %26 = arith.addf %24, %25 : vector<4x512xf32>
    %27 = vector.extract_strided_slice %26 {offsets = [0, 0], sizes = [4, 128], strides = [1, 1]} : vector<4x512xf32> to vector<4x128xf32>
    %28 = vector.extract_strided_slice %26 {offsets = [0, 128], sizes = [4, 128], strides = [1, 1]} : vector<4x512xf32> to vector<4x128xf32>
    %29 = vector.extract_strided_slice %26 {offsets = [0, 256], sizes = [4, 256], strides = [1, 1]} : vector<4x512xf32> to vector<4x256xf32>
    %30 = arith.truncf %27 : vector<4x128xf32> to vector<4x128xbf16>
    %cst_24 = arith.constant dense<0.000000e+00> : vector<4x128xf32>
    %31 = tpu.matmul %5, %30, %cst_24 {dimension_numbers = #tpu.dot_dimension_numbers<[1], [0], [0], [1], [0, 0, 1, 1], [], []>} : vector<4x4xbf16>, vector<4x128xbf16>, vector<4x128xf32> -> vector<4x128xf32>
    %32 = arith.truncf %28 : vector<4x128xf32> to vector<4x128xbf16>
    %cst_25 = arith.constant dense<0.000000e+00> : vector<4x128xf32>
    %33 = tpu.matmul %6, %32, %cst_25 {dimension_numbers = #tpu.dot_dimension_numbers<[1], [0], [0], [1], [0, 0, 1, 1], [], []>} : vector<4x4xbf16>, vector<4x128xbf16>, vector<4x128xf32> -> vector<4x128xf32>
    %34 = tpu.concatenate %31, %33 in 1 : vector<4x128xf32>, vector<4x128xf32> -> vector<4x256xf32>
    %35 = arith.truncf %34 : vector<4x256xf32> to vector<4x256xbf16>
    %cst_26 = arith.constant dense<0.000000e+00> : vector<4x384xf32>
    %36 = tpu.matmul %35, %11, %cst_26 {dimension_numbers = #tpu.dot_dimension_numbers<[1], [0], [0], [1], [0, 0, 1, 1], [], []>} : vector<4x256xbf16>, vector<256x384xbf16>, vector<4x384xf32> -> vector<4x384xf32>
    %37 = vector.broadcast %12 : vector<1x384xf32> to vector<4x384xf32>
    %38 = arith.addf %36, %37 : vector<4x384xf32>
    %39 = vector.extract_strided_slice %38 {offsets = [0, 0], sizes = [4, 256], strides = [1, 1]} : vector<4x384xf32> to vector<4x256xf32>
    %40 = arith.addf %39, %29 : vector<4x256xf32>
    %41 = arith.negf %40 : vector<4x256xf32>
    %42 = math.exp %41 : vector<4x256xf32>
    %cst_27 = arith.constant 1.000000e+00 : f32
    %43 = vector.broadcast %cst_27 : f32 to vector<4x256xf32>
    %44 = arith.addf %43, %42 : vector<4x256xf32>
    %45 = arith.divf %43, %44 : vector<4x256xf32>
    %46 = vector.extract_strided_slice %45 {offsets = [0, 0], sizes = [4, 128], strides = [1, 1]} : vector<4x256xf32> to vector<4x128xf32>
    %47 = vector.extract_strided_slice %45 {offsets = [0, 128], sizes = [4, 128], strides = [1, 1]} : vector<4x256xf32> to vector<4x128xf32>
    %48 = vector.extract_strided_slice %38 {offsets = [0, 256], sizes = [4, 128], strides = [1, 1]} : vector<4x384xf32> to vector<4x128xf32>
    %49 = arith.mulf %46, %22 : vector<4x128xf32>
    %50 = arith.truncf %49 : vector<4x128xf32> to vector<4x128xbf16>
    %cst_28 = arith.constant dense<0.000000e+00> : vector<4x128xf32>
    %51 = tpu.matmul %50, %13, %cst_28 {dimension_numbers = #tpu.dot_dimension_numbers<[1], [0], [0], [1], [0, 0, 1, 1], [], []>} : vector<4x128xbf16>, vector<128x128xbf16>, vector<4x128xf32> -> vector<4x128xf32>
    %52 = arith.addf %48, %51 : vector<4x128xf32>
    %53 = math.tanh %52 : vector<4x128xf32>
    %cst_29 = arith.constant 1.000000e+00 : f32
    %54 = vector.broadcast %cst_29 : f32 to vector<4x128xf32>
    %55 = arith.subf %54, %47 : vector<4x128xf32>
    %56 = arith.mulf %55, %22 : vector<4x128xf32>
    %57 = arith.mulf %47, %53 : vector<4x128xf32>
    %58 = arith.addf %56, %57 : vector<4x128xf32>
    %c1_i32 = arith.constant 1 : i32
    %59 = arith.truncf %58 : vector<4x128xf32> to vector<4x128xbf16>
    %cst_30 = arith.constant dense<0.000000e+00> : vector<4x512xf32>
    %60 = tpu.matmul %59, %9, %cst_30 {dimension_numbers = #tpu.dot_dimension_numbers<[1], [0], [0], [1], [0, 0, 1, 1], [], []>} : vector<4x128xbf16>, vector<128x512xbf16>, vector<4x512xf32> -> vector<4x512xf32>
    %61 = vector.broadcast %10 : vector<1x512xf32> to vector<4x512xf32>
    %62 = arith.addf %60, %61 : vector<4x512xf32>
    %63 = vector.extract_strided_slice %62 {offsets = [0, 0], sizes = [4, 128], strides = [1, 1]} : vector<4x512xf32> to vector<4x128xf32>
    %64 = vector.extract_strided_slice %62 {offsets = [0, 128], sizes = [4, 128], strides = [1, 1]} : vector<4x512xf32> to vector<4x128xf32>
    %65 = vector.extract_strided_slice %62 {offsets = [0, 256], sizes = [4, 256], strides = [1, 1]} : vector<4x512xf32> to vector<4x256xf32>
    %66 = arith.truncf %63 : vector<4x128xf32> to vector<4x128xbf16>
    %cst_31 = arith.constant dense<0.000000e+00> : vector<4x128xf32>
    %67 = tpu.matmul %5, %66, %cst_31 {dimension_numbers = #tpu.dot_dimension_numbers<[1], [0], [0], [1], [0, 0, 1, 1], [], []>} : vector<4x4xbf16>, vector<4x128xbf16>, vector<4x128xf32> -> vector<4x128xf32>
    %68 = arith.truncf %64 : vector<4x128xf32> to vector<4x128xbf16>
    %cst_32 = arith.constant dense<0.000000e+00> : vector<4x128xf32>
    %69 = tpu.matmul %6, %68, %cst_32 {dimension_numbers = #tpu.dot_dimension_numbers<[1], [0], [0], [1], [0, 0, 1, 1], [], []>} : vector<4x4xbf16>, vector<4x128xbf16>, vector<4x128xf32> -> vector<4x128xf32>
    %70 = tpu.concatenate %67, %69 in 1 : vector<4x128xf32>, vector<4x128xf32> -> vector<4x256xf32>
    %71 = arith.truncf %70 : vector<4x256xf32> to vector<4x256xbf16>
    %cst_33 = arith.constant dense<0.000000e+00> : vector<4x384xf32>
    %72 = tpu.matmul %71, %11, %cst_33 {dimension_numbers = #tpu.dot_dimension_numbers<[1], [0], [0], [1], [0, 0, 1, 1], [], []>} : vector<4x256xbf16>, vector<256x384xbf16>, vector<4x384xf32> -> vector<4x384xf32>
    %73 = vector.broadcast %12 : vector<1x384xf32> to vector<4x384xf32>
    %74 = arith.addf %72, %73 : vector<4x384xf32>
    %75 = vector.extract_strided_slice %74 {offsets = [0, 0], sizes = [4, 256], strides = [1, 1]} : vector<4x384xf32> to vector<4x256xf32>
    %76 = arith.addf %75, %65 : vector<4x256xf32>
    %77 = arith.negf %76 : vector<4x256xf32>
    %78 = math.exp %77 : vector<4x256xf32>
    %cst_34 = arith.constant 1.000000e+00 : f32
    %79 = vector.broadcast %cst_34 : f32 to vector<4x256xf32>
    %80 = arith.addf %79, %78 : vector<4x256xf32>
    %81 = arith.divf %79, %80 : vector<4x256xf32>
    %82 = vector.extract_strided_slice %81 {offsets = [0, 0], sizes = [4, 128], strides = [1, 1]} : vector<4x256xf32> to vector<4x128xf32>
    %83 = vector.extract_strided_slice %81 {offsets = [0, 128], sizes = [4, 128], strides = [1, 1]} : vector<4x256xf32> to vector<4x128xf32>
    %84 = vector.extract_strided_slice %74 {offsets = [0, 256], sizes = [4, 128], strides = [1, 1]} : vector<4x384xf32> to vector<4x128xf32>
    %85 = arith.mulf %82, %58 : vector<4x128xf32>
    %86 = arith.truncf %85 : vector<4x128xf32> to vector<4x128xbf16>
    %cst_35 = arith.constant dense<0.000000e+00> : vector<4x128xf32>
    %87 = tpu.matmul %86, %13, %cst_35 {dimension_numbers = #tpu.dot_dimension_numbers<[1], [0], [0], [1], [0, 0, 1, 1], [], []>} : vector<4x128xbf16>, vector<128x128xbf16>, vector<4x128xf32> -> vector<4x128xf32>
    %88 = arith.addf %84, %87 : vector<4x128xf32>
    %89 = math.tanh %88 : vector<4x128xf32>
    %cst_36 = arith.constant 1.000000e+00 : f32
    %90 = vector.broadcast %cst_36 : f32 to vector<4x128xf32>
    %91 = arith.subf %90, %83 : vector<4x128xf32>
    %92 = arith.mulf %91, %58 : vector<4x128xf32>
    %93 = arith.mulf %83, %89 : vector<4x128xf32>
    %94 = arith.addf %92, %93 : vector<4x128xf32>
    %c2_i32 = arith.constant 2 : i32
    %95 = arith.truncf %94 : vector<4x128xf32> to vector<4x128xbf16>
    %cst_37 = arith.constant dense<0.000000e+00> : vector<4x512xf32>
    %96 = tpu.matmul %95, %9, %cst_37 {dimension_numbers = #tpu.dot_dimension_numbers<[1], [0], [0], [1], [0, 0, 1, 1], [], []>} : vector<4x128xbf16>, vector<128x512xbf16>, vector<4x512xf32> -> vector<4x512xf32>
    %97 = vector.broadcast %10 : vector<1x512xf32> to vector<4x512xf32>
    %98 = arith.addf %96, %97 : vector<4x512xf32>
    %99 = vector.extract_strided_slice %98 {offsets = [0, 0], sizes = [4, 128], strides = [1, 1]} : vector<4x512xf32> to vector<4x128xf32>
    %100 = vector.extract_strided_slice %98 {offsets = [0, 128], sizes = [4, 128], strides = [1, 1]} : vector<4x512xf32> to vector<4x128xf32>
    %101 = vector.extract_strided_slice %98 {offsets = [0, 256], sizes = [4, 256], strides = [1, 1]} : vector<4x512xf32> to vector<4x256xf32>
    %102 = arith.truncf %99 : vector<4x128xf32> to vector<4x128xbf16>
    %cst_38 = arith.constant dense<0.000000e+00> : vector<4x128xf32>
    %103 = tpu.matmul %5, %102, %cst_38 {dimension_numbers = #tpu.dot_dimension_numbers<[1], [0], [0], [1], [0, 0, 1, 1], [], []>} : vector<4x4xbf16>, vector<4x128xbf16>, vector<4x128xf32> -> vector<4x128xf32>
    %104 = arith.truncf %100 : vector<4x128xf32> to vector<4x128xbf16>
    %cst_39 = arith.constant dense<0.000000e+00> : vector<4x128xf32>
    %105 = tpu.matmul %6, %104, %cst_39 {dimension_numbers = #tpu.dot_dimension_numbers<[1], [0], [0], [1], [0, 0, 1, 1], [], []>} : vector<4x4xbf16>, vector<4x128xbf16>, vector<4x128xf32> -> vector<4x128xf32>
    %106 = tpu.concatenate %103, %105 in 1 : vector<4x128xf32>, vector<4x128xf32> -> vector<4x256xf32>
    %107 = arith.truncf %106 : vector<4x256xf32> to vector<4x256xbf16>
    %cst_40 = arith.constant dense<0.000000e+00> : vector<4x384xf32>
    %108 = tpu.matmul %107, %11, %cst_40 {dimension_numbers = #tpu.dot_dimension_numbers<[1], [0], [0], [1], [0, 0, 1, 1], [], []>} : vector<4x256xbf16>, vector<256x384xbf16>, vector<4x384xf32> -> vector<4x384xf32>
    %109 = vector.broadcast %12 : vector<1x384xf32> to vector<4x384xf32>
    %110 = arith.addf %108, %109 : vector<4x384xf32>
    %111 = vector.extract_strided_slice %110 {offsets = [0, 0], sizes = [4, 256], strides = [1, 1]} : vector<4x384xf32> to vector<4x256xf32>
    %112 = arith.addf %111, %101 : vector<4x256xf32>
    %113 = arith.negf %112 : vector<4x256xf32>
    %114 = math.exp %113 : vector<4x256xf32>
    %cst_41 = arith.constant 1.000000e+00 : f32
    %115 = vector.broadcast %cst_41 : f32 to vector<4x256xf32>
    %116 = arith.addf %115, %114 : vector<4x256xf32>
    %117 = arith.divf %115, %116 : vector<4x256xf32>
    %118 = vector.extract_strided_slice %117 {offsets = [0, 0], sizes = [4, 128], strides = [1, 1]} : vector<4x256xf32> to vector<4x128xf32>
    %119 = vector.extract_strided_slice %117 {offsets = [0, 128], sizes = [4, 128], strides = [1, 1]} : vector<4x256xf32> to vector<4x128xf32>
    %120 = vector.extract_strided_slice %110 {offsets = [0, 256], sizes = [4, 128], strides = [1, 1]} : vector<4x384xf32> to vector<4x128xf32>
    %121 = arith.mulf %118, %94 : vector<4x128xf32>
    %122 = arith.truncf %121 : vector<4x128xf32> to vector<4x128xbf16>
    %cst_42 = arith.constant dense<0.000000e+00> : vector<4x128xf32>
    %123 = tpu.matmul %122, %13, %cst_42 {dimension_numbers = #tpu.dot_dimension_numbers<[1], [0], [0], [1], [0, 0, 1, 1], [], []>} : vector<4x128xbf16>, vector<128x128xbf16>, vector<4x128xf32> -> vector<4x128xf32>
    %124 = arith.addf %120, %123 : vector<4x128xf32>
    %125 = math.tanh %124 : vector<4x128xf32>
    %cst_43 = arith.constant 1.000000e+00 : f32
    %126 = vector.broadcast %cst_43 : f32 to vector<4x128xf32>
    %127 = arith.subf %126, %119 : vector<4x128xf32>
    %128 = arith.mulf %127, %94 : vector<4x128xf32>
    %129 = arith.mulf %119, %125 : vector<4x128xf32>
    %130 = arith.addf %128, %129 : vector<4x128xf32>
    %c3_i32 = arith.constant 3 : i32
    %131 = arith.truncf %130 : vector<4x128xf32> to vector<4x128xbf16>
    %cst_44 = arith.constant dense<0.000000e+00> : vector<4x512xf32>
    %132 = tpu.matmul %131, %9, %cst_44 {dimension_numbers = #tpu.dot_dimension_numbers<[1], [0], [0], [1], [0, 0, 1, 1], [], []>} : vector<4x128xbf16>, vector<128x512xbf16>, vector<4x512xf32> -> vector<4x512xf32>
    %133 = vector.broadcast %10 : vector<1x512xf32> to vector<4x512xf32>
    %134 = arith.addf %132, %133 : vector<4x512xf32>
    %135 = vector.extract_strided_slice %134 {offsets = [0, 0], sizes = [4, 128], strides = [1, 1]} : vector<4x512xf32> to vector<4x128xf32>
    %136 = vector.extract_strided_slice %134 {offsets = [0, 128], sizes = [4, 128], strides = [1, 1]} : vector<4x512xf32> to vector<4x128xf32>
    %137 = vector.extract_strided_slice %134 {offsets = [0, 256], sizes = [4, 256], strides = [1, 1]} : vector<4x512xf32> to vector<4x256xf32>
    %138 = arith.truncf %135 : vector<4x128xf32> to vector<4x128xbf16>
    %cst_45 = arith.constant dense<0.000000e+00> : vector<4x128xf32>
    %139 = tpu.matmul %5, %138, %cst_45 {dimension_numbers = #tpu.dot_dimension_numbers<[1], [0], [0], [1], [0, 0, 1, 1], [], []>} : vector<4x4xbf16>, vector<4x128xbf16>, vector<4x128xf32> -> vector<4x128xf32>
    %140 = arith.truncf %136 : vector<4x128xf32> to vector<4x128xbf16>
    %cst_46 = arith.constant dense<0.000000e+00> : vector<4x128xf32>
    %141 = tpu.matmul %6, %140, %cst_46 {dimension_numbers = #tpu.dot_dimension_numbers<[1], [0], [0], [1], [0, 0, 1, 1], [], []>} : vector<4x4xbf16>, vector<4x128xbf16>, vector<4x128xf32> -> vector<4x128xf32>
    %142 = tpu.concatenate %139, %141 in 1 : vector<4x128xf32>, vector<4x128xf32> -> vector<4x256xf32>
    %143 = arith.truncf %142 : vector<4x256xf32> to vector<4x256xbf16>
    %cst_47 = arith.constant dense<0.000000e+00> : vector<4x384xf32>
    %144 = tpu.matmul %143, %11, %cst_47 {dimension_numbers = #tpu.dot_dimension_numbers<[1], [0], [0], [1], [0, 0, 1, 1], [], []>} : vector<4x256xbf16>, vector<256x384xbf16>, vector<4x384xf32> -> vector<4x384xf32>
    %145 = vector.broadcast %12 : vector<1x384xf32> to vector<4x384xf32>
    %146 = arith.addf %144, %145 : vector<4x384xf32>
    %147 = vector.extract_strided_slice %146 {offsets = [0, 0], sizes = [4, 256], strides = [1, 1]} : vector<4x384xf32> to vector<4x256xf32>
    %148 = arith.addf %147, %137 : vector<4x256xf32>
    %149 = arith.negf %148 : vector<4x256xf32>
    %150 = math.exp %149 : vector<4x256xf32>
    %cst_48 = arith.constant 1.000000e+00 : f32
    %151 = vector.broadcast %cst_48 : f32 to vector<4x256xf32>
    %152 = arith.addf %151, %150 : vector<4x256xf32>
    %153 = arith.divf %151, %152 : vector<4x256xf32>
    %154 = vector.extract_strided_slice %153 {offsets = [0, 0], sizes = [4, 128], strides = [1, 1]} : vector<4x256xf32> to vector<4x128xf32>
    %155 = vector.extract_strided_slice %153 {offsets = [0, 128], sizes = [4, 128], strides = [1, 1]} : vector<4x256xf32> to vector<4x128xf32>
    %156 = vector.extract_strided_slice %146 {offsets = [0, 256], sizes = [4, 128], strides = [1, 1]} : vector<4x384xf32> to vector<4x128xf32>
    %157 = arith.mulf %154, %130 : vector<4x128xf32>
    %158 = arith.truncf %157 : vector<4x128xf32> to vector<4x128xbf16>
    %cst_49 = arith.constant dense<0.000000e+00> : vector<4x128xf32>
    %159 = tpu.matmul %158, %13, %cst_49 {dimension_numbers = #tpu.dot_dimension_numbers<[1], [0], [0], [1], [0, 0, 1, 1], [], []>} : vector<4x128xbf16>, vector<128x128xbf16>, vector<4x128xf32> -> vector<4x128xf32>
    %160 = arith.addf %156, %159 : vector<4x128xf32>
    %161 = math.tanh %160 : vector<4x128xf32>
    %cst_50 = arith.constant 1.000000e+00 : f32
    %162 = vector.broadcast %cst_50 : f32 to vector<4x128xf32>
    %163 = arith.subf %162, %155 : vector<4x128xf32>
    %164 = arith.mulf %163, %130 : vector<4x128xf32>
    %165 = arith.mulf %155, %161 : vector<4x128xf32>
    %166 = arith.addf %164, %165 : vector<4x128xf32>
    %167 = arith.truncf %166 : vector<4x128xf32> to vector<4x128xbf16>
    %168 = tpu.concatenate %167, %2 in 1 : vector<4x128xbf16>, vector<4x32xbf16> -> vector<4x160xbf16>
    %c0_51 = arith.constant 0 : index
    %c0_52 = arith.constant 0 : index
    %169 = vector.load %arg11[%c0_51, %c0_52] : memref<160x128xbf16, #tpu.memory_space<vmem>>, vector<160x128xbf16>
    %cst_53 = arith.constant dense<0.000000e+00> : vector<4x128xf32>
    %170 = tpu.matmul %168, %169, %cst_53 {dimension_numbers = #tpu.dot_dimension_numbers<[1], [0], [0], [1], [0, 0, 1, 1], [], []>} : vector<4x160xbf16>, vector<160x128xbf16>, vector<4x128xf32> -> vector<4x128xf32>
    %c0_54 = arith.constant 0 : index
    %c0_55 = arith.constant 0 : index
    %171 = vector.load %arg12[%c0_54, %c0_55] : memref<1x128xf32, #tpu.memory_space<vmem>>, vector<1x128xf32>
    %172 = vector.broadcast %171 : vector<1x128xf32> to vector<4x128xf32>
    %173 = arith.addf %170, %172 : vector<4x128xf32>
    %174 = math.tanh %173 : vector<4x128xf32>
    %c0_56 = arith.constant 0 : index
    %c0_57 = arith.constant 0 : index
    %175 = vector.load %arg13[%c0_56, %c0_57] : memref<128x128xbf16, #tpu.memory_space<vmem>>, vector<128x128xbf16>
    %176 = arith.truncf %174 : vector<4x128xf32> to vector<4x128xbf16>
    %cst_58 = arith.constant dense<0.000000e+00> : vector<4x128xf32>
    %177 = tpu.matmul %176, %175, %cst_58 {dimension_numbers = #tpu.dot_dimension_numbers<[1], [0], [0], [1], [0, 0, 1, 1], [], []>} : vector<4x128xbf16>, vector<128x128xbf16>, vector<4x128xf32> -> vector<4x128xf32>
    %c0_59 = arith.constant 0 : index
    %c0_60 = arith.constant 0 : index
    %178 = vector.load %arg14[%c0_59, %c0_60] : memref<1x128xf32, #tpu.memory_space<vmem>>, vector<1x128xf32>
    %179 = vector.broadcast %178 : vector<1x128xf32> to vector<4x128xf32>
    %180 = arith.addf %177, %179 : vector<4x128xf32>
    %c0_61 = arith.constant 0 : index
    %c0_62 = arith.constant 0 : index
    %c0_63 = arith.constant 0 : index
    %181 = vector.load %arg15[%c0_61, %c0_62, %c0_63] : memref<1x4x128xf32, #tpu.memory_space<vmem>>, vector<1x4x128xf32>
    %182 = vector.shape_cast %181 : vector<1x4x128xf32> to vector<4x128xf32>
    %183 = vector.shape_cast %180 : vector<4x128xf32> to vector<1x4x128xf32>
    tpu.vector_store %arg15[%c0_61, %c0_62, %c0_63], %183 {strides = array<i32>} : memref<1x4x128xf32, #tpu.memory_space<vmem>>, vector<1x4x128xf32>,
    return
  }
  func.func @transform_0(%arg0: i32) -> (i32, i32, i32) {
    %c0_i32 = arith.constant 0 : i32
    %c0_i32_0 = arith.constant 0 : i32
    %c0_i32_1 = arith.constant 0 : i32
    return %arg0, %c0_i32, %c0_i32_0 : i32, i32, i32
  }
  func.func @transform_1(%arg0: i32) -> (i32, i32, i32) {
    %c0_i32 = arith.constant 0 : i32
    %c0_i32_0 = arith.constant 0 : i32
    %c0_i32_1 = arith.constant 0 : i32
    return %arg0, %c0_i32, %c0_i32_0 : i32, i32, i32
  }
  func.func @transform_2(%arg0: i32) -> (i32, i32, i32) {
    %c0_i32 = arith.constant 0 : i32
    %c0_i32_0 = arith.constant 0 : i32
    %c0_i32_1 = arith.constant 0 : i32
    return %arg0, %c0_i32, %c0_i32_0 : i32, i32, i32
  }
  func.func @transform_3(%arg0: i32) -> (i32, i32) {
    %c0_i32 = arith.constant 0 : i32
    %c0_i32_0 = arith.constant 0 : i32
    %c0_i32_1 = arith.constant 0 : i32
    return %c0_i32, %c0_i32_0 : i32, i32
  }
  func.func @transform_4(%arg0: i32) -> (i32, i32) {
    %c0_i32 = arith.constant 0 : i32
    %c0_i32_0 = arith.constant 0 : i32
    %c0_i32_1 = arith.constant 0 : i32
    return %c0_i32, %c0_i32_0 : i32, i32
  }
  func.func @transform_5(%arg0: i32) -> (i32, i32) {
    %c0_i32 = arith.constant 0 : i32
    %c0_i32_0 = arith.constant 0 : i32
    %c0_i32_1 = arith.constant 0 : i32
    return %c0_i32, %c0_i32_0 : i32, i32
  }
  func.func @transform_6(%arg0: i32) -> (i32, i32) {
    %c0_i32 = arith.constant 0 : i32
    %c0_i32_0 = arith.constant 0 : i32
    %c0_i32_1 = arith.constant 0 : i32
    return %c0_i32, %c0_i32_0 : i32, i32
  }
  func.func @transform_7(%arg0: i32) -> (i32, i32) {
    %c0_i32 = arith.constant 0 : i32
    %c0_i32_0 = arith.constant 0 : i32
    %c0_i32_1 = arith.constant 0 : i32
    return %c0_i32, %c0_i32_0 : i32, i32
  }
  func.func @transform_8(%arg0: i32) -> (i32, i32) {
    %c0_i32 = arith.constant 0 : i32
    %c0_i32_0 = arith.constant 0 : i32
    %c0_i32_1 = arith.constant 0 : i32
    return %c0_i32, %c0_i32_0 : i32, i32
  }
  func.func @transform_9(%arg0: i32) -> (i32, i32) {
    %c0_i32 = arith.constant 0 : i32
    %c0_i32_0 = arith.constant 0 : i32
    %c0_i32_1 = arith.constant 0 : i32
    return %c0_i32, %c0_i32_0 : i32, i32
  }
  func.func @transform_10(%arg0: i32) -> (i32, i32) {
    %c0_i32 = arith.constant 0 : i32
    %c0_i32_0 = arith.constant 0 : i32
    %c0_i32_1 = arith.constant 0 : i32
    return %c0_i32, %c0_i32_0 : i32, i32
  }
  func.func @transform_11(%arg0: i32) -> (i32, i32) {
    %c0_i32 = arith.constant 0 : i32
    %c0_i32_0 = arith.constant 0 : i32
    %c0_i32_1 = arith.constant 0 : i32
    return %c0_i32, %c0_i32_0 : i32, i32
  }
  func.func @transform_12(%arg0: i32) -> (i32, i32) {
    %c0_i32 = arith.constant 0 : i32
    %c0_i32_0 = arith.constant 0 : i32
    %c0_i32_1 = arith.constant 0 : i32
    return %c0_i32, %c0_i32_0 : i32, i32
  }
  func.func @transform_13(%arg0: i32) -> (i32, i32) {
    %c0_i32 = arith.constant 0 : i32
    %c0_i32_0 = arith.constant 0 : i32
    %c0_i32_1 = arith.constant 0 : i32
    return %c0_i32, %c0_i32_0 : i32, i32
  }
  func.func @transform_14(%arg0: i32) -> (i32, i32, i32) {
    %c0_i32 = arith.constant 0 : i32
    %c0_i32_0 = arith.constant 0 : i32
    %c0_i32_1 = arith.constant 0 : i32
    return %arg0, %c0_i32, %c0_i32_0 : i32, i32, i32
  }
}

</mosaic_0001>

<llo_original>
// kernel: e2e_forward.4
$region0: #{e2e_forward.4}
  #allocation0 [shape = 'u32[]', space=smem, size = 0x4, offset = 0x4, fixed_abs, tag = 'smem constant byte address 0x4 - core index']
  #allocation1 [shape = 'u32[144,128]{1,0:T(1,128)}', space=vmem, size = 0x12000, scoped, tag = 'internal scratch']
  %s0 = inlined_call_operand.vmem [shape: bf16[2,1,512], index: 0, kind: input, shape index: {}]
  %s1 = inlined_call_operand.vmem [shape: bf16[512,256], index: 1, kind: input, shape index: {}]
  %s2 = inlined_call_operand.vmem [shape: f32[1,256], index: 2, kind: input, shape index: {}]
  %s3 = inlined_call_operand.vmem [shape: bf16[256,256], index: 3, kind: input, shape index: {}]
  %s4 = inlined_call_operand.vmem [shape: f32[1,256], index: 4, kind: input, shape index: {}]
  %s5 = inlined_call_operand.vmem [shape: bf16[256,128], index: 5, kind: input, shape index: {}]
  %s6 = inlined_call_operand.vmem [shape: f32[1,128], index: 6, kind: input, shape index: {}]
  %s7 = inlined_call_operand.vmem [shape: bf16[128,128], index: 7, kind: input, shape index: {}]
  %s8 = inlined_call_operand.hbm [shape: f32[1,128], index: 8, kind: input, shape index: {}]
  %s9 = inlined_call_operand.vmem [shape: f32[2,1,128], index: 9, kind: output, shape index: {0}]
  %s10 = inlined_call_operand.hbm [shape: f32[2,1,128], index: 10, kind: output, shape index: {1}]
  %11 = xla_tuple %s9, %s10
  %s12 = sld [smem:[#allocation0]]
  $region81: #{e2e_forward.4} parent=0
    _
  %s14 = ssub.s32 1, %s12
  %s15 = scalar_select 0, %s14, %s12
  $region1: #{e2e_forward.4} parent=0
    #allocation2 [shape = 'u8[512]{0}', space=vmem, size = 0x400, scoped, tag = 'input window, operand 8, single buffered']
    #allocation3 [shape = 's32[2]{0}', space=sflag, size = 0x8, scoped, tag = 'scoped memory for e2e_forward.4']
    #allocation4 [shape = 's32[2]{0}', space=sflag, size = 0x8, scoped, tag = 'scoped memory for e2e_forward.4']
    #allocation5 [shape = 'u8[1024]{0}', space=vmem, size = 0x400, scoped, tag = 'output window, operand 1']
    %16 = vsyncpa [#allocation3], 0
    %17 = vsyncpa [#allocation4], 0
    %s18 = scalar_lea.sflag [#allocation4], 1
    %19 = vsyncpa %s18, 0
    loop: start=0, step=1, limit=4
    $region2: #{e2e_forward.4} parent=1 // loop_pre_header
      _
    $region3: #{e2e_forward.4} parent=1 // loop_header
      %s21 = sphi 0, %s25
      %p22 = scmp.ge.s32.totalorder %s21, 4
      %s31 = sphi 0, %s33
      %s34 = sphi 0, %s31
      %s35 = sphi 0, %s34
      %s51 = sphi 0, %s35
      %s55 = sphi 0, %s55
      %s57 = sphi 0, %s55
      %s58 = sphi 0, %s57
      %s72 = sphi 0, %s58
      %s76 = sphi 0, %s76
      %s78 = sphi 0, %s76
      %s79 = sphi 0, %s78
      %s93 = sphi 0, %s79
      %s97 = sphi 0, %s97
      %s99 = sphi 0, %s97
      %s100 = sphi 0, %s99
      %s114 = sphi 0, %s100
      %s118 = sphi 0, %s118
      %s120 = sphi 0, %s118
      %s121 = sphi 0, %s120
      %s135 = sphi 0, %s121
      %s139 = sphi 0, %s139
      %s141 = sphi 0, %s139
      %s142 = sphi 0, %s141
      %s156 = sphi 0, %s142
      %s160 = sphi 0, %s160
      %s162 = sphi 0, %s160
      %s163 = sphi 0, %s162
      %s177 = sphi 0, %s163
      %s181 = sphi 0, %s181
      %s183 = sphi 0, %s181
      %s184 = sphi 0, %s183
      %s198 = sphi 0, %s184
      %s202 = sphi 0, %s202
      %s204 = sphi 0, %s202
      %s205 = sphi 0, %s204
      %s219 = sphi 0, %s205
      %s225 = sphi 0, %s227
      %s228 = sphi 0, %s225
      %s229 = sphi 0, %s228
      %s245 = sphi 0, %s229
      %s251 = sphi 0, %s253
      %s254 = sphi 0, %s251
      %s255 = sphi 0, %s254
      %s271 = sphi 0, %s255
    $region4: #{e2e_forward.4} parent=1 // loop_header_branch
      %24 = sbr.rel (%p22) target = $region8
    $region5: #{e2e_forward.4} parent=1 // loop_body
      %s26 = ssub.s32 %s21, 1
      %s27 = ssub.s32 %s21, 2
      %s28 = sadd.s32 %s21, 1
      %s29 = ssub.s32 %s21, %s28
      %p30 = scmp.eq.s32.totalorder %s29, 0
      %s32 = sadd.s32 %s31, 1
      %s33 = scalar_select %p30, %s31, %s32
      %p36 = pneg %p30
      %p37 = scmp.eq.s32.totalorder %s21, 1
      %p38 = por %p36, %p37
      %p39 = scmp.ne.s32.totalorder %s31, %s34
      %p40 = scmp.eq.s32.totalorder %s21, 0
      %p41 = por %p39, %p40
      %p42 = scmp.ne.s32.totalorder %s31, %s34
      %p43 = scmp.eq.s32.totalorder %s26, 1
      %p44 = por %p42, %p43
      %p45 = scmp.ne.s32.totalorder %s34, %s35
      %p46 = scmp.eq.s32.totalorder %s26, 0
      %p47 = por %p45, %p46
      %p48 = scmp.ne.s32.totalorder %s34, %s35
      %p49 = scmp.eq.s32.totalorder %s27, 1
      %p50 = por %p48, %p49
      %p52 = scmp.ne.s32.totalorder %s35, %s51
      %p53 = scmp.eq.s32.totalorder %s27, 0
      %p54 = por %p52, %p53
      %s56 = sadd.s32 %s55, 1
      %p59 = scmp.eq.s32.totalorder %s21, 1
      %p60 = scmp.ne.s32.totalorder %s55, %s57
      %p61 = scmp.eq.s32.totalorder %s21, 0
      %p62 = por %p60, %p61
      %p63 = scmp.ne.s32.totalorder %s55, %s57
      %p64 = scmp.eq.s32.totalorder %s26, 1
      %p65 = por %p63, %p64
      %p66 = scmp.ne.s32.totalorder %s57, %s58
      %p67 = scmp.eq.s32.totalorder %s26, 0
      %p68 = por %p66, %p67
      %p69 = scmp.ne.s32.totalorder %s57, %s58
      %p70 = scmp.eq.s32.totalorder %s27, 1
      %p71 = por %p69, %p70
      %p73 = scmp.ne.s32.totalorder %s58, %s72
      %p74 = scmp.eq.s32.totalorder %s27, 0
      %p75 = por %p73, %p74
      %s77 = sadd.s32 %s76, 1
      %p80 = scmp.eq.s32.totalorder %s21, 1
      %p81 = scmp.ne.s32.totalorder %s76, %s78
      %p82 = scmp.eq.s32.totalorder %s21, 0
      %p83 = por %p81, %p82
      %p84 = scmp.ne.s32.totalorder %s76, %s78
      %p85 = scmp.eq.s32.totalorder %s26, 1
      %p86 = por %p84, %p85
      %p87 = scmp.ne.s32.totalorder %s78, %s79
      %p88 = scmp.eq.s32.totalorder %s26, 0
      %p89 = por %p87, %p88
      %p90 = scmp.ne.s32.totalorder %s78, %s79
      %p91 = scmp.eq.s32.totalorder %s27, 1
      %p92 = por %p90, %p91
      %p94 = scmp.ne.s32.totalorder %s79, %s93
      %p95 = scmp.eq.s32.totalorder %s27, 0
      %p96 = por %p94, %p95
      %s98 = sadd.s32 %s97, 1
      %p101 = scmp.eq.s32.totalorder %s21, 1
      %p102 = scmp.ne.s32.totalorder %s97, %s99
      %p103 = scmp.eq.s32.totalorder %s21, 0
      %p104 = por %p102, %p103
      %p105 = scmp.ne.s32.totalorder %s97, %s99
      %p106 = scmp.eq.s32.totalorder %s26, 1
      %p107 = por %p105, %p106
      %p108 = scmp.ne.s32.totalorder %s99, %s100
      %p109 = scmp.eq.s32.totalorder %s26, 0
      %p110 = por %p108, %p109
      %p111 = scmp.ne.s32.totalorder %s99, %s100
      %p112 = scmp.eq.s32.totalorder %s27, 1
      %p113 = por %p111, %p112
      %p115 = scmp.ne.s32.totalorder %s100, %s114
      %p116 = scmp.eq.s32.totalorder %s27, 0
      %p117 = por %p115, %p116
      %s119 = sadd.s32 %s118, 1
      %p122 = scmp.eq.s32.totalorder %s21, 1
      %p123 = scmp.ne.s32.totalorder %s118, %s120
      %p124 = scmp.eq.s32.totalorder %s21, 0
      %p125 = por %p123, %p124
      %p126 = scmp.ne.s32.totalorder %s118, %s120
      %p127 = scmp.eq.s32.totalorder %s26, 1
      %p128 = por %p126, %p127
      %p129 = scmp.ne.s32.totalorder %s120, %s121
      %p130 = scmp.eq.s32.totalorder %s26, 0
      %p131 = por %p129, %p130
      %p132 = scmp.ne.s32.totalorder %s120, %s121
      %p133 = scmp.eq.s32.totalorder %s27, 1
      %p134 = por %p132, %p133
      %p136 = scmp.ne.s32.totalorder %s121, %s135
      %p137 = scmp.eq.s32.totalorder %s27, 0
      %p138 = por %p136, %p137
      %s140 = sadd.s32 %s139, 1
      %p143 = scmp.eq.s32.totalorder %s21, 1
      %p144 = scmp.ne.s32.totalorder %s139, %s141
      %p145 = scmp.eq.s32.totalorder %s21, 0
      %p146 = por %p144, %p145
      %p147 = scmp.ne.s32.totalorder %s139, %s141
      %p148 = scmp.eq.s32.totalorder %s26, 1
      %p149 = por %p147, %p148
      %p150 = scmp.ne.s32.totalorder %s141, %s142
      %p151 = scmp.eq.s32.totalorder %s26, 0
      %p152 = por %p150, %p151
      %p153 = scmp.ne.s32.totalorder %s141, %s142
      %p154 = scmp.eq.s32.totalorder %s27, 1
      %p155 = por %p153, %p154
      %p157 = scmp.ne.s32.totalorder %s142, %s156
      %p158 = scmp.eq.s32.totalorder %s27, 0
      %p159 = por %p157, %p158
      %s161 = sadd.s32 %s160, 1
      %p164 = scmp.eq.s32.totalorder %s21, 1
      %p165 = scmp.ne.s32.totalorder %s160, %s162
      %p166 = scmp.eq.s32.totalorder %s21, 0
      %p167 = por %p165, %p166
      %p168 = scmp.ne.s32.totalorder %s160, %s162
      %p169 = scmp.eq.s32.totalorder %s26, 1
      %p170 = por %p168, %p169
      %p171 = scmp.ne.s32.totalorder %s162, %s163
      %p172 = scmp.eq.s32.totalorder %s26, 0
      %p173 = por %p171, %p172
      %p174 = scmp.ne.s32.totalorder %s162, %s163
      %p175 = scmp.eq.s32.totalorder %s27, 1
      %p176 = por %p174, %p175
      %p178 = scmp.ne.s32.totalorder %s163, %s177
      %p179 = scmp.eq.s32.totalorder %s27, 0
      %p180 = por %p178, %p179
      %s182 = sadd.s32 %s181, 1
      %p185 = scmp.eq.s32.totalorder %s21, 1
      %p186 = scmp.ne.s32.totalorder %s181, %s183
      %p187 = scmp.eq.s32.totalorder %s21, 0
      %p188 = por %p186, %p187
      %p189 = scmp.ne.s32.totalorder %s181, %s183
      %p190 = scmp.eq.s32.totalorder %s26, 1
      %p191 = por %p189, %p190
      %p192 = scmp.ne.s32.totalorder %s183, %s184
      %p193 = scmp.eq.s32.totalorder %s26, 0
      %p194 = por %p192, %p193
      %p195 = scmp.ne.s32.totalorder %s183, %s184
      %p196 = scmp.eq.s32.totalorder %s27, 1
      %p197 = por %p195, %p196
      %p199 = scmp.ne.s32.totalorder %s184, %s198
      %p200 = scmp.eq.s32.totalorder %s27, 0
      %p201 = por %p199, %p200
      %s203 = sadd.s32 %s202, 1
      %p206 = scmp.eq.s32.totalorder %s21, 1
      %p207 = scmp.ne.s32.totalorder %s202, %s204
      %p208 = scmp.eq.s32.totalorder %s21, 0
      %p209 = por %p207, %p208
      %p210 = scmp.ne.s32.totalorder %s202, %s204
      %p211 = scmp.eq.s32.totalorder %s26, 1
      %p212 = por %p210, %p211
      %p213 = scmp.ne.s32.totalorder %s204, %s205
      %p214 = scmp.eq.s32.totalorder %s26, 0
      %p215 = por %p213, %p214
      %p216 = scmp.ne.s32.totalorder %s204, %s205
      %p217 = scmp.eq.s32.totalorder %s27, 1
      %p218 = por %p216, %p217
      %p220 = scmp.ne.s32.totalorder %s205, %s219
      %p221 = scmp.eq.s32.totalorder %s27, 0
      %p222 = por %p220, %p221
      %s223 = ssub.s32 %s21, %s28
      %p224 = scmp.eq.s32.totalorder %s223, 0
      %s226 = sadd.s32 %s225, 1
      %s227 = scalar_select %p224, %s225, %s226
      %p230 = pneg %p224
      %p231 = scmp.eq.s32.totalorder %s21, 1
      %p232 = por %p230, %p231
      %p233 = scmp.ne.s32.totalorder %s225, %s228
      %p234 = scmp.eq.s32.totalorder %s21, 0
      %p235 = por %p233, %p234
      %p236 = scmp.ne.s32.totalorder %s225, %s228
      %p237 = scmp.eq.s32.totalorder %s26, 1
      %p238 = por %p236, %p237
      %p239 = scmp.ne.s32.totalorder %s228, %s229
      %p240 = scmp.eq.s32.totalorder %s26, 0
      %p241 = por %p239, %p240
      %p242 = scmp.ne.s32.totalorder %s228, %s229
      %p243 = scmp.eq.s32.totalorder %s27, 1
      %p244 = por %p242, %p243
      %p246 = scmp.ne.s32.totalorder %s229, %s245
      %p247 = scmp.eq.s32.totalorder %s27, 0
      %p248 = por %p246, %p247
      %s249 = ssub.s32 %s21, %s28
      %p250 = scmp.eq.s32.totalorder %s249, 0
      %s252 = sadd.s32 %s251, 1
      %s253 = scalar_select %p250, %s251, %s252
      %p256 = pneg %p250
      %p257 = scmp.eq.s32.totalorder %s21, 1
      %p258 = por %p256, %p257
      %p259 = scmp.ne.s32.totalorder %s251, %s254
      %p260 = scmp.eq.s32.totalorder %s21, 0
      %p261 = por %p259, %p260
      %p262 = scmp.ne.s32.totalorder %s251, %s254
      %p263 = scmp.eq.s32.totalorder %s26, 1
      %p264 = por %p262, %p263
      %p265 = scmp.ne.s32.totalorder %s254, %s255
      %p266 = scmp.eq.s32.totalorder %s26, 0
      %p267 = por %p265, %p266
      %p268 = scmp.ne.s32.totalorder %s254, %s255
      %p269 = scmp.eq.s32.totalorder %s27, 1
      %p270 = por %p268, %p269
      %p272 = scmp.ne.s32.totalorder %s255, %s271
      %p273 = scmp.eq.s32.totalorder %s27, 0
      %p274 = por %p272, %p273
      %p275 = scmp.le.s32.totalorder 1, %s21
      %p276 = scmp.lt.s32.totalorder %s21, 3
      %p277 = pnand %p275, %p276
      %p278 = pneg %p277
      // Predicated region
      $region9: #{e2e_forward.4} parent=5 // pred_check
        _
      $region10: #{e2e_forward.4} parent=5 // pred_check_branch
        %280 = sbr.rel (%p277) target = $region12
      $region11: #{e2e_forward.4} parent=5 // pred_region
        %s281 = ssub.s32 %s21, 1
        // Predicated region
        $region13: #{e2e_forward.4} parent=11 // pred_check
          %p282 = pneg %p68
        $region14: #{e2e_forward.4} parent=11 // pred_check_branch
          %284 = sbr.rel (%p282) target = $region16
        $region15: #{e2e_forward.4} parent=11 // pred_region
          _
        $region16: #{e2e_forward.4} parent=11 // pred_fallthru
          _
        // Predicated region
        $region17: #{e2e_forward.4} parent=11 // pred_check
          %p285 = pneg %p89
        $region18: #{e2e_forward.4} parent=11 // pred_check_branch
          %287 = sbr.rel (%p285) target = $region20
        $region19: #{e2e_forward.4} parent=11 // pred_region
          _
        $region20: #{e2e_forward.4} parent=11 // pred_fallthru
          _
        // Predicated region
        $region21: #{e2e_forward.4} parent=11 // pred_check
          %p288 = pneg %p110
        $region22: #{e2e_forward.4} parent=11 // pred_check_branch
          %290 = sbr.rel (%p288) target = $region24
        $region23: #{e2e_forward.4} parent=11 // pred_region
          _
        $region24: #{e2e_forward.4} parent=11 // pred_fallthru
          _
        // Predicated region
        $region25: #{e2e_forward.4} parent=11 // pred_check
          %p291 = pneg %p131
        $region26: #{e2e_forward.4} parent=11 // pred_check_branch
          %293 = sbr.rel (%p291) target = $region28
        $region27: #{e2e_forward.4} parent=11 // pred_region
          _
        $region28: #{e2e_forward.4} parent=11 // pred_fallthru
          _
        // Predicated region
        $region29: #{e2e_forward.4} parent=11 // pred_check
          %p294 = pneg %p152
        $region30: #{e2e_forward.4} parent=11 // pred_check_branch
          %296 = sbr.rel (%p294) target = $region32
        $region31: #{e2e_forward.4} parent=11 // pred_region
          _
        $region32: #{e2e_forward.4} parent=11 // pred_fallthru
          _
        // Predicated region
        $region33: #{e2e_forward.4} parent=11 // pred_check
          %p297 = pneg %p173
        $region34: #{e2e_forward.4} parent=11 // pred_check_branch
          %299 = sbr.rel (%p297) target = $region36
        $region35: #{e2e_forward.4} parent=11 // pred_region
          _
        $region36: #{e2e_forward.4} parent=11 // pred_fallthru
          _
        // Predicated region
        $region37: #{e2e_forward.4} parent=11 // pred_check
          %p300 = pneg %p194
        $region38: #{e2e_forward.4} parent=11 // pred_check_branch
          %302 = sbr.rel (%p300) target = $region40
        $region39: #{e2e_forward.4} parent=11 // pred_region
          _
        $region40: #{e2e_forward.4} parent=11 // pred_fallthru
          _
        // Predicated region
        $region41: #{e2e_forward.4} parent=11 // pred_check
          %p303 = pneg %p215
        $region42: #{e2e_forward.4} parent=11 // pred_check_branch
          %305 = sbr.rel (%p303) target = $region44
        $region43: #{e2e_forward.4} parent=11 // pred_region
          %s307 = ssub.s32 16, 16
          %308 = vsyncadd [#allocation3], %s307
          %s310 = sshll.u32 [#allocation2], 4
          %s311 = int_to_ptr.vmem [resolvable:$true] %s310
          %313 = dma.hbm_to_vmem [thread:$0]  %s8, 16, %s311, [#allocation3]
        $region44: #{e2e_forward.4} parent=11 // pred_fallthru
          _
      $region12: #{e2e_forward.4} parent=5 // pred_fallthru
        _
      %p314 = scmp.lt.s32.totalorder %s21, 2
      // Predicated region
      $region45: #{e2e_forward.4} parent=5 // pred_check
        %p315 = pneg %p314
      $region46: #{e2e_forward.4} parent=5 // pred_check_branch
        %317 = sbr.rel (%p315) target = $region48
      $region47: #{e2e_forward.4} parent=5 // pred_region
        // Predicated region
        $region49: #{e2e_forward.4} parent=47 // pred_check
          %p318 = pneg %p41
        $region50: #{e2e_forward.4} parent=47 // pred_check_branch
          %320 = sbr.rel (%p318) target = $region52
        $region51: #{e2e_forward.4} parent=47 // pred_region
          %p321 = scmp.lt.s32.totalorder %s21, 1
          %s322 = scalar_select %p321, %s21, 1
          %s323 = smul.addr %s322, 4
          %s324 = scalar_lea.vmem %s0, %s323
        $region52: #{e2e_forward.4} parent=47 // pred_fallthru
          _
      $region48: #{e2e_forward.4} parent=5 // pred_fallthru
        _
      %p325 = scmp.le.s32.totalorder 1, %s21
      %p326 = scmp.lt.s32.totalorder %s21, 3
      %p327 = pnand %p325, %p326
      %p328 = pneg %p327
      // Predicated region
      $region53: #{e2e_forward.4} parent=5 // pred_check
        _
      $region54: #{e2e_forward.4} parent=5 // pred_check_branch
        %330 = sbr.rel (%p327) target = $region56
      $region55: #{e2e_forward.4} parent=5 // pred_region
        %s331 = ssub.s32 %s21, 1
        // Predicated region
        $region57: #{e2e_forward.4} parent=55 // pred_check
          %p332 = pneg %p215
        $region58: #{e2e_forward.4} parent=55 // pred_check_branch
          %334 = sbr.rel (%p332) target = $region60
        $region59: #{e2e_forward.4} parent=55 // pred_region
          %335 = dma.done [#allocation3], 16
        $region60: #{e2e_forward.4} parent=55 // pred_fallthru
          _
        %p336 = scmp.lt.s32.totalorder %s26, 1
        %s337 = scalar_select %p336, %s26, 1
        %s338 = smul.addr %s337, 4
        %s339 = scalar_lea.vmem %s0, %s338
        %p340 = pneg %p47
        %p341 = pneg %p44
        %p342 = pneg %p68
        %p343 = pneg %p65
        %p344 = pneg %p89
        %p345 = pneg %p86
        %p346 = pneg %p110
        %p347 = pneg %p107
        %p348 = pneg %p131
        %p349 = pneg %p128
        %p350 = pneg %p152
        %p351 = pneg %p149
        %p352 = pneg %p173
        %p353 = pneg %p170
        %p354 = pneg %p194
        %p355 = pneg %p191
        %p356 = pneg %p215
        %p357 = pneg %p212
        %p358 = pneg %p241
        %p359 = pneg %p238
        %p360 = scmp.lt.s32.totalorder %s26, 1
        %s361 = scalar_select %p360, %s26, 1
        %s362 = scalar_lea.vmem %s9, %s361
        %p363 = pneg %p267
        %p364 = pneg %p264
        %s365 = sand.u32 %s254, 1
        %s366 = scalar_lea.sflag [#allocation4], %s365
        %s367 = sand.u32 %s254, 1
        %s368 = scalar_lea.vmem [#allocation5], %s367
        %p369 = scmp.lt.s32.totalorder %s26, 1
        %s370 = scalar_select %p369, %s26, 1
        %s371 = smul.addr %s370, 4
        %s372 = scalar_lea.vmem %s0, %s371
        %p373 = scmp.lt.s32.totalorder %s26, 1
        %s374 = scalar_select %p373, %s26, 1
        %s375 = scalar_lea.vmem %s9, %s374
        %v377 = vld [vmem:[%s372] sm:$0xf]
        %v378 = vld [vmem:[%s1] sm:$0xff]
        %v379 = vld [vmem:[%s1 + $0x8] sm:$0xff]
        %v380 = vld [vmem:[%s1 + $0x10] sm:$0xff]
        %v381 = vld [vmem:[%s1 + $0x18] sm:$0xff]
        %v382 = vld [vmem:[%s1 + $0x20] sm:$0xff]
        %v383 = vld [vmem:[%s1 + $0x28] sm:$0xff]
        %v384 = vld [vmem:[%s1 + $0x30] sm:$0xff]
        %v385 = vld [vmem:[%s1 + $0x38] sm:$0xff]
        %v386 = vld [vmem:[%s1 + $0x40] sm:$0xff]
        %v387 = vld [vmem:[%s1 + $0x48] sm:$0xff]
        %v388 = vld [vmem:[%s1 + $0x50] sm:$0xff]
        %v389 = vld [vmem:[%s1 + $0x58] sm:$0xff]
        %v390 = vld [vmem:[%s1 + $0x60] sm:$0xff]
        %v391 = vld [vmem:[%s1 + $0x68] sm:$0xff]
        %v392 = vld [vmem:[%s1 + $0x70] sm:$0xff]
        %v393 = vld [vmem:[%s1 + $0x78] sm:$0xff]
        %v394 = vld [vmem:[%s1 + $0x80] sm:$0xff]
        %v395 = vld [vmem:[%s1 + $0x88] sm:$0xff]
        %v396 = vld [vmem:[%s1 + $0x90] sm:$0xff]
        %v397 = vld [vmem:[%s1 + $0x98] sm:$0xff]
        %v398 = vld [vmem:[%s1 + $0xa0] sm:$0xff]
        %v399 = vld [vmem:[%s1 + $0xa8] sm:$0xff]
        %v400 = vld [vmem:[%s1 + $0xb0] sm:$0xff]
        %v401 = vld [vmem:[%s1 + $0xb8] sm:$0xff]
        %v402 = vld [vmem:[%s1 + $0xc0] sm:$0xff]
        %v403 = vld [vmem:[%s1 + $0xc8] sm:$0xff]
        %v404 = vld [vmem:[%s1 + $0xd0] sm:$0xff]
        %v405 = vld [vmem:[%s1 + $0xd8] sm:$0xff]
        %v406 = vld [vmem:[%s1 + $0xe0] sm:$0xff]
        %v407 = vld [vmem:[%s1 + $0xe8] sm:$0xff]
        %v408 = vld [vmem:[%s1 + $0xf0] sm:$0xff]
        %v409 = vld [vmem:[%s1 + $0xf8] sm:$0xff]
        %v410 = vld [vmem:[%s1 + $0x100] sm:$0xff]
        %v411 = vld [vmem:[%s1 + $0x108] sm:$0xff]
        %v412 = vld [vmem:[%s1 + $0x110] sm:$0xff]
        %v413 = vld [vmem:[%s1 + $0x118] sm:$0xff]
        %v414 = vld [vmem:[%s1 + $0x120] sm:$0xff]
        %v415 = vld [vmem:[%s1 + $0x128] sm:$0xff]
        %v416 = vld [vmem:[%s1 + $0x130] sm:$0xff]
        %v417 = vld [vmem:[%s1 + $0x138] sm:$0xff]
        %v418 = vld [vmem:[%s1 + $0x140] sm:$0xff]
        %v419 = vld [vmem:[%s1 + $0x148] sm:$0xff]
        %v420 = vld [vmem:[%s1 + $0x150] sm:$0xff]
        %v421 = vld [vmem:[%s1 + $0x158] sm:$0xff]
        %v422 = vld [vmem:[%s1 + $0x160] sm:$0xff]
        %v423 = vld [vmem:[%s1 + $0x168] sm:$0xff]
        %v424 = vld [vmem:[%s1 + $0x170] sm:$0xff]
        %v425 = vld [vmem:[%s1 + $0x178] sm:$0xff]
        %v426 = vld [vmem:[%s1 + $0x180] sm:$0xff]
        %v427 = vld [vmem:[%s1 + $0x188] sm:$0xff]
        %v428 = vld [vmem:[%s1 + $0x190] sm:$0xff]
        %v429 = vld [vmem:[%s1 + $0x198] sm:$0xff]
        %v430 = vld [vmem:[%s1 + $0x1a0] sm:$0xff]
        %v431 = vld [vmem:[%s1 + $0x1a8] sm:$0xff]
        %v432 = vld [vmem:[%s1 + $0x1b0] sm:$0xff]
        %v433 = vld [vmem:[%s1 + $0x1b8] sm:$0xff]
        %v434 = vld [vmem:[%s1 + $0x1c0] sm:$0xff]
        %v435 = vld [vmem:[%s1 + $0x1c8] sm:$0xff]
        %v436 = vld [vmem:[%s1 + $0x1d0] sm:$0xff]
        %v437 = vld [vmem:[%s1 + $0x1d8] sm:$0xff]
        %v438 = vld [vmem:[%s1 + $0x1e0] sm:$0xff]
        %v439 = vld [vmem:[%s1 + $0x1e8] sm:$0xff]
        %v440 = vld [vmem:[%s1 + $0x1f0] sm:$0xff]
        %v441 = vld [vmem:[%s1 + $0x1f8] sm:$0xff]
        %v442 = vld [vmem:[%s2] sm:$0x3]
        %v445 = vunpack.c.l.s4 1966171168
        %v446 = vunpack.c.0.s8 %v445
        %v447 = vlaneseq
        %v448 = vshrl.u32 %v447, 7
        %v449 = vsub.s32 %v446, %v448
        %v450 = vrot.slane %v377, %v449
        %v451 = vcombine.high %v450, %v450
        %v453 = vunpack.c.l.s4 1966171168
        %v454 = vunpack.c.0.s8 %v453
        %v455 = vlaneseq
        %v456 = vshrl.u32 %v455, 7
        %v457 = vsub.s32 %v454, %v456
        %v458 = vrot.slane %v450, %v457
        %v460 = vunpack.c.l.s4 1966171168
        %v461 = vunpack.c.0.s8 %v460
        %v462 = vlaneseq
        %v463 = vshrl.u32 %v462, 7
        %v464 = vsub.s32 %v461, %v463
        %v465 = vrot.slane %v451, %v464
        %v466 = vcombine.high %v458, %v458
        %v467 = vcombine.high %v465, %v465
        %v536 = vunpack.c.l.b16 %v378
        %v537 = vunpack.c.h.b16 %v378
        %v538 = vunpack.c.l.b16 %v379
        %v539 = vunpack.c.h.b16 %v379
        %v540 = vunpack.c.l.b16 %v380
        %v541 = vunpack.c.h.b16 %v380
        %v542 = vunpack.c.l.b16 %v381
        %v543 = vunpack.c.h.b16 %v381
        %v544 = vunpack.c.l.b16 %v382
        %v545 = vunpack.c.h.b16 %v382
        %v546 = vunpack.c.l.b16 %v383
        %v547 = vunpack.c.h.b16 %v383
        %v548 = vunpack.c.l.b16 %v384
        %v549 = vunpack.c.h.b16 %v384
        %v550 = vunpack.c.l.b16 %v385
        %v551 = vunpack.c.h.b16 %v385
        %v552 = vunpack.c.l.b16 %v386
        %v553 = vunpack.c.h.b16 %v386
        %v554 = vunpack.c.l.b16 %v387
        %v555 = vunpack.c.h.b16 %v387
        %v556 = vunpack.c.l.b16 %v388
        %v557 = vunpack.c.h.b16 %v388
        %v558 = vunpack.c.l.b16 %v389
        %v559 = vunpack.c.h.b16 %v389
        %v560 = vunpack.c.l.b16 %v390
        %v561 = vunpack.c.h.b16 %v390
        %v562 = vunpack.c.l.b16 %v391
        %v563 = vunpack.c.h.b16 %v391
        %v564 = vunpack.c.l.b16 %v392
        %v565 = vunpack.c.h.b16 %v392
        %v566 = vunpack.c.l.b16 %v393
        %v567 = vunpack.c.h.b16 %v393
        %v568 = vunpack.c.l.b16 %v394
        %v569 = vunpack.c.h.b16 %v394
        %v570 = vunpack.c.l.b16 %v395
        %v571 = vunpack.c.h.b16 %v395
        %v572 = vunpack.c.l.b16 %v396
        %v573 = vunpack.c.h.b16 %v396
        %v574 = vunpack.c.l.b16 %v397
        %v575 = vunpack.c.h.b16 %v397
        %v576 = vunpack.c.l.b16 %v398
        %v577 = vunpack.c.h.b16 %v398
        %v578 = vunpack.c.l.b16 %v399
        %v579 = vunpack.c.h.b16 %v399
        %v580 = vunpack.c.l.b16 %v400
        %v581 = vunpack.c.h.b16 %v400
        %v582 = vunpack.c.l.b16 %v401
        %v583 = vunpack.c.h.b16 %v401
        %v584 = vunpack.c.l.b16 %v402
        %v585 = vunpack.c.h.b16 %v402
        %v586 = vunpack.c.l.b16 %v403
        %v587 = vunpack.c.h.b16 %v403
        %v588 = vunpack.c.l.b16 %v404
        %v589 = vunpack.c.h.b16 %v404
        %v590 = vunpack.c.l.b16 %v405
        %v591 = vunpack.c.h.b16 %v405
        %v592 = vunpack.c.l.b16 %v406
        %v593 = vunpack.c.h.b16 %v406
        %v594 = vunpack.c.l.b16 %v407
        %v595 = vunpack.c.h.b16 %v407
        %v596 = vunpack.c.l.b16 %v408
        %v597 = vunpack.c.h.b16 %v408
        %v598 = vunpack.c.l.b16 %v409
        %v599 = vunpack.c.h.b16 %v409
        %v600 = vunpack.c.l.b16 %v410
        %v601 = vunpack.c.h.b16 %v410
        %v602 = vunpack.c.l.b16 %v411
        %v603 = vunpack.c.h.b16 %v411
        %v604 = vunpack.c.l.b16 %v412
        %v605 = vunpack.c.h.b16 %v412
        %v606 = vunpack.c.l.b16 %v413
        %v607 = vunpack.c.h.b16 %v413
        %v608 = vunpack.c.l.b16 %v414
        %v609 = vunpack.c.h.b16 %v414
        %v610 = vunpack.c.l.b16 %v415
        %v611 = vunpack.c.h.b16 %v415
        %v612 = vunpack.c.l.b16 %v416
        %v613 = vunpack.c.h.b16 %v416
        %v614 = vunpack.c.l.b16 %v417
        %v615 = vunpack.c.h.b16 %v417
        %v616 = vunpack.c.l.b16 %v418
        %v617 = vunpack.c.h.b16 %v418
        %v618 = vunpack.c.l.b16 %v419
        %v619 = vunpack.c.h.b16 %v419
        %v620 = vunpack.c.l.b16 %v420
        %v621 = vunpack.c.h.b16 %v420
        %v622 = vunpack.c.l.b16 %v421
        %v623 = vunpack.c.h.b16 %v421
        %v624 = vunpack.c.l.b16 %v422
        %v625 = vunpack.c.h.b16 %v422
        %v626 = vunpack.c.l.b16 %v423
        %v627 = vunpack.c.h.b16 %v423
        %v628 = vunpack.c.l.b16 %v424
        %v629 = vunpack.c.h.b16 %v424
        %v630 = vunpack.c.l.b16 %v425
        %v631 = vunpack.c.h.b16 %v425
        %v632 = vunpack.c.l.b16 %v426
        %v633 = vunpack.c.h.b16 %v426
        %v634 = vunpack.c.l.b16 %v427
        %v635 = vunpack.c.h.b16 %v427
        %v636 = vunpack.c.l.b16 %v428
        %v637 = vunpack.c.h.b16 %v428
        %v638 = vunpack.c.l.b16 %v429
        %v639 = vunpack.c.h.b16 %v429
        %v640 = vunpack.c.l.b16 %v430
        %v641 = vunpack.c.h.b16 %v430
        %v642 = vunpack.c.l.b16 %v431
        %v643 = vunpack.c.h.b16 %v431
        %v644 = vunpack.c.l.b16 %v432
        %v645 = vunpack.c.h.b16 %v432
        %v646 = vunpack.c.l.b16 %v433
        %v647 = vunpack.c.h.b16 %v433
        %v648 = vunpack.c.l.b16 %v434
        %v649 = vunpack.c.h.b16 %v434
        %v650 = vunpack.c.l.b16 %v435
        %v651 = vunpack.c.h.b16 %v435
        %v652 = vunpack.c.l.b16 %v436
        %v653 = vunpack.c.h.b16 %v436
        %v654 = vunpack.c.l.b16 %v437
        %v655 = vunpack.c.h.b16 %v437
        %v656 = vunpack.c.l.b16 %v438
        %v657 = vunpack.c.h.b16 %v438
        %v658 = vunpack.c.l.b16 %v439
        %v659 = vunpack.c.h.b16 %v439
        %v660 = vunpack.c.l.b16 %v440
        %v661 = vunpack.c.h.b16 %v440
        %v662 = vunpack.c.l.b16 %v441
        %v663 = vunpack.c.h.b16 %v441
        %v664 = vpack.c.b16 %v538, %v536
        %v665 = vpack.c.b16 %v539, %v537
        %v666 = vpack.c.b16 %v542, %v540
        %v667 = vpack.c.b16 %v543, %v541
        %v668 = vpack.c.b16 %v546, %v544
        %v669 = vpack.c.b16 %v547, %v545
        %v670 = vpack.c.b16 %v550, %v548
        %v671 = vpack.c.b16 %v551, %v549
        %v672 = vpack.c.b16 %v554, %v552
        %v673 = vpack.c.b16 %v555, %v553
        %v674 = vpack.c.b16 %v558, %v556
        %v675 = vpack.c.b16 %v559, %v557
        %v676 = vpack.c.b16 %v562, %v560
        %v677 = vpack.c.b16 %v563, %v561
        %v678 = vpack.c.b16 %v566, %v564
        %v679 = vpack.c.b16 %v567, %v565
        %v680 = vpack.c.b16 %v570, %v568
        %v681 = vpack.c.b16 %v571, %v569
        %v682 = vpack.c.b16 %v574, %v572
        %v683 = vpack.c.b16 %v575, %v573
        %v684 = vpack.c.b16 %v578, %v576
        %v685 = vpack.c.b16 %v579, %v577
        %v686 = vpack.c.b16 %v582, %v580
        %v687 = vpack.c.b16 %v583, %v581
        %v688 = vpack.c.b16 %v586, %v584
        %v689 = vpack.c.b16 %v587, %v585
        %v690 = vpack.c.b16 %v590, %v588
        %v691 = vpack.c.b16 %v591, %v589
        %v692 = vpack.c.b16 %v594, %v592
        %v693 = vpack.c.b16 %v595, %v593
        %v694 = vpack.c.b16 %v598, %v596
        %v695 = vpack.c.b16 %v599, %v597
        %v696 = vpack.c.b16 %v602, %v600
        %v697 = vpack.c.b16 %v603, %v601
        %v698 = vpack.c.b16 %v606, %v604
        %v699 = vpack.c.b16 %v607, %v605
        %v700 = vpack.c.b16 %v610, %v608
        %v701 = vpack.c.b16 %v611, %v609
        %v702 = vpack.c.b16 %v614, %v612
        %v703 = vpack.c.b16 %v615, %v613
        %v704 = vpack.c.b16 %v618, %v616
        %v705 = vpack.c.b16 %v619, %v617
        %v706 = vpack.c.b16 %v622, %v620
        %v707 = vpack.c.b16 %v623, %v621
        %v708 = vpack.c.b16 %v626, %v624
        %v709 = vpack.c.b16 %v627, %v625
        %v710 = vpack.c.b16 %v630, %v628
        %v711 = vpack.c.b16 %v631, %v629
        %v712 = vpack.c.b16 %v634, %v632
        %v713 = vpack.c.b16 %v635, %v633
        %v714 = vpack.c.b16 %v638, %v636
        %v715 = vpack.c.b16 %v639, %v637
        %v716 = vpack.c.b16 %v642, %v640
        %v717 = vpack.c.b16 %v643, %v641
        %v718 = vpack.c.b16 %v646, %v644
        %v719 = vpack.c.b16 %v647, %v645
        %v720 = vpack.c.b16 %v650, %v648
        %v721 = vpack.c.b16 %v651, %v649
        %v722 = vpack.c.b16 %v654, %v652
        %v723 = vpack.c.b16 %v655, %v653
        %v724 = vpack.c.b16 %v658, %v656
        %v725 = vpack.c.b16 %v659, %v657
        %v726 = vpack.c.b16 %v662, %v660
        %v727 = vpack.c.b16 %v663, %v661
        %v793 = vlaneseq
        %v794 = vshrl.u32 %v793, 7
        %v795 = vsub.s32 0, %v794
        %v796 = vrot.slane %v442, %v795
        %v797 = vlaneseq
        %v798 = vshrl.u32 %v797, 7
        %v799 = vsub.s32 1, %v798
        %v800 = vrot.slane %v442, %v799
        %803 = vmatprep.subr.bf16.mxu0 %v665
        %804 = vmatpush1.bf16.msra.mxu0 %v664
        %805 = vmatprep.subr.bf16.mxu0 %v667
        %806 = vmatpush1.bf16.msra.mxu0 %v666
        %807 = vmatprep.subr.bf16.mxu0 %v669
        %808 = vmatpush1.bf16.msra.mxu0 %v668
        %809 = vmatprep.subr.bf16.mxu0 %v671
        %810 = vmatpush1.bf16.msra.mxu0 %v670
        %811 = vmatprep.subr.bf16.mxu0 %v673
        %812 = vmatpush1.bf16.msra.mxu0 %v672
        %813 = vmatprep.subr.bf16.mxu0 %v675
        %814 = vmatpush1.bf16.msra.mxu0 %v674
        %815 = vmatprep.subr.bf16.mxu0 %v677
        %816 = vmatpush1.bf16.msra.mxu0 %v676
        %817 = vmatprep.subr.bf16.mxu0 %v679
        %818 = vmatpush1.bf16.msra.mxu0 %v678
        %819 = vmatprep.subr.bf16.mxu0 %v681
        %820 = vmatpush1.bf16.msra.mxu0 %v680
        %821 = vmatprep.subr.bf16.mxu0 %v683
        %822 = vmatpush1.bf16.msra.mxu0 %v682
        %823 = vmatprep.subr.bf16.mxu0 %v685
        %824 = vmatpush1.bf16.msra.mxu0 %v684
        %825 = vmatprep.subr.bf16.mxu0 %v687
        %826 = vmatpush1.bf16.msra.mxu0 %v686
        %827 = vmatprep.subr.bf16.mxu0 %v689
        %828 = vmatpush1.bf16.msra.mxu0 %v688
        %829 = vmatprep.subr.bf16.mxu0 %v691
        %830 = vmatpush1.bf16.msra.mxu0 %v690
        %831 = vmatprep.subr.bf16.mxu0 %v693
        %832 = vmatpush1.bf16.msra.mxu0 %v692
        %833 = vmatprep.subr.bf16.mxu0 %v695
        %834 = vmatpush1.bf16.msra.mxu0 %v694
        %835 = vmatprep.mubr.bf16.mxu0 %v465
        %836 = vmatmul.mubr.bf16.gmra.mrb[0].mxu0 %v458
        %v837 = vpop.f32.mrb[0].mxu0
        %v838 = vadd.f32 %v796, %v837
        %v839 = vpop.f32.mrb[0].mxu0
        %v840 = vadd.f32 %v800, %v839
        %v841 = vpop.f32.mrb[0].mxu0
        %v842 = vpop.f32.mrb[0].mxu0
        %843 = vdwg.mxu0
        %844 = vmatprep.subr.bf16.mxu0 %v697
        %845 = vmatpush1.bf16.msra.mxu0 %v696
        %846 = vmatprep.subr.bf16.mxu0 %v699
        %847 = vmatpush1.bf16.msra.mxu0 %v698
        %848 = vmatprep.subr.bf16.mxu0 %v701
        %849 = vmatpush1.bf16.msra.mxu0 %v700
        %850 = vmatprep.subr.bf16.mxu0 %v703
        %851 = vmatpush1.bf16.msra.mxu0 %v702
        %852 = vmatprep.subr.bf16.mxu0 %v705
        %853 = vmatpush1.bf16.msra.mxu0 %v704
        %854 = vmatprep.subr.bf16.mxu0 %v707
        %855 = vmatpush1.bf16.msra.mxu0 %v706
        %856 = vmatprep.subr.bf16.mxu0 %v709
        %857 = vmatpush1.bf16.msra.mxu0 %v708
        %858 = vmatprep.subr.bf16.mxu0 %v711
        %859 = vmatpush1.bf16.msra.mxu0 %v710
        %860 = vmatprep.subr.bf16.mxu0 %v713
        %861 = vmatpush1.bf16.msra.mxu0 %v712
        %862 = vmatprep.subr.bf16.mxu0 %v715
        %863 = vmatpush1.bf16.msra.mxu0 %v714
        %864 = vmatprep.subr.bf16.mxu0 %v717
        %865 = vmatpush1.bf16.msra.mxu0 %v716
        %866 = vmatprep.subr.bf16.mxu0 %v719
        %867 = vmatpush1.bf16.msra.mxu0 %v718
        %868 = vmatprep.subr.bf16.mxu0 %v721
        %869 = vmatpush1.bf16.msra.mxu0 %v720
        %870 = vmatprep.subr.bf16.mxu0 %v723
        %871 = vmatpush1.bf16.msra.mxu0 %v722
        %872 = vmatprep.subr.bf16.mxu0 %v725
        %873 = vmatpush1.bf16.msra.mxu0 %v724
        %874 = vmatprep.subr.bf16.mxu0 %v727
        %875 = vmatpush1.bf16.msra.mxu0 %v726
        %876 = vmatprep.mubr.bf16.mxu0 %v467
        %877 = vmatmul.mubr.bf16.gmra.mrb[0].mxu0 %v466
        %v878 = vpop.f32.mrb[0].mxu0
        %v879 = vadd.f32 %v838, %v878
        %v880 = vpop.f32.mrb[0].mxu0
        %v881 = vadd.f32 %v840, %v880
        %v882 = vpop.f32.mrb[0].mxu0
        %v883 = vpop.f32.mrb[0].mxu0
        %884 = vdwg.mxu0
        %v885 = vmax.f32 %v879, 0.0
        %v886 = vmax.f32 %v881, 0.0
        %v887 = vpack.c.bf16 %v885, %v885
        %v888 = vpack.c.bf16 %v886, %v886
        %v889 = vld [vmem:[%s3] sm:$0xff]
        %v890 = vld [vmem:[%s3 + $0x8] sm:$0xff]
        %v891 = vld [vmem:[%s3 + $0x10] sm:$0xff]
        %v892 = vld [vmem:[%s3 + $0x18] sm:$0xff]
        %v893 = vld [vmem:[%s3 + $0x20] sm:$0xff]
        %v894 = vld [vmem:[%s3 + $0x28] sm:$0xff]
        %v895 = vld [vmem:[%s3 + $0x30] sm:$0xff]
        %v896 = vld [vmem:[%s3 + $0x38] sm:$0xff]
        %v897 = vld [vmem:[%s3 + $0x40] sm:$0xff]
        %v898 = vld [vmem:[%s3 + $0x48] sm:$0xff]
        %v899 = vld [vmem:[%s3 + $0x50] sm:$0xff]
        %v900 = vld [vmem:[%s3 + $0x58] sm:$0xff]
        %v901 = vld [vmem:[%s3 + $0x60] sm:$0xff]
        %v902 = vld [vmem:[%s3 + $0x68] sm:$0xff]
        %v903 = vld [vmem:[%s3 + $0x70] sm:$0xff]
        %v904 = vld [vmem:[%s3 + $0x78] sm:$0xff]
        %v905 = vld [vmem:[%s3 + $0x80] sm:$0xff]
        %v906 = vld [vmem:[%s3 + $0x88] sm:$0xff]
        %v907 = vld [vmem:[%s3 + $0x90] sm:$0xff]
        %v908 = vld [vmem:[%s3 + $0x98] sm:$0xff]
        %v909 = vld [vmem:[%s3 + $0xa0] sm:$0xff]
        %v910 = vld [vmem:[%s3 + $0xa8] sm:$0xff]
        %v911 = vld [vmem:[%s3 + $0xb0] sm:$0xff]
        %v912 = vld [vmem:[%s3 + $0xb8] sm:$0xff]
        %v913 = vld [vmem:[%s3 + $0xc0] sm:$0xff]
        %v914 = vld [vmem:[%s3 + $0xc8] sm:$0xff]
        %v915 = vld [vmem:[%s3 + $0xd0] sm:$0xff]
        %v916 = vld [vmem:[%s3 + $0xd8] sm:$0xff]
        %v917 = vld [vmem:[%s3 + $0xe0] sm:$0xff]
        %v918 = vld [vmem:[%s3 + $0xe8] sm:$0xff]
        %v919 = vld [vmem:[%s3 + $0xf0] sm:$0xff]
        %v920 = vld [vmem:[%s3 + $0xf8] sm:$0xff]
        %v921 = vld [vmem:[%s4] sm:$0x3]
        %v954 = vunpack.c.l.b16 %v889
        %v955 = vunpack.c.h.b16 %v889
        %v956 = vunpack.c.l.b16 %v890
        %v957 = vunpack.c.h.b16 %v890
        %v958 = vunpack.c.l.b16 %v891
        %v959 = vunpack.c.h.b16 %v891
        %v960 = vunpack.c.l.b16 %v892
        %v961 = vunpack.c.h.b16 %v892
        %v962 = vunpack.c.l.b16 %v893
        %v963 = vunpack.c.h.b16 %v893
        %v964 = vunpack.c.l.b16 %v894
        %v965 = vunpack.c.h.b16 %v894
        %v966 = vunpack.c.l.b16 %v895
        %v967 = vunpack.c.h.b16 %v895
        %v968 = vunpack.c.l.b16 %v896
        %v969 = vunpack.c.h.b16 %v896
        %v970 = vunpack.c.l.b16 %v897
        %v971 = vunpack.c.h.b16 %v897
        %v972 = vunpack.c.l.b16 %v898
        %v973 = vunpack.c.h.b16 %v898
        %v974 = vunpack.c.l.b16 %v899
        %v975 = vunpack.c.h.b16 %v899
        %v976 = vunpack.c.l.b16 %v900
        %v977 = vunpack.c.h.b16 %v900
        %v978 = vunpack.c.l.b16 %v901
        %v979 = vunpack.c.h.b16 %v901
        %v980 = vunpack.c.l.b16 %v902
        %v981 = vunpack.c.h.b16 %v902
        %v982 = vunpack.c.l.b16 %v903
        %v983 = vunpack.c.h.b16 %v903
        %v984 = vunpack.c.l.b16 %v904
        %v985 = vunpack.c.h.b16 %v904
        %v986 = vunpack.c.l.b16 %v905
        %v987 = vunpack.c.h.b16 %v905
        %v988 = vunpack.c.l.b16 %v906
        %v989 = vunpack.c.h.b16 %v906
        %v990 = vunpack.c.l.b16 %v907
        %v991 = vunpack.c.h.b16 %v907
        %v992 = vunpack.c.l.b16 %v908
        %v993 = vunpack.c.h.b16 %v908
        %v994 = vunpack.c.l.b16 %v909
        %v995 = vunpack.c.h.b16 %v909
        %v996 = vunpack.c.l.b16 %v910
        %v997 = vunpack.c.h.b16 %v910
        %v998 = vunpack.c.l.b16 %v911
        %v999 = vunpack.c.h.b16 %v911
        %v1000 = vunpack.c.l.b16 %v912
        %v1001 = vunpack.c.h.b16 %v912
        %v1002 = vunpack.c.l.b16 %v913
        %v1003 = vunpack.c.h.b16 %v913
        %v1004 = vunpack.c.l.b16 %v914
        %v1005 = vunpack.c.h.b16 %v914
        %v1006 = vunpack.c.l.b16 %v915
        %v1007 = vunpack.c.h.b16 %v915
        %v1008 = vunpack.c.l.b16 %v916
        %v1009 = vunpack.c.h.b16 %v916
        %v1010 = vunpack.c.l.b16 %v917
        %v1011 = vunpack.c.h.b16 %v917
        %v1012 = vunpack.c.l.b16 %v918
        %v1013 = vunpack.c.h.b16 %v918
        %v1014 = vunpack.c.l.b16 %v919
        %v1015 = vunpack.c.h.b16 %v919
        %v1016 = vunpack.c.l.b16 %v920
        %v1017 = vunpack.c.h.b16 %v920
        %v1018 = vpack.c.b16 %v956, %v954
        %v1019 = vpack.c.b16 %v957, %v955
        %v1020 = vpack.c.b16 %v960, %v958
        %v1021 = vpack.c.b16 %v961, %v959
        %v1022 = vpack.c.b16 %v964, %v962
        %v1023 = vpack.c.b16 %v965, %v963
        %v1024 = vpack.c.b16 %v968, %v966
        %v1025 = vpack.c.b16 %v969, %v967
        %v1026 = vpack.c.b16 %v972, %v970
        %v1027 = vpack.c.b16 %v973, %v971
        %v1028 = vpack.c.b16 %v976, %v974
        %v1029 = vpack.c.b16 %v977, %v975
        %v1030 = vpack.c.b16 %v980, %v978
        %v1031 = vpack.c.b16 %v981, %v979
        %v1032 = vpack.c.b16 %v984, %v982
        %v1033 = vpack.c.b16 %v985, %v983
        %v1034 = vpack.c.b16 %v988, %v986
        %v1035 = vpack.c.b16 %v989, %v987
        %v1036 = vpack.c.b16 %v992, %v990
        %v1037 = vpack.c.b16 %v993, %v991
        %v1038 = vpack.c.b16 %v996, %v994
        %v1039 = vpack.c.b16 %v997, %v995
        %v1040 = vpack.c.b16 %v1000, %v998
        %v1041 = vpack.c.b16 %v1001, %v999
        %v1042 = vpack.c.b16 %v1004, %v1002
        %v1043 = vpack.c.b16 %v1005, %v1003
        %v1044 = vpack.c.b16 %v1008, %v1006
        %v1045 = vpack.c.b16 %v1009, %v1007
        %v1046 = vpack.c.b16 %v1012, %v1010
        %v1047 = vpack.c.b16 %v1013, %v1011
        %v1048 = vpack.c.b16 %v1016, %v1014
        %v1049 = vpack.c.b16 %v1017, %v1015
        %v1083 = vlaneseq
        %v1084 = vshrl.u32 %v1083, 7
        %v1085 = vsub.s32 0, %v1084
        %v1086 = vrot.slane %v921, %v1085
        %v1087 = vlaneseq
        %v1088 = vshrl.u32 %v1087, 7
        %v1089 = vsub.s32 1, %v1088
        %v1090 = vrot.slane %v921, %v1089
        %1093 = vmatprep.subr.bf16.mxu0 %v1019
        %1094 = vmatpush1.bf16.msra.mxu0 %v1018
        %1095 = vmatprep.subr.bf16.mxu0 %v1021
        %1096 = vmatpush1.bf16.msra.mxu0 %v1020
        %1097 = vmatprep.subr.bf16.mxu0 %v1023
        %1098 = vmatpush1.bf16.msra.mxu0 %v1022
        %1099 = vmatprep.subr.bf16.mxu0 %v1025
        %1100 = vmatpush1.bf16.msra.mxu0 %v1024
        %1101 = vmatprep.subr.bf16.mxu0 %v1027
        %1102 = vmatpush1.bf16.msra.mxu0 %v1026
        %1103 = vmatprep.subr.bf16.mxu0 %v1029
        %1104 = vmatpush1.bf16.msra.mxu0 %v1028
        %1105 = vmatprep.subr.bf16.mxu0 %v1031
        %1106 = vmatpush1.bf16.msra.mxu0 %v1030
        %1107 = vmatprep.subr.bf16.mxu0 %v1033
        %1108 = vmatpush1.bf16.msra.mxu0 %v1032
        %1109 = vmatprep.subr.bf16.mxu0 %v1035
        %1110 = vmatpush1.bf16.msra.mxu0 %v1034
        %1111 = vmatprep.subr.bf16.mxu0 %v1037
        %1112 = vmatpush1.bf16.msra.mxu0 %v1036
        %1113 = vmatprep.subr.bf16.mxu0 %v1039
        %1114 = vmatpush1.bf16.msra.mxu0 %v1038
        %1115 = vmatprep.subr.bf16.mxu0 %v1041
        %1116 = vmatpush1.bf16.msra.mxu0 %v1040
        %1117 = vmatprep.subr.bf16.mxu0 %v1043
        %1118 = vmatpush1.bf16.msra.mxu0 %v1042
        %1119 = vmatprep.subr.bf16.mxu0 %v1045
        %1120 = vmatpush1.bf16.msra.mxu0 %v1044
        %1121 = vmatprep.subr.bf16.mxu0 %v1047
        %1122 = vmatpush1.bf16.msra.mxu0 %v1046
        %1123 = vmatprep.subr.bf16.mxu0 %v1049
        %1124 = vmatpush1.bf16.msra.mxu0 %v1048
        %1125 = vmatprep.mubr.bf16.mxu0 %v888
        %1126 = vmatmul.mubr.bf16.gmra.mrb[0].mxu0 %v887
        %v1127 = vpop.f32.mrb[0].mxu0
        %v1128 = vadd.f32 %v1086, %v1127
        %v1129 = vpop.f32.mrb[0].mxu0
        %v1130 = vadd.f32 %v1090, %v1129
        %v1131 = vpop.f32.mrb[0].mxu0
        %v1132 = vpop.f32.mrb[0].mxu0
        %1133 = vdwg.mxu0
        %v1134 = vmax.f32 %v1128, 0.0
        %v1135 = vmax.f32 %v1130, 0.0
        %v1136 = vpack.c.bf16 %v1134, %v1134
        %v1137 = vpack.c.bf16 %v1135, %v1135
        %v1138 = vld [vmem:[%s5] sm:$0xf]
        %v1139 = vld [vmem:[%s5 + $0x4] sm:$0xf]
        %v1140 = vld [vmem:[%s5 + $0x8] sm:$0xf]
        %v1141 = vld [vmem:[%s5 + $0xc] sm:$0xf]
        %v1142 = vld [vmem:[%s5 + $0x10] sm:$0xf]
        %v1143 = vld [vmem:[%s5 + $0x14] sm:$0xf]
        %v1144 = vld [vmem:[%s5 + $0x18] sm:$0xf]
        %v1145 = vld [vmem:[%s5 + $0x1c] sm:$0xf]
        %v1146 = vld [vmem:[%s5 + $0x20] sm:$0xf]
        %v1147 = vld [vmem:[%s5 + $0x24] sm:$0xf]
        %v1148 = vld [vmem:[%s5 + $0x28] sm:$0xf]
        %v1149 = vld [vmem:[%s5 + $0x2c] sm:$0xf]
        %v1150 = vld [vmem:[%s5 + $0x30] sm:$0xf]
        %v1151 = vld [vmem:[%s5 + $0x34] sm:$0xf]
        %v1152 = vld [vmem:[%s5 + $0x38] sm:$0xf]
        %v1153 = vld [vmem:[%s5 + $0x3c] sm:$0xf]
        %v1154 = vld [vmem:[%s5 + $0x40] sm:$0xf]
        %v1155 = vld [vmem:[%s5 + $0x44] sm:$0xf]
        %v1156 = vld [vmem:[%s5 + $0x48] sm:$0xf]
        %v1157 = vld [vmem:[%s5 + $0x4c] sm:$0xf]
        %v1158 = vld [vmem:[%s5 + $0x50] sm:$0xf]
        %v1159 = vld [vmem:[%s5 + $0x54] sm:$0xf]
        %v1160 = vld [vmem:[%s5 + $0x58] sm:$0xf]
        %v1161 = vld [vmem:[%s5 + $0x5c] sm:$0xf]
        %v1162 = vld [vmem:[%s5 + $0x60] sm:$0xf]
        %v1163 = vld [vmem:[%s5 + $0x64] sm:$0xf]
        %v1164 = vld [vmem:[%s5 + $0x68] sm:$0xf]
        %v1165 = vld [vmem:[%s5 + $0x6c] sm:$0xf]
        %v1166 = vld [vmem:[%s5 + $0x70] sm:$0xf]
        %v1167 = vld [vmem:[%s5 + $0x74] sm:$0xf]
        %v1168 = vld [vmem:[%s5 + $0x78] sm:$0xf]
        %v1169 = vld [vmem:[%s5 + $0x7c] sm:$0xf]
        %v1170 = vld [vmem:[%s6] sm:$0x1]
        %v1203 = vunpack.c.l.b16 %v1138
        %v1204 = vunpack.c.l.b16 %v1139
        %v1205 = vunpack.c.l.b16 %v1140
        %v1206 = vunpack.c.l.b16 %v1141
        %v1207 = vunpack.c.l.b16 %v1142
        %v1208 = vunpack.c.l.b16 %v1143
        %v1209 = vunpack.c.l.b16 %v1144
        %v1210 = vunpack.c.l.b16 %v1145
        %v1211 = vunpack.c.l.b16 %v1146
        %v1212 = vunpack.c.l.b16 %v1147
        %v1213 = vunpack.c.l.b16 %v1148
        %v1214 = vunpack.c.l.b16 %v1149
        %v1215 = vunpack.c.l.b16 %v1150
        %v1216 = vunpack.c.l.b16 %v1151
        %v1217 = vunpack.c.l.b16 %v1152
        %v1218 = vunpack.c.l.b16 %v1153
        %v1219 = vunpack.c.l.b16 %v1154
        %v1220 = vunpack.c.l.b16 %v1155
        %v1221 = vunpack.c.l.b16 %v1156
        %v1222 = vunpack.c.l.b16 %v1157
        %v1223 = vunpack.c.l.b16 %v1158
        %v1224 = vunpack.c.l.b16 %v1159
        %v1225 = vunpack.c.l.b16 %v1160
        %v1226 = vunpack.c.l.b16 %v1161
        %v1227 = vunpack.c.l.b16 %v1162
        %v1228 = vunpack.c.l.b16 %v1163
        %v1229 = vunpack.c.l.b16 %v1164
        %v1230 = vunpack.c.l.b16 %v1165
        %v1231 = vunpack.c.l.b16 %v1166
        %v1232 = vunpack.c.l.b16 %v1167
        %v1233 = vunpack.c.l.b16 %v1168
        %v1234 = vunpack.c.l.b16 %v1169
        %v1235 = vpack.c.b16 %v1204, %v1203
        %v1236 = vpack.c.b16 %v1206, %v1205
        %v1237 = vpack.c.b16 %v1208, %v1207
        %v1238 = vpack.c.b16 %v1210, %v1209
        %v1239 = vpack.c.b16 %v1212, %v1211
        %v1240 = vpack.c.b16 %v1214, %v1213
        %v1241 = vpack.c.b16 %v1216, %v1215
        %v1242 = vpack.c.b16 %v1218, %v1217
        %v1243 = vpack.c.b16 %v1220, %v1219
        %v1244 = vpack.c.b16 %v1222, %v1221
        %v1245 = vpack.c.b16 %v1224, %v1223
        %v1246 = vpack.c.b16 %v1226, %v1225
        %v1247 = vpack.c.b16 %v1228, %v1227
        %v1248 = vpack.c.b16 %v1230, %v1229
        %v1249 = vpack.c.b16 %v1232, %v1231
        %v1250 = vpack.c.b16 %v1234, %v1233
        %1267 = vmatprep.subr.bf16.mxu0 0
        %1268 = vmatpush1.bf16.msra.mxu0 %v1235
        %1269 = vmatprep.subr.bf16.mxu0 0
        %1270 = vmatpush1.bf16.msra.mxu0 %v1236
        %1271 = vmatprep.subr.bf16.mxu0 0
        %1272 = vmatpush1.bf16.msra.mxu0 %v1237
        %1273 = vmatprep.subr.bf16.mxu0 0
        %1274 = vmatpush1.bf16.msra.mxu0 %v1238
        %1275 = vmatprep.subr.bf16.mxu0 0
        %1276 = vmatpush1.bf16.msra.mxu0 %v1239
        %1277 = vmatprep.subr.bf16.mxu0 0
        %1278 = vmatpush1.bf16.msra.mxu0 %v1240
        %1279 = vmatprep.subr.bf16.mxu0 0
        %1280 = vmatpush1.bf16.msra.mxu0 %v1241
        %1281 = vmatprep.subr.bf16.mxu0 0
        %1282 = vmatpush1.bf16.msra.mxu0 %v1242
        %1283 = vmatprep.subr.bf16.mxu0 0
        %1284 = vmatpush1.bf16.msra.mxu0 %v1243
        %1285 = vmatprep.subr.bf16.mxu0 0
        %1286 = vmatpush1.bf16.msra.mxu0 %v1244
        %1287 = vmatprep.subr.bf16.mxu0 0
        %1288 = vmatpush1.bf16.msra.mxu0 %v1245
        %1289 = vmatprep.subr.bf16.mxu0 0
        %1290 = vmatpush1.bf16.msra.mxu0 %v1246
        %1291 = vmatprep.subr.bf16.mxu0 0
        %1292 = vmatpush1.bf16.msra.mxu0 %v1247
        %1293 = vmatprep.subr.bf16.mxu0 0
        %1294 = vmatpush1.bf16.msra.mxu0 %v1248
        %1295 = vmatprep.subr.bf16.mxu0 0
        %1296 = vmatpush1.bf16.msra.mxu0 %v1249
        %1297 = vmatprep.subr.bf16.mxu0 0
        %1298 = vmatpush1.bf16.msra.mxu0 %v1250
        %1299 = vmatprep.mubr.bf16.mxu0 %v1137
        %1300 = vmatmul.mubr.bf16.gmra.mrb[0].mxu0 %v1136
        %v1301 = vpop.f32.mrb[0].mxu0
        %v1302 = vadd.f32 %v1170, %v1301
        %v1303 = vpop.f32.mrb[0].mxu0
        %v1304 = vpop.f32.mrb[0].mxu0
        %v1305 = vpop.f32.mrb[0].mxu0
        %1306 = vdwg.mxu0
        %v1307 = vmax.f32 %v1302, 0.0
        %1308 = vst [vmem:[%s375] sm:$0x1] %v1307
        %v1309 = vpack.c.bf16 %v1307, %v1307
        %v1310 = vld [vmem:[%s7] sm:$0xf]
        %v1311 = vld [vmem:[%s7 + $0x4] sm:$0xf]
        %v1312 = vld [vmem:[%s7 + $0x8] sm:$0xf]
        %v1313 = vld [vmem:[%s7 + $0xc] sm:$0xf]
        %v1314 = vld [vmem:[%s7 + $0x10] sm:$0xf]
        %v1315 = vld [vmem:[%s7 + $0x14] sm:$0xf]
        %v1316 = vld [vmem:[%s7 + $0x18] sm:$0xf]
        %v1317 = vld [vmem:[%s7 + $0x1c] sm:$0xf]
        %v1318 = vld [vmem:[%s7 + $0x20] sm:$0xf]
        %v1319 = vld [vmem:[%s7 + $0x24] sm:$0xf]
        %v1320 = vld [vmem:[%s7 + $0x28] sm:$0xf]
        %v1321 = vld [vmem:[%s7 + $0x2c] sm:$0xf]
        %v1322 = vld [vmem:[%s7 + $0x30] sm:$0xf]
        %v1323 = vld [vmem:[%s7 + $0x34] sm:$0xf]
        %v1324 = vld [vmem:[%s7 + $0x38] sm:$0xf]
        %v1325 = vld [vmem:[%s7 + $0x3c] sm:$0xf]
        %v1326 = vld [vmem:[#allocation2] sm:$0x1]
        %v1343 = vunpack.c.l.b16 %v1310
        %v1344 = vunpack.c.l.b16 %v1311
        %v1345 = vunpack.c.l.b16 %v1312
        %v1346 = vunpack.c.l.b16 %v1313
        %v1347 = vunpack.c.l.b16 %v1314
        %v1348 = vunpack.c.l.b16 %v1315
        %v1349 = vunpack.c.l.b16 %v1316
        %v1350 = vunpack.c.l.b16 %v1317
        %v1351 = vunpack.c.l.b16 %v1318
        %v1352 = vunpack.c.l.b16 %v1319
        %v1353 = vunpack.c.l.b16 %v1320
        %v1354 = vunpack.c.l.b16 %v1321
        %v1355 = vunpack.c.l.b16 %v1322
        %v1356 = vunpack.c.l.b16 %v1323
        %v1357 = vunpack.c.l.b16 %v1324
        %v1358 = vunpack.c.l.b16 %v1325
        %v1359 = vpack.c.b16 %v1344, %v1343
        %v1360 = vpack.c.b16 %v1346, %v1345
        %v1361 = vpack.c.b16 %v1348, %v1347
        %v1362 = vpack.c.b16 %v1350, %v1349
        %v1363 = vpack.c.b16 %v1352, %v1351
        %v1364 = vpack.c.b16 %v1354, %v1353
        %v1365 = vpack.c.b16 %v1356, %v1355
        %v1366 = vpack.c.b16 %v1358, %v1357
        %1375 = vmatprep.subr.bf16.mxu0 0
        %1376 = vmatpush1.bf16.msra.mxu0 %v1359
        %1377 = vmatprep.subr.bf16.mxu0 0
        %1378 = vmatpush1.bf16.msra.mxu0 %v1360
        %1379 = vmatprep.subr.bf16.mxu0 0
        %1380 = vmatpush1.bf16.msra.mxu0 %v1361
        %1381 = vmatprep.subr.bf16.mxu0 0
        %1382 = vmatpush1.bf16.msra.mxu0 %v1362
        %1383 = vmatprep.subr.bf16.mxu0 0
        %1384 = vmatpush1.bf16.msra.mxu0 %v1363
        %1385 = vmatprep.subr.bf16.mxu0 0
        %1386 = vmatpush1.bf16.msra.mxu0 %v1364
        %1387 = vmatprep.subr.bf16.mxu0 0
        %1388 = vmatpush1.bf16.msra.mxu0 %v1365
        %1389 = vmatprep.subr.bf16.mxu0 0
        %1390 = vmatpush1.bf16.msra.mxu0 %v1366
        %1391 = vmatprep.subr.bf16.mxu0 0
        %1392 = vmatpush1.bf16.msra.mxu0 0
        %1393 = vmatprep.subr.bf16.mxu0 0
        %1394 = vmatpush1.bf16.msra.mxu0 0
        %1395 = vmatprep.subr.bf16.mxu0 0
        %1396 = vmatpush1.bf16.msra.mxu0 0
        %1397 = vmatprep.subr.bf16.mxu0 0
        %1398 = vmatpush1.bf16.msra.mxu0 0
        %1399 = vmatprep.subr.bf16.mxu0 0
        %1400 = vmatpush1.bf16.msra.mxu0 0
        %1401 = vmatprep.subr.bf16.mxu0 0
        %1402 = vmatpush1.bf16.msra.mxu0 0
        %1403 = vmatprep.subr.bf16.mxu0 0
        %1404 = vmatpush1.bf16.msra.mxu0 0
        %1405 = vmatprep.subr.bf16.mxu0 0
        %1406 = vmatpush1.bf16.msra.mxu0 0
        %1407 = vmatprep.mubr.bf16.mxu0 0
        %1408 = vmatmul.mubr.bf16.gmra.mrb[0].mxu0 %v1309
        %v1409 = vpop.f32.mrb[0].mxu0
        %v1410 = vadd.f32 %v1326, %v1409
        %v1411 = vpop.f32.mrb[0].mxu0
        %v1412 = vpop.f32.mrb[0].mxu0
        %v1413 = vpop.f32.mrb[0].mxu0
        %1414 = vdwg.mxu0
        %1415 = vst [vmem:[%s368] sm:$0x1] %v1410
        %p1416 = scmp.lt.s32.totalorder %s26, 1
        %s1417 = scalar_select %p1416, %s26, 1
        %s1418 = scalar_lea.vmem %s9, %s1417
        %s1419 = sand.u32 %s254, 1
        %s1420 = scalar_lea.sflag [#allocation4], %s1419
        %s1421 = sand.u32 %s254, 1
        %s1422 = scalar_lea.vmem [#allocation5], %s1421
        // Predicated region
        $region61: #{e2e_forward.4} parent=55 // pred_check
          %p1423 = pneg %p238
        $region62: #{e2e_forward.4} parent=55 // pred_check_branch
          %1425 = sbr.rel (%p1423) target = $region64
        $region63: #{e2e_forward.4} parent=55 // pred_region
          _
        $region64: #{e2e_forward.4} parent=55 // pred_fallthru
          _
        // Predicated region
        $region65: #{e2e_forward.4} parent=55 // pred_check
          %p1426 = pneg %p264
        $region66: #{e2e_forward.4} parent=55 // pred_check_branch
          %1428 = sbr.rel (%p1426) target = $region68
        $region67: #{e2e_forward.4} parent=55 // pred_region
          %s1430 = ssub.s32 16, 16
          %1431 = vsyncadd %s1420, %s1430
          %s1432 = smul.addr %s26, 16
          %s1433 = scalar_lea.hbm %s10, %s1432
          %s1435 = sshll.u32 %s1422, 4
          %s1436 = int_to_ptr.vmem [resolvable:$true] %s1435
          %1438 = dma.vmem_to_hbm [thread:$0]  %s1436, 16, %s1433, %s1420
        $region68: #{e2e_forward.4} parent=55 // pred_fallthru
          _
      $region56: #{e2e_forward.4} parent=5 // pred_fallthru
        _
      %p1439 = scmp.le.s32.totalorder 2, %s21
      // Predicated region
      $region69: #{e2e_forward.4} parent=5 // pred_check
        %p1440 = pneg %p1439
      $region70: #{e2e_forward.4} parent=5 // pred_check_branch
        %1442 = sbr.rel (%p1440) target = $region72
      $region71: #{e2e_forward.4} parent=5 // pred_region
        %s1443 = ssub.s32 %s21, 2
        // Predicated region
        $region73: #{e2e_forward.4} parent=71 // pred_check
          %p1444 = pneg %p244
        $region74: #{e2e_forward.4} parent=71 // pred_check_branch
          %1446 = sbr.rel (%p1444) target = $region76
        $region75: #{e2e_forward.4} parent=71 // pred_region
          %p1447 = scmp.lt.s32.totalorder %s27, 1
          %s1448 = scalar_select %p1447, %s27, 1
          %s1449 = scalar_lea.vmem %s9, %s1448
        $region76: #{e2e_forward.4} parent=71 // pred_fallthru
          _
        // Predicated region
        $region77: #{e2e_forward.4} parent=71 // pred_check
          %p1450 = pneg %p270
        $region78: #{e2e_forward.4} parent=71 // pred_check_branch
          %1452 = sbr.rel (%p1450) target = $region80
        $region79: #{e2e_forward.4} parent=71 // pred_region
          %s1453 = sand.u32 %s255, 1
          %s1454 = scalar_lea.sflag [#allocation4], %s1453
          %s1455 = sand.u32 %s255, 1
          %s1456 = scalar_lea.vmem [#allocation5], %s1455
          %1457 = dma.done %s1454, 16
        $region80: #{e2e_forward.4} parent=71 // pred_fallthru
          _
      $region72: #{e2e_forward.4} parent=5 // pred_fallthru
        _
    $region6: #{e2e_forward.4} parent=1 // loop_footer
      %s25 = sadd.s32 1, %s21
    $region7: #{e2e_forward.4} parent=1 // loop_footer_branch
      %20 = sbr.rel target = $region3
    $region8: #{e2e_forward.4} parent=1 // loop_exit
      _
    %1458 = vsyncpa [#allocation3], 1
    %s1459 = scalar_lea.sflag [#allocation3], 1
    %1460 = vsyncpa %s1459, 1
    %1461 = vsyncpa [#allocation4], 1
    %s1462 = scalar_lea.sflag [#allocation4], 1
    %1463 = vsyncpa %s1462, 1

// kernel: e2e_forward.5
$region0: #{e2e_forward.5}
  #allocation0 [shape = 'u32[]', space=smem, size = 0x4, offset = 0x4, fixed_abs, tag = 'smem constant byte address 0x4 - core index']
  #allocation1 [shape = 'u32[144,128]{1,0:T(1,128)}', space=vmem, size = 0x12000, scoped, tag = 'internal scratch']
  %s0 = inlined_call_operand.vmem [shape: f32[2,4,32], index: 0, kind: input, shape index: {}]
  %s1 = inlined_call_operand.vmem [shape: f32[2,1,128], index: 1, kind: input, shape index: {}]
  %s2 = inlined_call_operand.vmem [shape: bf16[2,4,8], index: 2, kind: input, shape index: {}]
  %s3 = inlined_call_operand.vmem [shape: bf16[32,128], index: 3, kind: input, shape index: {}]
  %s4 = inlined_call_operand.vmem [shape: f32[1,128], index: 4, kind: input, shape index: {}]
  %s5 = inlined_call_operand.vmem [shape: bf16[128,512], index: 5, kind: input, shape index: {}]
  %s6 = inlined_call_operand.vmem [shape: f32[1,512], index: 6, kind: input, shape index: {}]
  %s7 = inlined_call_operand.vmem [shape: bf16[256,384], index: 7, kind: input, shape index: {}]
  %s8 = inlined_call_operand.vmem [shape: f32[1,384], index: 8, kind: input, shape index: {}]
  %s9 = inlined_call_operand.vmem [shape: bf16[128,128], index: 9, kind: input, shape index: {}]
  %s10 = inlined_call_operand.vmem [shape: bf16[160,128], index: 10, kind: input, shape index: {}]
  %s11 = inlined_call_operand.vmem [shape: f32[1,128], index: 11, kind: input, shape index: {}]
  %s12 = inlined_call_operand.vmem [shape: bf16[128,128], index: 12, kind: input, shape index: {}]
  %s13 = inlined_call_operand.vmem [shape: f32[1,128], index: 13, kind: input, shape index: {}]
  %s14 = inlined_call_operand.hbm [shape: f32[2,4,128], index: 14, kind: output, shape index: {}]
  %s15 = sld [smem:[#allocation0]]
  $region89: #{e2e_forward.5} parent=0
    _
  %s17 = ssub.s32 1, %s15
  %s18 = scalar_select 0, %s17, %s15
  $region1: #{e2e_forward.5} parent=0
    #allocation2 [shape = 'u8[4096]{0}', space=vmem, size = 0x1000, scoped, tag = 'output window, operand 0']
    #allocation3 [shape = 's32[2]{0}', space=sflag, size = 0x8, scoped, tag = 'scoped memory for e2e_forward.5']
    %19 = vsyncpa [#allocation3], 0
    %s20 = scalar_lea.sflag [#allocation3], 1
    %21 = vsyncpa %s20, 0
    loop: start=0, step=1, limit=4
    $region2: #{e2e_forward.5} parent=1 // loop_pre_header
      _
    $region3: #{e2e_forward.5} parent=1 // loop_header
      %s23 = sphi 0, %s27
      %p24 = scmp.ge.s32.totalorder %s23, 4
      %s33 = sphi 0, %s35
      %s36 = sphi 0, %s33
      %s37 = sphi 0, %s36
      %s53 = sphi 0, %s37
      %s59 = sphi 0, %s61
      %s62 = sphi 0, %s59
      %s63 = sphi 0, %s62
      %s79 = sphi 0, %s63
      %s85 = sphi 0, %s87
      %s88 = sphi 0, %s85
      %s89 = sphi 0, %s88
      %s105 = sphi 0, %s89
      %s109 = sphi 0, %s109
      %s111 = sphi 0, %s109
      %s112 = sphi 0, %s111
      %s126 = sphi 0, %s112
      %s130 = sphi 0, %s130
      %s132 = sphi 0, %s130
      %s133 = sphi 0, %s132
      %s147 = sphi 0, %s133
      %s151 = sphi 0, %s151
      %s153 = sphi 0, %s151
      %s154 = sphi 0, %s153
      %s168 = sphi 0, %s154
      %s172 = sphi 0, %s172
      %s174 = sphi 0, %s172
      %s175 = sphi 0, %s174
      %s189 = sphi 0, %s175
      %s193 = sphi 0, %s193
      %s195 = sphi 0, %s193
      %s196 = sphi 0, %s195
      %s210 = sphi 0, %s196
      %s214 = sphi 0, %s214
      %s216 = sphi 0, %s214
      %s217 = sphi 0, %s216
      %s231 = sphi 0, %s217
      %s235 = sphi 0, %s235
      %s237 = sphi 0, %s235
      %s238 = sphi 0, %s237
      %s252 = sphi 0, %s238
      %s256 = sphi 0, %s256
      %s258 = sphi 0, %s256
      %s259 = sphi 0, %s258
      %s273 = sphi 0, %s259
      %s277 = sphi 0, %s277
      %s279 = sphi 0, %s277
      %s280 = sphi 0, %s279
      %s294 = sphi 0, %s280
      %s298 = sphi 0, %s298
      %s300 = sphi 0, %s298
      %s301 = sphi 0, %s300
      %s315 = sphi 0, %s301
      %s319 = sphi 0, %s319
      %s321 = sphi 0, %s319
      %s322 = sphi 0, %s321
      %s336 = sphi 0, %s322
      %s342 = sphi 0, %s344
      %s345 = sphi 0, %s342
      %s346 = sphi 0, %s345
      %s362 = sphi 0, %s346
    $region4: #{e2e_forward.5} parent=1 // loop_header_branch
      %26 = sbr.rel (%p24) target = $region8
    $region5: #{e2e_forward.5} parent=1 // loop_body
      %s28 = ssub.s32 %s23, 1
      %s29 = ssub.s32 %s23, 2
      %s30 = sadd.s32 %s23, 1
      %s31 = ssub.s32 %s23, %s30
      %p32 = scmp.eq.s32.totalorder %s31, 0
      %s34 = sadd.s32 %s33, 1
      %s35 = scalar_select %p32, %s33, %s34
      %p38 = pneg %p32
      %p39 = scmp.eq.s32.totalorder %s23, 1
      %p40 = por %p38, %p39
      %p41 = scmp.ne.s32.totalorder %s33, %s36
      %p42 = scmp.eq.s32.totalorder %s23, 0
      %p43 = por %p41, %p42
      %p44 = scmp.ne.s32.totalorder %s33, %s36
      %p45 = scmp.eq.s32.totalorder %s28, 1
      %p46 = por %p44, %p45
      %p47 = scmp.ne.s32.totalorder %s36, %s37
      %p48 = scmp.eq.s32.totalorder %s28, 0
      %p49 = por %p47, %p48
      %p50 = scmp.ne.s32.totalorder %s36, %s37
      %p51 = scmp.eq.s32.totalorder %s29, 1
      %p52 = por %p50, %p51
      %p54 = scmp.ne.s32.totalorder %s37, %s53
      %p55 = scmp.eq.s32.totalorder %s29, 0
      %p56 = por %p54, %p55
      %s57 = ssub.s32 %s23, %s30
      %p58 = scmp.eq.s32.totalorder %s57, 0
      %s60 = sadd.s32 %s59, 1
      %s61 = scalar_select %p58, %s59, %s60
      %p64 = pneg %p58
      %p65 = scmp.eq.s32.totalorder %s23, 1
      %p66 = por %p64, %p65
      %p67 = scmp.ne.s32.totalorder %s59, %s62
      %p68 = scmp.eq.s32.totalorder %s23, 0
      %p69 = por %p67, %p68
      %p70 = scmp.ne.s32.totalorder %s59, %s62
      %p71 = scmp.eq.s32.totalorder %s28, 1
      %p72 = por %p70, %p71
      %p73 = scmp.ne.s32.totalorder %s62, %s63
      %p74 = scmp.eq.s32.totalorder %s28, 0
      %p75 = por %p73, %p74
      %p76 = scmp.ne.s32.totalorder %s62, %s63
      %p77 = scmp.eq.s32.totalorder %s29, 1
      %p78 = por %p76, %p77
      %p80 = scmp.ne.s32.totalorder %s63, %s79
      %p81 = scmp.eq.s32.totalorder %s29, 0
      %p82 = por %p80, %p81
      %s83 = ssub.s32 %s23, %s30
      %p84 = scmp.eq.s32.totalorder %s83, 0
      %s86 = sadd.s32 %s85, 1
      %s87 = scalar_select %p84, %s85, %s86
      %p90 = pneg %p84
      %p91 = scmp.eq.s32.totalorder %s23, 1
      %p92 = por %p90, %p91
      %p93 = scmp.ne.s32.totalorder %s85, %s88
      %p94 = scmp.eq.s32.totalorder %s23, 0
      %p95 = por %p93, %p94
      %p96 = scmp.ne.s32.totalorder %s85, %s88
      %p97 = scmp.eq.s32.totalorder %s28, 1
      %p98 = por %p96, %p97
      %p99 = scmp.ne.s32.totalorder %s88, %s89
      %p100 = scmp.eq.s32.totalorder %s28, 0
      %p101 = por %p99, %p100
      %p102 = scmp.ne.s32.totalorder %s88, %s89
      %p103 = scmp.eq.s32.totalorder %s29, 1
      %p104 = por %p102, %p103
      %p106 = scmp.ne.s32.totalorder %s89, %s105
      %p107 = scmp.eq.s32.totalorder %s29, 0
      %p108 = por %p106, %p107
      %s110 = sadd.s32 %s109, 1
      %p113 = scmp.eq.s32.totalorder %s23, 1
      %p114 = scmp.ne.s32.totalorder %s109, %s111
      %p115 = scmp.eq.s32.totalorder %s23, 0
      %p116 = por %p114, %p115
      %p117 = scmp.ne.s32.totalorder %s109, %s111
      %p118 = scmp.eq.s32.totalorder %s28, 1
      %p119 = por %p117, %p118
      %p120 = scmp.ne.s32.totalorder %s111, %s112
      %p121 = scmp.eq.s32.totalorder %s28, 0
      %p122 = por %p120, %p121
      %p123 = scmp.ne.s32.totalorder %s111, %s112
      %p124 = scmp.eq.s32.totalorder %s29, 1
      %p125 = por %p123, %p124
      %p127 = scmp.ne.s32.totalorder %s112, %s126
      %p128 = scmp.eq.s32.totalorder %s29, 0
      %p129 = por %p127, %p128
      %s131 = sadd.s32 %s130, 1
      %p134 = scmp.eq.s32.totalorder %s23, 1
      %p135 = scmp.ne.s32.totalorder %s130, %s132
      %p136 = scmp.eq.s32.totalorder %s23, 0
      %p137 = por %p135, %p136
      %p138 = scmp.ne.s32.totalorder %s130, %s132
      %p139 = scmp.eq.s32.totalorder %s28, 1
      %p140 = por %p138, %p139
      %p141 = scmp.ne.s32.totalorder %s132, %s133
      %p142 = scmp.eq.s32.totalorder %s28, 0
      %p143 = por %p141, %p142
      %p144 = scmp.ne.s32.totalorder %s132, %s133
      %p145 = scmp.eq.s32.totalorder %s29, 1
      %p146 = por %p144, %p145
      %p148 = scmp.ne.s32.totalorder %s133, %s147
      %p149 = scmp.eq.s32.totalorder %s29, 0
      %p150 = por %p148, %p149
      %s152 = sadd.s32 %s151, 1
      %p155 = scmp.eq.s32.totalorder %s23, 1
      %p156 = scmp.ne.s32.totalorder %s151, %s153
      %p157 = scmp.eq.s32.totalorder %s23, 0
      %p158 = por %p156, %p157
      %p159 = scmp.ne.s32.totalorder %s151, %s153
      %p160 = scmp.eq.s32.totalorder %s28, 1
      %p161 = por %p159, %p160
      %p162 = scmp.ne.s32.totalorder %s153, %s154
      %p163 = scmp.eq.s32.totalorder %s28, 0
      %p164 = por %p162, %p163
      %p165 = scmp.ne.s32.totalorder %s153, %s154
      %p166 = scmp.eq.s32.totalorder %s29, 1
      %p167 = por %p165, %p166
      %p169 = scmp.ne.s32.totalorder %s154, %s168
      %p170 = scmp.eq.s32.totalorder %s29, 0
      %p171 = por %p169, %p170
      %s173 = sadd.s32 %s172, 1
      %p176 = scmp.eq.s32.totalorder %s23, 1
      %p177 = scmp.ne.s32.totalorder %s172, %s174
      %p178 = scmp.eq.s32.totalorder %s23, 0
      %p179 = por %p177, %p178
      %p180 = scmp.ne.s32.totalorder %s172, %s174
      %p181 = scmp.eq.s32.totalorder %s28, 1
      %p182 = por %p180, %p181
      %p183 = scmp.ne.s32.totalorder %s174, %s175
      %p184 = scmp.eq.s32.totalorder %s28, 0
      %p185 = por %p183, %p184
      %p186 = scmp.ne.s32.totalorder %s174, %s175
      %p187 = scmp.eq.s32.totalorder %s29, 1
      %p188 = por %p186, %p187
      %p190 = scmp.ne.s32.totalorder %s175, %s189
      %p191 = scmp.eq.s32.totalorder %s29, 0
      %p192 = por %p190, %p191
      %s194 = sadd.s32 %s193, 1
      %p197 = scmp.eq.s32.totalorder %s23, 1
      %p198 = scmp.ne.s32.totalorder %s193, %s195
      %p199 = scmp.eq.s32.totalorder %s23, 0
      %p200 = por %p198, %p199
      %p201 = scmp.ne.s32.totalorder %s193, %s195
      %p202 = scmp.eq.s32.totalorder %s28, 1
      %p203 = por %p201, %p202
      %p204 = scmp.ne.s32.totalorder %s195, %s196
      %p205 = scmp.eq.s32.totalorder %s28, 0
      %p206 = por %p204, %p205
      %p207 = scmp.ne.s32.totalorder %s195, %s196
      %p208 = scmp.eq.s32.totalorder %s29, 1
      %p209 = por %p207, %p208
      %p211 = scmp.ne.s32.totalorder %s196, %s210
      %p212 = scmp.eq.s32.totalorder %s29, 0
      %p213 = por %p211, %p212
      %s215 = sadd.s32 %s214, 1
      %p218 = scmp.eq.s32.totalorder %s23, 1
      %p219 = scmp.ne.s32.totalorder %s214, %s216
      %p220 = scmp.eq.s32.totalorder %s23, 0
      %p221 = por %p219, %p220
      %p222 = scmp.ne.s32.totalorder %s214, %s216
      %p223 = scmp.eq.s32.totalorder %s28, 1
      %p224 = por %p222, %p223
      %p225 = scmp.ne.s32.totalorder %s216, %s217
      %p226 = scmp.eq.s32.totalorder %s28, 0
      %p227 = por %p225, %p226
      %p228 = scmp.ne.s32.totalorder %s216, %s217
      %p229 = scmp.eq.s32.totalorder %s29, 1
      %p230 = por %p228, %p229
      %p232 = scmp.ne.s32.totalorder %s217, %s231
      %p233 = scmp.eq.s32.totalorder %s29, 0
      %p234 = por %p232, %p233
      %s236 = sadd.s32 %s235, 1
      %p239 = scmp.eq.s32.totalorder %s23, 1
      %p240 = scmp.ne.s32.totalorder %s235, %s237
      %p241 = scmp.eq.s32.totalorder %s23, 0
      %p242 = por %p240, %p241
      %p243 = scmp.ne.s32.totalorder %s235, %s237
      %p244 = scmp.eq.s32.totalorder %s28, 1
      %p245 = por %p243, %p244
      %p246 = scmp.ne.s32.totalorder %s237, %s238
      %p247 = scmp.eq.s32.totalorder %s28, 0
      %p248 = por %p246, %p247
      %p249 = scmp.ne.s32.totalorder %s237, %s238
      %p250 = scmp.eq.s32.totalorder %s29, 1
      %p251 = por %p249, %p250
      %p253 = scmp.ne.s32.totalorder %s238, %s252
      %p254 = scmp.eq.s32.totalorder %s29, 0
      %p255 = por %p253, %p254
      %s257 = sadd.s32 %s256, 1
      %p260 = scmp.eq.s32.totalorder %s23, 1
      %p261 = scmp.ne.s32.totalorder %s256, %s258
      %p262 = scmp.eq.s32.totalorder %s23, 0
      %p263 = por %p261, %p262
      %p264 = scmp.ne.s32.totalorder %s256, %s258
      %p265 = scmp.eq.s32.totalorder %s28, 1
      %p266 = por %p264, %p265
      %p267 = scmp.ne.s32.totalorder %s258, %s259
      %p268 = scmp.eq.s32.totalorder %s28, 0
      %p269 = por %p267, %p268
      %p270 = scmp.ne.s32.totalorder %s258, %s259
      %p271 = scmp.eq.s32.totalorder %s29, 1
      %p272 = por %p270, %p271
      %p274 = scmp.ne.s32.totalorder %s259, %s273
      %p275 = scmp.eq.s32.totalorder %s29, 0
      %p276 = por %p274, %p275
      %s278 = sadd.s32 %s277, 1
      %p281 = scmp.eq.s32.totalorder %s23, 1
      %p282 = scmp.ne.s32.totalorder %s277, %s279
      %p283 = scmp.eq.s32.totalorder %s23, 0
      %p284 = por %p282, %p283
      %p285 = scmp.ne.s32.totalorder %s277, %s279
      %p286 = scmp.eq.s32.totalorder %s28, 1
      %p287 = por %p285, %p286
      %p288 = scmp.ne.s32.totalorder %s279, %s280
      %p289 = scmp.eq.s32.totalorder %s28, 0
      %p290 = por %p288, %p289
      %p291 = scmp.ne.s32.totalorder %s279, %s280
      %p292 = scmp.eq.s32.totalorder %s29, 1
      %p293 = por %p291, %p292
      %p295 = scmp.ne.s32.totalorder %s280, %s294
      %p296 = scmp.eq.s32.totalorder %s29, 0
      %p297 = por %p295, %p296
      %s299 = sadd.s32 %s298, 1
      %p302 = scmp.eq.s32.totalorder %s23, 1
      %p303 = scmp.ne.s32.totalorder %s298, %s300
      %p304 = scmp.eq.s32.totalorder %s23, 0
      %p305 = por %p303, %p304
      %p306 = scmp.ne.s32.totalorder %s298, %s300
      %p307 = scmp.eq.s32.totalorder %s28, 1
      %p308 = por %p306, %p307
      %p309 = scmp.ne.s32.totalorder %s300, %s301
      %p310 = scmp.eq.s32.totalorder %s28, 0
      %p311 = por %p309, %p310
      %p312 = scmp.ne.s32.totalorder %s300, %s301
      %p313 = scmp.eq.s32.totalorder %s29, 1
      %p314 = por %p312, %p313
      %p316 = scmp.ne.s32.totalorder %s301, %s315
      %p317 = scmp.eq.s32.totalorder %s29, 0
      %p318 = por %p316, %p317
      %s320 = sadd.s32 %s319, 1
      %p323 = scmp.eq.s32.totalorder %s23, 1
      %p324 = scmp.ne.s32.totalorder %s319, %s321
      %p325 = scmp.eq.s32.totalorder %s23, 0
      %p326 = por %p324, %p325
      %p327 = scmp.ne.s32.totalorder %s319, %s321
      %p328 = scmp.eq.s32.totalorder %s28, 1
      %p329 = por %p327, %p328
      %p330 = scmp.ne.s32.totalorder %s321, %s322
      %p331 = scmp.eq.s32.totalorder %s28, 0
      %p332 = por %p330, %p331
      %p333 = scmp.ne.s32.totalorder %s321, %s322
      %p334 = scmp.eq.s32.totalorder %s29, 1
      %p335 = por %p333, %p334
      %p337 = scmp.ne.s32.totalorder %s322, %s336
      %p338 = scmp.eq.s32.totalorder %s29, 0
      %p339 = por %p337, %p338
      %s340 = ssub.s32 %s23, %s30
      %p341 = scmp.eq.s32.totalorder %s340, 0
      %s343 = sadd.s32 %s342, 1
      %s344 = scalar_select %p341, %s342, %s343
      %p347 = pneg %p341
      %p348 = scmp.eq.s32.totalorder %s23, 1
      %p349 = por %p347, %p348
      %p350 = scmp.ne.s32.totalorder %s342, %s345
      %p351 = scmp.eq.s32.totalorder %s23, 0
      %p352 = por %p350, %p351
      %p353 = scmp.ne.s32.totalorder %s342, %s345
      %p354 = scmp.eq.s32.totalorder %s28, 1
      %p355 = por %p353, %p354
      %p356 = scmp.ne.s32.totalorder %s345, %s346
      %p357 = scmp.eq.s32.totalorder %s28, 0
      %p358 = por %p356, %p357
      %p359 = scmp.ne.s32.totalorder %s345, %s346
      %p360 = scmp.eq.s32.totalorder %s29, 1
      %p361 = por %p359, %p360
      %p363 = scmp.ne.s32.totalorder %s346, %s362
      %p364 = scmp.eq.s32.totalorder %s29, 0
      %p365 = por %p363, %p364
      %p366 = scmp.le.s32.totalorder 1, %s23
      %p367 = scmp.lt.s32.totalorder %s23, 3
      %p368 = pnand %p366, %p367
      %p369 = pneg %p368
      // Predicated region
      $region9: #{e2e_forward.5} parent=5 // pred_check
        _
      $region10: #{e2e_forward.5} parent=5 // pred_check_branch
        %371 = sbr.rel (%p368) target = $region12
      $region11: #{e2e_forward.5} parent=5 // pred_region
        %s372 = ssub.s32 %s23, 1
        // Predicated region
        $region13: #{e2e_forward.5} parent=11 // pred_check
          %p373 = pneg %p122
        $region14: #{e2e_forward.5} parent=11 // pred_check_branch
          %375 = sbr.rel (%p373) target = $region16
        $region15: #{e2e_forward.5} parent=11 // pred_region
          _
        $region16: #{e2e_forward.5} parent=11 // pred_fallthru
          _
        // Predicated region
        $region17: #{e2e_forward.5} parent=11 // pred_check
          %p376 = pneg %p143
        $region18: #{e2e_forward.5} parent=11 // pred_check_branch
          %378 = sbr.rel (%p376) target = $region20
        $region19: #{e2e_forward.5} parent=11 // pred_region
          _
        $region20: #{e2e_forward.5} parent=11 // pred_fallthru
          _
        // Predicated region
        $region21: #{e2e_forward.5} parent=11 // pred_check
          %p379 = pneg %p164
        $region22: #{e2e_forward.5} parent=11 // pred_check_branch
          %381 = sbr.rel (%p379) target = $region24
        $region23: #{e2e_forward.5} parent=11 // pred_region
          _
        $region24: #{e2e_forward.5} parent=11 // pred_fallthru
          _
        // Predicated region
        $region25: #{e2e_forward.5} parent=11 // pred_check
          %p382 = pneg %p185
        $region26: #{e2e_forward.5} parent=11 // pred_check_branch
          %384 = sbr.rel (%p382) target = $region28
        $region27: #{e2e_forward.5} parent=11 // pred_region
          _
        $region28: #{e2e_forward.5} parent=11 // pred_fallthru
          _
        // Predicated region
        $region29: #{e2e_forward.5} parent=11 // pred_check
          %p385 = pneg %p206
        $region30: #{e2e_forward.5} parent=11 // pred_check_branch
          %387 = sbr.rel (%p385) target = $region32
        $region31: #{e2e_forward.5} parent=11 // pred_region
          _
        $region32: #{e2e_forward.5} parent=11 // pred_fallthru
          _
        // Predicated region
        $region33: #{e2e_forward.5} parent=11 // pred_check
          %p388 = pneg %p227
        $region34: #{e2e_forward.5} parent=11 // pred_check_branch
          %390 = sbr.rel (%p388) target = $region36
        $region35: #{e2e_forward.5} parent=11 // pred_region
          _
        $region36: #{e2e_forward.5} parent=11 // pred_fallthru
          _
        // Predicated region
        $region37: #{e2e_forward.5} parent=11 // pred_check
          %p391 = pneg %p248
        $region38: #{e2e_forward.5} parent=11 // pred_check_branch
          %393 = sbr.rel (%p391) target = $region40
        $region39: #{e2e_forward.5} parent=11 // pred_region
          _
        $region40: #{e2e_forward.5} parent=11 // pred_fallthru
          _
        // Predicated region
        $region41: #{e2e_forward.5} parent=11 // pred_check
          %p394 = pneg %p269
        $region42: #{e2e_forward.5} parent=11 // pred_check_branch
          %396 = sbr.rel (%p394) target = $region44
        $region43: #{e2e_forward.5} parent=11 // pred_region
          _
        $region44: #{e2e_forward.5} parent=11 // pred_fallthru
          _
        // Predicated region
        $region45: #{e2e_forward.5} parent=11 // pred_check
          %p397 = pneg %p290
        $region46: #{e2e_forward.5} parent=11 // pred_check_branch
          %399 = sbr.rel (%p397) target = $region48
        $region47: #{e2e_forward.5} parent=11 // pred_region
          _
        $region48: #{e2e_forward.5} parent=11 // pred_fallthru
          _
        // Predicated region
        $region49: #{e2e_forward.5} parent=11 // pred_check
          %p400 = pneg %p311
        $region50: #{e2e_forward.5} parent=11 // pred_check_branch
          %402 = sbr.rel (%p400) target = $region52
        $region51: #{e2e_forward.5} parent=11 // pred_region
          _
        $region52: #{e2e_forward.5} parent=11 // pred_fallthru
          _
        // Predicated region
        $region53: #{e2e_forward.5} parent=11 // pred_check
          %p403 = pneg %p332
        $region54: #{e2e_forward.5} parent=11 // pred_check_branch
          %405 = sbr.rel (%p403) target = $region56
        $region55: #{e2e_forward.5} parent=11 // pred_region
          _
        $region56: #{e2e_forward.5} parent=11 // pred_fallthru
          _
      $region12: #{e2e_forward.5} parent=5 // pred_fallthru
        _
      %p406 = scmp.lt.s32.totalorder %s23, 2
      // Predicated region
      $region57: #{e2e_forward.5} parent=5 // pred_check
        %p407 = pneg %p406
      $region58: #{e2e_forward.5} parent=5 // pred_check_branch
        %409 = sbr.rel (%p407) target = $region60
      $region59: #{e2e_forward.5} parent=5 // pred_region
        // Predicated region
        $region61: #{e2e_forward.5} parent=59 // pred_check
          %p410 = pneg %p43
        $region62: #{e2e_forward.5} parent=59 // pred_check_branch
          %412 = sbr.rel (%p410) target = $region64
        $region63: #{e2e_forward.5} parent=59 // pred_region
          %p413 = scmp.lt.s32.totalorder %s23, 1
          %s414 = scalar_select %p413, %s23, 1
          %s415 = smul.addr %s414, 4
          %s416 = scalar_lea.vmem %s0, %s415
        $region64: #{e2e_forward.5} parent=59 // pred_fallthru
          _
        // Predicated region
        $region65: #{e2e_forward.5} parent=59 // pred_check
          %p417 = pneg %p69
        $region66: #{e2e_forward.5} parent=59 // pred_check_branch
          %419 = sbr.rel (%p417) target = $region68
        $region67: #{e2e_forward.5} parent=59 // pred_region
          %p420 = scmp.lt.s32.totalorder %s23, 1
          %s421 = scalar_select %p420, %s23, 1
          %s422 = scalar_lea.vmem %s1, %s421
        $region68: #{e2e_forward.5} parent=59 // pred_fallthru
          _
        // Predicated region
        $region69: #{e2e_forward.5} parent=59 // pred_check
          %p423 = pneg %p95
        $region70: #{e2e_forward.5} parent=59 // pred_check_branch
          %425 = sbr.rel (%p423) target = $region72
        $region71: #{e2e_forward.5} parent=59 // pred_region
          %p426 = scmp.lt.s32.totalorder %s23, 1
          %s427 = scalar_select %p426, %s23, 1
          %s428 = smul.addr %s427, 2
          %s429 = scalar_lea.vmem %s2, %s428
        $region72: #{e2e_forward.5} parent=59 // pred_fallthru
          _
      $region60: #{e2e_forward.5} parent=5 // pred_fallthru
        _
      %p430 = scmp.le.s32.totalorder 1, %s23
      %p431 = scmp.lt.s32.totalorder %s23, 3
      %p432 = pnand %p430, %p431
      %p433 = pneg %p432
      // Predicated region
      $region73: #{e2e_forward.5} parent=5 // pred_check
        _
      $region74: #{e2e_forward.5} parent=5 // pred_check_branch
        %435 = sbr.rel (%p432) target = $region76
      $region75: #{e2e_forward.5} parent=5 // pred_region
        %s436 = ssub.s32 %s23, 1
        %p437 = scmp.lt.s32.totalorder %s28, 1
        %s438 = scalar_select %p437, %s28, 1
        %s439 = smul.addr %s438, 4
        %s440 = scalar_lea.vmem %s0, %s439
        %p441 = pneg %p49
        %p442 = pneg %p46
        %p443 = scmp.lt.s32.totalorder %s28, 1
        %s444 = scalar_select %p443, %s28, 1
        %s445 = scalar_lea.vmem %s1, %s444
        %p446 = pneg %p75
        %p447 = pneg %p72
        %p448 = scmp.lt.s32.totalorder %s28, 1
        %s449 = scalar_select %p448, %s28, 1
        %s450 = smul.addr %s449, 2
        %s451 = scalar_lea.vmem %s2, %s450
        %p452 = pneg %p101
        %p453 = pneg %p98
        %p454 = pneg %p122
        %p455 = pneg %p119
        %p456 = pneg %p143
        %p457 = pneg %p140
        %p458 = pneg %p164
        %p459 = pneg %p161
        %p460 = pneg %p185
        %p461 = pneg %p182
        %p462 = pneg %p206
        %p463 = pneg %p203
        %p464 = pneg %p227
        %p465 = pneg %p224
        %p466 = pneg %p248
        %p467 = pneg %p245
        %p468 = pneg %p269
        %p469 = pneg %p266
        %p470 = pneg %p290
        %p471 = pneg %p287
        %p472 = pneg %p311
        %p473 = pneg %p308
        %p474 = pneg %p332
        %p475 = pneg %p329
        %p476 = pneg %p358
        %p477 = pneg %p355
        %s478 = sand.u32 %s345, 1
        %s479 = scalar_lea.sflag [#allocation3], %s478
        %s480 = sand.u32 %s345, 1
        %s481 = smul.addr %s480, 4
        %s482 = scalar_lea.vmem [#allocation2], %s481
        %p483 = scmp.lt.s32.totalorder %s28, 1
        %s484 = scalar_select %p483, %s28, 1
        %s485 = smul.addr %s484, 4
        %s486 = scalar_lea.vmem %s0, %s485
        %p487 = scmp.lt.s32.totalorder %s28, 1
        %s488 = scalar_select %p487, %s28, 1
        %s489 = scalar_lea.vmem %s1, %s488
        %p490 = scmp.lt.s32.totalorder %s28, 1
        %s491 = scalar_select %p490, %s28, 1
        %s492 = smul.addr %s491, 2
        %s493 = scalar_lea.vmem %s2, %s492
        %v495 = vld [vmem:[%s486] sm:$0xf]
        %v496 = vpack.c.bf16 %v495, %v495
        %v497 = vld [vmem:[%s493] sm:$0x3]
        %v498 = vld [vmem:[%s489] sm:$0x1]
        %v499 = vld [vmem:[%s5] sm:$0xff]
        %v500 = vld [vmem:[%s5 + $0x8] sm:$0xff]
        %v501 = vld [vmem:[%s5 + $0x10] sm:$0xff]
        %v502 = vld [vmem:[%s5 + $0x18] sm:$0xff]
        %v503 = vld [vmem:[%s5 + $0x20] sm:$0xff]
        %v504 = vld [vmem:[%s5 + $0x28] sm:$0xff]
        %v505 = vld [vmem:[%s5 + $0x30] sm:$0xff]
        %v506 = vld [vmem:[%s5 + $0x38] sm:$0xff]
        %v507 = vld [vmem:[%s5 + $0x40] sm:$0xff]
        %v508 = vld [vmem:[%s5 + $0x48] sm:$0xff]
        %v509 = vld [vmem:[%s5 + $0x50] sm:$0xff]
        %v510 = vld [vmem:[%s5 + $0x58] sm:$0xff]
        %v511 = vld [vmem:[%s5 + $0x60] sm:$0xff]
        %v512 = vld [vmem:[%s5 + $0x68] sm:$0xff]
        %v513 = vld [vmem:[%s5 + $0x70] sm:$0xff]
        %v514 = vld [vmem:[%s5 + $0x78] sm:$0xff]
        %v515 = vld [vmem:[%s5 + $0x80] sm:$0xff]
        %v516 = vld [vmem:[%s5 + $0x88] sm:$0xff]
        %v517 = vld [vmem:[%s5 + $0x90] sm:$0xff]
        %v518 = vld [vmem:[%s5 + $0x98] sm:$0xff]
        %v519 = vld [vmem:[%s5 + $0xa0] sm:$0xff]
        %v520 = vld [vmem:[%s5 + $0xa8] sm:$0xff]
        %v521 = vld [vmem:[%s5 + $0xb0] sm:$0xff]
        %v522 = vld [vmem:[%s5 + $0xb8] sm:$0xff]
        %v523 = vld [vmem:[%s5 + $0xc0] sm:$0xff]
        %v524 = vld [vmem:[%s5 + $0xc8] sm:$0xff]
        %v525 = vld [vmem:[%s5 + $0xd0] sm:$0xff]
        %v526 = vld [vmem:[%s5 + $0xd8] sm:$0xff]
        %v527 = vld [vmem:[%s5 + $0xe0] sm:$0xff]
        %v528 = vld [vmem:[%s5 + $0xe8] sm:$0xff]
        %v529 = vld [vmem:[%s5 + $0xf0] sm:$0xff]
        %v530 = vld [vmem:[%s5 + $0xf8] sm:$0xff]
        %v531 = vld [vmem:[%s6] sm:$0xf]
        %v532 = vld [vmem:[%s7] sm:$0xff]
        %v533 = vld [vmem:[%s7 + $0x8] sm:$0xf]
        %v534 = vld [vmem:[%s7 + $0xc] sm:$0xff]
        %v535 = vld [vmem:[%s7 + $0x14] sm:$0xf]
        %v536 = vld [vmem:[%s7 + $0x18] sm:$0xff]
        %v537 = vld [vmem:[%s7 + $0x20] sm:$0xf]
        %v538 = vld [vmem:[%s7 + $0x24] sm:$0xff]
        %v539 = vld [vmem:[%s7 + $0x2c] sm:$0xf]
        %v540 = vld [vmem:[%s7 + $0x30] sm:$0xff]
        %v541 = vld [vmem:[%s7 + $0x38] sm:$0xf]
        %v542 = vld [vmem:[%s7 + $0x3c] sm:$0xff]
        %v543 = vld [vmem:[%s7 + $0x44] sm:$0xf]
        %v544 = vld [vmem:[%s7 + $0x48] sm:$0xff]
        %v545 = vld [vmem:[%s7 + $0x50] sm:$0xf]
        %v546 = vld [vmem:[%s7 + $0x54] sm:$0xff]
        %v547 = vld [vmem:[%s7 + $0x5c] sm:$0xf]
        %v548 = vld [vmem:[%s7 + $0x60] sm:$0xff]
        %v549 = vld [vmem:[%s7 + $0x68] sm:$0xf]
        %v550 = vld [vmem:[%s7 + $0x6c] sm:$0xff]
        %v551 = vld [vmem:[%s7 + $0x74] sm:$0xf]
        %v552 = vld [vmem:[%s7 + $0x78] sm:$0xff]
        %v553 = vld [vmem:[%s7 + $0x80] sm:$0xf]
        %v554 = vld [vmem:[%s7 + $0x84] sm:$0xff]
        %v555 = vld [vmem:[%s7 + $0x8c] sm:$0xf]
        %v556 = vld [vmem:[%s7 + $0x90] sm:$0xff]
        %v557 = vld [vmem:[%s7 + $0x98] sm:$0xf]
        %v558 = vld [vmem:[%s7 + $0x9c] sm:$0xff]
        %v559 = vld [vmem:[%s7 + $0xa4] sm:$0xf]
        %v560 = vld [vmem:[%s7 + $0xa8] sm:$0xff]
        %v561 = vld [vmem:[%s7 + $0xb0] sm:$0xf]
        %v562 = vld [vmem:[%s7 + $0xb4] sm:$0xff]
        %v563 = vld [vmem:[%s7 + $0xbc] sm:$0xf]
        %v564 = vld [vmem:[%s7 + $0xc0] sm:$0xff]
        %v565 = vld [vmem:[%s7 + $0xc8] sm:$0xf]
        %v566 = vld [vmem:[%s7 + $0xcc] sm:$0xff]
        %v567 = vld [vmem:[%s7 + $0xd4] sm:$0xf]
        %v568 = vld [vmem:[%s7 + $0xd8] sm:$0xff]
        %v569 = vld [vmem:[%s7 + $0xe0] sm:$0xf]
        %v570 = vld [vmem:[%s7 + $0xe4] sm:$0xff]
        %v571 = vld [vmem:[%s7 + $0xec] sm:$0xf]
        %v572 = vld [vmem:[%s7 + $0xf0] sm:$0xff]
        %v573 = vld [vmem:[%s7 + $0xf8] sm:$0xf]
        %v574 = vld [vmem:[%s7 + $0xfc] sm:$0xff]
        %v575 = vld [vmem:[%s7 + $0x104] sm:$0xf]
        %v576 = vld [vmem:[%s7 + $0x108] sm:$0xff]
        %v577 = vld [vmem:[%s7 + $0x110] sm:$0xf]
        %v578 = vld [vmem:[%s7 + $0x114] sm:$0xff]
        %v579 = vld [vmem:[%s7 + $0x11c] sm:$0xf]
        %v580 = vld [vmem:[%s7 + $0x120] sm:$0xff]
        %v581 = vld [vmem:[%s7 + $0x128] sm:$0xf]
        %v582 = vld [vmem:[%s7 + $0x12c] sm:$0xff]
        %v583 = vld [vmem:[%s7 + $0x134] sm:$0xf]
        %v584 = vld [vmem:[%s7 + $0x138] sm:$0xff]
        %v585 = vld [vmem:[%s7 + $0x140] sm:$0xf]
        %v586 = vld [vmem:[%s7 + $0x144] sm:$0xff]
        %v587 = vld [vmem:[%s7 + $0x14c] sm:$0xf]
        %v588 = vld [vmem:[%s7 + $0x150] sm:$0xff]
        %v589 = vld [vmem:[%s7 + $0x158] sm:$0xf]
        %v590 = vld [vmem:[%s7 + $0x15c] sm:$0xff]
        %v591 = vld [vmem:[%s7 + $0x164] sm:$0xf]
        %v592 = vld [vmem:[%s7 + $0x168] sm:$0xff]
        %v593 = vld [vmem:[%s7 + $0x170] sm:$0xf]
        %v594 = vld [vmem:[%s7 + $0x174] sm:$0xff]
        %v595 = vld [vmem:[%s7 + $0x17c] sm:$0xf]
        %v596 = vld [vmem:[%s8] sm:$0x7]
        %v597 = vld [vmem:[%s9] sm:$0xf]
        %v598 = vld [vmem:[%s9 + $0x4] sm:$0xf]
        %v599 = vld [vmem:[%s9 + $0x8] sm:$0xf]
        %v600 = vld [vmem:[%s9 + $0xc] sm:$0xf]
        %v601 = vld [vmem:[%s9 + $0x10] sm:$0xf]
        %v602 = vld [vmem:[%s9 + $0x14] sm:$0xf]
        %v603 = vld [vmem:[%s9 + $0x18] sm:$0xf]
        %v604 = vld [vmem:[%s9 + $0x1c] sm:$0xf]
        %v605 = vld [vmem:[%s9 + $0x20] sm:$0xf]
        %v606 = vld [vmem:[%s9 + $0x24] sm:$0xf]
        %v607 = vld [vmem:[%s9 + $0x28] sm:$0xf]
        %v608 = vld [vmem:[%s9 + $0x2c] sm:$0xf]
        %v609 = vld [vmem:[%s9 + $0x30] sm:$0xf]
        %v610 = vld [vmem:[%s9 + $0x34] sm:$0xf]
        %v611 = vld [vmem:[%s9 + $0x38] sm:$0xf]
        %v612 = vld [vmem:[%s9 + $0x3c] sm:$0xf]
        %v613 = vld [vmem:[%s3] sm:$0xf]
        %v614 = vld [vmem:[%s3 + $0x4] sm:$0xf]
        %v615 = vld [vmem:[%s3 + $0x8] sm:$0xf]
        %v616 = vld [vmem:[%s3 + $0xc] sm:$0xf]
        %v617 = vld [vmem:[%s4] sm:$0x1]
        %v619 = vlaneseq
        %v620 = vshrl.u32 %v619, 7
        %v621 = vsub.s32 0, %v620
        %v622 = vrot.slane %v617, %v621
        %v628 = vunpack.c.l.b16 %v613
        %v629 = vunpack.c.l.b16 %v614
        %v630 = vunpack.c.l.b16 %v615
        %v631 = vunpack.c.l.b16 %v616
        %v632 = vpack.c.b16 %v629, %v628
        %v633 = vpack.c.b16 %v631, %v630
        %vm636 = vcmask 261120
        %v638 = vsel %vm636, %v496, 0
        %640 = vmatprep.subr.bf16.mxu0 0
        %641 = vmatpush1.bf16.msra.mxu0 %v632
        %642 = vmatprep.subr.bf16.mxu0 0
        %643 = vmatpush1.bf16.msra.mxu0 %v633
        %644 = vmatprep.subr.bf16.mxu0 0
        %645 = vmatpush1.bf16.msra.mxu0 0
        %646 = vmatprep.subr.bf16.mxu0 0
        %647 = vmatpush1.bf16.msra.mxu0 0
        %648 = vmatprep.subr.bf16.mxu0 0
        %649 = vmatpush1.bf16.msra.mxu0 0
        %650 = vmatprep.subr.bf16.mxu0 0
        %651 = vmatpush1.bf16.msra.mxu0 0
        %652 = vmatprep.subr.bf16.mxu0 0
        %653 = vmatpush1.bf16.msra.mxu0 0
        %654 = vmatprep.subr.bf16.mxu0 0
        %655 = vmatpush1.bf16.msra.mxu0 0
        %656 = vmatprep.subr.bf16.mxu0 0
        %657 = vmatpush1.bf16.msra.mxu0 0
        %658 = vmatprep.subr.bf16.mxu0 0
        %659 = vmatpush1.bf16.msra.mxu0 0
        %660 = vmatprep.subr.bf16.mxu0 0
        %661 = vmatpush1.bf16.msra.mxu0 0
        %662 = vmatprep.subr.bf16.mxu0 0
        %663 = vmatpush1.bf16.msra.mxu0 0
        %664 = vmatprep.subr.bf16.mxu0 0
        %665 = vmatpush1.bf16.msra.mxu0 0
        %666 = vmatprep.subr.bf16.mxu0 0
        %667 = vmatpush1.bf16.msra.mxu0 0
        %668 = vmatprep.subr.bf16.mxu0 0
        %669 = vmatpush1.bf16.msra.mxu0 0
        %670 = vmatprep.subr.bf16.mxu0 0
        %671 = vmatpush1.bf16.msra.mxu0 0
        %672 = vmatprep.mubr.bf16.mxu0 0
        %673 = vmatmul.mubr.bf16.gmra.mrb[0].mxu0 %v638
        %v674 = vpop.f32.mrb[0].mxu0
        %v675 = vadd.f32 %v622, %v674
        %v676 = vpop.f32.mrb[0].mxu0
        %v677 = vpop.f32.mrb[0].mxu0
        %v678 = vpop.f32.mrb[0].mxu0
        %679 = vdwg.mxu0
        %v680 = vmax.f32 %v675, 0.0
        %v682 = vlaneseq
        %v683 = vshrl.u32 %v682, 7
        %v684 = vsub.s32 0, %v683
        %v685 = vrot.slane %v498, %v684
        %v687 = vmul.f32 %v680, %v685
        %v688 = vpack.c.bf16 %v687, %v687
        %v690 = vlaneseq
        %v691 = vshrl.u32 %v690, 7
        %v692 = vsub.s32 0, %v691
        %v693 = vrot.slane %v531, %v692
        %v694 = vlaneseq
        %v695 = vshrl.u32 %v694, 7
        %v696 = vsub.s32 1, %v695
        %v697 = vrot.slane %v531, %v696
        %v698 = vlaneseq
        %v699 = vshrl.u32 %v698, 7
        %v700 = vsub.s32 2, %v699
        %v701 = vrot.slane %v531, %v700
        %v702 = vlaneseq
        %v703 = vshrl.u32 %v702, 7
        %v704 = vsub.s32 3, %v703
        %v705 = vrot.slane %v531, %v704
        %v742 = vunpack.c.l.b16 %v499
        %v743 = vunpack.c.h.b16 %v499
        %v744 = vunpack.c.l.b16 %v500
        %v745 = vunpack.c.h.b16 %v500
        %v746 = vunpack.c.l.b16 %v501
        %v747 = vunpack.c.h.b16 %v501
        %v748 = vunpack.c.l.b16 %v502
        %v749 = vunpack.c.h.b16 %v502
        %v750 = vunpack.c.l.b16 %v503
        %v751 = vunpack.c.h.b16 %v503
        %v752 = vunpack.c.l.b16 %v504
        %v753 = vunpack.c.h.b16 %v504
        %v754 = vunpack.c.l.b16 %v505
        %v755 = vunpack.c.h.b16 %v505
        %v756 = vunpack.c.l.b16 %v506
        %v757 = vunpack.c.h.b16 %v506
        %v758 = vunpack.c.l.b16 %v507
        %v759 = vunpack.c.h.b16 %v507
        %v760 = vunpack.c.l.b16 %v508
        %v761 = vunpack.c.h.b16 %v508
        %v762 = vunpack.c.l.b16 %v509
        %v763 = vunpack.c.h.b16 %v509
        %v764 = vunpack.c.l.b16 %v510
        %v765 = vunpack.c.h.b16 %v510
        %v766 = vunpack.c.l.b16 %v511
        %v767 = vunpack.c.h.b16 %v511
        %v768 = vunpack.c.l.b16 %v512
        %v769 = vunpack.c.h.b16 %v512
        %v770 = vunpack.c.l.b16 %v513
        %v771 = vunpack.c.h.b16 %v513
        %v772 = vunpack.c.l.b16 %v514
        %v773 = vunpack.c.h.b16 %v514
        %v774 = vunpack.c.l.b16 %v515
        %v775 = vunpack.c.h.b16 %v515
        %v776 = vunpack.c.l.b16 %v516
        %v777 = vunpack.c.h.b16 %v516
        %v778 = vunpack.c.l.b16 %v517
        %v779 = vunpack.c.h.b16 %v517
        %v780 = vunpack.c.l.b16 %v518
        %v781 = vunpack.c.h.b16 %v518
        %v782 = vunpack.c.l.b16 %v519
        %v783 = vunpack.c.h.b16 %v519
        %v784 = vunpack.c.l.b16 %v520
        %v785 = vunpack.c.h.b16 %v520
        %v786 = vunpack.c.l.b16 %v521
        %v787 = vunpack.c.h.b16 %v521
        %v788 = vunpack.c.l.b16 %v522
        %v789 = vunpack.c.h.b16 %v522
        %v790 = vunpack.c.l.b16 %v523
        %v791 = vunpack.c.h.b16 %v523
        %v792 = vunpack.c.l.b16 %v524
        %v793 = vunpack.c.h.b16 %v524
        %v794 = vunpack.c.l.b16 %v525
        %v795 = vunpack.c.h.b16 %v525
        %v796 = vunpack.c.l.b16 %v526
        %v797 = vunpack.c.h.b16 %v526
        %v798 = vunpack.c.l.b16 %v527
        %v799 = vunpack.c.h.b16 %v527
        %v800 = vunpack.c.l.b16 %v528
        %v801 = vunpack.c.h.b16 %v528
        %v802 = vunpack.c.l.b16 %v529
        %v803 = vunpack.c.h.b16 %v529
        %v804 = vunpack.c.l.b16 %v530
        %v805 = vunpack.c.h.b16 %v530
        %v806 = vpack.c.b16 %v746, %v742
        %v807 = vpack.c.b16 %v747, %v743
        %v808 = vpack.c.b16 %v748, %v744
        %v809 = vpack.c.b16 %v749, %v745
        %v810 = vpack.c.b16 %v754, %v750
        %v811 = vpack.c.b16 %v755, %v751
        %v812 = vpack.c.b16 %v756, %v752
        %v813 = vpack.c.b16 %v757, %v753
        %v814 = vpack.c.b16 %v762, %v758
        %v815 = vpack.c.b16 %v763, %v759
        %v816 = vpack.c.b16 %v764, %v760
        %v817 = vpack.c.b16 %v765, %v761
        %v818 = vpack.c.b16 %v770, %v766
        %v819 = vpack.c.b16 %v771, %v767
        %v820 = vpack.c.b16 %v772, %v768
        %v821 = vpack.c.b16 %v773, %v769
        %v822 = vpack.c.b16 %v778, %v774
        %v823 = vpack.c.b16 %v779, %v775
        %v824 = vpack.c.b16 %v780, %v776
        %v825 = vpack.c.b16 %v781, %v777
        %v826 = vpack.c.b16 %v786, %v782
        %v827 = vpack.c.b16 %v787, %v783
        %v828 = vpack.c.b16 %v788, %v784
        %v829 = vpack.c.b16 %v789, %v785
        %v830 = vpack.c.b16 %v794, %v790
        %v831 = vpack.c.b16 %v795, %v791
        %v832 = vpack.c.b16 %v796, %v792
        %v833 = vpack.c.b16 %v797, %v793
        %v834 = vpack.c.b16 %v802, %v798
        %v835 = vpack.c.b16 %v803, %v799
        %v836 = vpack.c.b16 %v804, %v800
        %v837 = vpack.c.b16 %v805, %v801
        %870 = vmatprep.subr.bf16.mxu0 %v807
        %871 = vmatpush1.bf16.msra.mxu0 %v806
        %872 = vmatprep.subr.bf16.mxu0 %v811
        %873 = vmatpush1.bf16.msra.mxu0 %v810
        %874 = vmatprep.subr.bf16.mxu0 %v815
        %875 = vmatpush1.bf16.msra.mxu0 %v814
        %876 = vmatprep.subr.bf16.mxu0 %v819
        %877 = vmatpush1.bf16.msra.mxu0 %v818
        %878 = vmatprep.subr.bf16.mxu0 %v823
        %879 = vmatpush1.bf16.msra.mxu0 %v822
        %880 = vmatprep.subr.bf16.mxu0 %v827
        %881 = vmatpush1.bf16.msra.mxu0 %v826
        %882 = vmatprep.subr.bf16.mxu0 %v831
        %883 = vmatpush1.bf16.msra.mxu0 %v830
        %884 = vmatprep.subr.bf16.mxu0 %v835
        %885 = vmatpush1.bf16.msra.mxu0 %v834
        %886 = vmatprep.subr.bf16.mxu0 0
        %887 = vmatpush1.bf16.msra.mxu0 0
        %888 = vmatprep.subr.bf16.mxu0 0
        %889 = vmatpush1.bf16.msra.mxu0 0
        %890 = vmatprep.subr.bf16.mxu0 0
        %891 = vmatpush1.bf16.msra.mxu0 0
        %892 = vmatprep.subr.bf16.mxu0 0
        %893 = vmatpush1.bf16.msra.mxu0 0
        %894 = vmatprep.subr.bf16.mxu0 0
        %895 = vmatpush1.bf16.msra.mxu0 0
        %896 = vmatprep.subr.bf16.mxu0 0
        %897 = vmatpush1.bf16.msra.mxu0 0
        %898 = vmatprep.subr.bf16.mxu0 0
        %899 = vmatpush1.bf16.msra.mxu0 0
        %900 = vmatprep.subr.bf16.mxu0 0
        %901 = vmatpush1.bf16.msra.mxu0 0
        %902 = vmatprep.mubr.bf16.mxu0 0
        %903 = vmatmul.mubr.bf16.gmra.mrb[0].mxu0 %v688
        %v904 = vpop.f32.mrb[0].mxu0
        %v905 = vadd.f32 %v693, %v904
        %v906 = vpop.f32.mrb[0].mxu0
        %v907 = vadd.f32 %v697, %v906
        %v908 = vpop.f32.mrb[0].mxu0
        %v909 = vpop.f32.mrb[0].mxu0
        %910 = vdwg.mxu0
        %911 = vmatprep.subr.bf16.mxu0 %v809
        %912 = vmatpush1.bf16.msra.mxu0 %v808
        %913 = vmatprep.subr.bf16.mxu0 %v813
        %914 = vmatpush1.bf16.msra.mxu0 %v812
        %915 = vmatprep.subr.bf16.mxu0 %v817
        %916 = vmatpush1.bf16.msra.mxu0 %v816
        %917 = vmatprep.subr.bf16.mxu0 %v821
        %918 = vmatpush1.bf16.msra.mxu0 %v820
        %919 = vmatprep.subr.bf16.mxu0 %v825
        %920 = vmatpush1.bf16.msra.mxu0 %v824
        %921 = vmatprep.subr.bf16.mxu0 %v829
        %922 = vmatpush1.bf16.msra.mxu0 %v828
        %923 = vmatprep.subr.bf16.mxu0 %v833
        %924 = vmatpush1.bf16.msra.mxu0 %v832
        %925 = vmatprep.subr.bf16.mxu0 %v837
        %926 = vmatpush1.bf16.msra.mxu0 %v836
        %927 = vmatprep.subr.bf16.mxu0 0
        %928 = vmatpush1.bf16.msra.mxu0 0
        %929 = vmatprep.subr.bf16.mxu0 0
        %930 = vmatpush1.bf16.msra.mxu0 0
        %931 = vmatprep.subr.bf16.mxu0 0
        %932 = vmatpush1.bf16.msra.mxu0 0
        %933 = vmatprep.subr.bf16.mxu0 0
        %934 = vmatpush1.bf16.msra.mxu0 0
        %935 = vmatprep.subr.bf16.mxu0 0
        %936 = vmatpush1.bf16.msra.mxu0 0
        %937 = vmatprep.subr.bf16.mxu0 0
        %938 = vmatpush1.bf16.msra.mxu0 0
        %939 = vmatprep.subr.bf16.mxu0 0
        %940 = vmatpush1.bf16.msra.mxu0 0
        %941 = vmatprep.subr.bf16.mxu0 0
        %942 = vmatpush1.bf16.msra.mxu0 0
        %943 = vmatprep.mubr.bf16.mxu0 0
        %944 = vmatmul.mubr.bf16.gmra.mrb[0].mxu0 %v688
        %v945 = vpop.f32.mrb[0].mxu0
        %v946 = vadd.f32 %v701, %v945
        %v947 = vpop.f32.mrb[0].mxu0
        %v948 = vadd.f32 %v705, %v947
        %v949 = vpop.f32.mrb[0].mxu0
        %v950 = vpop.f32.mrb[0].mxu0
        %951 = vdwg.mxu0
        %v952 = vpack.c.bf16 %v905, %v905
        %vm953 = vcmask 31744
        %v955 = vsel %vm953, %v497, 0
        %vm957 = vcmask 1041408
        %v959 = vsel %vm957, %v952, 0
        %961 = vmatprep.subr.bf16.mxu0 0
        %962 = vmatpush1.bf16.msra.mxu0 %v959
        %963 = vmatprep.subr.bf16.mxu0 0
        %964 = vmatpush1.bf16.msra.mxu0 0
        %965 = vmatprep.subr.bf16.mxu0 0
        %966 = vmatpush1.bf16.msra.mxu0 0
        %967 = vmatprep.subr.bf16.mxu0 0
        %968 = vmatpush1.bf16.msra.mxu0 0
        %969 = vmatprep.subr.bf16.mxu0 0
        %970 = vmatpush1.bf16.msra.mxu0 0
        %971 = vmatprep.subr.bf16.mxu0 0
        %972 = vmatpush1.bf16.msra.mxu0 0
        %973 = vmatprep.subr.bf16.mxu0 0
        %974 = vmatpush1.bf16.msra.mxu0 0
        %975 = vmatprep.subr.bf16.mxu0 0
        %976 = vmatpush1.bf16.msra.mxu0 0
        %977 = vmatprep.subr.bf16.mxu0 0
        %978 = vmatpush1.bf16.msra.mxu0 0
        %979 = vmatprep.subr.bf16.mxu0 0
        %980 = vmatpush1.bf16.msra.mxu0 0
        %981 = vmatprep.subr.bf16.mxu0 0
        %982 = vmatpush1.bf16.msra.mxu0 0
        %983 = vmatprep.subr.bf16.mxu0 0
        %984 = vmatpush1.bf16.msra.mxu0 0
        %985 = vmatprep.subr.bf16.mxu0 0
        %986 = vmatpush1.bf16.msra.mxu0 0
        %987 = vmatprep.subr.bf16.mxu0 0
        %988 = vmatpush1.bf16.msra.mxu0 0
        %989 = vmatprep.subr.bf16.mxu0 0
        %990 = vmatpush1.bf16.msra.mxu0 0
        %991 = vmatprep.subr.bf16.mxu0 0
        %992 = vmatpush1.bf16.msra.mxu0 0
        %993 = vmatprep.mubr.bf16.mxu0 0
        %994 = vmatmul.mubr.bf16.gmra.mrb[0].mxu0 %v955
        %v995 = vpop.f32.mrb[0].mxu0
        %v996 = vadd.f32 0.0, %v995
        %v997 = vpop.f32.mrb[0].mxu0
        %v998 = vpop.f32.mrb[0].mxu0
        %v999 = vpop.f32.mrb[0].mxu0
        %1000 = vdwg.mxu0
        %v1001 = vpack.c.bf16 %v907, %v907
        %v1004 = vunpack.c.l.s4 1983009808
        %v1005 = vunpack.c.0.s8 %v1004
        %v1006 = vlaneseq
        %v1007 = vshrl.u32 %v1006, 7
        %v1008 = vsub.s32 %v1005, %v1007
        %v1009 = vrot.slane %v497, %v1008
        %1010 = vrot.lane.b32.xlu0 %v1009, 124
        %v1011 = vpop.permute.xlu0 %1010
        %v1013 = vsel %vm953, %v1011, 0
        %v1016 = vsel %vm957, %v1001, 0
        %1018 = vmatprep.subr.bf16.mxu0 0
        %1019 = vmatpush1.bf16.msra.mxu0 %v1016
        %1020 = vmatprep.subr.bf16.mxu0 0
        %1021 = vmatpush1.bf16.msra.mxu0 0
        %1022 = vmatprep.subr.bf16.mxu0 0
        %1023 = vmatpush1.bf16.msra.mxu0 0
        %1024 = vmatprep.subr.bf16.mxu0 0
        %1025 = vmatpush1.bf16.msra.mxu0 0
        %1026 = vmatprep.subr.bf16.mxu0 0
        %1027 = vmatpush1.bf16.msra.mxu0 0
        %1028 = vmatprep.subr.bf16.mxu0 0
        %1029 = vmatpush1.bf16.msra.mxu0 0
        %1030 = vmatprep.subr.bf16.mxu0 0
        %1031 = vmatpush1.bf16.msra.mxu0 0
        %1032 = vmatprep.subr.bf16.mxu0 0
        %1033 = vmatpush1.bf16.msra.mxu0 0
        %1034 = vmatprep.subr.bf16.mxu0 0
        %1035 = vmatpush1.bf16.msra.mxu0 0
        %1036 = vmatprep.subr.bf16.mxu0 0
        %1037 = vmatpush1.bf16.msra.mxu0 0
        %1038 = vmatprep.subr.bf16.mxu0 0
        %1039 = vmatpush1.bf16.msra.mxu0 0
        %1040 = vmatprep.subr.bf16.mxu0 0
        %1041 = vmatpush1.bf16.msra.mxu0 0
        %1042 = vmatprep.subr.bf16.mxu0 0
        %1043 = vmatpush1.bf16.msra.mxu0 0
        %1044 = vmatprep.subr.bf16.mxu0 0
        %1045 = vmatpush1.bf16.msra.mxu0 0
        %1046 = vmatprep.subr.bf16.mxu0 0
        %1047 = vmatpush1.bf16.msra.mxu0 0
        %1048 = vmatprep.subr.bf16.mxu0 0
        %1049 = vmatpush1.bf16.msra.mxu0 0
        %1050 = vmatprep.mubr.bf16.mxu0 0
        %1051 = vmatmul.mubr.bf16.gmra.mrb[0].mxu0 %v1013
        %v1052 = vpop.f32.mrb[0].mxu0
        %v1053 = vadd.f32 0.0, %v1052
        %v1054 = vpop.f32.mrb[0].mxu0
        %v1055 = vpop.f32.mrb[0].mxu0
        %v1056 = vpop.f32.mrb[0].mxu0
        %1057 = vdwg.mxu0
        %v1058 = vpack.c.bf16 %v996, %v996
        %v1059 = vpack.c.bf16 %v1053, %v1053
        %v1061 = vlaneseq
        %v1062 = vshrl.u32 %v1061, 7
        %v1063 = vsub.s32 0, %v1062
        %v1064 = vrot.slane %v596, %v1063
        %v1065 = vlaneseq
        %v1066 = vshrl.u32 %v1065, 7
        %v1067 = vsub.s32 1, %v1066
        %v1068 = vrot.slane %v596, %v1067
        %v1069 = vlaneseq
        %v1070 = vshrl.u32 %v1069, 7
        %v1071 = vsub.s32 2, %v1070
        %v1072 = vrot.slane %v596, %v1071
        %v1140 = vunpack.c.l.b16 %v532
        %v1141 = vunpack.c.h.b16 %v532
        %v1142 = vunpack.c.l.b16 %v533
        %v1143 = vunpack.c.l.b16 %v534
        %v1144 = vunpack.c.h.b16 %v534
        %v1145 = vunpack.c.l.b16 %v535
        %v1146 = vunpack.c.l.b16 %v536
        %v1147 = vunpack.c.h.b16 %v536
        %v1148 = vunpack.c.l.b16 %v537
        %v1149 = vunpack.c.l.b16 %v538
        %v1150 = vunpack.c.h.b16 %v538
        %v1151 = vunpack.c.l.b16 %v539
        %v1152 = vunpack.c.l.b16 %v540
        %v1153 = vunpack.c.h.b16 %v540
        %v1154 = vunpack.c.l.b16 %v541
        %v1155 = vunpack.c.l.b16 %v542
        %v1156 = vunpack.c.h.b16 %v542
        %v1157 = vunpack.c.l.b16 %v543
        %v1158 = vunpack.c.l.b16 %v544
        %v1159 = vunpack.c.h.b16 %v544
        %v1160 = vunpack.c.l.b16 %v545
        %v1161 = vunpack.c.l.b16 %v546
        %v1162 = vunpack.c.h.b16 %v546
        %v1163 = vunpack.c.l.b16 %v547
        %v1164 = vunpack.c.l.b16 %v548
        %v1165 = vunpack.c.h.b16 %v548
        %v1166 = vunpack.c.l.b16 %v549
        %v1167 = vunpack.c.l.b16 %v550
        %v1168 = vunpack.c.h.b16 %v550
        %v1169 = vunpack.c.l.b16 %v551
        %v1170 = vunpack.c.l.b16 %v552
        %v1171 = vunpack.c.h.b16 %v552
        %v1172 = vunpack.c.l.b16 %v553
        %v1173 = vunpack.c.l.b16 %v554
        %v1174 = vunpack.c.h.b16 %v554
        %v1175 = vunpack.c.l.b16 %v555
        %v1176 = vunpack.c.l.b16 %v556
        %v1177 = vunpack.c.h.b16 %v556
        %v1178 = vunpack.c.l.b16 %v557
        %v1179 = vunpack.c.l.b16 %v558
        %v1180 = vunpack.c.h.b16 %v558
        %v1181 = vunpack.c.l.b16 %v559
        %v1182 = vunpack.c.l.b16 %v560
        %v1183 = vunpack.c.h.b16 %v560
        %v1184 = vunpack.c.l.b16 %v561
        %v1185 = vunpack.c.l.b16 %v562
        %v1186 = vunpack.c.h.b16 %v562
        %v1187 = vunpack.c.l.b16 %v563
        %v1188 = vunpack.c.l.b16 %v564
        %v1189 = vunpack.c.h.b16 %v564
        %v1190 = vunpack.c.l.b16 %v565
        %v1191 = vunpack.c.l.b16 %v566
        %v1192 = vunpack.c.h.b16 %v566
        %v1193 = vunpack.c.l.b16 %v567
        %v1194 = vunpack.c.l.b16 %v568
        %v1195 = vunpack.c.h.b16 %v568
        %v1196 = vunpack.c.l.b16 %v569
        %v1197 = vunpack.c.l.b16 %v570
        %v1198 = vunpack.c.h.b16 %v570
        %v1199 = vunpack.c.l.b16 %v571
        %v1200 = vunpack.c.l.b16 %v572
        %v1201 = vunpack.c.h.b16 %v572
        %v1202 = vunpack.c.l.b16 %v573
        %v1203 = vunpack.c.l.b16 %v574
        %v1204 = vunpack.c.h.b16 %v574
        %v1205 = vunpack.c.l.b16 %v575
        %v1206 = vunpack.c.l.b16 %v576
        %v1207 = vunpack.c.h.b16 %v576
        %v1208 = vunpack.c.l.b16 %v577
        %v1209 = vunpack.c.l.b16 %v578
        %v1210 = vunpack.c.h.b16 %v578
        %v1211 = vunpack.c.l.b16 %v579
        %v1212 = vunpack.c.l.b16 %v580
        %v1213 = vunpack.c.h.b16 %v580
        %v1214 = vunpack.c.l.b16 %v581
        %v1215 = vunpack.c.l.b16 %v582
        %v1216 = vunpack.c.h.b16 %v582
        %v1217 = vunpack.c.l.b16 %v583
        %v1218 = vunpack.c.l.b16 %v584
        %v1219 = vunpack.c.h.b16 %v584
        %v1220 = vunpack.c.l.b16 %v585
        %v1221 = vunpack.c.l.b16 %v586
        %v1222 = vunpack.c.h.b16 %v586
        %v1223 = vunpack.c.l.b16 %v587
        %v1224 = vunpack.c.l.b16 %v588
        %v1225 = vunpack.c.h.b16 %v588
        %v1226 = vunpack.c.l.b16 %v589
        %v1227 = vunpack.c.l.b16 %v590
        %v1228 = vunpack.c.h.b16 %v590
        %v1229 = vunpack.c.l.b16 %v591
        %v1230 = vunpack.c.l.b16 %v592
        %v1231 = vunpack.c.h.b16 %v592
        %v1232 = vunpack.c.l.b16 %v593
        %v1233 = vunpack.c.l.b16 %v594
        %v1234 = vunpack.c.h.b16 %v594
        %v1235 = vunpack.c.l.b16 %v595
        %v1236 = vpack.c.b16 %v1143, %v1140
        %v1237 = vpack.c.b16 %v1144, %v1141
        %v1238 = vpack.c.b16 %v1145, %v1142
        %v1239 = vpack.c.b16 %v1149, %v1146
        %v1240 = vpack.c.b16 %v1150, %v1147
        %v1241 = vpack.c.b16 %v1151, %v1148
        %v1242 = vpack.c.b16 %v1155, %v1152
        %v1243 = vpack.c.b16 %v1156, %v1153
        %v1244 = vpack.c.b16 %v1157, %v1154
        %v1245 = vpack.c.b16 %v1161, %v1158
        %v1246 = vpack.c.b16 %v1162, %v1159
        %v1247 = vpack.c.b16 %v1163, %v1160
        %v1248 = vpack.c.b16 %v1167, %v1164
        %v1249 = vpack.c.b16 %v1168, %v1165
        %v1250 = vpack.c.b16 %v1169, %v1166
        %v1251 = vpack.c.b16 %v1173, %v1170
        %v1252 = vpack.c.b16 %v1174, %v1171
        %v1253 = vpack.c.b16 %v1175, %v1172
        %v1254 = vpack.c.b16 %v1179, %v1176
        %v1255 = vpack.c.b16 %v1180, %v1177
        %v1256 = vpack.c.b16 %v1181, %v1178
        %v1257 = vpack.c.b16 %v1185, %v1182
        %v1258 = vpack.c.b16 %v1186, %v1183
        %v1259 = vpack.c.b16 %v1187, %v1184
        %v1260 = vpack.c.b16 %v1191, %v1188
        %v1261 = vpack.c.b16 %v1192, %v1189
        %v1262 = vpack.c.b16 %v1193, %v1190
        %v1263 = vpack.c.b16 %v1197, %v1194
        %v1264 = vpack.c.b16 %v1198, %v1195
        %v1265 = vpack.c.b16 %v1199, %v1196
        %v1266 = vpack.c.b16 %v1203, %v1200
        %v1267 = vpack.c.b16 %v1204, %v1201
        %v1268 = vpack.c.b16 %v1205, %v1202
        %v1269 = vpack.c.b16 %v1209, %v1206
        %v1270 = vpack.c.b16 %v1210, %v1207
        %v1271 = vpack.c.b16 %v1211, %v1208
        %v1272 = vpack.c.b16 %v1215, %v1212
        %v1273 = vpack.c.b16 %v1216, %v1213
        %v1274 = vpack.c.b16 %v1217, %v1214
        %v1275 = vpack.c.b16 %v1221, %v1218
        %v1276 = vpack.c.b16 %v1222, %v1219
        %v1277 = vpack.c.b16 %v1223, %v1220
        %v1278 = vpack.c.b16 %v1227, %v1224
        %v1279 = vpack.c.b16 %v1228, %v1225
        %v1280 = vpack.c.b16 %v1229, %v1226
        %v1281 = vpack.c.b16 %v1233, %v1230
        %v1282 = vpack.c.b16 %v1234, %v1231
        %v1283 = vpack.c.b16 %v1235, %v1232
        %1332 = vmatprep.subr.bf16.mxu0 %v1237
        %1333 = vmatpush1.bf16.msra.mxu0 %v1236
        %1334 = vmatprep.subr.bf16.mxu0 %v1240
        %1335 = vmatpush1.bf16.msra.mxu0 %v1239
        %1336 = vmatprep.subr.bf16.mxu0 %v1243
        %1337 = vmatpush1.bf16.msra.mxu0 %v1242
        %1338 = vmatprep.subr.bf16.mxu0 %v1246
        %1339 = vmatpush1.bf16.msra.mxu0 %v1245
        %1340 = vmatprep.subr.bf16.mxu0 %v1249
        %1341 = vmatpush1.bf16.msra.mxu0 %v1248
        %1342 = vmatprep.subr.bf16.mxu0 %v1252
        %1343 = vmatpush1.bf16.msra.mxu0 %v1251
        %1344 = vmatprep.subr.bf16.mxu0 %v1255
        %1345 = vmatpush1.bf16.msra.mxu0 %v1254
        %1346 = vmatprep.subr.bf16.mxu0 %v1258
        %1347 = vmatpush1.bf16.msra.mxu0 %v1257
        %1348 = vmatprep.subr.bf16.mxu0 %v1261
        %1349 = vmatpush1.bf16.msra.mxu0 %v1260
        %1350 = vmatprep.subr.bf16.mxu0 %v1264
        %1351 = vmatpush1.bf16.msra.mxu0 %v1263
        %1352 = vmatprep.subr.bf16.mxu0 %v1267
        %1353 = vmatpush1.bf16.msra.mxu0 %v1266
        %1354 = vmatprep.subr.bf16.mxu0 %v1270
        %1355 = vmatpush1.bf16.msra.mxu0 %v1269
        %1356 = vmatprep.subr.bf16.mxu0 %v1273
        %1357 = vmatpush1.bf16.msra.mxu0 %v1272
        %1358 = vmatprep.subr.bf16.mxu0 %v1276
        %1359 = vmatpush1.bf16.msra.mxu0 %v1275
        %1360 = vmatprep.subr.bf16.mxu0 %v1279
        %1361 = vmatpush1.bf16.msra.mxu0 %v1278
        %1362 = vmatprep.subr.bf16.mxu0 %v1282
        %1363 = vmatpush1.bf16.msra.mxu0 %v1281
        %1364 = vmatprep.mubr.bf16.mxu0 %v1059
        %1365 = vmatmul.mubr.bf16.gmra.mrb[0].mxu0 %v1058
        %v1366 = vpop.f32.mrb[0].mxu0
        %v1367 = vadd.f32 %v1064, %v1366
        %v1368 = vpop.f32.mrb[0].mxu0
        %v1369 = vadd.f32 %v1068, %v1368
        %v1370 = vpop.f32.mrb[0].mxu0
        %v1371 = vpop.f32.mrb[0].mxu0
        %1372 = vdwg.mxu0
        %1373 = vmatprep.subr.bf16.mxu0 0
        %1374 = vmatpush1.bf16.msra.mxu0 %v1238
        %1375 = vmatprep.subr.bf16.mxu0 0
        %1376 = vmatpush1.bf16.msra.mxu0 %v1241
        %1377 = vmatprep.subr.bf16.mxu0 0
        %1378 = vmatpush1.bf16.msra.mxu0 %v1244
        %1379 = vmatprep.subr.bf16.mxu0 0
        %1380 = vmatpush1.bf16.msra.mxu0 %v1247
        %1381 = vmatprep.subr.bf16.mxu0 0
        %1382 = vmatpush1.bf16.msra.mxu0 %v1250
        %1383 = vmatprep.subr.bf16.mxu0 0
        %1384 = vmatpush1.bf16.msra.mxu0 %v1253
        %1385 = vmatprep.subr.bf16.mxu0 0
        %1386 = vmatpush1.bf16.msra.mxu0 %v1256
        %1387 = vmatprep.subr.bf16.mxu0 0
        %1388 = vmatpush1.bf16.msra.mxu0 %v1259
        %1389 = vmatprep.subr.bf16.mxu0 0
        %1390 = vmatpush1.bf16.msra.mxu0 %v1262
        %1391 = vmatprep.subr.bf16.mxu0 0
        %1392 = vmatpush1.bf16.msra.mxu0 %v1265
        %1393 = vmatprep.subr.bf16.mxu0 0
        %1394 = vmatpush1.bf16.msra.mxu0 %v1268
        %1395 = vmatprep.subr.bf16.mxu0 0
        %1396 = vmatpush1.bf16.msra.mxu0 %v1271
        %1397 = vmatprep.subr.bf16.mxu0 0
        %1398 = vmatpush1.bf16.msra.mxu0 %v1274
        %1399 = vmatprep.subr.bf16.mxu0 0
        %1400 = vmatpush1.bf16.msra.mxu0 %v1277
        %1401 = vmatprep.subr.bf16.mxu0 0
        %1402 = vmatpush1.bf16.msra.mxu0 %v1280
        %1403 = vmatprep.subr.bf16.mxu0 0
        %1404 = vmatpush1.bf16.msra.mxu0 %v1283
        %1405 = vmatprep.mubr.bf16.mxu0 %v1059
        %1406 = vmatmul.mubr.bf16.gmra.mrb[0].mxu0 %v1058
        %v1407 = vpop.f32.mrb[0].mxu0
        %v1408 = vadd.f32 %v1072, %v1407
        %v1409 = vpop.f32.mrb[0].mxu0
        %v1410 = vpop.f32.mrb[0].mxu0
        %v1411 = vpop.f32.mrb[0].mxu0
        %1412 = vdwg.mxu0
        %v1413 = vadd.f32 %v1367, %v946
        %v1414 = vadd.f32 %v1369, %v948
        %v1415 = vxor.u32 %v1413, 2147483648
        %v1416 = vxor.u32 %v1414, 2147483648
        %v1417 = vmul.f32 %v1415, 1.442695
        %v1418 = vpow.pop %v1417
        %v1419 = vmul.f32 %v1416, 1.442695
        %v1420 = vpow.pop %v1419
        %v1421 = vadd.f32 %v1418, 1.0
        %v1422 = vadd.f32 %v1420, 1.0
        %v1423 = vrcp.pop %v1421
        %v1424 = vmul.f32 1.0, %v1423
        %v1425 = vrcp.pop %v1422
        %v1426 = vmul.f32 1.0, %v1425
        %v1427 = vmul.f32 %v1424, %v687
        %v1428 = vpack.c.bf16 %v1427, %v1427
        %v1445 = vunpack.c.l.b16 %v597
        %v1446 = vunpack.c.l.b16 %v598
        %v1447 = vunpack.c.l.b16 %v599
        %v1448 = vunpack.c.l.b16 %v600
        %v1449 = vunpack.c.l.b16 %v601
        %v1450 = vunpack.c.l.b16 %v602
        %v1451 = vunpack.c.l.b16 %v603
        %v1452 = vunpack.c.l.b16 %v604
        %v1453 = vunpack.c.l.b16 %v605
        %v1454 = vunpack.c.l.b16 %v606
        %v1455 = vunpack.c.l.b16 %v607
        %v1456 = vunpack.c.l.b16 %v608
        %v1457 = vunpack.c.l.b16 %v609
        %v1458 = vunpack.c.l.b16 %v610
        %v1459 = vunpack.c.l.b16 %v611
        %v1460 = vunpack.c.l.b16 %v612
        %v1461 = vpack.c.b16 %v1446, %v1445
        %v1462 = vpack.c.b16 %v1448, %v1447
        %v1463 = vpack.c.b16 %v1450, %v1449
        %v1464 = vpack.c.b16 %v1452, %v1451
        %v1465 = vpack.c.b16 %v1454, %v1453
        %v1466 = vpack.c.b16 %v1456, %v1455
        %v1467 = vpack.c.b16 %v1458, %v1457
        %v1468 = vpack.c.b16 %v1460, %v1459
        %1477 = vmatprep.subr.bf16.mxu0 0
        %1478 = vmatpush1.bf16.msra.mxu0 %v1461
        %1479 = vmatprep.subr.bf16.mxu0 0
        %1480 = vmatpush1.bf16.msra.mxu0 %v1462
        %1481 = vmatprep.subr.bf16.mxu0 0
        %1482 = vmatpush1.bf16.msra.mxu0 %v1463
        %1483 = vmatprep.subr.bf16.mxu0 0
        %1484 = vmatpush1.bf16.msra.mxu0 %v1464
        %1485 = vmatprep.subr.bf16.mxu0 0
        %1486 = vmatpush1.bf16.msra.mxu0 %v1465
        %1487 = vmatprep.subr.bf16.mxu0 0
        %1488 = vmatpush1.bf16.msra.mxu0 %v1466
        %1489 = vmatprep.subr.bf16.mxu0 0
        %1490 = vmatpush1.bf16.msra.mxu0 %v1467
        %1491 = vmatprep.subr.bf16.mxu0 0
        %1492 = vmatpush1.bf16.msra.mxu0 %v1468
        %1493 = vmatprep.subr.bf16.mxu0 0
        %1494 = vmatpush1.bf16.msra.mxu0 0
        %1495 = vmatprep.subr.bf16.mxu0 0
        %1496 = vmatpush1.bf16.msra.mxu0 0
        %1497 = vmatprep.subr.bf16.mxu0 0
        %1498 = vmatpush1.bf16.msra.mxu0 0
        %1499 = vmatprep.subr.bf16.mxu0 0
        %1500 = vmatpush1.bf16.msra.mxu0 0
        %1501 = vmatprep.subr.bf16.mxu0 0
        %1502 = vmatpush1.bf16.msra.mxu0 0
        %1503 = vmatprep.subr.bf16.mxu0 0
        %1504 = vmatpush1.bf16.msra.mxu0 0
        %1505 = vmatprep.subr.bf16.mxu0 0
        %1506 = vmatpush1.bf16.msra.mxu0 0
        %1507 = vmatprep.subr.bf16.mxu0 0
        %1508 = vmatpush1.bf16.msra.mxu0 0
        %1509 = vmatprep.mubr.bf16.mxu0 0
        %1510 = vmatmul.mubr.bf16.gmra.mrb[0].mxu0 %v1428
        %v1511 = vpop.f32.mrb[0].mxu0
        %v1512 = vadd.f32 0.0, %v1511
        %v1513 = vpop.f32.mrb[0].mxu0
        %v1514 = vpop.f32.mrb[0].mxu0
        %v1515 = vpop.f32.mrb[0].mxu0
        %1516 = vdwg.mxu0
        %v1517 = vadd.f32 %v1408, %v1512
        %v1518 = vtanh.pop %v1517
        %v1519 = vsub.f32 1.0, %v1426
        %v1520 = vmul.f32 %v1519, %v687
        %v1521 = vmul.f32 %v1426, %v1518
        %v1522 = vadd.f32 %v1520, %v1521
        %v1523 = vpack.c.bf16 %v1522, %v1522
        %1524 = vmatprep.subr.bf16.mxu0 %v807
        %1525 = vmatpush1.bf16.msra.mxu0 %v806
        %1526 = vmatprep.subr.bf16.mxu0 %v811
        %1527 = vmatpush1.bf16.msra.mxu0 %v810
        %1528 = vmatprep.subr.bf16.mxu0 %v815
        %1529 = vmatpush1.bf16.msra.mxu0 %v814
        %1530 = vmatprep.subr.bf16.mxu0 %v819
        %1531 = vmatpush1.bf16.msra.mxu0 %v818
        %1532 = vmatprep.subr.bf16.mxu0 %v823
        %1533 = vmatpush1.bf16.msra.mxu0 %v822
        %1534 = vmatprep.subr.bf16.mxu0 %v827
        %1535 = vmatpush1.bf16.msra.mxu0 %v826
        %1536 = vmatprep.subr.bf16.mxu0 %v831
        %1537 = vmatpush1.bf16.msra.mxu0 %v830
        %1538 = vmatprep.subr.bf16.mxu0 %v835
        %1539 = vmatpush1.bf16.msra.mxu0 %v834
        %1540 = vmatprep.subr.bf16.mxu0 0
        %1541 = vmatpush1.bf16.msra.mxu0 0
        %1542 = vmatprep.subr.bf16.mxu0 0
        %1543 = vmatpush1.bf16.msra.mxu0 0
        %1544 = vmatprep.subr.bf16.mxu0 0
        %1545 = vmatpush1.bf16.msra.mxu0 0
        %1546 = vmatprep.subr.bf16.mxu0 0
        %1547 = vmatpush1.bf16.msra.mxu0 0
        %1548 = vmatprep.subr.bf16.mxu0 0
        %1549 = vmatpush1.bf16.msra.mxu0 0
        %1550 = vmatprep.subr.bf16.mxu0 0
        %1551 = vmatpush1.bf16.msra.mxu0 0
        %1552 = vmatprep.subr.bf16.mxu0 0
        %1553 = vmatpush1.bf16.msra.mxu0 0
        %1554 = vmatprep.subr.bf16.mxu0 0
        %1555 = vmatpush1.bf16.msra.mxu0 0
        %1556 = vmatprep.mubr.bf16.mxu0 0
        %1557 = vmatmul.mubr.bf16.gmra.mrb[0].mxu0 %v1523
        %v1558 = vpop.f32.mrb[0].mxu0
        %v1559 = vadd.f32 %v693, %v1558
        %v1560 = vpop.f32.mrb[0].mxu0
        %v1561 = vadd.f32 %v697, %v1560
        %v1562 = vpop.f32.mrb[0].mxu0
        %v1563 = vpop.f32.mrb[0].mxu0
        %1564 = vdwg.mxu0
        %1565 = vmatprep.subr.bf16.mxu0 %v809
        %1566 = vmatpush1.bf16.msra.mxu0 %v808
        %1567 = vmatprep.subr.bf16.mxu0 %v813
        %1568 = vmatpush1.bf16.msra.mxu0 %v812
        %1569 = vmatprep.subr.bf16.mxu0 %v817
        %1570 = vmatpush1.bf16.msra.mxu0 %v816
        %1571 = vmatprep.subr.bf16.mxu0 %v821
        %1572 = vmatpush1.bf16.msra.mxu0 %v820
        %1573 = vmatprep.subr.bf16.mxu0 %v825
        %1574 = vmatpush1.bf16.msra.mxu0 %v824
        %1575 = vmatprep.subr.bf16.mxu0 %v829
        %1576 = vmatpush1.bf16.msra.mxu0 %v828
        %1577 = vmatprep.subr.bf16.mxu0 %v833
        %1578 = vmatpush1.bf16.msra.mxu0 %v832
        %1579 = vmatprep.subr.bf16.mxu0 %v837
        %1580 = vmatpush1.bf16.msra.mxu0 %v836
        %1581 = vmatprep.subr.bf16.mxu0 0
        %1582 = vmatpush1.bf16.msra.mxu0 0
        %1583 = vmatprep.subr.bf16.mxu0 0
        %1584 = vmatpush1.bf16.msra.mxu0 0
        %1585 = vmatprep.subr.bf16.mxu0 0
        %1586 = vmatpush1.bf16.msra.mxu0 0
        %1587 = vmatprep.subr.bf16.mxu0 0
        %1588 = vmatpush1.bf16.msra.mxu0 0
        %1589 = vmatprep.subr.bf16.mxu0 0
        %1590 = vmatpush1.bf16.msra.mxu0 0
        %1591 = vmatprep.subr.bf16.mxu0 0
        %1592 = vmatpush1.bf16.msra.mxu0 0
        %1593 = vmatprep.subr.bf16.mxu0 0
        %1594 = vmatpush1.bf16.msra.mxu0 0
        %1595 = vmatprep.subr.bf16.mxu0 0
        %1596 = vmatpush1.bf16.msra.mxu0 0
        %1597 = vmatprep.mubr.bf16.mxu0 0
        %1598 = vmatmul.mubr.bf16.gmra.mrb[0].mxu0 %v1523
        %v1599 = vpop.f32.mrb[0].mxu0
        %v1600 = vadd.f32 %v701, %v1599
        %v1601 = vpop.f32.mrb[0].mxu0
        %v1602 = vadd.f32 %v705, %v1601
        %v1603 = vpop.f32.mrb[0].mxu0
        %v1604 = vpop.f32.mrb[0].mxu0
        %1605 = vdwg.mxu0
        %v1606 = vpack.c.bf16 %v1559, %v1559
        %v1608 = vsel %vm957, %v1606, 0
        %1610 = vmatprep.subr.bf16.mxu0 0
        %1611 = vmatpush1.bf16.msra.mxu0 %v1608
        %1612 = vmatprep.subr.bf16.mxu0 0
        %1613 = vmatpush1.bf16.msra.mxu0 0
        %1614 = vmatprep.subr.bf16.mxu0 0
        %1615 = vmatpush1.bf16.msra.mxu0 0
        %1616 = vmatprep.subr.bf16.mxu0 0
        %1617 = vmatpush1.bf16.msra.mxu0 0
        %1618 = vmatprep.subr.bf16.mxu0 0
        %1619 = vmatpush1.bf16.msra.mxu0 0
        %1620 = vmatprep.subr.bf16.mxu0 0
        %1621 = vmatpush1.bf16.msra.mxu0 0
        %1622 = vmatprep.subr.bf16.mxu0 0
        %1623 = vmatpush1.bf16.msra.mxu0 0
        %1624 = vmatprep.subr.bf16.mxu0 0
        %1625 = vmatpush1.bf16.msra.mxu0 0
        %1626 = vmatprep.subr.bf16.mxu0 0
        %1627 = vmatpush1.bf16.msra.mxu0 0
        %1628 = vmatprep.subr.bf16.mxu0 0
        %1629 = vmatpush1.bf16.msra.mxu0 0
        %1630 = vmatprep.subr.bf16.mxu0 0
        %1631 = vmatpush1.bf16.msra.mxu0 0
        %1632 = vmatprep.subr.bf16.mxu0 0
        %1633 = vmatpush1.bf16.msra.mxu0 0
        %1634 = vmatprep.subr.bf16.mxu0 0
        %1635 = vmatpush1.bf16.msra.mxu0 0
        %1636 = vmatprep.subr.bf16.mxu0 0
        %1637 = vmatpush1.bf16.msra.mxu0 0
        %1638 = vmatprep.subr.bf16.mxu0 0
        %1639 = vmatpush1.bf16.msra.mxu0 0
        %1640 = vmatprep.subr.bf16.mxu0 0
        %1641 = vmatpush1.bf16.msra.mxu0 0
        %1642 = vmatprep.mubr.bf16.mxu0 0
        %1643 = vmatmul.mubr.bf16.gmra.mrb[0].mxu0 %v955
        %v1644 = vpop.f32.mrb[0].mxu0
        %v1645 = vadd.f32 0.0, %v1644
        %v1646 = vpop.f32.mrb[0].mxu0
        %v1647 = vpop.f32.mrb[0].mxu0
        %v1648 = vpop.f32.mrb[0].mxu0
        %1649 = vdwg.mxu0
        %v1650 = vpack.c.bf16 %v1561, %v1561
        %v1652 = vsel %vm957, %v1650, 0
        %1654 = vmatprep.subr.bf16.mxu0 0
        %1655 = vmatpush1.bf16.msra.mxu0 %v1652
        %1656 = vmatprep.subr.bf16.mxu0 0
        %1657 = vmatpush1.bf16.msra.mxu0 0
        %1658 = vmatprep.subr.bf16.mxu0 0
        %1659 = vmatpush1.bf16.msra.mxu0 0
        %1660 = vmatprep.subr.bf16.mxu0 0
        %1661 = vmatpush1.bf16.msra.mxu0 0
        %1662 = vmatprep.subr.bf16.mxu0 0
        %1663 = vmatpush1.bf16.msra.mxu0 0
        %1664 = vmatprep.subr.bf16.mxu0 0
        %1665 = vmatpush1.bf16.msra.mxu0 0
        %1666 = vmatprep.subr.bf16.mxu0 0
        %1667 = vmatpush1.bf16.msra.mxu0 0
        %1668 = vmatprep.subr.bf16.mxu0 0
        %1669 = vmatpush1.bf16.msra.mxu0 0
        %1670 = vmatprep.subr.bf16.mxu0 0
        %1671 = vmatpush1.bf16.msra.mxu0 0
        %1672 = vmatprep.subr.bf16.mxu0 0
        %1673 = vmatpush1.bf16.msra.mxu0 0
        %1674 = vmatprep.subr.bf16.mxu0 0
        %1675 = vmatpush1.bf16.msra.mxu0 0
        %1676 = vmatprep.subr.bf16.mxu0 0
        %1677 = vmatpush1.bf16.msra.mxu0 0
        %1678 = vmatprep.subr.bf16.mxu0 0
        %1679 = vmatpush1.bf16.msra.mxu0 0
        %1680 = vmatprep.subr.bf16.mxu0 0
        %1681 = vmatpush1.bf16.msra.mxu0 0
        %1682 = vmatprep.subr.bf16.mxu0 0
        %1683 = vmatpush1.bf16.msra.mxu0 0
        %1684 = vmatprep.subr.bf16.mxu0 0
        %1685 = vmatpush1.bf16.msra.mxu0 0
        %1686 = vmatprep.mubr.bf16.mxu0 0
        %1687 = vmatmul.mubr.bf16.gmra.mrb[0].mxu0 %v1013
        %v1688 = vpop.f32.mrb[0].mxu0
        %v1689 = vadd.f32 0.0, %v1688
        %v1690 = vpop.f32.mrb[0].mxu0
        %v1691 = vpop.f32.mrb[0].mxu0
        %v1692 = vpop.f32.mrb[0].mxu0
        %1693 = vdwg.mxu0
        %v1694 = vpack.c.bf16 %v1645, %v1645
        %v1695 = vpack.c.bf16 %v1689, %v1689
        %1696 = vmatprep.subr.bf16.mxu0 %v1237
        %1697 = vmatpush1.bf16.msra.mxu0 %v1236
        %1698 = vmatprep.subr.bf16.mxu0 %v1240
        %1699 = vmatpush1.bf16.msra.mxu0 %v1239
        %1700 = vmatprep.subr.bf16.mxu0 %v1243
        %1701 = vmatpush1.bf16.msra.mxu0 %v1242
        %1702 = vmatprep.subr.bf16.mxu0 %v1246
        %1703 = vmatpush1.bf16.msra.mxu0 %v1245
        %1704 = vmatprep.subr.bf16.mxu0 %v1249
        %1705 = vmatpush1.bf16.msra.mxu0 %v1248
        %1706 = vmatprep.subr.bf16.mxu0 %v1252
        %1707 = vmatpush1.bf16.msra.mxu0 %v1251
        %1708 = vmatprep.subr.bf16.mxu0 %v1255
        %1709 = vmatpush1.bf16.msra.mxu0 %v1254
        %1710 = vmatprep.subr.bf16.mxu0 %v1258
        %1711 = vmatpush1.bf16.msra.mxu0 %v1257
        %1712 = vmatprep.subr.bf16.mxu0 %v1261
        %1713 = vmatpush1.bf16.msra.mxu0 %v1260
        %1714 = vmatprep.subr.bf16.mxu0 %v1264
        %1715 = vmatpush1.bf16.msra.mxu0 %v1263
        %1716 = vmatprep.subr.bf16.mxu0 %v1267
        %1717 = vmatpush1.bf16.msra.mxu0 %v1266
        %1718 = vmatprep.subr.bf16.mxu0 %v1270
        %1719 = vmatpush1.bf16.msra.mxu0 %v1269
        %1720 = vmatprep.subr.bf16.mxu0 %v1273
        %1721 = vmatpush1.bf16.msra.mxu0 %v1272
        %1722 = vmatprep.subr.bf16.mxu0 %v1276
        %1723 = vmatpush1.bf16.msra.mxu0 %v1275
        %1724 = vmatprep.subr.bf16.mxu0 %v1279
        %1725 = vmatpush1.bf16.msra.mxu0 %v1278
        %1726 = vmatprep.subr.bf16.mxu0 %v1282
        %1727 = vmatpush1.bf16.msra.mxu0 %v1281
        %1728 = vmatprep.mubr.bf16.mxu0 %v1695
        %1729 = vmatmul.mubr.bf16.gmra.mrb[0].mxu0 %v1694
        %v1730 = vpop.f32.mrb[0].mxu0
        %v1731 = vadd.f32 %v1064, %v1730
        %v1732 = vpop.f32.mrb[0].mxu0
        %v1733 = vadd.f32 %v1068, %v1732
        %v1734 = vpop.f32.mrb[0].mxu0
        %v1735 = vpop.f32.mrb[0].mxu0
        %1736 = vdwg.mxu0
        %1737 = vmatprep.subr.bf16.mxu0 0
        %1738 = vmatpush1.bf16.msra.mxu0 %v1238
        %1739 = vmatprep.subr.bf16.mxu0 0
        %1740 = vmatpush1.bf16.msra.mxu0 %v1241
        %1741 = vmatprep.subr.bf16.mxu0 0
        %1742 = vmatpush1.bf16.msra.mxu0 %v1244
        %1743 = vmatprep.subr.bf16.mxu0 0
        %1744 = vmatpush1.bf16.msra.mxu0 %v1247
        %1745 = vmatprep.subr.bf16.mxu0 0
        %1746 = vmatpush1.bf16.msra.mxu0 %v1250
        %1747 = vmatprep.subr.bf16.mxu0 0
        %1748 = vmatpush1.bf16.msra.mxu0 %v1253
        %1749 = vmatprep.subr.bf16.mxu0 0
        %1750 = vmatpush1.bf16.msra.mxu0 %v1256
        %1751 = vmatprep.subr.bf16.mxu0 0
        %1752 = vmatpush1.bf16.msra.mxu0 %v1259
        %1753 = vmatprep.subr.bf16.mxu0 0
        %1754 = vmatpush1.bf16.msra.mxu0 %v1262
        %1755 = vmatprep.subr.bf16.mxu0 0
        %1756 = vmatpush1.bf16.msra.mxu0 %v1265
        %1757 = vmatprep.subr.bf16.mxu0 0
        %1758 = vmatpush1.bf16.msra.mxu0 %v1268
        %1759 = vmatprep.subr.bf16.mxu0 0
        %1760 = vmatpush1.bf16.msra.mxu0 %v1271
        %1761 = vmatprep.subr.bf16.mxu0 0
        %1762 = vmatpush1.bf16.msra.mxu0 %v1274
        %1763 = vmatprep.subr.bf16.mxu0 0
        %1764 = vmatpush1.bf16.msra.mxu0 %v1277
        %1765 = vmatprep.subr.bf16.mxu0 0
        %1766 = vmatpush1.bf16.msra.mxu0 %v1280
        %1767 = vmatprep.subr.bf16.mxu0 0
        %1768 = vmatpush1.bf16.msra.mxu0 %v1283
        %1769 = vmatprep.mubr.bf16.mxu0 %v1695
        %1770 = vmatmul.mubr.bf16.gmra.mrb[0].mxu0 %v1694
        %v1771 = vpop.f32.mrb[0].mxu0
        %v1772 = vadd.f32 %v1072, %v1771
        %v1773 = vpop.f32.mrb[0].mxu0
        %v1774 = vpop.f32.mrb[0].mxu0
        %v1775 = vpop.f32.mrb[0].mxu0
        %1776 = vdwg.mxu0
        %v1777 = vadd.f32 %v1731, %v1600
        %v1778 = vadd.f32 %v1733, %v1602
        %v1779 = vxor.u32 %v1777, 2147483648
        %v1780 = vxor.u32 %v1778, 2147483648
        %v1781 = vmul.f32 %v1779, 1.442695
        %v1782 = vpow.pop %v1781
        %v1783 = vmul.f32 %v1780, 1.442695
        %v1784 = vpow.pop %v1783
        %v1785 = vadd.f32 %v1782, 1.0
        %v1786 = vadd.f32 %v1784, 1.0
        %v1787 = vrcp.pop %v1785
        %v1788 = vmul.f32 1.0, %v1787
        %v1789 = vrcp.pop %v1786
        %v1790 = vmul.f32 1.0, %v1789
        %v1791 = vmul.f32 %v1788, %v1522
        %v1792 = vpack.c.bf16 %v1791, %v1791
        %1793 = vmatprep.subr.bf16.mxu0 0
        %1794 = vmatpush1.bf16.msra.mxu0 %v1461
        %1795 = vmatprep.subr.bf16.mxu0 0
        %1796 = vmatpush1.bf16.msra.mxu0 %v1462
        %1797 = vmatprep.subr.bf16.mxu0 0
        %1798 = vmatpush1.bf16.msra.mxu0 %v1463
        %1799 = vmatprep.subr.bf16.mxu0 0
        %1800 = vmatpush1.bf16.msra.mxu0 %v1464
        %1801 = vmatprep.subr.bf16.mxu0 0
        %1802 = vmatpush1.bf16.msra.mxu0 %v1465
        %1803 = vmatprep.subr.bf16.mxu0 0
        %1804 = vmatpush1.bf16.msra.mxu0 %v1466
        %1805 = vmatprep.subr.bf16.mxu0 0
        %1806 = vmatpush1.bf16.msra.mxu0 %v1467
        %1807 = vmatprep.subr.bf16.mxu0 0
        %1808 = vmatpush1.bf16.msra.mxu0 %v1468
        %1809 = vmatprep.subr.bf16.mxu0 0
        %1810 = vmatpush1.bf16.msra.mxu0 0
        %1811 = vmatprep.subr.bf16.mxu0 0
        %1812 = vmatpush1.bf16.msra.mxu0 0
        %1813 = vmatprep.subr.bf16.mxu0 0
        %1814 = vmatpush1.bf16.msra.mxu0 0
        %1815 = vmatprep.subr.bf16.mxu0 0
        %1816 = vmatpush1.bf16.msra.mxu0 0
        %1817 = vmatprep.subr.bf16.mxu0 0
        %1818 = vmatpush1.bf16.msra.mxu0 0
        %1819 = vmatprep.subr.bf16.mxu0 0
        %1820 = vmatpush1.bf16.msra.mxu0 0
        %1821 = vmatprep.subr.bf16.mxu0 0
        %1822 = vmatpush1.bf16.msra.mxu0 0
        %1823 = vmatprep.subr.bf16.mxu0 0
        %1824 = vmatpush1.bf16.msra.mxu0 0
        %1825 = vmatprep.mubr.bf16.mxu0 0
        %1826 = vmatmul.mubr.bf16.gmra.mrb[0].mxu0 %v1792
        %v1827 = vpop.f32.mrb[0].mxu0
        %v1828 = vadd.f32 0.0, %v1827
        %v1829 = vpop.f32.mrb[0].mxu0
        %v1830 = vpop.f32.mrb[0].mxu0
        %v1831 = vpop.f32.mrb[0].mxu0
        %1832 = vdwg.mxu0
        %v1833 = vadd.f32 %v1772, %v1828
        %v1834 = vtanh.pop %v1833
        %v1835 = vsub.f32 1.0, %v1790
        %v1836 = vmul.f32 %v1835, %v1522
        %v1837 = vmul.f32 %v1790, %v1834
        %v1838 = vadd.f32 %v1836, %v1837
        %v1839 = vpack.c.bf16 %v1838, %v1838
        %1840 = vmatprep.subr.bf16.mxu0 %v807
        %1841 = vmatpush1.bf16.msra.mxu0 %v806
        %1842 = vmatprep.subr.bf16.mxu0 %v811
        %1843 = vmatpush1.bf16.msra.mxu0 %v810
        %1844 = vmatprep.subr.bf16.mxu0 %v815
        %1845 = vmatpush1.bf16.msra.mxu0 %v814
        %1846 = vmatprep.subr.bf16.mxu0 %v819
        %1847 = vmatpush1.bf16.msra.mxu0 %v818
        %1848 = vmatprep.subr.bf16.mxu0 %v823
        %1849 = vmatpush1.bf16.msra.mxu0 %v822
        %1850 = vmatprep.subr.bf16.mxu0 %v827
        %1851 = vmatpush1.bf16.msra.mxu0 %v826
        %1852 = vmatprep.subr.bf16.mxu0 %v831
        %1853 = vmatpush1.bf16.msra.mxu0 %v830
        %1854 = vmatprep.subr.bf16.mxu0 %v835
        %1855 = vmatpush1.bf16.msra.mxu0 %v834
        %1856 = vmatprep.subr.bf16.mxu0 0
        %1857 = vmatpush1.bf16.msra.mxu0 0
        %1858 = vmatprep.subr.bf16.mxu0 0
        %1859 = vmatpush1.bf16.msra.mxu0 0
        %1860 = vmatprep.subr.bf16.mxu0 0
        %1861 = vmatpush1.bf16.msra.mxu0 0
        %1862 = vmatprep.subr.bf16.mxu0 0
        %1863 = vmatpush1.bf16.msra.mxu0 0
        %1864 = vmatprep.subr.bf16.mxu0 0
        %1865 = vmatpush1.bf16.msra.mxu0 0
        %1866 = vmatprep.subr.bf16.mxu0 0
        %1867 = vmatpush1.bf16.msra.mxu0 0
        %1868 = vmatprep.subr.bf16.mxu0 0
        %1869 = vmatpush1.bf16.msra.mxu0 0
        %1870 = vmatprep.subr.bf16.mxu0 0
        %1871 = vmatpush1.bf16.msra.mxu0 0
        %1872 = vmatprep.mubr.bf16.mxu0 0
        %1873 = vmatmul.mubr.bf16.gmra.mrb[0].mxu0 %v1839
        %v1874 = vpop.f32.mrb[0].mxu0
        %v1875 = vadd.f32 %v693, %v1874
        %v1876 = vpop.f32.mrb[0].mxu0
        %v1877 = vadd.f32 %v697, %v1876
        %v1878 = vpop.f32.mrb[0].mxu0
        %v1879 = vpop.f32.mrb[0].mxu0
        %1880 = vdwg.mxu0
        %1881 = vmatprep.subr.bf16.mxu0 %v809
        %1882 = vmatpush1.bf16.msra.mxu0 %v808
        %1883 = vmatprep.subr.bf16.mxu0 %v813
        %1884 = vmatpush1.bf16.msra.mxu0 %v812
        %1885 = vmatprep.subr.bf16.mxu0 %v817
        %1886 = vmatpush1.bf16.msra.mxu0 %v816
        %1887 = vmatprep.subr.bf16.mxu0 %v821
        %1888 = vmatpush1.bf16.msra.mxu0 %v820
        %1889 = vmatprep.subr.bf16.mxu0 %v825
        %1890 = vmatpush1.bf16.msra.mxu0 %v824
        %1891 = vmatprep.subr.bf16.mxu0 %v829
        %1892 = vmatpush1.bf16.msra.mxu0 %v828
        %1893 = vmatprep.subr.bf16.mxu0 %v833
        %1894 = vmatpush1.bf16.msra.mxu0 %v832
        %1895 = vmatprep.subr.bf16.mxu0 %v837
        %1896 = vmatpush1.bf16.msra.mxu0 %v836
        %1897 = vmatprep.subr.bf16.mxu0 0
        %1898 = vmatpush1.bf16.msra.mxu0 0
        %1899 = vmatprep.subr.bf16.mxu0 0
        %1900 = vmatpush1.bf16.msra.mxu0 0
        %1901 = vmatprep.subr.bf16.mxu0 0
        %1902 = vmatpush1.bf16.msra.mxu0 0
        %1903 = vmatprep.subr.bf16.mxu0 0
        %1904 = vmatpush1.bf16.msra.mxu0 0
        %1905 = vmatprep.subr.bf16.mxu0 0
        %1906 = vmatpush1.bf16.msra.mxu0 0
        %1907 = vmatprep.subr.bf16.mxu0 0
        %1908 = vmatpush1.bf16.msra.mxu0 0
        %1909 = vmatprep.subr.bf16.mxu0 0
        %1910 = vmatpush1.bf16.msra.mxu0 0
        %1911 = vmatprep.subr.bf16.mxu0 0
        %1912 = vmatpush1.bf16.msra.mxu0 0
        %1913 = vmatprep.mubr.bf16.mxu0 0
        %1914 = vmatmul.mubr.bf16.gmra.mrb[0].mxu0 %v1839
        %v1915 = vpop.f32.mrb[0].mxu0
        %v1916 = vadd.f32 %v701, %v1915
        %v1917 = vpop.f32.mrb[0].mxu0
        %v1918 = vadd.f32 %v705, %v1917
        %v1919 = vpop.f32.mrb[0].mxu0
        %v1920 = vpop.f32.mrb[0].mxu0
        %1921 = vdwg.mxu0
        %v1922 = vpack.c.bf16 %v1875, %v1875
        %v1924 = vsel %vm957, %v1922, 0
        %1926 = vmatprep.subr.bf16.mxu0 0
        %1927 = vmatpush1.bf16.msra.mxu0 %v1924
        %1928 = vmatprep.subr.bf16.mxu0 0
        %1929 = vmatpush1.bf16.msra.mxu0 0
        %1930 = vmatprep.subr.bf16.mxu0 0
        %1931 = vmatpush1.bf16.msra.mxu0 0
        %1932 = vmatprep.subr.bf16.mxu0 0
        %1933 = vmatpush1.bf16.msra.mxu0 0
        %1934 = vmatprep.subr.bf16.mxu0 0
        %1935 = vmatpush1.bf16.msra.mxu0 0
        %1936 = vmatprep.subr.bf16.mxu0 0
        %1937 = vmatpush1.bf16.msra.mxu0 0
        %1938 = vmatprep.subr.bf16.mxu0 0
        %1939 = vmatpush1.bf16.msra.mxu0 0
        %1940 = vmatprep.subr.bf16.mxu0 0
        %1941 = vmatpush1.bf16.msra.mxu0 0
        %1942 = vmatprep.subr.bf16.mxu0 0
        %1943 = vmatpush1.bf16.msra.mxu0 0
        %1944 = vmatprep.subr.bf16.mxu0 0
        %1945 = vmatpush1.bf16.msra.mxu0 0
        %1946 = vmatprep.subr.bf16.mxu0 0
        %1947 = vmatpush1.bf16.msra.mxu0 0
        %1948 = vmatprep.subr.bf16.mxu0 0
        %1949 = vmatpush1.bf16.msra.mxu0 0
        %1950 = vmatprep.subr.bf16.mxu0 0
        %1951 = vmatpush1.bf16.msra.mxu0 0
        %1952 = vmatprep.subr.bf16.mxu0 0
        %1953 = vmatpush1.bf16.msra.mxu0 0
        %1954 = vmatprep.subr.bf16.mxu0 0
        %1955 = vmatpush1.bf16.msra.mxu0 0
        %1956 = vmatprep.subr.bf16.mxu0 0
        %1957 = vmatpush1.bf16.msra.mxu0 0
        %1958 = vmatprep.mubr.bf16.mxu0 0
        %1959 = vmatmul.mubr.bf16.gmra.mrb[0].mxu0 %v955
        %v1960 = vpop.f32.mrb[0].mxu0
        %v1961 = vadd.f32 0.0, %v1960
        %v1962 = vpop.f32.mrb[0].mxu0
        %v1963 = vpop.f32.mrb[0].mxu0
        %v1964 = vpop.f32.mrb[0].mxu0
        %1965 = vdwg.mxu0
        %v1966 = vpack.c.bf16 %v1877, %v1877
        %v1968 = vsel %vm957, %v1966, 0
        %1970 = vmatprep.subr.bf16.mxu0 0
        %1971 = vmatpush1.bf16.msra.mxu0 %v1968
        %1972 = vmatprep.subr.bf16.mxu0 0
        %1973 = vmatpush1.bf16.msra.mxu0 0
        %1974 = vmatprep.subr.bf16.mxu0 0
        %1975 = vmatpush1.bf16.msra.mxu0 0
        %1976 = vmatprep.subr.bf16.mxu0 0
        %1977 = vmatpush1.bf16.msra.mxu0 0
        %1978 = vmatprep.subr.bf16.mxu0 0
        %1979 = vmatpush1.bf16.msra.mxu0 0
        %1980 = vmatprep.subr.bf16.mxu0 0
        %1981 = vmatpush1.bf16.msra.mxu0 0
        %1982 = vmatprep.subr.bf16.mxu0 0
        %1983 = vmatpush1.bf16.msra.mxu0 0
        %1984 = vmatprep.subr.bf16.mxu0 0
        %1985 = vmatpush1.bf16.msra.mxu0 0
        %1986 = vmatprep.subr.bf16.mxu0 0
        %1987 = vmatpush1.bf16.msra.mxu0 0
        %1988 = vmatprep.subr.bf16.mxu0 0
        %1989 = vmatpush1.bf16.msra.mxu0 0
        %1990 = vmatprep.subr.bf16.mxu0 0
        %1991 = vmatpush1.bf16.msra.mxu0 0
        %1992 = vmatprep.subr.bf16.mxu0 0
        %1993 = vmatpush1.bf16.msra.mxu0 0
        %1994 = vmatprep.subr.bf16.mxu0 0
        %1995 = vmatpush1.bf16.msra.mxu0 0
        %1996 = vmatprep.subr.bf16.mxu0 0
        %1997 = vmatpush1.bf16.msra.mxu0 0
        %1998 = vmatprep.subr.bf16.mxu0 0
        %1999 = vmatpush1.bf16.msra.mxu0 0
        %2000 = vmatprep.subr.bf16.mxu0 0
        %2001 = vmatpush1.bf16.msra.mxu0 0
        %2002 = vmatprep.mubr.bf16.mxu0 0
        %2003 = vmatmul.mubr.bf16.gmra.mrb[0].mxu0 %v1013
        %v2004 = vpop.f32.mrb[0].mxu0
        %v2005 = vadd.f32 0.0, %v2004
        %v2006 = vpop.f32.mrb[0].mxu0
        %v2007 = vpop.f32.mrb[0].mxu0
        %v2008 = vpop.f32.mrb[0].mxu0
        %2009 = vdwg.mxu0
        %v2010 = vpack.c.bf16 %v1961, %v1961
        %v2011 = vpack.c.bf16 %v2005, %v2005
        %2012 = vmatprep.subr.bf16.mxu0 %v1237
        %2013 = vmatpush1.bf16.msra.mxu0 %v1236
        %2014 = vmatprep.subr.bf16.mxu0 %v1240
        %2015 = vmatpush1.bf16.msra.mxu0 %v1239
        %2016 = vmatprep.subr.bf16.mxu0 %v1243
        %2017 = vmatpush1.bf16.msra.mxu0 %v1242
        %2018 = vmatprep.subr.bf16.mxu0 %v1246
        %2019 = vmatpush1.bf16.msra.mxu0 %v1245
        %2020 = vmatprep.subr.bf16.mxu0 %v1249
        %2021 = vmatpush1.bf16.msra.mxu0 %v1248
        %2022 = vmatprep.subr.bf16.mxu0 %v1252
        %2023 = vmatpush1.bf16.msra.mxu0 %v1251
        %2024 = vmatprep.subr.bf16.mxu0 %v1255
        %2025 = vmatpush1.bf16.msra.mxu0 %v1254
        %2026 = vmatprep.subr.bf16.mxu0 %v1258
        %2027 = vmatpush1.bf16.msra.mxu0 %v1257
        %2028 = vmatprep.subr.bf16.mxu0 %v1261
        %2029 = vmatpush1.bf16.msra.mxu0 %v1260
        %2030 = vmatprep.subr.bf16.mxu0 %v1264
        %2031 = vmatpush1.bf16.msra.mxu0 %v1263
        %2032 = vmatprep.subr.bf16.mxu0 %v1267
        %2033 = vmatpush1.bf16.msra.mxu0 %v1266
        %2034 = vmatprep.subr.bf16.mxu0 %v1270
        %2035 = vmatpush1.bf16.msra.mxu0 %v1269
        %2036 = vmatprep.subr.bf16.mxu0 %v1273
        %2037 = vmatpush1.bf16.msra.mxu0 %v1272
        %2038 = vmatprep.subr.bf16.mxu0 %v1276
        %2039 = vmatpush1.bf16.msra.mxu0 %v1275
        %2040 = vmatprep.subr.bf16.mxu0 %v1279
        %2041 = vmatpush1.bf16.msra.mxu0 %v1278
        %2042 = vmatprep.subr.bf16.mxu0 %v1282
        %2043 = vmatpush1.bf16.msra.mxu0 %v1281
        %2044 = vmatprep.mubr.bf16.mxu0 %v2011
        %2045 = vmatmul.mubr.bf16.gmra.mrb[0].mxu0 %v2010
        %v2046 = vpop.f32.mrb[0].mxu0
        %v2047 = vadd.f32 %v1064, %v2046
        %v2048 = vpop.f32.mrb[0].mxu0
        %v2049 = vadd.f32 %v1068, %v2048
        %v2050 = vpop.f32.mrb[0].mxu0
        %v2051 = vpop.f32.mrb[0].mxu0
        %2052 = vdwg.mxu0
        %2053 = vmatprep.subr.bf16.mxu0 0
        %2054 = vmatpush1.bf16.msra.mxu0 %v1238
        %2055 = vmatprep.subr.bf16.mxu0 0
        %2056 = vmatpush1.bf16.msra.mxu0 %v1241
        %2057 = vmatprep.subr.bf16.mxu0 0
        %2058 = vmatpush1.bf16.msra.mxu0 %v1244
        %2059 = vmatprep.subr.bf16.mxu0 0
        %2060 = vmatpush1.bf16.msra.mxu0 %v1247
        %2061 = vmatprep.subr.bf16.mxu0 0
        %2062 = vmatpush1.bf16.msra.mxu0 %v1250
        %2063 = vmatprep.subr.bf16.mxu0 0
        %2064 = vmatpush1.bf16.msra.mxu0 %v1253
        %2065 = vmatprep.subr.bf16.mxu0 0
        %2066 = vmatpush1.bf16.msra.mxu0 %v1256
        %2067 = vmatprep.subr.bf16.mxu0 0
        %2068 = vmatpush1.bf16.msra.mxu0 %v1259
        %2069 = vmatprep.subr.bf16.mxu0 0
        %2070 = vmatpush1.bf16.msra.mxu0 %v1262
        %2071 = vmatprep.subr.bf16.mxu0 0
        %2072 = vmatpush1.bf16.msra.mxu0 %v1265
        %2073 = vmatprep.subr.bf16.mxu0 0
        %2074 = vmatpush1.bf16.msra.mxu0 %v1268
        %2075 = vmatprep.subr.bf16.mxu0 0
        %2076 = vmatpush1.bf16.msra.mxu0 %v1271
        %2077 = vmatprep.subr.bf16.mxu0 0
        %2078 = vmatpush1.bf16.msra.mxu0 %v1274
        %2079 = vmatprep.subr.bf16.mxu0 0
        %2080 = vmatpush1.bf16.msra.mxu0 %v1277
        %2081 = vmatprep.subr.bf16.mxu0 0
        %2082 = vmatpush1.bf16.msra.mxu0 %v1280
        %2083 = vmatprep.subr.bf16.mxu0 0
        %2084 = vmatpush1.bf16.msra.mxu0 %v1283
        %2085 = vmatprep.mubr.bf16.mxu0 %v2011
        %2086 = vmatmul.mubr.bf16.gmra.mrb[0].mxu0 %v2010
        %v2087 = vpop.f32.mrb[0].mxu0
        %v2088 = vadd.f32 %v1072, %v2087
        %v2089 = vpop.f32.mrb[0].mxu0
        %v2090 = vpop.f32.mrb[0].mxu0
        %v2091 = vpop.f32.mrb[0].mxu0
        %2092 = vdwg.mxu0
        %v2093 = vadd.f32 %v2047, %v1916
        %v2094 = vadd.f32 %v2049, %v1918
        %v2095 = vxor.u32 %v2093, 2147483648
        %v2096 = vxor.u32 %v2094, 2147483648
        %v2097 = vmul.f32 %v2095, 1.442695
        %v2098 = vpow.pop %v2097
        %v2099 = vmul.f32 %v2096, 1.442695
        %v2100 = vpow.pop %v2099
        %v2101 = vadd.f32 %v2098, 1.0
        %v2102 = vadd.f32 %v2100, 1.0
        %v2103 = vrcp.pop %v2101
        %v2104 = vmul.f32 1.0, %v2103
        %v2105 = vrcp.pop %v2102
        %v2106 = vmul.f32 1.0, %v2105
        %v2107 = vmul.f32 %v2104, %v1838
        %v2108 = vpack.c.bf16 %v2107, %v2107
        %2109 = vmatprep.subr.bf16.mxu0 0
        %2110 = vmatpush1.bf16.msra.mxu0 %v1461
        %2111 = vmatprep.subr.bf16.mxu0 0
        %2112 = vmatpush1.bf16.msra.mxu0 %v1462
        %2113 = vmatprep.subr.bf16.mxu0 0
        %2114 = vmatpush1.bf16.msra.mxu0 %v1463
        %2115 = vmatprep.subr.bf16.mxu0 0
        %2116 = vmatpush1.bf16.msra.mxu0 %v1464
        %2117 = vmatprep.subr.bf16.mxu0 0
        %2118 = vmatpush1.bf16.msra.mxu0 %v1465
        %2119 = vmatprep.subr.bf16.mxu0 0
        %2120 = vmatpush1.bf16.msra.mxu0 %v1466
        %2121 = vmatprep.subr.bf16.mxu0 0
        %2122 = vmatpush1.bf16.msra.mxu0 %v1467
        %2123 = vmatprep.subr.bf16.mxu0 0
        %2124 = vmatpush1.bf16.msra.mxu0 %v1468
        %2125 = vmatprep.subr.bf16.mxu0 0
        %2126 = vmatpush1.bf16.msra.mxu0 0
        %2127 = vmatprep.subr.bf16.mxu0 0
        %2128 = vmatpush1.bf16.msra.mxu0 0
        %2129 = vmatprep.subr.bf16.mxu0 0
        %2130 = vmatpush1.bf16.msra.mxu0 0
        %2131 = vmatprep.subr.bf16.mxu0 0
        %2132 = vmatpush1.bf16.msra.mxu0 0
        %2133 = vmatprep.subr.bf16.mxu0 0
        %2134 = vmatpush1.bf16.msra.mxu0 0
        %2135 = vmatprep.subr.bf16.mxu0 0
        %2136 = vmatpush1.bf16.msra.mxu0 0
        %2137 = vmatprep.subr.bf16.mxu0 0
        %2138 = vmatpush1.bf16.msra.mxu0 0
        %2139 = vmatprep.subr.bf16.mxu0 0
        %2140 = vmatpush1.bf16.msra.mxu0 0
        %2141 = vmatprep.mubr.bf16.mxu0 0
        %2142 = vmatmul.mubr.bf16.gmra.mrb[0].mxu0 %v2108
        %v2143 = vpop.f32.mrb[0].mxu0
        %v2144 = vadd.f32 0.0, %v2143
        %v2145 = vpop.f32.mrb[0].mxu0
        %v2146 = vpop.f32.mrb[0].mxu0
        %v2147 = vpop.f32.mrb[0].mxu0
        %2148 = vdwg.mxu0
        %v2149 = vadd.f32 %v2088, %v2144
        %v2150 = vtanh.pop %v2149
        %v2151 = vsub.f32 1.0, %v2106
        %v2152 = vmul.f32 %v2151, %v1838
        %v2153 = vmul.f32 %v2106, %v2150
        %v2154 = vadd.f32 %v2152, %v2153
        %v2155 = vpack.c.bf16 %v2154, %v2154
        %2156 = vmatprep.subr.bf16.mxu0 %v807
        %2157 = vmatpush1.bf16.msra.mxu0 %v806
        %2158 = vmatprep.subr.bf16.mxu0 %v811
        %2159 = vmatpush1.bf16.msra.mxu0 %v810
        %2160 = vmatprep.subr.bf16.mxu0 %v815
        %2161 = vmatpush1.bf16.msra.mxu0 %v814
        %2162 = vmatprep.subr.bf16.mxu0 %v819
        %2163 = vmatpush1.bf16.msra.mxu0 %v818
        %2164 = vmatprep.subr.bf16.mxu0 %v823
        %2165 = vmatpush1.bf16.msra.mxu0 %v822
        %2166 = vmatprep.subr.bf16.mxu0 %v827
        %2167 = vmatpush1.bf16.msra.mxu0 %v826
        %2168 = vmatprep.subr.bf16.mxu0 %v831
        %2169 = vmatpush1.bf16.msra.mxu0 %v830
        %2170 = vmatprep.subr.bf16.mxu0 %v835
        %2171 = vmatpush1.bf16.msra.mxu0 %v834
        %2172 = vmatprep.subr.bf16.mxu0 0
        %2173 = vmatpush1.bf16.msra.mxu0 0
        %2174 = vmatprep.subr.bf16.mxu0 0
        %2175 = vmatpush1.bf16.msra.mxu0 0
        %2176 = vmatprep.subr.bf16.mxu0 0
        %2177 = vmatpush1.bf16.msra.mxu0 0
        %2178 = vmatprep.subr.bf16.mxu0 0
        %2179 = vmatpush1.bf16.msra.mxu0 0
        %2180 = vmatprep.subr.bf16.mxu0 0
        %2181 = vmatpush1.bf16.msra.mxu0 0
        %2182 = vmatprep.subr.bf16.mxu0 0
        %2183 = vmatpush1.bf16.msra.mxu0 0
        %2184 = vmatprep.subr.bf16.mxu0 0
        %2185 = vmatpush1.bf16.msra.mxu0 0
        %2186 = vmatprep.subr.bf16.mxu0 0
        %2187 = vmatpush1.bf16.msra.mxu0 0
        %2188 = vmatprep.mubr.bf16.mxu0 0
        %2189 = vmatmul.mubr.bf16.gmra.mrb[0].mxu0 %v2155
        %v2190 = vpop.f32.mrb[0].mxu0
        %v2191 = vadd.f32 %v693, %v2190
        %v2192 = vpop.f32.mrb[0].mxu0
        %v2193 = vadd.f32 %v697, %v2192
        %v2194 = vpop.f32.mrb[0].mxu0
        %v2195 = vpop.f32.mrb[0].mxu0
        %2196 = vdwg.mxu0
        %2197 = vmatprep.subr.bf16.mxu0 %v809
        %2198 = vmatpush1.bf16.msra.mxu0 %v808
        %2199 = vmatprep.subr.bf16.mxu0 %v813
        %2200 = vmatpush1.bf16.msra.mxu0 %v812
        %2201 = vmatprep.subr.bf16.mxu0 %v817
        %2202 = vmatpush1.bf16.msra.mxu0 %v816
        %2203 = vmatprep.subr.bf16.mxu0 %v821
        %2204 = vmatpush1.bf16.msra.mxu0 %v820
        %2205 = vmatprep.subr.bf16.mxu0 %v825
        %2206 = vmatpush1.bf16.msra.mxu0 %v824
        %2207 = vmatprep.subr.bf16.mxu0 %v829
        %2208 = vmatpush1.bf16.msra.mxu0 %v828
        %2209 = vmatprep.subr.bf16.mxu0 %v833
        %2210 = vmatpush1.bf16.msra.mxu0 %v832
        %2211 = vmatprep.subr.bf16.mxu0 %v837
        %2212 = vmatpush1.bf16.msra.mxu0 %v836
        %2213 = vmatprep.subr.bf16.mxu0 0
        %2214 = vmatpush1.bf16.msra.mxu0 0
        %2215 = vmatprep.subr.bf16.mxu0 0
        %2216 = vmatpush1.bf16.msra.mxu0 0
        %2217 = vmatprep.subr.bf16.mxu0 0
        %2218 = vmatpush1.bf16.msra.mxu0 0
        %2219 = vmatprep.subr.bf16.mxu0 0
        %2220 = vmatpush1.bf16.msra.mxu0 0
        %2221 = vmatprep.subr.bf16.mxu0 0
        %2222 = vmatpush1.bf16.msra.mxu0 0
        %2223 = vmatprep.subr.bf16.mxu0 0
        %2224 = vmatpush1.bf16.msra.mxu0 0
        %2225 = vmatprep.subr.bf16.mxu0 0
        %2226 = vmatpush1.bf16.msra.mxu0 0
        %2227 = vmatprep.subr.bf16.mxu0 0
        %2228 = vmatpush1.bf16.msra.mxu0 0
        %2229 = vmatprep.mubr.bf16.mxu0 0
        %2230 = vmatmul.mubr.bf16.gmra.mrb[0].mxu0 %v2155
        %v2231 = vpop.f32.mrb[0].mxu0
        %v2232 = vadd.f32 %v701, %v2231
        %v2233 = vpop.f32.mrb[0].mxu0
        %v2234 = vadd.f32 %v705, %v2233
        %v2235 = vpop.f32.mrb[0].mxu0
        %v2236 = vpop.f32.mrb[0].mxu0
        %2237 = vdwg.mxu0
        %v2238 = vpack.c.bf16 %v2191, %v2191
        %v2240 = vsel %vm957, %v2238, 0
        %2242 = vmatprep.subr.bf16.mxu0 0
        %2243 = vmatpush1.bf16.msra.mxu0 %v2240
        %2244 = vmatprep.subr.bf16.mxu0 0
        %2245 = vmatpush1.bf16.msra.mxu0 0
        %2246 = vmatprep.subr.bf16.mxu0 0
        %2247 = vmatpush1.bf16.msra.mxu0 0
        %2248 = vmatprep.subr.bf16.mxu0 0
        %2249 = vmatpush1.bf16.msra.mxu0 0
        %2250 = vmatprep.subr.bf16.mxu0 0
        %2251 = vmatpush1.bf16.msra.mxu0 0
        %2252 = vmatprep.subr.bf16.mxu0 0
        %2253 = vmatpush1.bf16.msra.mxu0 0
        %2254 = vmatprep.subr.bf16.mxu0 0
        %2255 = vmatpush1.bf16.msra.mxu0 0
        %2256 = vmatprep.subr.bf16.mxu0 0
        %2257 = vmatpush1.bf16.msra.mxu0 0
        %2258 = vmatprep.subr.bf16.mxu0 0
        %2259 = vmatpush1.bf16.msra.mxu0 0
        %2260 = vmatprep.subr.bf16.mxu0 0
        %2261 = vmatpush1.bf16.msra.mxu0 0
        %2262 = vmatprep.subr.bf16.mxu0 0
        %2263 = vmatpush1.bf16.msra.mxu0 0
        %2264 = vmatprep.subr.bf16.mxu0 0
        %2265 = vmatpush1.bf16.msra.mxu0 0
        %2266 = vmatprep.subr.bf16.mxu0 0
        %2267 = vmatpush1.bf16.msra.mxu0 0
        %2268 = vmatprep.subr.bf16.mxu0 0
        %2269 = vmatpush1.bf16.msra.mxu0 0
        %2270 = vmatprep.subr.bf16.mxu0 0
        %2271 = vmatpush1.bf16.msra.mxu0 0
        %2272 = vmatprep.subr.bf16.mxu0 0
        %2273 = vmatpush1.bf16.msra.mxu0 0
        %2274 = vmatprep.mubr.bf16.mxu0 0
        %2275 = vmatmul.mubr.bf16.gmra.mrb[0].mxu0 %v955
        %v2276 = vpop.f32.mrb[0].mxu0
        %v2277 = vadd.f32 0.0, %v2276
        %v2278 = vpop.f32.mrb[0].mxu0
        %v2279 = vpop.f32.mrb[0].mxu0
        %v2280 = vpop.f32.mrb[0].mxu0
        %2281 = vdwg.mxu0
        %v2282 = vpack.c.bf16 %v2193, %v2193
        %v2284 = vsel %vm957, %v2282, 0
        %2286 = vmatprep.subr.bf16.mxu0 0
        %2287 = vmatpush1.bf16.msra.mxu0 %v2284
        %2288 = vmatprep.subr.bf16.mxu0 0
        %2289 = vmatpush1.bf16.msra.mxu0 0
        %2290 = vmatprep.subr.bf16.mxu0 0
        %2291 = vmatpush1.bf16.msra.mxu0 0
        %2292 = vmatprep.subr.bf16.mxu0 0
        %2293 = vmatpush1.bf16.msra.mxu0 0
        %2294 = vmatprep.subr.bf16.mxu0 0
        %2295 = vmatpush1.bf16.msra.mxu0 0
        %2296 = vmatprep.subr.bf16.mxu0 0
        %2297 = vmatpush1.bf16.msra.mxu0 0
        %2298 = vmatprep.subr.bf16.mxu0 0
        %2299 = vmatpush1.bf16.msra.mxu0 0
        %2300 = vmatprep.subr.bf16.mxu0 0
        %2301 = vmatpush1.bf16.msra.mxu0 0
        %2302 = vmatprep.subr.bf16.mxu0 0
        %2303 = vmatpush1.bf16.msra.mxu0 0
        %2304 = vmatprep.subr.bf16.mxu0 0
        %2305 = vmatpush1.bf16.msra.mxu0 0
        %2306 = vmatprep.subr.bf16.mxu0 0
        %2307 = vmatpush1.bf16.msra.mxu0 0
        %2308 = vmatprep.subr.bf16.mxu0 0
        %2309 = vmatpush1.bf16.msra.mxu0 0
        %2310 = vmatprep.subr.bf16.mxu0 0
        %2311 = vmatpush1.bf16.msra.mxu0 0
        %2312 = vmatprep.subr.bf16.mxu0 0
        %2313 = vmatpush1.bf16.msra.mxu0 0
        %2314 = vmatprep.subr.bf16.mxu0 0
        %2315 = vmatpush1.bf16.msra.mxu0 0
        %2316 = vmatprep.subr.bf16.mxu0 0
        %2317 = vmatpush1.bf16.msra.mxu0 0
        %2318 = vmatprep.mubr.bf16.mxu0 0
        %2319 = vmatmul.mubr.bf16.gmra.mrb[0].mxu0 %v1013
        %v2320 = vpop.f32.mrb[0].mxu0
        %v2321 = vadd.f32 0.0, %v2320
        %v2322 = vpop.f32.mrb[0].mxu0
        %v2323 = vpop.f32.mrb[0].mxu0
        %v2324 = vpop.f32.mrb[0].mxu0
        %2325 = vdwg.mxu0
        %v2326 = vpack.c.bf16 %v2277, %v2277
        %v2327 = vpack.c.bf16 %v2321, %v2321
        %2328 = vmatprep.subr.bf16.mxu0 %v1237
        %2329 = vmatpush1.bf16.msra.mxu0 %v1236
        %2330 = vmatprep.subr.bf16.mxu0 %v1240
        %2331 = vmatpush1.bf16.msra.mxu0 %v1239
        %2332 = vmatprep.subr.bf16.mxu0 %v1243
        %2333 = vmatpush1.bf16.msra.mxu0 %v1242
        %2334 = vmatprep.subr.bf16.mxu0 %v1246
        %2335 = vmatpush1.bf16.msra.mxu0 %v1245
        %2336 = vmatprep.subr.bf16.mxu0 %v1249
        %2337 = vmatpush1.bf16.msra.mxu0 %v1248
        %2338 = vmatprep.subr.bf16.mxu0 %v1252
        %2339 = vmatpush1.bf16.msra.mxu0 %v1251
        %2340 = vmatprep.subr.bf16.mxu0 %v1255
        %2341 = vmatpush1.bf16.msra.mxu0 %v1254
        %2342 = vmatprep.subr.bf16.mxu0 %v1258
        %2343 = vmatpush1.bf16.msra.mxu0 %v1257
        %2344 = vmatprep.subr.bf16.mxu0 %v1261
        %2345 = vmatpush1.bf16.msra.mxu0 %v1260
        %2346 = vmatprep.subr.bf16.mxu0 %v1264
        %2347 = vmatpush1.bf16.msra.mxu0 %v1263
        %2348 = vmatprep.subr.bf16.mxu0 %v1267
        %2349 = vmatpush1.bf16.msra.mxu0 %v1266
        %2350 = vmatprep.subr.bf16.mxu0 %v1270
        %2351 = vmatpush1.bf16.msra.mxu0 %v1269
        %2352 = vmatprep.subr.bf16.mxu0 %v1273
        %2353 = vmatpush1.bf16.msra.mxu0 %v1272
        %2354 = vmatprep.subr.bf16.mxu0 %v1276
        %2355 = vmatpush1.bf16.msra.mxu0 %v1275
        %2356 = vmatprep.subr.bf16.mxu0 %v1279
        %2357 = vmatpush1.bf16.msra.mxu0 %v1278
        %2358 = vmatprep.subr.bf16.mxu0 %v1282
        %2359 = vmatpush1.bf16.msra.mxu0 %v1281
        %2360 = vmatprep.mubr.bf16.mxu0 %v2327
        %2361 = vmatmul.mubr.bf16.gmra.mrb[0].mxu0 %v2326
        %v2362 = vpop.f32.mrb[0].mxu0
        %v2363 = vadd.f32 %v1064, %v2362
        %v2364 = vpop.f32.mrb[0].mxu0
        %v2365 = vadd.f32 %v1068, %v2364
        %v2366 = vpop.f32.mrb[0].mxu0
        %v2367 = vpop.f32.mrb[0].mxu0
        %2368 = vdwg.mxu0
        %2369 = vmatprep.subr.bf16.mxu0 0
        %2370 = vmatpush1.bf16.msra.mxu0 %v1238
        %2371 = vmatprep.subr.bf16.mxu0 0
        %2372 = vmatpush1.bf16.msra.mxu0 %v1241
        %2373 = vmatprep.subr.bf16.mxu0 0
        %2374 = vmatpush1.bf16.msra.mxu0 %v1244
        %2375 = vmatprep.subr.bf16.mxu0 0
        %2376 = vmatpush1.bf16.msra.mxu0 %v1247
        %2377 = vmatprep.subr.bf16.mxu0 0
        %2378 = vmatpush1.bf16.msra.mxu0 %v1250
        %2379 = vmatprep.subr.bf16.mxu0 0
        %2380 = vmatpush1.bf16.msra.mxu0 %v1253
        %2381 = vmatprep.subr.bf16.mxu0 0
        %2382 = vmatpush1.bf16.msra.mxu0 %v1256
        %2383 = vmatprep.subr.bf16.mxu0 0
        %2384 = vmatpush1.bf16.msra.mxu0 %v1259
        %2385 = vmatprep.subr.bf16.mxu0 0
        %2386 = vmatpush1.bf16.msra.mxu0 %v1262
        %2387 = vmatprep.subr.bf16.mxu0 0
        %2388 = vmatpush1.bf16.msra.mxu0 %v1265
        %2389 = vmatprep.subr.bf16.mxu0 0
        %2390 = vmatpush1.bf16.msra.mxu0 %v1268
        %2391 = vmatprep.subr.bf16.mxu0 0
        %2392 = vmatpush1.bf16.msra.mxu0 %v1271
        %2393 = vmatprep.subr.bf16.mxu0 0
        %2394 = vmatpush1.bf16.msra.mxu0 %v1274
        %2395 = vmatprep.subr.bf16.mxu0 0
        %2396 = vmatpush1.bf16.msra.mxu0 %v1277
        %2397 = vmatprep.subr.bf16.mxu0 0
        %2398 = vmatpush1.bf16.msra.mxu0 %v1280
        %2399 = vmatprep.subr.bf16.mxu0 0
        %2400 = vmatpush1.bf16.msra.mxu0 %v1283
        %2401 = vmatprep.mubr.bf16.mxu0 %v2327
        %2402 = vmatmul.mubr.bf16.gmra.mrb[0].mxu0 %v2326
        %v2403 = vpop.f32.mrb[0].mxu0
        %v2404 = vadd.f32 %v1072, %v2403
        %v2405 = vpop.f32.mrb[0].mxu0
        %v2406 = vpop.f32.mrb[0].mxu0
        %v2407 = vpop.f32.mrb[0].mxu0
        %2408 = vdwg.mxu0
        %v2409 = vadd.f32 %v2363, %v2232
        %v2410 = vadd.f32 %v2365, %v2234
        %v2411 = vxor.u32 %v2409, 2147483648
        %v2412 = vxor.u32 %v2410, 2147483648
        %v2413 = vmul.f32 %v2411, 1.442695
        %v2414 = vpow.pop %v2413
        %v2415 = vmul.f32 %v2412, 1.442695
        %v2416 = vpow.pop %v2415
        %v2417 = vadd.f32 %v2414, 1.0
        %v2418 = vadd.f32 %v2416, 1.0
        %v2419 = vrcp.pop %v2417
        %v2420 = vmul.f32 1.0, %v2419
        %v2421 = vrcp.pop %v2418
        %v2422 = vmul.f32 1.0, %v2421
        %v2423 = vmul.f32 %v2420, %v2154
        %v2424 = vpack.c.bf16 %v2423, %v2423
        %2425 = vmatprep.subr.bf16.mxu0 0
        %2426 = vmatpush1.bf16.msra.mxu0 %v1461
        %2427 = vmatprep.subr.bf16.mxu0 0
        %2428 = vmatpush1.bf16.msra.mxu0 %v1462
        %2429 = vmatprep.subr.bf16.mxu0 0
        %2430 = vmatpush1.bf16.msra.mxu0 %v1463
        %2431 = vmatprep.subr.bf16.mxu0 0
        %2432 = vmatpush1.bf16.msra.mxu0 %v1464
        %2433 = vmatprep.subr.bf16.mxu0 0
        %2434 = vmatpush1.bf16.msra.mxu0 %v1465
        %2435 = vmatprep.subr.bf16.mxu0 0
        %2436 = vmatpush1.bf16.msra.mxu0 %v1466
        %2437 = vmatprep.subr.bf16.mxu0 0
        %2438 = vmatpush1.bf16.msra.mxu0 %v1467
        %2439 = vmatprep.subr.bf16.mxu0 0
        %2440 = vmatpush1.bf16.msra.mxu0 %v1468
        %2441 = vmatprep.subr.bf16.mxu0 0
        %2442 = vmatpush1.bf16.msra.mxu0 0
        %2443 = vmatprep.subr.bf16.mxu0 0
        %2444 = vmatpush1.bf16.msra.mxu0 0
        %2445 = vmatprep.subr.bf16.mxu0 0
        %2446 = vmatpush1.bf16.msra.mxu0 0
        %2447 = vmatprep.subr.bf16.mxu0 0
        %2448 = vmatpush1.bf16.msra.mxu0 0
        %2449 = vmatprep.subr.bf16.mxu0 0
        %2450 = vmatpush1.bf16.msra.mxu0 0
        %2451 = vmatprep.subr.bf16.mxu0 0
        %2452 = vmatpush1.bf16.msra.mxu0 0
        %2453 = vmatprep.subr.bf16.mxu0 0
        %2454 = vmatpush1.bf16.msra.mxu0 0
        %2455 = vmatprep.subr.bf16.mxu0 0
        %2456 = vmatpush1.bf16.msra.mxu0 0
        %2457 = vmatprep.mubr.bf16.mxu0 0
        %2458 = vmatmul.mubr.bf16.gmra.mrb[0].mxu0 %v2424
        %v2459 = vpop.f32.mrb[0].mxu0
        %v2460 = vadd.f32 0.0, %v2459
        %v2461 = vpop.f32.mrb[0].mxu0
        %v2462 = vpop.f32.mrb[0].mxu0
        %v2463 = vpop.f32.mrb[0].mxu0
        %2464 = vdwg.mxu0
        %v2465 = vadd.f32 %v2404, %v2460
        %v2466 = vtanh.pop %v2465
        %v2467 = vsub.f32 1.0, %v2422
        %v2468 = vmul.f32 %v2467, %v2154
        %v2469 = vmul.f32 %v2422, %v2466
        %v2470 = vadd.f32 %v2468, %v2469
        %v2471 = vpack.c.bf16 %v2470, %v2470
        %v2472 = vld [vmem:[%s10] sm:$0xf]
        %v2473 = vld [vmem:[%s10 + $0x4] sm:$0xf]
        %v2474 = vld [vmem:[%s10 + $0x8] sm:$0xf]
        %v2475 = vld [vmem:[%s10 + $0xc] sm:$0xf]
        %v2476 = vld [vmem:[%s10 + $0x10] sm:$0xf]
        %v2477 = vld [vmem:[%s10 + $0x14] sm:$0xf]
        %v2478 = vld [vmem:[%s10 + $0x18] sm:$0xf]
        %v2479 = vld [vmem:[%s10 + $0x1c] sm:$0xf]
        %v2480 = vld [vmem:[%s10 + $0x20] sm:$0xf]
        %v2481 = vld [vmem:[%s10 + $0x24] sm:$0xf]
        %v2482 = vld [vmem:[%s10 + $0x28] sm:$0xf]
        %v2483 = vld [vmem:[%s10 + $0x2c] sm:$0xf]
        %v2484 = vld [vmem:[%s10 + $0x30] sm:$0xf]
        %v2485 = vld [vmem:[%s10 + $0x34] sm:$0xf]
        %v2486 = vld [vmem:[%s10 + $0x38] sm:$0xf]
        %v2487 = vld [vmem:[%s10 + $0x3c] sm:$0xf]
        %v2488 = vld [vmem:[%s10 + $0x40] sm:$0xf]
        %v2489 = vld [vmem:[%s10 + $0x44] sm:$0xf]
        %v2490 = vld [vmem:[%s10 + $0x48] sm:$0xf]
        %v2491 = vld [vmem:[%s10 + $0x4c] sm:$0xf]
        %v2492 = vld [vmem:[%s11] sm:$0x1]
        %v2494 = vlaneseq
        %v2495 = vshrl.u32 %v2494, 7
        %v2496 = vsub.s32 0, %v2495
        %v2497 = vrot.slane %v2492, %v2496
        %v2519 = vunpack.c.l.b16 %v2472
        %v2520 = vunpack.c.l.b16 %v2473
        %v2521 = vunpack.c.l.b16 %v2474
        %v2522 = vunpack.c.l.b16 %v2475
        %v2523 = vunpack.c.l.b16 %v2476
        %v2524 = vunpack.c.l.b16 %v2477
        %v2525 = vunpack.c.l.b16 %v2478
        %v2526 = vunpack.c.l.b16 %v2479
        %v2527 = vunpack.c.l.b16 %v2480
        %v2528 = vunpack.c.l.b16 %v2481
        %v2529 = vunpack.c.l.b16 %v2482
        %v2530 = vunpack.c.l.b16 %v2483
        %v2531 = vunpack.c.l.b16 %v2484
        %v2532 = vunpack.c.l.b16 %v2485
        %v2533 = vunpack.c.l.b16 %v2486
        %v2534 = vunpack.c.l.b16 %v2487
        %v2535 = vunpack.c.l.b16 %v2488
        %v2536 = vunpack.c.l.b16 %v2489
        %v2537 = vunpack.c.l.b16 %v2490
        %v2538 = vunpack.c.l.b16 %v2491
        %v2539 = vpack.c.b16 %v2520, %v2519
        %v2540 = vpack.c.b16 %v2522, %v2521
        %v2541 = vpack.c.b16 %v2524, %v2523
        %v2542 = vpack.c.b16 %v2526, %v2525
        %v2543 = vpack.c.b16 %v2528, %v2527
        %v2544 = vpack.c.b16 %v2530, %v2529
        %v2545 = vpack.c.b16 %v2532, %v2531
        %v2546 = vpack.c.b16 %v2534, %v2533
        %v2547 = vpack.c.b16 %v2536, %v2535
        %v2548 = vpack.c.b16 %v2538, %v2537
        %2559 = vmatprep.subr.bf16.mxu0 0
        %2560 = vmatpush1.bf16.msra.mxu0 %v2539
        %2561 = vmatprep.subr.bf16.mxu0 0
        %2562 = vmatpush1.bf16.msra.mxu0 %v2540
        %2563 = vmatprep.subr.bf16.mxu0 0
        %2564 = vmatpush1.bf16.msra.mxu0 %v2541
        %2565 = vmatprep.subr.bf16.mxu0 0
        %2566 = vmatpush1.bf16.msra.mxu0 %v2542
        %2567 = vmatprep.subr.bf16.mxu0 0
        %2568 = vmatpush1.bf16.msra.mxu0 %v2543
        %2569 = vmatprep.subr.bf16.mxu0 0
        %2570 = vmatpush1.bf16.msra.mxu0 %v2544
        %2571 = vmatprep.subr.bf16.mxu0 0
        %2572 = vmatpush1.bf16.msra.mxu0 %v2545
        %2573 = vmatprep.subr.bf16.mxu0 0
        %2574 = vmatpush1.bf16.msra.mxu0 %v2546
        %2575 = vmatprep.subr.bf16.mxu0 0
        %2576 = vmatpush1.bf16.msra.mxu0 %v2547
        %2577 = vmatprep.subr.bf16.mxu0 0
        %2578 = vmatpush1.bf16.msra.mxu0 %v2548
        %2579 = vmatprep.subr.bf16.mxu0 0
        %2580 = vmatpush1.bf16.msra.mxu0 0
        %2581 = vmatprep.subr.bf16.mxu0 0
        %2582 = vmatpush1.bf16.msra.mxu0 0
        %2583 = vmatprep.subr.bf16.mxu0 0
        %2584 = vmatpush1.bf16.msra.mxu0 0
        %2585 = vmatprep.subr.bf16.mxu0 0
        %2586 = vmatpush1.bf16.msra.mxu0 0
        %2587 = vmatprep.subr.bf16.mxu0 0
        %2588 = vmatpush1.bf16.msra.mxu0 0
        %2589 = vmatprep.subr.bf16.mxu0 0
        %2590 = vmatpush1.bf16.msra.mxu0 0
        %2591 = vmatprep.mubr.bf16.mxu0 %v638
        %2592 = vmatmul.mubr.bf16.gmra.mrb[0].mxu0 %v2471
        %v2593 = vpop.f32.mrb[0].mxu0
        %v2594 = vadd.f32 %v2497, %v2593
        %v2595 = vpop.f32.mrb[0].mxu0
        %v2596 = vpop.f32.mrb[0].mxu0
        %v2597 = vpop.f32.mrb[0].mxu0
        %2598 = vdwg.mxu0
        %v2599 = vtanh.pop %v2594
        %v2600 = vld [vmem:[%s12] sm:$0xf]
        %v2601 = vld [vmem:[%s12 + $0x4] sm:$0xf]
        %v2602 = vld [vmem:[%s12 + $0x8] sm:$0xf]
        %v2603 = vld [vmem:[%s12 + $0xc] sm:$0xf]
        %v2604 = vld [vmem:[%s12 + $0x10] sm:$0xf]
        %v2605 = vld [vmem:[%s12 + $0x14] sm:$0xf]
        %v2606 = vld [vmem:[%s12 + $0x18] sm:$0xf]
        %v2607 = vld [vmem:[%s12 + $0x1c] sm:$0xf]
        %v2608 = vld [vmem:[%s12 + $0x20] sm:$0xf]
        %v2609 = vld [vmem:[%s12 + $0x24] sm:$0xf]
        %v2610 = vld [vmem:[%s12 + $0x28] sm:$0xf]
        %v2611 = vld [vmem:[%s12 + $0x2c] sm:$0xf]
        %v2612 = vld [vmem:[%s12 + $0x30] sm:$0xf]
        %v2613 = vld [vmem:[%s12 + $0x34] sm:$0xf]
        %v2614 = vld [vmem:[%s12 + $0x38] sm:$0xf]
        %v2615 = vld [vmem:[%s12 + $0x3c] sm:$0xf]
        %v2616 = vpack.c.bf16 %v2599, %v2599
        %v2617 = vld [vmem:[%s13] sm:$0x1]
        %v2619 = vlaneseq
        %v2620 = vshrl.u32 %v2619, 7
        %v2621 = vsub.s32 0, %v2620
        %v2622 = vrot.slane %v2617, %v2621
        %v2640 = vunpack.c.l.b16 %v2600
        %v2641 = vunpack.c.l.b16 %v2601
        %v2642 = vunpack.c.l.b16 %v2602
        %v2643 = vunpack.c.l.b16 %v2603
        %v2644 = vunpack.c.l.b16 %v2604
        %v2645 = vunpack.c.l.b16 %v2605
        %v2646 = vunpack.c.l.b16 %v2606
        %v2647 = vunpack.c.l.b16 %v2607
        %v2648 = vunpack.c.l.b16 %v2608
        %v2649 = vunpack.c.l.b16 %v2609
        %v2650 = vunpack.c.l.b16 %v2610
        %v2651 = vunpack.c.l.b16 %v2611
        %v2652 = vunpack.c.l.b16 %v2612
        %v2653 = vunpack.c.l.b16 %v2613
        %v2654 = vunpack.c.l.b16 %v2614
        %v2655 = vunpack.c.l.b16 %v2615
        %v2656 = vpack.c.b16 %v2641, %v2640
        %v2657 = vpack.c.b16 %v2643, %v2642
        %v2658 = vpack.c.b16 %v2645, %v2644
        %v2659 = vpack.c.b16 %v2647, %v2646
        %v2660 = vpack.c.b16 %v2649, %v2648
        %v2661 = vpack.c.b16 %v2651, %v2650
        %v2662 = vpack.c.b16 %v2653, %v2652
        %v2663 = vpack.c.b16 %v2655, %v2654
        %2672 = vmatprep.subr.bf16.mxu0 0
        %2673 = vmatpush1.bf16.msra.mxu0 %v2656
        %2674 = vmatprep.subr.bf16.mxu0 0
        %2675 = vmatpush1.bf16.msra.mxu0 %v2657
        %2676 = vmatprep.subr.bf16.mxu0 0
        %2677 = vmatpush1.bf16.msra.mxu0 %v2658
        %2678 = vmatprep.subr.bf16.mxu0 0
        %2679 = vmatpush1.bf16.msra.mxu0 %v2659
        %2680 = vmatprep.subr.bf16.mxu0 0
        %2681 = vmatpush1.bf16.msra.mxu0 %v2660
        %2682 = vmatprep.subr.bf16.mxu0 0
        %2683 = vmatpush1.bf16.msra.mxu0 %v2661
        %2684 = vmatprep.subr.bf16.mxu0 0
        %2685 = vmatpush1.bf16.msra.mxu0 %v2662
        %2686 = vmatprep.subr.bf16.mxu0 0
        %2687 = vmatpush1.bf16.msra.mxu0 %v2663
        %2688 = vmatprep.subr.bf16.mxu0 0
        %2689 = vmatpush1.bf16.msra.mxu0 0
        %2690 = vmatprep.subr.bf16.mxu0 0
        %2691 = vmatpush1.bf16.msra.mxu0 0
        %2692 = vmatprep.subr.bf16.mxu0 0
        %2693 = vmatpush1.bf16.msra.mxu0 0
        %2694 = vmatprep.subr.bf16.mxu0 0
        %2695 = vmatpush1.bf16.msra.mxu0 0
        %2696 = vmatprep.subr.bf16.mxu0 0
        %2697 = vmatpush1.bf16.msra.mxu0 0
        %2698 = vmatprep.subr.bf16.mxu0 0
        %2699 = vmatpush1.bf16.msra.mxu0 0
        %2700 = vmatprep.subr.bf16.mxu0 0
        %2701 = vmatpush1.bf16.msra.mxu0 0
        %2702 = vmatprep.subr.bf16.mxu0 0
        %2703 = vmatpush1.bf16.msra.mxu0 0
        %2704 = vmatprep.mubr.bf16.mxu0 0
        %2705 = vmatmul.mubr.bf16.gmra.mrb[0].mxu0 %v2616
        %v2706 = vpop.f32.mrb[0].mxu0
        %v2707 = vadd.f32 %v2622, %v2706
        %v2708 = vpop.f32.mrb[0].mxu0
        %v2709 = vpop.f32.mrb[0].mxu0
        %v2710 = vpop.f32.mrb[0].mxu0
        %2711 = vdwg.mxu0
        %2712 = vst [vmem:[%s482] sm:$0xf] %v2707
        %s2713 = sand.u32 %s345, 1
        %s2714 = scalar_lea.sflag [#allocation3], %s2713
        %s2715 = sand.u32 %s345, 1
        %s2716 = smul.addr %s2715, 4
        %s2717 = scalar_lea.vmem [#allocation2], %s2716
        // Predicated region
        $region77: #{e2e_forward.5} parent=75 // pred_check
          %p2718 = pneg %p355
        $region78: #{e2e_forward.5} parent=75 // pred_check_branch
          %2720 = sbr.rel (%p2718) target = $region80
        $region79: #{e2e_forward.5} parent=75 // pred_region
          %s2722 = ssub.s32 64, 64
          %2723 = vsyncadd %s2714, %s2722
          %s2724 = smul.addr %s28, 64
          %s2725 = scalar_lea.hbm %s14, %s2724
          %s2727 = sshll.u32 %s2717, 4
          %s2728 = int_to_ptr.vmem [resolvable:$true] %s2727
          %2730 = dma.vmem_to_hbm [thread:$0]  %s2728, 64, %s2725, %s2714
        $region80: #{e2e_forward.5} parent=75 // pred_fallthru
          _
      $region76: #{e2e_forward.5} parent=5 // pred_fallthru
        _
      %p2731 = scmp.le.s32.totalorder 2, %s23
      // Predicated region
      $region81: #{e2e_forward.5} parent=5 // pred_check
        %p2732 = pneg %p2731
      $region82: #{e2e_forward.5} parent=5 // pred_check_branch
        %2734 = sbr.rel (%p2732) target = $region84
      $region83: #{e2e_forward.5} parent=5 // pred_region
        %s2735 = ssub.s32 %s23, 2
        // Predicated region
        $region85: #{e2e_forward.5} parent=83 // pred_check
          %p2736 = pneg %p361
        $region86: #{e2e_forward.5} parent=83 // pred_check_branch
          %2738 = sbr.rel (%p2736) target = $region88
        $region87: #{e2e_forward.5} parent=83 // pred_region
          %s2739 = sand.u32 %s346, 1
          %s2740 = scalar_lea.sflag [#allocation3], %s2739
          %s2741 = sand.u32 %s346, 1
          %s2742 = smul.addr %s2741, 4
          %s2743 = scalar_lea.vmem [#allocation2], %s2742
          %2744 = dma.done %s2740, 64
        $region88: #{e2e_forward.5} parent=83 // pred_fallthru
          _
      $region84: #{e2e_forward.5} parent=5 // pred_fallthru
        _
    $region6: #{e2e_forward.5} parent=1 // loop_footer
      %s27 = sadd.s32 1, %s23
    $region7: #{e2e_forward.5} parent=1 // loop_footer_branch
      %22 = sbr.rel target = $region3
    $region8: #{e2e_forward.5} parent=1 // loop_exit
      _
    %2745 = vsyncpa [#allocation3], 1
    %s2746 = scalar_lea.sflag [#allocation3], 1
    %2747 = vsyncpa %s2746, 1

// kernel: e2e_forward.3
$region0: #{e2e_forward.3}
  #allocation0 [shape = 'u32[]', space=smem, size = 0x4, offset = 0x4, fixed_abs, tag = 'smem constant byte address 0x4 - core index']
  #allocation1 [shape = 'u32[144,128]{1,0:T(1,128)}', space=vmem, size = 0x12000, scoped, tag = 'internal scratch']
  #allocation2 [shape = 'bf16[1,18,18,3]{3,2,1,0:T(8,128)(2,1)}', space=vmem, size = 0x1b000, scoped, tag = 'scratch operand']
  #allocation3 [shape = 'bf16[1,10,10,16]{3,2,1,0:T(8,128)(2,1)}', space=vmem, size = 0xa000, scoped, tag = 'scratch operand']
  #allocation4 [shape = 'f32[1,8,16,16]{3,2,1,0:T(8,128)}', space=vmem, size = 0x10000, scoped, tag = 'scratch operand']
  #allocation5 [shape = 'f32[1,4,8,32]{3,2,1,0:T(8,128)}', space=vmem, size = 0x4000, scoped, tag = 'scratch operand']
  %s0 = inlined_call_operand.vmem [shape: bf16[2,16,16,3], index: 0, kind: input, shape index: {}]
  %s1 = inlined_call_operand.vmem [shape: bf16[27,16], index: 1, kind: input, shape index: {}]
  %s2 = inlined_call_operand.vmem [shape: f32[1,16], index: 2, kind: input, shape index: {}]
  %s3 = inlined_call_operand.vmem [shape: bf16[144,32], index: 3, kind: input, shape index: {}]
  %s4 = inlined_call_operand.vmem [shape: f32[1,32], index: 4, kind: input, shape index: {}]
  %s5 = inlined_call_operand.vmem [shape: bf16[2,16,32], index: 5, kind: output, shape index: {}]
  %s6 = sld [smem:[#allocation0]]
  $region53: #{e2e_forward.3} parent=0
    _
  %s8 = ssub.s32 1, %s6
  %s9 = scalar_select 0, %s8, %s6
  loop: start=0, step=1, limit=4
  $region2: #{e2e_forward.3} parent=0 // loop_pre_header
    _
  $region3: #{e2e_forward.3} parent=0 // loop_header
    %s11 = sphi 0, %s15
    %p12 = scmp.ge.s32.totalorder %s11, 4
    %s21 = sphi 0, %s23
    %s24 = sphi 0, %s21
    %s25 = sphi 0, %s24
    %s41 = sphi 0, %s25
    %s45 = sphi 0, %s45
    %s47 = sphi 0, %s45
    %s48 = sphi 0, %s47
    %s62 = sphi 0, %s48
    %s66 = sphi 0, %s66
    %s68 = sphi 0, %s66
    %s69 = sphi 0, %s68
    %s83 = sphi 0, %s69
    %s87 = sphi 0, %s87
    %s89 = sphi 0, %s87
    %s90 = sphi 0, %s89
    %s104 = sphi 0, %s90
    %s108 = sphi 0, %s108
    %s110 = sphi 0, %s108
    %s111 = sphi 0, %s110
    %s125 = sphi 0, %s111
    %s131 = sphi 0, %s133
    %s134 = sphi 0, %s131
    %s135 = sphi 0, %s134
    %s151 = sphi 0, %s135
  $region4: #{e2e_forward.3} parent=0 // loop_header_branch
    %14 = sbr.rel (%p12) target = $region8
  $region5: #{e2e_forward.3} parent=0 // loop_body
    %s16 = ssub.s32 %s11, 1
    %s17 = ssub.s32 %s11, 2
    %s18 = sadd.s32 %s11, 1
    %s19 = ssub.s32 %s11, %s18
    %p20 = scmp.eq.s32.totalorder %s19, 0
    %s22 = sadd.s32 %s21, 1
    %s23 = scalar_select %p20, %s21, %s22
    %p26 = pneg %p20
    %p27 = scmp.eq.s32.totalorder %s11, 1
    %p28 = por %p26, %p27
    %p29 = scmp.ne.s32.totalorder %s21, %s24
    %p30 = scmp.eq.s32.totalorder %s11, 0
    %p31 = por %p29, %p30
    %p32 = scmp.ne.s32.totalorder %s21, %s24
    %p33 = scmp.eq.s32.totalorder %s16, 1
    %p34 = por %p32, %p33
    %p35 = scmp.ne.s32.totalorder %s24, %s25
    %p36 = scmp.eq.s32.totalorder %s16, 0
    %p37 = por %p35, %p36
    %p38 = scmp.ne.s32.totalorder %s24, %s25
    %p39 = scmp.eq.s32.totalorder %s17, 1
    %p40 = por %p38, %p39
    %p42 = scmp.ne.s32.totalorder %s25, %s41
    %p43 = scmp.eq.s32.totalorder %s17, 0
    %p44 = por %p42, %p43
    %s46 = sadd.s32 %s45, 1
    %p49 = scmp.eq.s32.totalorder %s11, 1
    %p50 = scmp.ne.s32.totalorder %s45, %s47
    %p51 = scmp.eq.s32.totalorder %s11, 0
    %p52 = por %p50, %p51
    %p53 = scmp.ne.s32.totalorder %s45, %s47
    %p54 = scmp.eq.s32.totalorder %s16, 1
    %p55 = por %p53, %p54
    %p56 = scmp.ne.s32.totalorder %s47, %s48
    %p57 = scmp.eq.s32.totalorder %s16, 0
    %p58 = por %p56, %p57
    %p59 = scmp.ne.s32.totalorder %s47, %s48
    %p60 = scmp.eq.s32.totalorder %s17, 1
    %p61 = por %p59, %p60
    %p63 = scmp.ne.s32.totalorder %s48, %s62
    %p64 = scmp.eq.s32.totalorder %s17, 0
    %p65 = por %p63, %p64
    %s67 = sadd.s32 %s66, 1
    %p70 = scmp.eq.s32.totalorder %s11, 1
    %p71 = scmp.ne.s32.totalorder %s66, %s68
    %p72 = scmp.eq.s32.totalorder %s11, 0
    %p73 = por %p71, %p72
    %p74 = scmp.ne.s32.totalorder %s66, %s68
    %p75 = scmp.eq.s32.totalorder %s16, 1
    %p76 = por %p74, %p75
    %p77 = scmp.ne.s32.totalorder %s68, %s69
    %p78 = scmp.eq.s32.totalorder %s16, 0
    %p79 = por %p77, %p78
    %p80 = scmp.ne.s32.totalorder %s68, %s69
    %p81 = scmp.eq.s32.totalorder %s17, 1
    %p82 = por %p80, %p81
    %p84 = scmp.ne.s32.totalorder %s69, %s83
    %p85 = scmp.eq.s32.totalorder %s17, 0
    %p86 = por %p84, %p85
    %s88 = sadd.s32 %s87, 1
    %p91 = scmp.eq.s32.totalorder %s11, 1
    %p92 = scmp.ne.s32.totalorder %s87, %s89
    %p93 = scmp.eq.s32.totalorder %s11, 0
    %p94 = por %p92, %p93
    %p95 = scmp.ne.s32.totalorder %s87, %s89
    %p96 = scmp.eq.s32.totalorder %s16, 1
    %p97 = por %p95, %p96
    %p98 = scmp.ne.s32.totalorder %s89, %s90
    %p99 = scmp.eq.s32.totalorder %s16, 0
    %p100 = por %p98, %p99
    %p101 = scmp.ne.s32.totalorder %s89, %s90
    %p102 = scmp.eq.s32.totalorder %s17, 1
    %p103 = por %p101, %p102
    %p105 = scmp.ne.s32.totalorder %s90, %s104
    %p106 = scmp.eq.s32.totalorder %s17, 0
    %p107 = por %p105, %p106
    %s109 = sadd.s32 %s108, 1
    %p112 = scmp.eq.s32.totalorder %s11, 1
    %p113 = scmp.ne.s32.totalorder %s108, %s110
    %p114 = scmp.eq.s32.totalorder %s11, 0
    %p115 = por %p113, %p114
    %p116 = scmp.ne.s32.totalorder %s108, %s110
    %p117 = scmp.eq.s32.totalorder %s16, 1
    %p118 = por %p116, %p117
    %p119 = scmp.ne.s32.totalorder %s110, %s111
    %p120 = scmp.eq.s32.totalorder %s16, 0
    %p121 = por %p119, %p120
    %p122 = scmp.ne.s32.totalorder %s110, %s111
    %p123 = scmp.eq.s32.totalorder %s17, 1
    %p124 = por %p122, %p123
    %p126 = scmp.ne.s32.totalorder %s111, %s125
    %p127 = scmp.eq.s32.totalorder %s17, 0
    %p128 = por %p126, %p127
    %s129 = ssub.s32 %s11, %s18
    %p130 = scmp.eq.s32.totalorder %s129, 0
    %s132 = sadd.s32 %s131, 1
    %s133 = scalar_select %p130, %s131, %s132
    %p136 = pneg %p130
    %p137 = scmp.eq.s32.totalorder %s11, 1
    %p138 = por %p136, %p137
    %p139 = scmp.ne.s32.totalorder %s131, %s134
    %p140 = scmp.eq.s32.totalorder %s11, 0
    %p141 = por %p139, %p140
    %p142 = scmp.ne.s32.totalorder %s131, %s134
    %p143 = scmp.eq.s32.totalorder %s16, 1
    %p144 = por %p142, %p143
    %p145 = scmp.ne.s32.totalorder %s134, %s135
    %p146 = scmp.eq.s32.totalorder %s16, 0
    %p147 = por %p145, %p146
    %p148 = scmp.ne.s32.totalorder %s134, %s135
    %p149 = scmp.eq.s32.totalorder %s17, 1
    %p150 = por %p148, %p149
    %p152 = scmp.ne.s32.totalorder %s135, %s151
    %p153 = scmp.eq.s32.totalorder %s17, 0
    %p154 = por %p152, %p153
    %p155 = scmp.le.s32.totalorder 1, %s11
    %p156 = scmp.lt.s32.totalorder %s11, 3
    %p157 = pnand %p155, %p156
    %p158 = pneg %p157
    // Predicated region
    $region9: #{e2e_forward.3} parent=5 // pred_check
      _
    $region10: #{e2e_forward.3} parent=5 // pred_check_branch
      %160 = sbr.rel (%p157) target = $region12
    $region11: #{e2e_forward.3} parent=5 // pred_region
      %s161 = ssub.s32 %s11, 1
      // Predicated region
      $region13: #{e2e_forward.3} parent=11 // pred_check
        %p162 = pneg %p58
      $region14: #{e2e_forward.3} parent=11 // pred_check_branch
        %164 = sbr.rel (%p162) target = $region16
      $region15: #{e2e_forward.3} parent=11 // pred_region
        _
      $region16: #{e2e_forward.3} parent=11 // pred_fallthru
        _
      // Predicated region
      $region17: #{e2e_forward.3} parent=11 // pred_check
        %p165 = pneg %p79
      $region18: #{e2e_forward.3} parent=11 // pred_check_branch
        %167 = sbr.rel (%p165) target = $region20
      $region19: #{e2e_forward.3} parent=11 // pred_region
        _
      $region20: #{e2e_forward.3} parent=11 // pred_fallthru
        _
      // Predicated region
      $region21: #{e2e_forward.3} parent=11 // pred_check
        %p168 = pneg %p100
      $region22: #{e2e_forward.3} parent=11 // pred_check_branch
        %170 = sbr.rel (%p168) target = $region24
      $region23: #{e2e_forward.3} parent=11 // pred_region
        _
      $region24: #{e2e_forward.3} parent=11 // pred_fallthru
        _
      // Predicated region
      $region25: #{e2e_forward.3} parent=11 // pred_check
        %p171 = pneg %p121
      $region26: #{e2e_forward.3} parent=11 // pred_check_branch
        %173 = sbr.rel (%p171) target = $region28
      $region27: #{e2e_forward.3} parent=11 // pred_region
        _
      $region28: #{e2e_forward.3} parent=11 // pred_fallthru
        _
    $region12: #{e2e_forward.3} parent=5 // pred_fallthru
      _
    %p174 = scmp.lt.s32.totalorder %s11, 2
    // Predicated region
    $region29: #{e2e_forward.3} parent=5 // pred_check
      %p175 = pneg %p174
    $region30: #{e2e_forward.3} parent=5 // pred_check_branch
      %177 = sbr.rel (%p175) target = $region32
    $region31: #{e2e_forward.3} parent=5 // pred_region
      // Predicated region
      $region33: #{e2e_forward.3} parent=31 // pred_check
        %p178 = pneg %p31
      $region34: #{e2e_forward.3} parent=31 // pred_check_branch
        %180 = sbr.rel (%p178) target = $region36
      $region35: #{e2e_forward.3} parent=31 // pred_region
        %p181 = scmp.lt.s32.totalorder %s11, 1
        %s182 = scalar_select %p181, %s11, 1
        %s183 = smul.addr %s182, 32
        %s184 = smul.addr %s183, 4
        %s185 = scalar_lea.vmem %s0, %s184
      $region36: #{e2e_forward.3} parent=31 // pred_fallthru
        _
    $region32: #{e2e_forward.3} parent=5 // pred_fallthru
      _
    %p186 = scmp.le.s32.totalorder 1, %s11
    %p187 = scmp.lt.s32.totalorder %s11, 3
    %p188 = pnand %p186, %p187
    %p189 = pneg %p188
    // Predicated region
    $region37: #{e2e_forward.3} parent=5 // pred_check
      _
    $region38: #{e2e_forward.3} parent=5 // pred_check_branch
      %191 = sbr.rel (%p188) target = $region40
    $region39: #{e2e_forward.3} parent=5 // pred_region
      %s192 = ssub.s32 %s11, 1
      %p193 = scmp.lt.s32.totalorder %s16, 1
      %s194 = scalar_select %p193, %s16, 1
      %s195 = smul.addr %s194, 32
      %s196 = smul.addr %s195, 4
      %s197 = scalar_lea.vmem %s0, %s196
      %p198 = pneg %p37
      %p199 = pneg %p34
      %p200 = pneg %p58
      %p201 = pneg %p55
      %p202 = pneg %p79
      %p203 = pneg %p76
      %p204 = pneg %p100
      %p205 = pneg %p97
      %p206 = pneg %p121
      %p207 = pneg %p118
      %p208 = pneg %p147
      %p209 = pneg %p144
      %p210 = scmp.lt.s32.totalorder %s16, 1
      %s211 = scalar_select %p210, %s16, 1
      %s212 = smul.addr %s211, 2
      %s213 = smul.addr %s212, 4
      %s214 = scalar_lea.vmem %s5, %s213
      %p215 = scmp.lt.s32.totalorder %s16, 1
      %s216 = scalar_select %p215, %s16, 1
      %s217 = smul.addr %s216, 32
      %s218 = smul.addr %s217, 4
      %s219 = scalar_lea.vmem %s0, %s218
      %p220 = scmp.lt.s32.totalorder %s16, 1
      %s221 = scalar_select %p220, %s16, 1
      %s222 = smul.addr %s221, 2
      %s223 = smul.addr %s222, 4
      %s224 = scalar_lea.vmem %s5, %s223
      %vm226 = vcmask 19456
      %227 = vst.msk [vmem:[#allocation2] sm:$0xf] %vm226, 0
      %228 = vst.msk [vmem:[#allocation2 + $0x4] sm:$0xf] %vm226, 0
      %vm229 = vcmask 16384
      %230 = vst.msk [vmem:[#allocation2 + $0x8] sm:$0x1] %vm229, 0
      %231 = vst.msk [vmem:[#allocation2 + $0xc] sm:$0xf] %vm226, 0
      %232 = vst.msk [vmem:[#allocation2 + $0x10] sm:$0xf] %vm226, 0
      %233 = vst.msk [vmem:[#allocation2 + $0x14] sm:$0x1] %vm229, 0
      %234 = vst.msk [vmem:[#allocation2 + $0x18] sm:$0xf] %vm226, 0
      %235 = vst.msk [vmem:[#allocation2 + $0x1c] sm:$0xf] %vm226, 0
      %236 = vst.msk [vmem:[#allocation2 + $0x20] sm:$0x1] %vm229, 0
      %237 = vst.msk [vmem:[#allocation2 + $0x24] sm:$0xf] %vm226, 0
      %238 = vst.msk [vmem:[#allocation2 + $0x28] sm:$0xf] %vm226, 0
      %239 = vst.msk [vmem:[#allocation2 + $0x2c] sm:$0x1] %vm229, 0
      %240 = vst.msk [vmem:[#allocation2 + $0x30] sm:$0xf] %vm226, 0
      %241 = vst.msk [vmem:[#allocation2 + $0x34] sm:$0xf] %vm226, 0
      %242 = vst.msk [vmem:[#allocation2 + $0x38] sm:$0x1] %vm229, 0
      %243 = vst.msk [vmem:[#allocation2 + $0x3c] sm:$0xf] %vm226, 0
      %244 = vst.msk [vmem:[#allocation2 + $0x40] sm:$0xf] %vm226, 0
      %245 = vst.msk [vmem:[#allocation2 + $0x44] sm:$0x1] %vm229, 0
      %246 = vst.msk [vmem:[#allocation2 + $0x48] sm:$0xf] %vm226, 0
      %247 = vst.msk [vmem:[#allocation2 + $0x4c] sm:$0xf] %vm226, 0
      %248 = vst.msk [vmem:[#allocation2 + $0x50] sm:$0x1] %vm229, 0
      %249 = vst.msk [vmem:[#allocation2 + $0x54] sm:$0xf] %vm226, 0
      %250 = vst.msk [vmem:[#allocation2 + $0x58] sm:$0xf] %vm226, 0
      %251 = vst.msk [vmem:[#allocation2 + $0x5c] sm:$0x1] %vm229, 0
      %252 = vst.msk [vmem:[#allocation2 + $0x60] sm:$0xf] %vm226, 0
      %253 = vst.msk [vmem:[#allocation2 + $0x64] sm:$0xf] %vm226, 0
      %254 = vst.msk [vmem:[#allocation2 + $0x68] sm:$0x1] %vm229, 0
      %255 = vst.msk [vmem:[#allocation2 + $0x6c] sm:$0xf] %vm226, 0
      %256 = vst.msk [vmem:[#allocation2 + $0x70] sm:$0xf] %vm226, 0
      %257 = vst.msk [vmem:[#allocation2 + $0x74] sm:$0x1] %vm229, 0
      %258 = vst.msk [vmem:[#allocation2 + $0x78] sm:$0xf] %vm226, 0
      %259 = vst.msk [vmem:[#allocation2 + $0x7c] sm:$0xf] %vm226, 0
      %260 = vst.msk [vmem:[#allocation2 + $0x80] sm:$0x1] %vm229, 0
      %261 = vst.msk [vmem:[#allocation2 + $0x84] sm:$0xf] %vm226, 0
      %262 = vst.msk [vmem:[#allocation2 + $0x88] sm:$0xf] %vm226, 0
      %263 = vst.msk [vmem:[#allocation2 + $0x8c] sm:$0x1] %vm229, 0
      %264 = vst.msk [vmem:[#allocation2 + $0x90] sm:$0xf] %vm226, 0
      %265 = vst.msk [vmem:[#allocation2 + $0x94] sm:$0xf] %vm226, 0
      %266 = vst.msk [vmem:[#allocation2 + $0x98] sm:$0x1] %vm229, 0
      %267 = vst.msk [vmem:[#allocation2 + $0x9c] sm:$0xf] %vm226, 0
      %268 = vst.msk [vmem:[#allocation2 + $0xa0] sm:$0xf] %vm226, 0
      %269 = vst.msk [vmem:[#allocation2 + $0xa4] sm:$0x1] %vm229, 0
      %270 = vst.msk [vmem:[#allocation2 + $0xa8] sm:$0xf] %vm226, 0
      %271 = vst.msk [vmem:[#allocation2 + $0xac] sm:$0xf] %vm226, 0
      %272 = vst.msk [vmem:[#allocation2 + $0xb0] sm:$0x1] %vm229, 0
      %273 = vst.msk [vmem:[#allocation2 + $0xb4] sm:$0xf] %vm226, 0
      %274 = vst.msk [vmem:[#allocation2 + $0xb8] sm:$0xf] %vm226, 0
      %275 = vst.msk [vmem:[#allocation2 + $0xbc] sm:$0x1] %vm229, 0
      %276 = vst.msk [vmem:[#allocation2 + $0xc0] sm:$0xf] %vm226, 0
      %277 = vst.msk [vmem:[#allocation2 + $0xc4] sm:$0xf] %vm226, 0
      %278 = vst.msk [vmem:[#allocation2 + $0xc8] sm:$0x1] %vm229, 0
      %279 = vst.msk [vmem:[#allocation2 + $0xcc] sm:$0xf] %vm226, 0
      %280 = vst.msk [vmem:[#allocation2 + $0xd0] sm:$0xf] %vm226, 0
      %281 = vst.msk [vmem:[#allocation2 + $0xd4] sm:$0x1] %vm229, 0
      %v282 = vld [vmem:[%s219] sm:$0xf]
      %v283 = vld [vmem:[%s219 + $0x4] sm:$0xf]
      %v284 = vld [vmem:[%s219 + $0x8] sm:$0xf]
      %v285 = vld [vmem:[%s219 + $0xc] sm:$0xf]
      %v286 = vld [vmem:[%s219 + $0x10] sm:$0xf]
      %v287 = vld [vmem:[%s219 + $0x14] sm:$0xf]
      %v288 = vld [vmem:[%s219 + $0x18] sm:$0xf]
      %v289 = vld [vmem:[%s219 + $0x1c] sm:$0xf]
      %v290 = vld [vmem:[%s219 + $0x20] sm:$0xf]
      %v291 = vld [vmem:[%s219 + $0x24] sm:$0xf]
      %v292 = vld [vmem:[%s219 + $0x28] sm:$0xf]
      %v293 = vld [vmem:[%s219 + $0x2c] sm:$0xf]
      %v294 = vld [vmem:[%s219 + $0x30] sm:$0xf]
      %v295 = vld [vmem:[%s219 + $0x34] sm:$0xf]
      %v296 = vld [vmem:[%s219 + $0x38] sm:$0xf]
      %v297 = vld [vmem:[%s219 + $0x3c] sm:$0xf]
      %v298 = vld [vmem:[%s219 + $0x40] sm:$0xf]
      %v299 = vld [vmem:[%s219 + $0x44] sm:$0xf]
      %v300 = vld [vmem:[%s219 + $0x48] sm:$0xf]
      %v301 = vld [vmem:[%s219 + $0x4c] sm:$0xf]
      %v302 = vld [vmem:[%s219 + $0x50] sm:$0xf]
      %v303 = vld [vmem:[%s219 + $0x54] sm:$0xf]
      %v304 = vld [vmem:[%s219 + $0x58] sm:$0xf]
      %v305 = vld [vmem:[%s219 + $0x5c] sm:$0xf]
      %v306 = vld [vmem:[%s219 + $0x60] sm:$0xf]
      %v307 = vld [vmem:[%s219 + $0x64] sm:$0xf]
      %v308 = vld [vmem:[%s219 + $0x68] sm:$0xf]
      %v309 = vld [vmem:[%s219 + $0x6c] sm:$0xf]
      %v310 = vld [vmem:[%s219 + $0x70] sm:$0xf]
      %v311 = vld [vmem:[%s219 + $0x74] sm:$0xf]
      %v312 = vld [vmem:[%s219 + $0x78] sm:$0xf]
      %v313 = vld [vmem:[%s219 + $0x7c] sm:$0xf]
      %vm314 = vsmask.f32 256
      %vm315 = vsmask.f32 4368
      %vm316 = vmor %vm314, %vm315
      %v318 = vshrl.u32 %v282, 16
      %v320 = vrot.slane %v318, 7
      %v321 = vshll.u32 %v282, 16
      %v323 = vor.u32 %v320, %v321
      %v324 = vrot.slane %v320, 4
      %v326 = vshrl.u32 %v283, 16
      %v328 = vrot.slane %v326, 7
      %v329 = vshll.u32 %v283, 16
      %v331 = vor.u32 %v328, %v329
      %v332 = vsel %vm316, %v324, %v331
      %v333 = vrot.slane %v328, 4
      %v335 = vshrl.u32 %v284, 16
      %v337 = vrot.slane %v335, 7
      %v338 = vshll.u32 %v284, 16
      %v340 = vor.u32 %v337, %v338
      %v341 = vrot.slane %v337, 4
      %v343 = vshrl.u32 %v285, 16
      %v345 = vrot.slane %v343, 7
      %v346 = vshll.u32 %v285, 16
      %v348 = vor.u32 %v345, %v346
      %v349 = vsel %vm316, %v341, %v348
      %v350 = vrot.slane %v345, 4
      %v352 = vshrl.u32 %v286, 16
      %v354 = vrot.slane %v352, 7
      %v355 = vshll.u32 %v286, 16
      %v357 = vor.u32 %v354, %v355
      %v358 = vrot.slane %v354, 4
      %v360 = vshrl.u32 %v287, 16
      %v362 = vrot.slane %v360, 7
      %v363 = vshll.u32 %v287, 16
      %v365 = vor.u32 %v362, %v363
      %v366 = vsel %vm316, %v358, %v365
      %v367 = vrot.slane %v362, 4
      %v369 = vshrl.u32 %v288, 16
      %v371 = vrot.slane %v369, 7
      %v372 = vshll.u32 %v288, 16
      %v374 = vor.u32 %v371, %v372
      %v375 = vrot.slane %v371, 4
      %v377 = vshrl.u32 %v289, 16
      %v379 = vrot.slane %v377, 7
      %v380 = vshll.u32 %v289, 16
      %v382 = vor.u32 %v379, %v380
      %v383 = vsel %vm316, %v375, %v382
      %v384 = vrot.slane %v379, 4
      %v386 = vshrl.u32 %v290, 16
      %v388 = vrot.slane %v386, 7
      %v389 = vshll.u32 %v290, 16
      %v391 = vor.u32 %v388, %v389
      %v392 = vrot.slane %v388, 4
      %v394 = vshrl.u32 %v291, 16
      %v396 = vrot.slane %v394, 7
      %v397 = vshll.u32 %v291, 16
      %v399 = vor.u32 %v396, %v397
      %v400 = vsel %vm316, %v392, %v399
      %v401 = vrot.slane %v396, 4
      %v403 = vshrl.u32 %v292, 16
      %v405 = vrot.slane %v403, 7
      %v406 = vshll.u32 %v292, 16
      %v408 = vor.u32 %v405, %v406
      %v409 = vrot.slane %v405, 4
      %v411 = vshrl.u32 %v293, 16
      %v413 = vrot.slane %v411, 7
      %v414 = vshll.u32 %v293, 16
      %v416 = vor.u32 %v413, %v414
      %v417 = vsel %vm316, %v409, %v416
      %v418 = vrot.slane %v413, 4
      %v420 = vshrl.u32 %v294, 16
      %v422 = vrot.slane %v420, 7
      %v423 = vshll.u32 %v294, 16
      %v425 = vor.u32 %v422, %v423
      %v426 = vrot.slane %v422, 4
      %v428 = vshrl.u32 %v295, 16
      %v430 = vrot.slane %v428, 7
      %v431 = vshll.u32 %v295, 16
      %v433 = vor.u32 %v430, %v431
      %v434 = vsel %vm316, %v426, %v433
      %v435 = vrot.slane %v430, 4
      %v437 = vshrl.u32 %v296, 16
      %v439 = vrot.slane %v437, 7
      %v440 = vshll.u32 %v296, 16
      %v442 = vor.u32 %v439, %v440
      %v443 = vrot.slane %v439, 4
      %v445 = vshrl.u32 %v297, 16
      %v447 = vrot.slane %v445, 7
      %v448 = vshll.u32 %v297, 16
      %v450 = vor.u32 %v447, %v448
      %v451 = vsel %vm316, %v443, %v450
      %v452 = vrot.slane %v447, 4
      %v454 = vshrl.u32 %v298, 16
      %v456 = vrot.slane %v454, 7
      %v457 = vshll.u32 %v298, 16
      %v459 = vor.u32 %v456, %v457
      %v460 = vrot.slane %v456, 4
      %v462 = vshrl.u32 %v299, 16
      %v464 = vrot.slane %v462, 7
      %v465 = vshll.u32 %v299, 16
      %v467 = vor.u32 %v464, %v465
      %v468 = vsel %vm316, %v460, %v467
      %v469 = vrot.slane %v464, 4
      %v471 = vshrl.u32 %v300, 16
      %v473 = vrot.slane %v471, 7
      %v474 = vshll.u32 %v300, 16
      %v476 = vor.u32 %v473, %v474
      %v477 = vrot.slane %v473, 4
      %v479 = vshrl.u32 %v301, 16
      %v481 = vrot.slane %v479, 7
      %v482 = vshll.u32 %v301, 16
      %v484 = vor.u32 %v481, %v482
      %v485 = vsel %vm316, %v477, %v484
      %v486 = vrot.slane %v481, 4
      %v488 = vshrl.u32 %v302, 16
      %v490 = vrot.slane %v488, 7
      %v491 = vshll.u32 %v302, 16
      %v493 = vor.u32 %v490, %v491
      %v494 = vrot.slane %v490, 4
      %v496 = vshrl.u32 %v303, 16
      %v498 = vrot.slane %v496, 7
      %v499 = vshll.u32 %v303, 16
      %v501 = vor.u32 %v498, %v499
      %v502 = vsel %vm316, %v494, %v501
      %v503 = vrot.slane %v498, 4
      %v505 = vshrl.u32 %v304, 16
      %v507 = vrot.slane %v505, 7
      %v508 = vshll.u32 %v304, 16
      %v510 = vor.u32 %v507, %v508
      %v511 = vrot.slane %v507, 4
      %v513 = vshrl.u32 %v305, 16
      %v515 = vrot.slane %v513, 7
      %v516 = vshll.u32 %v305, 16
      %v518 = vor.u32 %v515, %v516
      %v519 = vsel %vm316, %v511, %v518
      %v520 = vrot.slane %v515, 4
      %v522 = vshrl.u32 %v306, 16
      %v524 = vrot.slane %v522, 7
      %v525 = vshll.u32 %v306, 16
      %v527 = vor.u32 %v524, %v525
      %v528 = vrot.slane %v524, 4
      %v530 = vshrl.u32 %v307, 16
      %v532 = vrot.slane %v530, 7
      %v533 = vshll.u32 %v307, 16
      %v535 = vor.u32 %v532, %v533
      %v536 = vsel %vm316, %v528, %v535
      %v537 = vrot.slane %v532, 4
      %v539 = vshrl.u32 %v308, 16
      %v541 = vrot.slane %v539, 7
      %v542 = vshll.u32 %v308, 16
      %v544 = vor.u32 %v541, %v542
      %v545 = vrot.slane %v541, 4
      %v547 = vshrl.u32 %v309, 16
      %v549 = vrot.slane %v547, 7
      %v550 = vshll.u32 %v309, 16
      %v552 = vor.u32 %v549, %v550
      %v553 = vsel %vm316, %v545, %v552
      %v554 = vrot.slane %v549, 4
      %v556 = vshrl.u32 %v310, 16
      %v558 = vrot.slane %v556, 7
      %v559 = vshll.u32 %v310, 16
      %v561 = vor.u32 %v558, %v559
      %v562 = vrot.slane %v558, 4
      %v564 = vshrl.u32 %v311, 16
      %v566 = vrot.slane %v564, 7
      %v567 = vshll.u32 %v311, 16
      %v569 = vor.u32 %v566, %v567
      %v570 = vsel %vm316, %v562, %v569
      %v571 = vrot.slane %v566, 4
      %v573 = vshrl.u32 %v312, 16
      %v575 = vrot.slane %v573, 7
      %v576 = vshll.u32 %v312, 16
      %v578 = vor.u32 %v575, %v576
      %v579 = vrot.slane %v575, 4
      %v581 = vshrl.u32 %v313, 16
      %v583 = vrot.slane %v581, 7
      %v584 = vshll.u32 %v313, 16
      %v586 = vor.u32 %v583, %v584
      %v587 = vsel %vm316, %v579, %v586
      %v588 = vrot.slane %v583, 4
      %s637 = scalar_lea.vmem [#allocation2], 12
      %vm638 = vcmask 19456
      %vm639 = vsmask.f32 7938
      %vm640 = vmand %vm638, %vm639
      %v641 = vld [vmem:[%s637] sm:$0xf]
      %v642 = vsel %vm640, %v323, %v641
      %643 = vst [vmem:[%s637] sm:$0xf] %v642
      %644 = vst.msk [vmem:[%s637 + $0x4] sm:$0xf] %vm226, %v332
      %vm645 = vcmask 16384
      %vm646 = vmand %vm645, %vm314
      %v647 = vld [vmem:[%s637 + $0x8] sm:$0x1]
      %v648 = vsel %vm646, %v333, %v647
      %649 = vst [vmem:[%s637 + $0x8] sm:$0x1] %v648
      %v650 = vld [vmem:[%s637 + $0xc] sm:$0xf]
      %v651 = vsel %vm640, %v340, %v650
      %652 = vst [vmem:[%s637 + $0xc] sm:$0xf] %v651
      %653 = vst.msk [vmem:[%s637 + $0x10] sm:$0xf] %vm226, %v349
      %v654 = vld [vmem:[%s637 + $0x14] sm:$0x1]
      %v655 = vsel %vm646, %v350, %v654
      %656 = vst [vmem:[%s637 + $0x14] sm:$0x1] %v655
      %v657 = vld [vmem:[%s637 + $0x18] sm:$0xf]
      %v658 = vsel %vm640, %v357, %v657
      %659 = vst [vmem:[%s637 + $0x18] sm:$0xf] %v658
      %660 = vst.msk [vmem:[%s637 + $0x1c] sm:$0xf] %vm226, %v366
      %v661 = vld [vmem:[%s637 + $0x20] sm:$0x1]
      %v662 = vsel %vm646, %v367, %v661
      %663 = vst [vmem:[%s637 + $0x20] sm:$0x1] %v662
      %v664 = vld [vmem:[%s637 + $0x24] sm:$0xf]
      %v665 = vsel %vm640, %v374, %v664
      %666 = vst [vmem:[%s637 + $0x24] sm:$0xf] %v665
      %667 = vst.msk [vmem:[%s637 + $0x28] sm:$0xf] %vm226, %v383
      %v668 = vld [vmem:[%s637 + $0x2c] sm:$0x1]
      %v669 = vsel %vm646, %v384, %v668
      %670 = vst [vmem:[%s637 + $0x2c] sm:$0x1] %v669
      %v671 = vld [vmem:[%s637 + $0x30] sm:$0xf]
      %v672 = vsel %vm640, %v391, %v671
      %673 = vst [vmem:[%s637 + $0x30] sm:$0xf] %v672
      %674 = vst.msk [vmem:[%s637 + $0x34] sm:$0xf] %vm226, %v400
      %v675 = vld [vmem:[%s637 + $0x38] sm:$0x1]
      %v676 = vsel %vm646, %v401, %v675
      %677 = vst [vmem:[%s637 + $0x38] sm:$0x1] %v676
      %v678 = vld [vmem:[%s637 + $0x3c] sm:$0xf]
      %v679 = vsel %vm640, %v408, %v678
      %680 = vst [vmem:[%s637 + $0x3c] sm:$0xf] %v679
      %681 = vst.msk [vmem:[%s637 + $0x40] sm:$0xf] %vm226, %v417
      %v682 = vld [vmem:[%s637 + $0x44] sm:$0x1]
      %v683 = vsel %vm646, %v418, %v682
      %684 = vst [vmem:[%s637 + $0x44] sm:$0x1] %v683
      %v685 = vld [vmem:[%s637 + $0x48] sm:$0xf]
      %v686 = vsel %vm640, %v425, %v685
      %687 = vst [vmem:[%s637 + $0x48] sm:$0xf] %v686
      %688 = vst.msk [vmem:[%s637 + $0x4c] sm:$0xf] %vm226, %v434
      %v689 = vld [vmem:[%s637 + $0x50] sm:$0x1]
      %v690 = vsel %vm646, %v435, %v689
      %691 = vst [vmem:[%s637 + $0x50] sm:$0x1] %v690
      %v692 = vld [vmem:[%s637 + $0x54] sm:$0xf]
      %v693 = vsel %vm640, %v442, %v692
      %694 = vst [vmem:[%s637 + $0x54] sm:$0xf] %v693
      %695 = vst.msk [vmem:[%s637 + $0x58] sm:$0xf] %vm226, %v451
      %v696 = vld [vmem:[%s637 + $0x5c] sm:$0x1]
      %v697 = vsel %vm646, %v452, %v696
      %698 = vst [vmem:[%s637 + $0x5c] sm:$0x1] %v697
      %v699 = vld [vmem:[%s637 + $0x60] sm:$0xf]
      %v700 = vsel %vm640, %v459, %v699
      %701 = vst [vmem:[%s637 + $0x60] sm:$0xf] %v700
      %702 = vst.msk [vmem:[%s637 + $0x64] sm:$0xf] %vm226, %v468
      %v703 = vld [vmem:[%s637 + $0x68] sm:$0x1]
      %v704 = vsel %vm646, %v469, %v703
      %705 = vst [vmem:[%s637 + $0x68] sm:$0x1] %v704
      %v706 = vld [vmem:[%s637 + $0x6c] sm:$0xf]
      %v707 = vsel %vm640, %v476, %v706
      %708 = vst [vmem:[%s637 + $0x6c] sm:$0xf] %v707
      %709 = vst.msk [vmem:[%s637 + $0x70] sm:$0xf] %vm226, %v485
      %v710 = vld [vmem:[%s637 + $0x74] sm:$0x1]
      %v711 = vsel %vm646, %v486, %v710
      %712 = vst [vmem:[%s637 + $0x74] sm:$0x1] %v711
      %v713 = vld [vmem:[%s637 + $0x78] sm:$0xf]
      %v714 = vsel %vm640, %v493, %v713
      %715 = vst [vmem:[%s637 + $0x78] sm:$0xf] %v714
      %716 = vst.msk [vmem:[%s637 + $0x7c] sm:$0xf] %vm226, %v502
      %v717 = vld [vmem:[%s637 + $0x80] sm:$0x1]
      %v718 = vsel %vm646, %v503, %v717
      %719 = vst [vmem:[%s637 + $0x80] sm:$0x1] %v718
      %v720 = vld [vmem:[%s637 + $0x84] sm:$0xf]
      %v721 = vsel %vm640, %v510, %v720
      %722 = vst [vmem:[%s637 + $0x84] sm:$0xf] %v721
      %723 = vst.msk [vmem:[%s637 + $0x88] sm:$0xf] %vm226, %v519
      %v724 = vld [vmem:[%s637 + $0x8c] sm:$0x1]
      %v725 = vsel %vm646, %v520, %v724
      %726 = vst [vmem:[%s637 + $0x8c] sm:$0x1] %v725
      %v727 = vld [vmem:[%s637 + $0x90] sm:$0xf]
      %v728 = vsel %vm640, %v527, %v727
      %729 = vst [vmem:[%s637 + $0x90] sm:$0xf] %v728
      %730 = vst.msk [vmem:[%s637 + $0x94] sm:$0xf] %vm226, %v536
      %v731 = vld [vmem:[%s637 + $0x98] sm:$0x1]
      %v732 = vsel %vm646, %v537, %v731
      %733 = vst [vmem:[%s637 + $0x98] sm:$0x1] %v732
      %v734 = vld [vmem:[%s637 + $0x9c] sm:$0xf]
      %v735 = vsel %vm640, %v544, %v734
      %736 = vst [vmem:[%s637 + $0x9c] sm:$0xf] %v735
      %737 = vst.msk [vmem:[%s637 + $0xa0] sm:$0xf] %vm226, %v553
      %v738 = vld [vmem:[%s637 + $0xa4] sm:$0x1]
      %v739 = vsel %vm646, %v554, %v738
      %740 = vst [vmem:[%s637 + $0xa4] sm:$0x1] %v739
      %v741 = vld [vmem:[%s637 + $0xa8] sm:$0xf]
      %v742 = vsel %vm640, %v561, %v741
      %743 = vst [vmem:[%s637 + $0xa8] sm:$0xf] %v742
      %744 = vst.msk [vmem:[%s637 + $0xac] sm:$0xf] %vm226, %v570
      %v745 = vld [vmem:[%s637 + $0xb0] sm:$0x1]
      %v746 = vsel %vm646, %v571, %v745
      %747 = vst [vmem:[%s637 + $0xb0] sm:$0x1] %v746
      %v748 = vld [vmem:[%s637 + $0xb4] sm:$0xf]
      %v749 = vsel %vm640, %v578, %v748
      %750 = vst [vmem:[%s637 + $0xb4] sm:$0xf] %v749
      %751 = vst.msk [vmem:[%s637 + $0xb8] sm:$0xf] %vm226, %v587
      %v752 = vld [vmem:[%s637 + $0xbc] sm:$0x1]
      %v753 = vsel %vm646, %v588, %v752
      %754 = vst [vmem:[%s637 + $0xbc] sm:$0x1] %v753
      %v755 = vld [vmem:[#allocation2] sm:$0xf]
      %v756 = vld [vmem:[#allocation2 + $0x4] sm:$0xf]
      %v757 = vld [vmem:[#allocation2 + $0x8] sm:$0x1]
      %v758 = vld [vmem:[#allocation2 + $0xc] sm:$0xf]
      %v759 = vld [vmem:[#allocation2 + $0x10] sm:$0xf]
      %v760 = vld [vmem:[#allocation2 + $0x14] sm:$0x1]
      %v761 = vld [vmem:[#allocation2 + $0x18] sm:$0xf]
      %v762 = vld [vmem:[#allocation2 + $0x1c] sm:$0xf]
      %v763 = vld [vmem:[#allocation2 + $0x20] sm:$0x1]
      %v764 = vld [vmem:[#allocation2 + $0x24] sm:$0xf]
      %v765 = vld [vmem:[#allocation2 + $0x28] sm:$0xf]
      %v766 = vld [vmem:[#allocation2 + $0x2c] sm:$0x1]
      %v767 = vld [vmem:[#allocation2 + $0x30] sm:$0xf]
      %v768 = vld [vmem:[#allocation2 + $0x34] sm:$0xf]
      %v769 = vld [vmem:[#allocation2 + $0x38] sm:$0x1]
      %v770 = vld [vmem:[#allocation2 + $0x3c] sm:$0xf]
      %v771 = vld [vmem:[#allocation2 + $0x40] sm:$0xf]
      %v772 = vld [vmem:[#allocation2 + $0x44] sm:$0x1]
      %v773 = vld [vmem:[#allocation2 + $0x48] sm:$0xf]
      %v774 = vld [vmem:[#allocation2 + $0x4c] sm:$0xf]
      %v775 = vld [vmem:[#allocation2 + $0x50] sm:$0x1]
      %v776 = vld [vmem:[#allocation2 + $0x54] sm:$0xf]
      %v777 = vld [vmem:[#allocation2 + $0x58] sm:$0xf]
      %v778 = vld [vmem:[#allocation2 + $0x5c] sm:$0x1]
      %v779 = vld [vmem:[#allocation2 + $0x60] sm:$0xf]
      %v780 = vld [vmem:[#allocation2 + $0x64] sm:$0xf]
      %v781 = vld [vmem:[#allocation2 + $0x68] sm:$0x1]
      %v782 = vld [vmem:[#allocation2 + $0x6c] sm:$0xf]
      %v783 = vld [vmem:[#allocation2 + $0x70] sm:$0xf]
      %v784 = vld [vmem:[#allocation2 + $0x74] sm:$0x1]
      %v785 = vld [vmem:[#allocation2 + $0x78] sm:$0xf]
      %v786 = vld [vmem:[#allocation2 + $0x7c] sm:$0xf]
      %v787 = vld [vmem:[#allocation2 + $0x80] sm:$0x1]
      %v788 = vld [vmem:[#allocation2 + $0x84] sm:$0xf]
      %v789 = vld [vmem:[#allocation2 + $0x88] sm:$0xf]
      %v790 = vld [vmem:[#allocation2 + $0x8c] sm:$0x1]
      %v791 = vld [vmem:[#allocation2 + $0x90] sm:$0xf]
      %v792 = vld [vmem:[#allocation2 + $0x94] sm:$0xf]
      %v793 = vld [vmem:[#allocation2 + $0x98] sm:$0x1]
      %v794 = vld [vmem:[#allocation2 + $0x9c] sm:$0xf]
      %v795 = vld [vmem:[#allocation2 + $0xa0] sm:$0xf]
      %v796 = vld [vmem:[#allocation2 + $0xa4] sm:$0x1]
      %v797 = vld [vmem:[#allocation2 + $0xa8] sm:$0xf]
      %v798 = vld [vmem:[#allocation2 + $0xac] sm:$0xf]
      %v799 = vld [vmem:[#allocation2 + $0xb0] sm:$0x1]
      %v800 = vld [vmem:[#allocation2 + $0xb4] sm:$0xf]
      %v801 = vld [vmem:[#allocation2 + $0xb8] sm:$0xf]
      %v802 = vld [vmem:[#allocation2 + $0xbc] sm:$0x1]
      %v803 = vld [vmem:[#allocation2 + $0xc0] sm:$0xf]
      %v804 = vld [vmem:[#allocation2 + $0xc4] sm:$0xf]
      %v805 = vld [vmem:[#allocation2 + $0xc8] sm:$0x1]
      %v806 = vld [vmem:[#allocation2 + $0xcc] sm:$0xf]
      %v807 = vld [vmem:[#allocation2 + $0xd0] sm:$0xf]
      %v808 = vld [vmem:[#allocation2 + $0xd4] sm:$0x1]
      %vm809 = vsmask.f32 3328
      %vm810 = vsmask.f32 7440
      %vm811 = vmor %vm809, %vm810
      %v813 = vshrl.u32 %v755, 16
      %v815 = vrot.slane %v813, 4
      %v816 = vshll.u32 %v755, 16
      %v818 = vrot.slane %v816, 5
      %v819 = vor.u32 %v815, %v818
      %v820 = vrot.slane %v819, 4
      %v822 = vshll.u32 %v756, 16
      %v824 = vrot.slane %v822, 5
      %v825 = vsel %vm811, %v820, %v824
      %v826 = vshrl.u32 %v756, 16
      %v828 = vrot.slane %v826, 4
      %v829 = vor.u32 %v828, %v824
      %v830 = vrot.slane %v829, 4
      %v832 = vshll.u32 %v757, 16
      %v834 = vrot.slane %v832, 5
      %v835 = vsel %vm811, %v830, %v834
      %v837 = vshrl.u32 %v758, 16
      %v839 = vrot.slane %v837, 4
      %v840 = vshll.u32 %v758, 16
      %v842 = vrot.slane %v840, 5
      %v843 = vor.u32 %v839, %v842
      %v844 = vrot.slane %v843, 4
      %v846 = vshll.u32 %v759, 16
      %v848 = vrot.slane %v846, 5
      %v849 = vsel %vm811, %v844, %v848
      %v850 = vshrl.u32 %v759, 16
      %v852 = vrot.slane %v850, 4
      %v853 = vor.u32 %v852, %v848
      %v854 = vrot.slane %v853, 4
      %v856 = vshll.u32 %v760, 16
      %v858 = vrot.slane %v856, 5
      %v859 = vsel %vm811, %v854, %v858
      %v861 = vshrl.u32 %v761, 16
      %v863 = vrot.slane %v861, 4
      %v864 = vshll.u32 %v761, 16
      %v866 = vrot.slane %v864, 5
      %v867 = vor.u32 %v863, %v866
      %v868 = vrot.slane %v867, 4
      %v870 = vshll.u32 %v762, 16
      %v872 = vrot.slane %v870, 5
      %v873 = vsel %vm811, %v868, %v872
      %v874 = vshrl.u32 %v762, 16
      %v876 = vrot.slane %v874, 4
      %v877 = vor.u32 %v876, %v872
      %v878 = vrot.slane %v877, 4
      %v880 = vshll.u32 %v763, 16
      %v882 = vrot.slane %v880, 5
      %v883 = vsel %vm811, %v878, %v882
      %v885 = vshrl.u32 %v764, 16
      %v887 = vrot.slane %v885, 4
      %v888 = vshll.u32 %v764, 16
      %v890 = vrot.slane %v888, 5
      %v891 = vor.u32 %v887, %v890
      %v892 = vrot.slane %v891, 4
      %v894 = vshll.u32 %v765, 16
      %v896 = vrot.slane %v894, 5
      %v897 = vsel %vm811, %v892, %v896
      %v898 = vshrl.u32 %v765, 16
      %v900 = vrot.slane %v898, 4
      %v901 = vor.u32 %v900, %v896
      %v902 = vrot.slane %v901, 4
      %v904 = vshll.u32 %v766, 16
      %v906 = vrot.slane %v904, 5
      %v907 = vsel %vm811, %v902, %v906
      %v909 = vshrl.u32 %v767, 16
      %v911 = vrot.slane %v909, 4
      %v912 = vshll.u32 %v767, 16
      %v914 = vrot.slane %v912, 5
      %v915 = vor.u32 %v911, %v914
      %v916 = vrot.slane %v915, 4
      %v918 = vshll.u32 %v768, 16
      %v920 = vrot.slane %v918, 5
      %v921 = vsel %vm811, %v916, %v920
      %v922 = vshrl.u32 %v768, 16
      %v924 = vrot.slane %v922, 4
      %v925 = vor.u32 %v924, %v920
      %v926 = vrot.slane %v925, 4
      %v928 = vshll.u32 %v769, 16
      %v930 = vrot.slane %v928, 5
      %v931 = vsel %vm811, %v926, %v930
      %v933 = vshrl.u32 %v770, 16
      %v935 = vrot.slane %v933, 4
      %v936 = vshll.u32 %v770, 16
      %v938 = vrot.slane %v936, 5
      %v939 = vor.u32 %v935, %v938
      %v940 = vrot.slane %v939, 4
      %v942 = vshll.u32 %v771, 16
      %v944 = vrot.slane %v942, 5
      %v945 = vsel %vm811, %v940, %v944
      %v946 = vshrl.u32 %v771, 16
      %v948 = vrot.slane %v946, 4
      %v949 = vor.u32 %v948, %v944
      %v950 = vrot.slane %v949, 4
      %v952 = vshll.u32 %v772, 16
      %v954 = vrot.slane %v952, 5
      %v955 = vsel %vm811, %v950, %v954
      %v957 = vshrl.u32 %v773, 16
      %v959 = vrot.slane %v957, 4
      %v960 = vshll.u32 %v773, 16
      %v962 = vrot.slane %v960, 5
      %v963 = vor.u32 %v959, %v962
      %v964 = vrot.slane %v963, 4
      %v966 = vshll.u32 %v774, 16
      %v968 = vrot.slane %v966, 5
      %v969 = vsel %vm811, %v964, %v968
      %v970 = vshrl.u32 %v774, 16
      %v972 = vrot.slane %v970, 4
      %v973 = vor.u32 %v972, %v968
      %v974 = vrot.slane %v973, 4
      %v976 = vshll.u32 %v775, 16
      %v978 = vrot.slane %v976, 5
      %v979 = vsel %vm811, %v974, %v978
      %v981 = vshrl.u32 %v776, 16
      %v983 = vrot.slane %v981, 4
      %v984 = vshll.u32 %v776, 16
      %v986 = vrot.slane %v984, 5
      %v987 = vor.u32 %v983, %v986
      %v988 = vrot.slane %v987, 4
      %v990 = vshll.u32 %v777, 16
      %v992 = vrot.slane %v990, 5
      %v993 = vsel %vm811, %v988, %v992
      %v994 = vshrl.u32 %v777, 16
      %v996 = vrot.slane %v994, 4
      %v997 = vor.u32 %v996, %v992
      %v998 = vrot.slane %v997, 4
      %v1000 = vshll.u32 %v778, 16
      %v1002 = vrot.slane %v1000, 5
      %v1003 = vsel %vm811, %v998, %v1002
      %v1005 = vshrl.u32 %v779, 16
      %v1007 = vrot.slane %v1005, 4
      %v1008 = vshll.u32 %v779, 16
      %v1010 = vrot.slane %v1008, 5
      %v1011 = vor.u32 %v1007, %v1010
      %v1012 = vrot.slane %v1011, 4
      %v1014 = vshll.u32 %v780, 16
      %v1016 = vrot.slane %v1014, 5
      %v1017 = vsel %vm811, %v1012, %v1016
      %v1018 = vshrl.u32 %v780, 16
      %v1020 = vrot.slane %v1018, 4
      %v1021 = vor.u32 %v1020, %v1016
      %v1022 = vrot.slane %v1021, 4
      %v1024 = vshll.u32 %v781, 16
      %v1026 = vrot.slane %v1024, 5
      %v1027 = vsel %vm811, %v1022, %v1026
      %v1029 = vshrl.u32 %v782, 16
      %v1031 = vrot.slane %v1029, 4
      %v1032 = vshll.u32 %v782, 16
      %v1034 = vrot.slane %v1032, 5
      %v1035 = vor.u32 %v1031, %v1034
      %v1036 = vrot.slane %v1035, 4
      %v1038 = vshll.u32 %v783, 16
      %v1040 = vrot.slane %v1038, 5
      %v1041 = vsel %vm811, %v1036, %v1040
      %v1042 = vshrl.u32 %v783, 16
      %v1044 = vrot.slane %v1042, 4
      %v1045 = vor.u32 %v1044, %v1040
      %v1046 = vrot.slane %v1045, 4
      %v1048 = vshll.u32 %v784, 16
      %v1050 = vrot.slane %v1048, 5
      %v1051 = vsel %vm811, %v1046, %v1050
      %v1053 = vshrl.u32 %v785, 16
      %v1055 = vrot.slane %v1053, 4
      %v1056 = vshll.u32 %v785, 16
      %v1058 = vrot.slane %v1056, 5
      %v1059 = vor.u32 %v1055, %v1058
      %v1060 = vrot.slane %v1059, 4
      %v1062 = vshll.u32 %v786, 16
      %v1064 = vrot.slane %v1062, 5
      %v1065 = vsel %vm811, %v1060, %v1064
      %v1066 = vshrl.u32 %v786, 16
      %v1068 = vrot.slane %v1066, 4
      %v1069 = vor.u32 %v1068, %v1064
      %v1070 = vrot.slane %v1069, 4
      %v1072 = vshll.u32 %v787, 16
      %v1074 = vrot.slane %v1072, 5
      %v1075 = vsel %vm811, %v1070, %v1074
      %v1077 = vshrl.u32 %v788, 16
      %v1079 = vrot.slane %v1077, 4
      %v1080 = vshll.u32 %v788, 16
      %v1082 = vrot.slane %v1080, 5
      %v1083 = vor.u32 %v1079, %v1082
      %v1084 = vrot.slane %v1083, 4
      %v1086 = vshll.u32 %v789, 16
      %v1088 = vrot.slane %v1086, 5
      %v1089 = vsel %vm811, %v1084, %v1088
      %v1090 = vshrl.u32 %v789, 16
      %v1092 = vrot.slane %v1090, 4
      %v1093 = vor.u32 %v1092, %v1088
      %v1094 = vrot.slane %v1093, 4
      %v1096 = vshll.u32 %v790, 16
      %v1098 = vrot.slane %v1096, 5
      %v1099 = vsel %vm811, %v1094, %v1098
      %v1101 = vshrl.u32 %v791, 16
      %v1103 = vrot.slane %v1101, 4
      %v1104 = vshll.u32 %v791, 16
      %v1106 = vrot.slane %v1104, 5
      %v1107 = vor.u32 %v1103, %v1106
      %v1108 = vrot.slane %v1107, 4
      %v1110 = vshll.u32 %v792, 16
      %v1112 = vrot.slane %v1110, 5
      %v1113 = vsel %vm811, %v1108, %v1112
      %v1114 = vshrl.u32 %v792, 16
      %v1116 = vrot.slane %v1114, 4
      %v1117 = vor.u32 %v1116, %v1112
      %v1118 = vrot.slane %v1117, 4
      %v1120 = vshll.u32 %v793, 16
      %v1122 = vrot.slane %v1120, 5
      %v1123 = vsel %vm811, %v1118, %v1122
      %v1125 = vshrl.u32 %v794, 16
      %v1127 = vrot.slane %v1125, 4
      %v1128 = vshll.u32 %v794, 16
      %v1130 = vrot.slane %v1128, 5
      %v1131 = vor.u32 %v1127, %v1130
      %v1132 = vrot.slane %v1131, 4
      %v1134 = vshll.u32 %v795, 16
      %v1136 = vrot.slane %v1134, 5
      %v1137 = vsel %vm811, %v1132, %v1136
      %v1138 = vshrl.u32 %v795, 16
      %v1140 = vrot.slane %v1138, 4
      %v1141 = vor.u32 %v1140, %v1136
      %v1142 = vrot.slane %v1141, 4
      %v1144 = vshll.u32 %v796, 16
      %v1146 = vrot.slane %v1144, 5
      %v1147 = vsel %vm811, %v1142, %v1146
      %v1149 = vshrl.u32 %v797, 16
      %v1151 = vrot.slane %v1149, 4
      %v1152 = vshll.u32 %v797, 16
      %v1154 = vrot.slane %v1152, 5
      %v1155 = vor.u32 %v1151, %v1154
      %v1156 = vrot.slane %v1155, 4
      %v1158 = vshll.u32 %v798, 16
      %v1160 = vrot.slane %v1158, 5
      %v1161 = vsel %vm811, %v1156, %v1160
      %v1162 = vshrl.u32 %v798, 16
      %v1164 = vrot.slane %v1162, 4
      %v1165 = vor.u32 %v1164, %v1160
      %v1166 = vrot.slane %v1165, 4
      %v1168 = vshll.u32 %v799, 16
      %v1170 = vrot.slane %v1168, 5
      %v1171 = vsel %vm811, %v1166, %v1170
      %v1173 = vshrl.u32 %v800, 16
      %v1175 = vrot.slane %v1173, 4
      %v1176 = vshll.u32 %v800, 16
      %v1178 = vrot.slane %v1176, 5
      %v1179 = vor.u32 %v1175, %v1178
      %v1180 = vrot.slane %v1179, 4
      %v1182 = vshll.u32 %v801, 16
      %v1184 = vrot.slane %v1182, 5
      %v1185 = vsel %vm811, %v1180, %v1184
      %v1186 = vshrl.u32 %v801, 16
      %v1188 = vrot.slane %v1186, 4
      %v1189 = vor.u32 %v1188, %v1184
      %v1190 = vrot.slane %v1189, 4
      %v1192 = vshll.u32 %v802, 16
      %v1194 = vrot.slane %v1192, 5
      %v1195 = vsel %vm811, %v1190, %v1194
      %vm1244 = vcmask 1042432
      %vm1245 = vcmask 1046532
      %vm1246 = vmor %vm1244, %vm1245
      %v1247 = vrot.slane %v755, 5
      %v1248 = vrot.slane %v1247, 4
      %v1249 = vrot.slane %v756, 5
      %v1250 = vsel %vm1246, %v1248, %v1249
      %v1251 = vrot.slane %v1249, 4
      %v1252 = vrot.slane %v757, 5
      %v1253 = vsel %vm1246, %v1251, %v1252
      %v1254 = vrot.slane %v758, 5
      %v1255 = vrot.slane %v1254, 4
      %v1256 = vrot.slane %v759, 5
      %v1257 = vsel %vm1246, %v1255, %v1256
      %v1258 = vrot.slane %v1256, 4
      %v1259 = vrot.slane %v760, 5
      %v1260 = vsel %vm1246, %v1258, %v1259
      %v1261 = vrot.slane %v761, 5
      %v1262 = vrot.slane %v1261, 4
      %v1263 = vrot.slane %v762, 5
      %v1264 = vsel %vm1246, %v1262, %v1263
      %v1265 = vrot.slane %v1263, 4
      %v1266 = vrot.slane %v763, 5
      %v1267 = vsel %vm1246, %v1265, %v1266
      %v1268 = vrot.slane %v764, 5
      %v1269 = vrot.slane %v1268, 4
      %v1270 = vrot.slane %v765, 5
      %v1271 = vsel %vm1246, %v1269, %v1270
      %v1272 = vrot.slane %v1270, 4
      %v1273 = vrot.slane %v766, 5
      %v1274 = vsel %vm1246, %v1272, %v1273
      %v1275 = vrot.slane %v767, 5
      %v1276 = vrot.slane %v1275, 4
      %v1277 = vrot.slane %v768, 5
      %v1278 = vsel %vm1246, %v1276, %v1277
      %v1279 = vrot.slane %v1277, 4
      %v1280 = vrot.slane %v769, 5
      %v1281 = vsel %vm1246, %v1279, %v1280
      %v1282 = vrot.slane %v770, 5
      %v1283 = vrot.slane %v1282, 4
      %v1284 = vrot.slane %v771, 5
      %v1285 = vsel %vm1246, %v1283, %v1284
      %v1286 = vrot.slane %v1284, 4
      %v1287 = vrot.slane %v772, 5
      %v1288 = vsel %vm1246, %v1286, %v1287
      %v1289 = vrot.slane %v773, 5
      %v1290 = vrot.slane %v1289, 4
      %v1291 = vrot.slane %v774, 5
      %v1292 = vsel %vm1246, %v1290, %v1291
      %v1293 = vrot.slane %v1291, 4
      %v1294 = vrot.slane %v775, 5
      %v1295 = vsel %vm1246, %v1293, %v1294
      %v1296 = vrot.slane %v776, 5
      %v1297 = vrot.slane %v1296, 4
      %v1298 = vrot.slane %v777, 5
      %v1299 = vsel %vm1246, %v1297, %v1298
      %v1300 = vrot.slane %v1298, 4
      %v1301 = vrot.slane %v778, 5
      %v1302 = vsel %vm1246, %v1300, %v1301
      %v1303 = vrot.slane %v779, 5
      %v1304 = vrot.slane %v1303, 4
      %v1305 = vrot.slane %v780, 5
      %v1306 = vsel %vm1246, %v1304, %v1305
      %v1307 = vrot.slane %v1305, 4
      %v1308 = vrot.slane %v781, 5
      %v1309 = vsel %vm1246, %v1307, %v1308
      %v1310 = vrot.slane %v782, 5
      %v1311 = vrot.slane %v1310, 4
      %v1312 = vrot.slane %v783, 5
      %v1313 = vsel %vm1246, %v1311, %v1312
      %v1314 = vrot.slane %v1312, 4
      %v1315 = vrot.slane %v784, 5
      %v1316 = vsel %vm1246, %v1314, %v1315
      %v1317 = vrot.slane %v785, 5
      %v1318 = vrot.slane %v1317, 4
      %v1319 = vrot.slane %v786, 5
      %v1320 = vsel %vm1246, %v1318, %v1319
      %v1321 = vrot.slane %v1319, 4
      %v1322 = vrot.slane %v787, 5
      %v1323 = vsel %vm1246, %v1321, %v1322
      %v1324 = vrot.slane %v788, 5
      %v1325 = vrot.slane %v1324, 4
      %v1326 = vrot.slane %v789, 5
      %v1327 = vsel %vm1246, %v1325, %v1326
      %v1328 = vrot.slane %v1326, 4
      %v1329 = vrot.slane %v790, 5
      %v1330 = vsel %vm1246, %v1328, %v1329
      %v1331 = vrot.slane %v791, 5
      %v1332 = vrot.slane %v1331, 4
      %v1333 = vrot.slane %v792, 5
      %v1334 = vsel %vm1246, %v1332, %v1333
      %v1335 = vrot.slane %v1333, 4
      %v1336 = vrot.slane %v793, 5
      %v1337 = vsel %vm1246, %v1335, %v1336
      %v1338 = vrot.slane %v794, 5
      %v1339 = vrot.slane %v1338, 4
      %v1340 = vrot.slane %v795, 5
      %v1341 = vsel %vm1246, %v1339, %v1340
      %v1342 = vrot.slane %v1340, 4
      %v1343 = vrot.slane %v796, 5
      %v1344 = vsel %vm1246, %v1342, %v1343
      %v1345 = vrot.slane %v797, 5
      %v1346 = vrot.slane %v1345, 4
      %v1347 = vrot.slane %v798, 5
      %v1348 = vsel %vm1246, %v1346, %v1347
      %v1349 = vrot.slane %v1347, 4
      %v1350 = vrot.slane %v799, 5
      %v1351 = vsel %vm1246, %v1349, %v1350
      %v1352 = vrot.slane %v800, 5
      %v1353 = vrot.slane %v1352, 4
      %v1354 = vrot.slane %v801, 5
      %v1355 = vsel %vm1246, %v1353, %v1354
      %v1356 = vrot.slane %v1354, 4
      %v1357 = vrot.slane %v802, 5
      %v1358 = vsel %vm1246, %v1356, %v1357
      %v1360 = vshrl.u32 %v803, 16
      %v1362 = vrot.slane %v1360, 4
      %v1363 = vshll.u32 %v803, 16
      %v1365 = vrot.slane %v1363, 5
      %v1366 = vor.u32 %v1362, %v1365
      %v1367 = vrot.slane %v1366, 4
      %v1369 = vshll.u32 %v804, 16
      %v1371 = vrot.slane %v1369, 5
      %v1372 = vsel %vm811, %v1367, %v1371
      %v1373 = vshrl.u32 %v804, 16
      %v1375 = vrot.slane %v1373, 4
      %v1376 = vor.u32 %v1375, %v1371
      %v1377 = vrot.slane %v1376, 4
      %v1379 = vshll.u32 %v805, 16
      %v1381 = vrot.slane %v1379, 5
      %v1382 = vsel %vm811, %v1377, %v1381
      %v1386 = vrot.slane %v803, 5
      %v1387 = vrot.slane %v1386, 4
      %v1388 = vrot.slane %v804, 5
      %v1389 = vsel %vm1246, %v1387, %v1388
      %v1390 = vrot.slane %v1388, 4
      %v1391 = vrot.slane %v805, 5
      %v1392 = vsel %vm1246, %v1390, %v1391
      %v1394 = vshrl.u32 %v806, 16
      %v1396 = vrot.slane %v1394, 4
      %v1397 = vshll.u32 %v806, 16
      %v1399 = vrot.slane %v1397, 5
      %v1400 = vor.u32 %v1396, %v1399
      %v1401 = vrot.slane %v1400, 4
      %v1403 = vshll.u32 %v807, 16
      %v1405 = vrot.slane %v1403, 5
      %v1406 = vsel %vm811, %v1401, %v1405
      %v1407 = vshrl.u32 %v807, 16
      %v1409 = vrot.slane %v1407, 4
      %v1410 = vor.u32 %v1409, %v1405
      %v1411 = vrot.slane %v1410, 4
      %v1413 = vshll.u32 %v808, 16
      %v1415 = vrot.slane %v1413, 5
      %v1416 = vsel %vm811, %v1411, %v1415
      %v1420 = vrot.slane %v806, 5
      %v1421 = vrot.slane %v1420, 4
      %v1422 = vrot.slane %v807, 5
      %v1423 = vsel %vm1246, %v1421, %v1422
      %v1424 = vrot.slane %v1422, 4
      %v1425 = vrot.slane %v808, 5
      %v1426 = vsel %vm1246, %v1424, %v1425
      %v1427 = vunpack.c.l.b16 %v755
      %v1428 = vunpack.c.l.b16 %v756
      %v1429 = vunpack.c.l.b16 %v758
      %v1430 = vunpack.c.l.b16 %v759
      %v1431 = vunpack.c.l.b16 %v761
      %v1432 = vunpack.c.l.b16 %v762
      %v1433 = vunpack.c.l.b16 %v764
      %v1434 = vunpack.c.l.b16 %v765
      %v1435 = vunpack.c.l.b16 %v767
      %v1436 = vunpack.c.l.b16 %v768
      %v1437 = vunpack.c.l.b16 %v770
      %v1438 = vunpack.c.l.b16 %v771
      %v1439 = vunpack.c.l.b16 %v773
      %v1440 = vunpack.c.l.b16 %v774
      %v1441 = vunpack.c.l.b16 %v776
      %v1442 = vunpack.c.l.b16 %v777
      %v1443 = vunpack.c.l.b16 %v779
      %v1444 = vunpack.c.l.b16 %v780
      %v1445 = vunpack.c.l.b16 %v782
      %v1446 = vunpack.c.l.b16 %v783
      %v1447 = vunpack.c.l.b16 %v785
      %v1448 = vunpack.c.l.b16 %v786
      %v1449 = vunpack.c.l.b16 %v788
      %v1450 = vunpack.c.l.b16 %v789
      %v1451 = vunpack.c.l.b16 %v791
      %v1452 = vunpack.c.l.b16 %v792
      %v1453 = vunpack.c.l.b16 %v794
      %v1454 = vunpack.c.l.b16 %v795
      %v1455 = vunpack.c.l.b16 %v797
      %v1456 = vunpack.c.l.b16 %v798
      %v1457 = vunpack.c.l.b16 %v800
      %v1458 = vunpack.c.l.b16 %v801
      %v1459 = vpack.c.b16 %v1428, %v1427
      %v1460 = vpack.c.b16 %v1430, %v1429
      %v1461 = vpack.c.b16 %v1432, %v1431
      %v1462 = vpack.c.b16 %v1434, %v1433
      %v1463 = vpack.c.b16 %v1436, %v1435
      %v1464 = vpack.c.b16 %v1438, %v1437
      %v1465 = vpack.c.b16 %v1440, %v1439
      %v1466 = vpack.c.b16 %v1442, %v1441
      %v1467 = vpack.c.b16 %v1444, %v1443
      %v1468 = vpack.c.b16 %v1446, %v1445
      %v1469 = vpack.c.b16 %v1448, %v1447
      %v1470 = vpack.c.b16 %v1450, %v1449
      %v1471 = vpack.c.b16 %v1452, %v1451
      %v1472 = vpack.c.b16 %v1454, %v1453
      %v1473 = vpack.c.b16 %v1456, %v1455
      %v1474 = vpack.c.b16 %v1458, %v1457
      %v1475 = vunpack.c.l.b16 %v825
      %v1476 = vunpack.c.l.b16 %v835
      %v1477 = vunpack.c.l.b16 %v849
      %v1478 = vunpack.c.l.b16 %v859
      %v1479 = vunpack.c.l.b16 %v873
      %v1480 = vunpack.c.l.b16 %v883
      %v1481 = vunpack.c.l.b16 %v897
      %v1482 = vunpack.c.l.b16 %v907
      %v1483 = vunpack.c.l.b16 %v921
      %v1484 = vunpack.c.l.b16 %v931
      %v1485 = vunpack.c.l.b16 %v945
      %v1486 = vunpack.c.l.b16 %v955
      %v1487 = vunpack.c.l.b16 %v969
      %v1488 = vunpack.c.l.b16 %v979
      %v1489 = vunpack.c.l.b16 %v993
      %v1490 = vunpack.c.l.b16 %v1003
      %v1491 = vunpack.c.l.b16 %v1017
      %v1492 = vunpack.c.l.b16 %v1027
      %v1493 = vunpack.c.l.b16 %v1041
      %v1494 = vunpack.c.l.b16 %v1051
      %v1495 = vunpack.c.l.b16 %v1065
      %v1496 = vunpack.c.l.b16 %v1075
      %v1497 = vunpack.c.l.b16 %v1089
      %v1498 = vunpack.c.l.b16 %v1099
      %v1499 = vunpack.c.l.b16 %v1113
      %v1500 = vunpack.c.l.b16 %v1123
      %v1501 = vunpack.c.l.b16 %v1137
      %v1502 = vunpack.c.l.b16 %v1147
      %v1503 = vunpack.c.l.b16 %v1161
      %v1504 = vunpack.c.l.b16 %v1171
      %v1505 = vunpack.c.l.b16 %v1185
      %v1506 = vunpack.c.l.b16 %v1195
      %v1507 = vpack.c.b16 %v1476, %v1475
      %v1508 = vpack.c.b16 %v1478, %v1477
      %v1509 = vpack.c.b16 %v1480, %v1479
      %v1510 = vpack.c.b16 %v1482, %v1481
      %v1511 = vpack.c.b16 %v1484, %v1483
      %v1512 = vpack.c.b16 %v1486, %v1485
      %v1513 = vpack.c.b16 %v1488, %v1487
      %v1514 = vpack.c.b16 %v1490, %v1489
      %v1515 = vpack.c.b16 %v1492, %v1491
      %v1516 = vpack.c.b16 %v1494, %v1493
      %v1517 = vpack.c.b16 %v1496, %v1495
      %v1518 = vpack.c.b16 %v1498, %v1497
      %v1519 = vpack.c.b16 %v1500, %v1499
      %v1520 = vpack.c.b16 %v1502, %v1501
      %v1521 = vpack.c.b16 %v1504, %v1503
      %v1522 = vpack.c.b16 %v1506, %v1505
      %1523 = vrot.lane.b32.xlu0 %v1507, 3
      %v1524 = vpop.permute.xlu0 %1523
      %1525 = vrot.lane.b32.xlu0 %v1508, 3
      %v1526 = vpop.permute.xlu0 %1525
      %1527 = vrot.lane.b32.xlu0 %v1509, 3
      %v1528 = vpop.permute.xlu0 %1527
      %1529 = vrot.lane.b32.xlu0 %v1510, 3
      %v1530 = vpop.permute.xlu0 %1529
      %1531 = vrot.lane.b32.xlu0 %v1511, 3
      %v1532 = vpop.permute.xlu0 %1531
      %1533 = vrot.lane.b32.xlu0 %v1512, 3
      %v1534 = vpop.permute.xlu0 %1533
      %1535 = vrot.lane.b32.xlu0 %v1513, 3
      %v1536 = vpop.permute.xlu0 %1535
      %1537 = vrot.lane.b32.xlu0 %v1514, 3
      %v1538 = vpop.permute.xlu0 %1537
      %1539 = vrot.lane.b32.xlu0 %v1515, 3
      %v1540 = vpop.permute.xlu0 %1539
      %1541 = vrot.lane.b32.xlu0 %v1516, 3
      %v1542 = vpop.permute.xlu0 %1541
      %1543 = vrot.lane.b32.xlu0 %v1517, 3
      %v1544 = vpop.permute.xlu0 %1543
      %1545 = vrot.lane.b32.xlu0 %v1518, 3
      %v1546 = vpop.permute.xlu0 %1545
      %1547 = vrot.lane.b32.xlu0 %v1519, 3
      %v1548 = vpop.permute.xlu0 %1547
      %1549 = vrot.lane.b32.xlu0 %v1520, 3
      %v1550 = vpop.permute.xlu0 %1549
      %1551 = vrot.lane.b32.xlu0 %v1521, 3
      %v1552 = vpop.permute.xlu0 %1551
      %1553 = vrot.lane.b32.xlu0 %v1522, 3
      %v1554 = vpop.permute.xlu0 %1553
      %v1555 = vunpack.c.l.b16 %v1250
      %v1556 = vunpack.c.l.b16 %v1253
      %v1557 = vunpack.c.l.b16 %v1257
      %v1558 = vunpack.c.l.b16 %v1260
      %v1559 = vunpack.c.l.b16 %v1264
      %v1560 = vunpack.c.l.b16 %v1267
      %v1561 = vunpack.c.l.b16 %v1271
      %v1562 = vunpack.c.l.b16 %v1274
      %v1563 = vunpack.c.l.b16 %v1278
      %v1564 = vunpack.c.l.b16 %v1281
      %v1565 = vunpack.c.l.b16 %v1285
      %v1566 = vunpack.c.l.b16 %v1288
      %v1567 = vunpack.c.l.b16 %v1292
      %v1568 = vunpack.c.l.b16 %v1295
      %v1569 = vunpack.c.l.b16 %v1299
      %v1570 = vunpack.c.l.b16 %v1302
      %v1571 = vunpack.c.l.b16 %v1306
      %v1572 = vunpack.c.l.b16 %v1309
      %v1573 = vunpack.c.l.b16 %v1313
      %v1574 = vunpack.c.l.b16 %v1316
      %v1575 = vunpack.c.l.b16 %v1320
      %v1576 = vunpack.c.l.b16 %v1323
      %v1577 = vunpack.c.l.b16 %v1327
      %v1578 = vunpack.c.l.b16 %v1330
      %v1579 = vunpack.c.l.b16 %v1334
      %v1580 = vunpack.c.l.b16 %v1337
      %v1581 = vunpack.c.l.b16 %v1341
      %v1582 = vunpack.c.l.b16 %v1344
      %v1583 = vunpack.c.l.b16 %v1348
      %v1584 = vunpack.c.l.b16 %v1351
      %v1585 = vunpack.c.l.b16 %v1355
      %v1586 = vunpack.c.l.b16 %v1358
      %v1587 = vpack.c.b16 %v1556, %v1555
      %v1588 = vpack.c.b16 %v1558, %v1557
      %v1589 = vpack.c.b16 %v1560, %v1559
      %v1590 = vpack.c.b16 %v1562, %v1561
      %v1591 = vpack.c.b16 %v1564, %v1563
      %v1592 = vpack.c.b16 %v1566, %v1565
      %v1593 = vpack.c.b16 %v1568, %v1567
      %v1594 = vpack.c.b16 %v1570, %v1569
      %v1595 = vpack.c.b16 %v1572, %v1571
      %v1596 = vpack.c.b16 %v1574, %v1573
      %v1597 = vpack.c.b16 %v1576, %v1575
      %v1598 = vpack.c.b16 %v1578, %v1577
      %v1599 = vpack.c.b16 %v1580, %v1579
      %v1600 = vpack.c.b16 %v1582, %v1581
      %v1601 = vpack.c.b16 %v1584, %v1583
      %v1602 = vpack.c.b16 %v1586, %v1585
      %1603 = vrot.lane.b32.xlu0 %v1587, 6
      %v1604 = vpop.permute.xlu0 %1603
      %1605 = vrot.lane.b32.xlu0 %v1588, 6
      %v1606 = vpop.permute.xlu0 %1605
      %1607 = vrot.lane.b32.xlu0 %v1589, 6
      %v1608 = vpop.permute.xlu0 %1607
      %1609 = vrot.lane.b32.xlu0 %v1590, 6
      %v1610 = vpop.permute.xlu0 %1609
      %1611 = vrot.lane.b32.xlu0 %v1591, 6
      %v1612 = vpop.permute.xlu0 %1611
      %1613 = vrot.lane.b32.xlu0 %v1592, 6
      %v1614 = vpop.permute.xlu0 %1613
      %1615 = vrot.lane.b32.xlu0 %v1593, 6
      %v1616 = vpop.permute.xlu0 %1615
      %1617 = vrot.lane.b32.xlu0 %v1594, 6
      %v1618 = vpop.permute.xlu0 %1617
      %1619 = vrot.lane.b32.xlu0 %v1595, 6
      %v1620 = vpop.permute.xlu0 %1619
      %1621 = vrot.lane.b32.xlu0 %v1596, 6
      %v1622 = vpop.permute.xlu0 %1621
      %1623 = vrot.lane.b32.xlu0 %v1597, 6
      %v1624 = vpop.permute.xlu0 %1623
      %1625 = vrot.lane.b32.xlu0 %v1598, 6
      %v1626 = vpop.permute.xlu0 %1625
      %1627 = vrot.lane.b32.xlu0 %v1599, 6
      %v1628 = vpop.permute.xlu0 %1627
      %1629 = vrot.lane.b32.xlu0 %v1600, 6
      %v1630 = vpop.permute.xlu0 %1629
      %1631 = vrot.lane.b32.xlu0 %v1601, 6
      %v1632 = vpop.permute.xlu0 %1631
      %1633 = vrot.lane.b32.xlu0 %v1602, 6
      %v1634 = vpop.permute.xlu0 %1633
      %v1635 = vunpack.c.l.b16 %v803
      %v1636 = vunpack.c.l.b16 %v804
      %v1637 = vpack.c.b16 %v1636, %v1635
      %1638 = vrot.lane.b32.xlu0 %v1460, 9
      %v1639 = vpop.permute.xlu0 %1638
      %1640 = vrot.lane.b32.xlu0 %v1461, 9
      %v1641 = vpop.permute.xlu0 %1640
      %1642 = vrot.lane.b32.xlu0 %v1462, 9
      %v1643 = vpop.permute.xlu0 %1642
      %1644 = vrot.lane.b32.xlu0 %v1463, 9
      %v1645 = vpop.permute.xlu0 %1644
      %1646 = vrot.lane.b32.xlu0 %v1464, 9
      %v1647 = vpop.permute.xlu0 %1646
      %1648 = vrot.lane.b32.xlu0 %v1465, 9
      %v1649 = vpop.permute.xlu0 %1648
      %1650 = vrot.lane.b32.xlu0 %v1466, 9
      %v1651 = vpop.permute.xlu0 %1650
      %1652 = vrot.lane.b32.xlu0 %v1467, 9
      %v1653 = vpop.permute.xlu0 %1652
      %1654 = vrot.lane.b32.xlu0 %v1468, 9
      %v1655 = vpop.permute.xlu0 %1654
      %1656 = vrot.lane.b32.xlu0 %v1469, 9
      %v1657 = vpop.permute.xlu0 %1656
      %1658 = vrot.lane.b32.xlu0 %v1470, 9
      %v1659 = vpop.permute.xlu0 %1658
      %1660 = vrot.lane.b32.xlu0 %v1471, 9
      %v1661 = vpop.permute.xlu0 %1660
      %1662 = vrot.lane.b32.xlu0 %v1472, 9
      %v1663 = vpop.permute.xlu0 %1662
      %1664 = vrot.lane.b32.xlu0 %v1473, 9
      %v1665 = vpop.permute.xlu0 %1664
      %1666 = vrot.lane.b32.xlu0 %v1474, 9
      %v1667 = vpop.permute.xlu0 %1666
      %1668 = vrot.lane.b32.xlu0 %v1637, 9
      %v1669 = vpop.permute.xlu0 %1668
      %v1670 = vunpack.c.l.b16 %v1372
      %v1671 = vunpack.c.l.b16 %v1382
      %v1672 = vpack.c.b16 %v1671, %v1670
      %1673 = vrot.lane.b32.xlu0 %v1508, 12
      %v1674 = vpop.permute.xlu0 %1673
      %1675 = vrot.lane.b32.xlu0 %v1509, 12
      %v1676 = vpop.permute.xlu0 %1675
      %1677 = vrot.lane.b32.xlu0 %v1510, 12
      %v1678 = vpop.permute.xlu0 %1677
      %1679 = vrot.lane.b32.xlu0 %v1511, 12
      %v1680 = vpop.permute.xlu0 %1679
      %1681 = vrot.lane.b32.xlu0 %v1512, 12
      %v1682 = vpop.permute.xlu0 %1681
      %1683 = vrot.lane.b32.xlu0 %v1513, 12
      %v1684 = vpop.permute.xlu0 %1683
      %1685 = vrot.lane.b32.xlu0 %v1514, 12
      %v1686 = vpop.permute.xlu0 %1685
      %1687 = vrot.lane.b32.xlu0 %v1515, 12
      %v1688 = vpop.permute.xlu0 %1687
      %1689 = vrot.lane.b32.xlu0 %v1516, 12
      %v1690 = vpop.permute.xlu0 %1689
      %1691 = vrot.lane.b32.xlu0 %v1517, 12
      %v1692 = vpop.permute.xlu0 %1691
      %1693 = vrot.lane.b32.xlu0 %v1518, 12
      %v1694 = vpop.permute.xlu0 %1693
      %1695 = vrot.lane.b32.xlu0 %v1519, 12
      %v1696 = vpop.permute.xlu0 %1695
      %1697 = vrot.lane.b32.xlu0 %v1520, 12
      %v1698 = vpop.permute.xlu0 %1697
      %1699 = vrot.lane.b32.xlu0 %v1521, 12
      %v1700 = vpop.permute.xlu0 %1699
      %1701 = vrot.lane.b32.xlu0 %v1522, 12
      %v1702 = vpop.permute.xlu0 %1701
      %1703 = vrot.lane.b32.xlu0 %v1672, 12
      %v1704 = vpop.permute.xlu0 %1703
      %v1705 = vunpack.c.l.b16 %v1389
      %v1706 = vunpack.c.l.b16 %v1392
      %v1707 = vpack.c.b16 %v1706, %v1705
      %1708 = vrot.lane.b32.xlu0 %v1588, 15
      %v1709 = vpop.permute.xlu0 %1708
      %1710 = vrot.lane.b32.xlu0 %v1589, 15
      %v1711 = vpop.permute.xlu0 %1710
      %1712 = vrot.lane.b32.xlu0 %v1590, 15
      %v1713 = vpop.permute.xlu0 %1712
      %1714 = vrot.lane.b32.xlu0 %v1591, 15
      %v1715 = vpop.permute.xlu0 %1714
      %1716 = vrot.lane.b32.xlu0 %v1592, 15
      %v1717 = vpop.permute.xlu0 %1716
      %1718 = vrot.lane.b32.xlu0 %v1593, 15
      %v1719 = vpop.permute.xlu0 %1718
      %1720 = vrot.lane.b32.xlu0 %v1594, 15
      %v1721 = vpop.permute.xlu0 %1720
      %1722 = vrot.lane.b32.xlu0 %v1595, 15
      %v1723 = vpop.permute.xlu0 %1722
      %1724 = vrot.lane.b32.xlu0 %v1596, 15
      %v1725 = vpop.permute.xlu0 %1724
      %1726 = vrot.lane.b32.xlu0 %v1597, 15
      %v1727 = vpop.permute.xlu0 %1726
      %1728 = vrot.lane.b32.xlu0 %v1598, 15
      %v1729 = vpop.permute.xlu0 %1728
      %1730 = vrot.lane.b32.xlu0 %v1599, 15
      %v1731 = vpop.permute.xlu0 %1730
      %1732 = vrot.lane.b32.xlu0 %v1600, 15
      %v1733 = vpop.permute.xlu0 %1732
      %1734 = vrot.lane.b32.xlu0 %v1601, 15
      %v1735 = vpop.permute.xlu0 %1734
      %1736 = vrot.lane.b32.xlu0 %v1602, 15
      %v1737 = vpop.permute.xlu0 %1736
      %1738 = vrot.lane.b32.xlu0 %v1707, 15
      %v1739 = vpop.permute.xlu0 %1738
      %v1740 = vunpack.c.l.b16 %v806
      %v1741 = vunpack.c.l.b16 %v807
      %v1742 = vpack.c.b16 %v1741, %v1740
      %1743 = vrot.lane.b32.xlu0 %v1461, 18
      %v1744 = vpop.permute.xlu0 %1743
      %1745 = vrot.lane.b32.xlu0 %v1462, 18
      %v1746 = vpop.permute.xlu0 %1745
      %1747 = vrot.lane.b32.xlu0 %v1463, 18
      %v1748 = vpop.permute.xlu0 %1747
      %1749 = vrot.lane.b32.xlu0 %v1464, 18
      %v1750 = vpop.permute.xlu0 %1749
      %1751 = vrot.lane.b32.xlu0 %v1465, 18
      %v1752 = vpop.permute.xlu0 %1751
      %1753 = vrot.lane.b32.xlu0 %v1466, 18
      %v1754 = vpop.permute.xlu0 %1753
      %1755 = vrot.lane.b32.xlu0 %v1467, 18
      %v1756 = vpop.permute.xlu0 %1755
      %1757 = vrot.lane.b32.xlu0 %v1468, 18
      %v1758 = vpop.permute.xlu0 %1757
      %1759 = vrot.lane.b32.xlu0 %v1469, 18
      %v1760 = vpop.permute.xlu0 %1759
      %1761 = vrot.lane.b32.xlu0 %v1470, 18
      %v1762 = vpop.permute.xlu0 %1761
      %1763 = vrot.lane.b32.xlu0 %v1471, 18
      %v1764 = vpop.permute.xlu0 %1763
      %1765 = vrot.lane.b32.xlu0 %v1472, 18
      %v1766 = vpop.permute.xlu0 %1765
      %1767 = vrot.lane.b32.xlu0 %v1473, 18
      %v1768 = vpop.permute.xlu0 %1767
      %1769 = vrot.lane.b32.xlu0 %v1474, 18
      %v1770 = vpop.permute.xlu0 %1769
      %1771 = vrot.lane.b32.xlu0 %v1637, 18
      %v1772 = vpop.permute.xlu0 %1771
      %1773 = vrot.lane.b32.xlu0 %v1742, 18
      %v1774 = vpop.permute.xlu0 %1773
      %v1775 = vunpack.c.l.b16 %v1406
      %v1776 = vunpack.c.l.b16 %v1416
      %v1777 = vpack.c.b16 %v1776, %v1775
      %1778 = vrot.lane.b32.xlu0 %v1509, 21
      %v1779 = vpop.permute.xlu0 %1778
      %1780 = vrot.lane.b32.xlu0 %v1510, 21
      %v1781 = vpop.permute.xlu0 %1780
      %1782 = vrot.lane.b32.xlu0 %v1511, 21
      %v1783 = vpop.permute.xlu0 %1782
      %1784 = vrot.lane.b32.xlu0 %v1512, 21
      %v1785 = vpop.permute.xlu0 %1784
      %1786 = vrot.lane.b32.xlu0 %v1513, 21
      %v1787 = vpop.permute.xlu0 %1786
      %1788 = vrot.lane.b32.xlu0 %v1514, 21
      %v1789 = vpop.permute.xlu0 %1788
      %1790 = vrot.lane.b32.xlu0 %v1515, 21
      %v1791 = vpop.permute.xlu0 %1790
      %1792 = vrot.lane.b32.xlu0 %v1516, 21
      %v1793 = vpop.permute.xlu0 %1792
      %1794 = vrot.lane.b32.xlu0 %v1517, 21
      %v1795 = vpop.permute.xlu0 %1794
      %1796 = vrot.lane.b32.xlu0 %v1518, 21
      %v1797 = vpop.permute.xlu0 %1796
      %1798 = vrot.lane.b32.xlu0 %v1519, 21
      %v1799 = vpop.permute.xlu0 %1798
      %1800 = vrot.lane.b32.xlu0 %v1520, 21
      %v1801 = vpop.permute.xlu0 %1800
      %1802 = vrot.lane.b32.xlu0 %v1521, 21
      %v1803 = vpop.permute.xlu0 %1802
      %1804 = vrot.lane.b32.xlu0 %v1522, 21
      %v1805 = vpop.permute.xlu0 %1804
      %1806 = vrot.lane.b32.xlu0 %v1672, 21
      %v1807 = vpop.permute.xlu0 %1806
      %1808 = vrot.lane.b32.xlu0 %v1777, 21
      %v1809 = vpop.permute.xlu0 %1808
      %v1810 = vunpack.c.l.b16 %v1423
      %v1811 = vunpack.c.l.b16 %v1426
      %v1812 = vpack.c.b16 %v1811, %v1810
      %1813 = vrot.lane.b32.xlu0 %v1589, 24
      %v1814 = vpop.permute.xlu0 %1813
      %1815 = vrot.lane.b32.xlu0 %v1590, 24
      %v1816 = vpop.permute.xlu0 %1815
      %1817 = vrot.lane.b32.xlu0 %v1591, 24
      %v1818 = vpop.permute.xlu0 %1817
      %1819 = vrot.lane.b32.xlu0 %v1592, 24
      %v1820 = vpop.permute.xlu0 %1819
      %1821 = vrot.lane.b32.xlu0 %v1593, 24
      %v1822 = vpop.permute.xlu0 %1821
      %1823 = vrot.lane.b32.xlu0 %v1594, 24
      %v1824 = vpop.permute.xlu0 %1823
      %1825 = vrot.lane.b32.xlu0 %v1595, 24
      %v1826 = vpop.permute.xlu0 %1825
      %1827 = vrot.lane.b32.xlu0 %v1596, 24
      %v1828 = vpop.permute.xlu0 %1827
      %1829 = vrot.lane.b32.xlu0 %v1597, 24
      %v1830 = vpop.permute.xlu0 %1829
      %1831 = vrot.lane.b32.xlu0 %v1598, 24
      %v1832 = vpop.permute.xlu0 %1831
      %1833 = vrot.lane.b32.xlu0 %v1599, 24
      %v1834 = vpop.permute.xlu0 %1833
      %1835 = vrot.lane.b32.xlu0 %v1600, 24
      %v1836 = vpop.permute.xlu0 %1835
      %1837 = vrot.lane.b32.xlu0 %v1601, 24
      %v1838 = vpop.permute.xlu0 %1837
      %1839 = vrot.lane.b32.xlu0 %v1602, 24
      %v1840 = vpop.permute.xlu0 %1839
      %1841 = vrot.lane.b32.xlu0 %v1707, 24
      %v1842 = vpop.permute.xlu0 %1841
      %1843 = vrot.lane.b32.xlu0 %v1812, 24
      %v1844 = vpop.permute.xlu0 %1843
      %vm1845 = vcmask 23552
      %v1848 = vsel %vm1845, %v1459, %v1524
      %v1851 = vsel %vm1845, %v1460, %v1526
      %v1854 = vsel %vm1845, %v1461, %v1528
      %v1857 = vsel %vm1845, %v1462, %v1530
      %v1860 = vsel %vm1845, %v1463, %v1532
      %v1863 = vsel %vm1845, %v1464, %v1534
      %v1866 = vsel %vm1845, %v1465, %v1536
      %v1869 = vsel %vm1845, %v1466, %v1538
      %v1872 = vsel %vm1845, %v1467, %v1540
      %v1875 = vsel %vm1845, %v1468, %v1542
      %v1878 = vsel %vm1845, %v1469, %v1544
      %v1881 = vsel %vm1845, %v1470, %v1546
      %v1884 = vsel %vm1845, %v1471, %v1548
      %v1887 = vsel %vm1845, %v1472, %v1550
      %v1890 = vsel %vm1845, %v1473, %v1552
      %v1893 = vsel %vm1845, %v1474, %v1554
      %vm1894 = vcmask 48128
      %v1896 = vsel %vm1894, %v1848, %v1604
      %v1898 = vsel %vm1894, %v1851, %v1606
      %v1900 = vsel %vm1894, %v1854, %v1608
      %v1902 = vsel %vm1894, %v1857, %v1610
      %v1904 = vsel %vm1894, %v1860, %v1612
      %v1906 = vsel %vm1894, %v1863, %v1614
      %v1908 = vsel %vm1894, %v1866, %v1616
      %v1910 = vsel %vm1894, %v1869, %v1618
      %v1912 = vsel %vm1894, %v1872, %v1620
      %v1914 = vsel %vm1894, %v1875, %v1622
      %v1916 = vsel %vm1894, %v1878, %v1624
      %v1918 = vsel %vm1894, %v1881, %v1626
      %v1920 = vsel %vm1894, %v1884, %v1628
      %v1922 = vsel %vm1894, %v1887, %v1630
      %v1924 = vsel %vm1894, %v1890, %v1632
      %v1926 = vsel %vm1894, %v1893, %v1634
      %vm1927 = vcmask 72704
      %v1929 = vsel %vm1927, %v1896, %v1639
      %v1931 = vsel %vm1927, %v1898, %v1641
      %v1933 = vsel %vm1927, %v1900, %v1643
      %v1935 = vsel %vm1927, %v1902, %v1645
      %v1937 = vsel %vm1927, %v1904, %v1647
      %v1939 = vsel %vm1927, %v1906, %v1649
      %v1941 = vsel %vm1927, %v1908, %v1651
      %v1943 = vsel %vm1927, %v1910, %v1653
      %v1945 = vsel %vm1927, %v1912, %v1655
      %v1947 = vsel %vm1927, %v1914, %v1657
      %v1949 = vsel %vm1927, %v1916, %v1659
      %v1951 = vsel %vm1927, %v1918, %v1661
      %v1953 = vsel %vm1927, %v1920, %v1663
      %v1955 = vsel %vm1927, %v1922, %v1665
      %v1957 = vsel %vm1927, %v1924, %v1667
      %v1959 = vsel %vm1927, %v1926, %v1669
      %vm1960 = vcmask 97280
      %v1962 = vsel %vm1960, %v1929, %v1674
      %v1964 = vsel %vm1960, %v1931, %v1676
      %v1966 = vsel %vm1960, %v1933, %v1678
      %v1968 = vsel %vm1960, %v1935, %v1680
      %v1970 = vsel %vm1960, %v1937, %v1682
      %v1972 = vsel %vm1960, %v1939, %v1684
      %v1974 = vsel %vm1960, %v1941, %v1686
      %v1976 = vsel %vm1960, %v1943, %v1688
      %v1978 = vsel %vm1960, %v1945, %v1690
      %v1980 = vsel %vm1960, %v1947, %v1692
      %v1982 = vsel %vm1960, %v1949, %v1694
      %v1984 = vsel %vm1960, %v1951, %v1696
      %v1986 = vsel %vm1960, %v1953, %v1698
      %v1988 = vsel %vm1960, %v1955, %v1700
      %v1990 = vsel %vm1960, %v1957, %v1702
      %v1992 = vsel %vm1960, %v1959, %v1704
      %vm1993 = vcmask 121856
      %v1995 = vsel %vm1993, %v1962, %v1709
      %v1997 = vsel %vm1993, %v1964, %v1711
      %v1999 = vsel %vm1993, %v1966, %v1713
      %v2001 = vsel %vm1993, %v1968, %v1715
      %v2003 = vsel %vm1993, %v1970, %v1717
      %v2005 = vsel %vm1993, %v1972, %v1719
      %v2007 = vsel %vm1993, %v1974, %v1721
      %v2009 = vsel %vm1993, %v1976, %v1723
      %v2011 = vsel %vm1993, %v1978, %v1725
      %v2013 = vsel %vm1993, %v1980, %v1727
      %v2015 = vsel %vm1993, %v1982, %v1729
      %v2017 = vsel %vm1993, %v1984, %v1731
      %v2019 = vsel %vm1993, %v1986, %v1733
      %v2021 = vsel %vm1993, %v1988, %v1735
      %v2023 = vsel %vm1993, %v1990, %v1737
      %v2025 = vsel %vm1993, %v1992, %v1739
      %vm2026 = vcmask 146432
      %v2028 = vsel %vm2026, %v1995, %v1744
      %v2030 = vsel %vm2026, %v1997, %v1746
      %v2032 = vsel %vm2026, %v1999, %v1748
      %v2034 = vsel %vm2026, %v2001, %v1750
      %v2036 = vsel %vm2026, %v2003, %v1752
      %v2038 = vsel %vm2026, %v2005, %v1754
      %v2040 = vsel %vm2026, %v2007, %v1756
      %v2042 = vsel %vm2026, %v2009, %v1758
      %v2044 = vsel %vm2026, %v2011, %v1760
      %v2046 = vsel %vm2026, %v2013, %v1762
      %v2048 = vsel %vm2026, %v2015, %v1764
      %v2050 = vsel %vm2026, %v2017, %v1766
      %v2052 = vsel %vm2026, %v2019, %v1768
      %v2054 = vsel %vm2026, %v2021, %v1770
      %v2056 = vsel %vm2026, %v2023, %v1772
      %v2058 = vsel %vm2026, %v2025, %v1774
      %vm2059 = vcmask 171008
      %v2061 = vsel %vm2059, %v2028, %v1779
      %v2063 = vsel %vm2059, %v2030, %v1781
      %v2065 = vsel %vm2059, %v2032, %v1783
      %v2067 = vsel %vm2059, %v2034, %v1785
      %v2069 = vsel %vm2059, %v2036, %v1787
      %v2071 = vsel %vm2059, %v2038, %v1789
      %v2073 = vsel %vm2059, %v2040, %v1791
      %v2075 = vsel %vm2059, %v2042, %v1793
      %v2077 = vsel %vm2059, %v2044, %v1795
      %v2079 = vsel %vm2059, %v2046, %v1797
      %v2081 = vsel %vm2059, %v2048, %v1799
      %v2083 = vsel %vm2059, %v2050, %v1801
      %v2085 = vsel %vm2059, %v2052, %v1803
      %v2087 = vsel %vm2059, %v2054, %v1805
      %v2089 = vsel %vm2059, %v2056, %v1807
      %v2091 = vsel %vm2059, %v2058, %v1809
      %vm2092 = vcmask 195584
      %v2094 = vsel %vm2092, %v2061, %v1814
      %v2096 = vsel %vm2092, %v2063, %v1816
      %v2098 = vsel %vm2092, %v2065, %v1818
      %v2100 = vsel %vm2092, %v2067, %v1820
      %v2102 = vsel %vm2092, %v2069, %v1822
      %v2104 = vsel %vm2092, %v2071, %v1824
      %v2106 = vsel %vm2092, %v2073, %v1826
      %v2108 = vsel %vm2092, %v2075, %v1828
      %v2110 = vsel %vm2092, %v2077, %v1830
      %v2112 = vsel %vm2092, %v2079, %v1832
      %v2114 = vsel %vm2092, %v2081, %v1834
      %v2116 = vsel %vm2092, %v2083, %v1836
      %v2118 = vsel %vm2092, %v2085, %v1838
      %v2120 = vsel %vm2092, %v2087, %v1840
      %v2122 = vsel %vm2092, %v2089, %v1842
      %v2124 = vsel %vm2092, %v2091, %v1844
      %v2125 = vld [vmem:[%s1] sm:$0xf]
      %v2126 = vld [vmem:[%s1 + $0x4] sm:$0xf]
      %v2127 = vld [vmem:[%s1 + $0x8] sm:$0xf]
      %v2128 = vld [vmem:[%s1 + $0xc] sm:$0x3]
      %v2129 = vld [vmem:[%s2] sm:$0x1]
      %v2131 = vlaneseq
      %v2132 = vshrl.u32 %v2131, 7
      %v2133 = vsub.s32 0, %v2132
      %v2134 = vrot.slane %v2129, %v2133
      %v2140 = vunpack.c.l.b16 %v2125
      %v2141 = vunpack.c.l.b16 %v2126
      %v2142 = vunpack.c.l.b16 %v2127
      %v2143 = vunpack.c.l.b16 %v2128
      %v2144 = vpack.c.b16 %v2141, %v2140
      %v2145 = vpack.c.b16 %v2143, %v2142
      %vm2147 = vcmask 220160
      %v2148 = vsel %vm2147, %v2094, 0
      %v2150 = vsel %vm2147, %v2096, 0
      %v2152 = vsel %vm2147, %v2098, 0
      %v2154 = vsel %vm2147, %v2100, 0
      %v2156 = vsel %vm2147, %v2102, 0
      %v2158 = vsel %vm2147, %v2104, 0
      %v2160 = vsel %vm2147, %v2106, 0
      %v2162 = vsel %vm2147, %v2108, 0
      %v2164 = vsel %vm2147, %v2110, 0
      %v2166 = vsel %vm2147, %v2112, 0
      %v2168 = vsel %vm2147, %v2114, 0
      %v2170 = vsel %vm2147, %v2116, 0
      %v2172 = vsel %vm2147, %v2118, 0
      %v2174 = vsel %vm2147, %v2120, 0
      %v2176 = vsel %vm2147, %v2122, 0
      %v2178 = vsel %vm2147, %v2124, 0
      %vm2180 = vcmask 1044480
      %vm2181 = vcmask 1045504
      %v2182 = vsel %vm2180, 4294967295, 65535
      %v2183 = vsel %vm2181, %v2182, 0
      %v2185 = vand.u32 %v2145, %v2183
      %2187 = vmatprep.subr.bf16.mxu0 0
      %2188 = vmatpush1.bf16.msra.mxu0 %v2144
      %2189 = vmatprep.subr.bf16.mxu0 0
      %2190 = vmatpush1.bf16.msra.mxu0 %v2185
      %2191 = vmatprep.subr.bf16.mxu0 0
      %2192 = vmatpush1.bf16.msra.mxu0 0
      %2193 = vmatprep.subr.bf16.mxu0 0
      %2194 = vmatpush1.bf16.msra.mxu0 0
      %2195 = vmatprep.subr.bf16.mxu0 0
      %2196 = vmatpush1.bf16.msra.mxu0 0
      %2197 = vmatprep.subr.bf16.mxu0 0
      %2198 = vmatpush1.bf16.msra.mxu0 0
      %2199 = vmatprep.subr.bf16.mxu0 0
      %2200 = vmatpush1.bf16.msra.mxu0 0
      %2201 = vmatprep.subr.bf16.mxu0 0
      %2202 = vmatpush1.bf16.msra.mxu0 0
      %2203 = vmatprep.subr.bf16.mxu0 0
      %2204 = vmatpush1.bf16.msra.mxu0 0
      %2205 = vmatprep.subr.bf16.mxu0 0
      %2206 = vmatpush1.bf16.msra.mxu0 0
      %2207 = vmatprep.subr.bf16.mxu0 0
      %2208 = vmatpush1.bf16.msra.mxu0 0
      %2209 = vmatprep.subr.bf16.mxu0 0
      %2210 = vmatpush1.bf16.msra.mxu0 0
      %2211 = vmatprep.subr.bf16.mxu0 0
      %2212 = vmatpush1.bf16.msra.mxu0 0
      %2213 = vmatprep.subr.bf16.mxu0 0
      %2214 = vmatpush1.bf16.msra.mxu0 0
      %2215 = vmatprep.subr.bf16.mxu0 0
      %2216 = vmatpush1.bf16.msra.mxu0 0
      %2217 = vmatprep.subr.bf16.mxu0 0
      %2218 = vmatpush1.bf16.msra.mxu0 0
      %2219 = vmatprep.mubr.bf16.mxu0 0
      %2220 = vmatmul.mubr.bf16.gmra.mrb[0].mxu0 %v2148
      %v2221 = vpop.f32.mrb[0].mxu0
      %v2222 = vadd.f32 %v2134, %v2221
      %v2223 = vpop.f32.mrb[0].mxu0
      %v2224 = vpop.f32.mrb[0].mxu0
      %v2225 = vadd.f32 %v2134, %v2224
      %v2226 = vpop.f32.mrb[0].mxu0
      %2227 = vmatprep.mubr.bf16.mxu0 0
      %2228 = vmatmul.mubr.bf16.gmra.mrb[0].mxu0 %v2150
      %v2229 = vpop.f32.mrb[0].mxu0
      %v2230 = vadd.f32 %v2134, %v2229
      %v2231 = vpop.f32.mrb[0].mxu0
      %v2232 = vpop.f32.mrb[0].mxu0
      %v2233 = vadd.f32 %v2134, %v2232
      %v2234 = vpop.f32.mrb[0].mxu0
      %2235 = vmatprep.mubr.bf16.mxu0 0
      %2236 = vmatmul.mubr.bf16.gmra.mrb[0].mxu0 %v2152
      %v2237 = vpop.f32.mrb[0].mxu0
      %v2238 = vadd.f32 %v2134, %v2237
      %v2239 = vpop.f32.mrb[0].mxu0
      %v2240 = vpop.f32.mrb[0].mxu0
      %v2241 = vadd.f32 %v2134, %v2240
      %v2242 = vpop.f32.mrb[0].mxu0
      %2243 = vmatprep.mubr.bf16.mxu0 0
      %2244 = vmatmul.mubr.bf16.gmra.mrb[0].mxu0 %v2154
      %v2245 = vpop.f32.mrb[0].mxu0
      %v2246 = vadd.f32 %v2134, %v2245
      %v2247 = vpop.f32.mrb[0].mxu0
      %v2248 = vpop.f32.mrb[0].mxu0
      %v2249 = vadd.f32 %v2134, %v2248
      %v2250 = vpop.f32.mrb[0].mxu0
      %2251 = vmatprep.mubr.bf16.mxu0 0
      %2252 = vmatmul.mubr.bf16.gmra.mrb[0].mxu0 %v2156
      %v2253 = vpop.f32.mrb[0].mxu0
      %v2254 = vadd.f32 %v2134, %v2253
      %v2255 = vpop.f32.mrb[0].mxu0
      %v2256 = vpop.f32.mrb[0].mxu0
      %v2257 = vadd.f32 %v2134, %v2256
      %v2258 = vpop.f32.mrb[0].mxu0
      %2259 = vmatprep.mubr.bf16.mxu0 0
      %2260 = vmatmul.mubr.bf16.gmra.mrb[0].mxu0 %v2158
      %v2261 = vpop.f32.mrb[0].mxu0
      %v2262 = vadd.f32 %v2134, %v2261
      %v2263 = vpop.f32.mrb[0].mxu0
      %v2264 = vpop.f32.mrb[0].mxu0
      %v2265 = vadd.f32 %v2134, %v2264
      %v2266 = vpop.f32.mrb[0].mxu0
      %2267 = vmatprep.mubr.bf16.mxu0 0
      %2268 = vmatmul.mubr.bf16.gmra.mrb[0].mxu0 %v2160
      %v2269 = vpop.f32.mrb[0].mxu0
      %v2270 = vadd.f32 %v2134, %v2269
      %v2271 = vpop.f32.mrb[0].mxu0
      %v2272 = vpop.f32.mrb[0].mxu0
      %v2273 = vadd.f32 %v2134, %v2272
      %v2274 = vpop.f32.mrb[0].mxu0
      %2275 = vmatprep.mubr.bf16.mxu0 0
      %2276 = vmatmul.mubr.bf16.gmra.mrb[0].mxu0 %v2162
      %v2277 = vpop.f32.mrb[0].mxu0
      %v2278 = vadd.f32 %v2134, %v2277
      %v2279 = vpop.f32.mrb[0].mxu0
      %v2280 = vpop.f32.mrb[0].mxu0
      %v2281 = vadd.f32 %v2134, %v2280
      %v2282 = vpop.f32.mrb[0].mxu0
      %2283 = vmatprep.mubr.bf16.mxu0 0
      %2284 = vmatmul.mubr.bf16.gmra.mrb[0].mxu0 %v2164
      %v2285 = vpop.f32.mrb[0].mxu0
      %v2286 = vadd.f32 %v2134, %v2285
      %v2287 = vpop.f32.mrb[0].mxu0
      %v2288 = vpop.f32.mrb[0].mxu0
      %v2289 = vadd.f32 %v2134, %v2288
      %v2290 = vpop.f32.mrb[0].mxu0
      %2291 = vmatprep.mubr.bf16.mxu0 0
      %2292 = vmatmul.mubr.bf16.gmra.mrb[0].mxu0 %v2166
      %v2293 = vpop.f32.mrb[0].mxu0
      %v2294 = vadd.f32 %v2134, %v2293
      %v2295 = vpop.f32.mrb[0].mxu0
      %v2296 = vpop.f32.mrb[0].mxu0
      %v2297 = vadd.f32 %v2134, %v2296
      %v2298 = vpop.f32.mrb[0].mxu0
      %2299 = vmatprep.mubr.bf16.mxu0 0
      %2300 = vmatmul.mubr.bf16.gmra.mrb[0].mxu0 %v2168
      %v2301 = vpop.f32.mrb[0].mxu0
      %v2302 = vadd.f32 %v2134, %v2301
      %v2303 = vpop.f32.mrb[0].mxu0
      %v2304 = vpop.f32.mrb[0].mxu0
      %v2305 = vadd.f32 %v2134, %v2304
      %v2306 = vpop.f32.mrb[0].mxu0
      %2307 = vmatprep.mubr.bf16.mxu0 0
      %2308 = vmatmul.mubr.bf16.gmra.mrb[0].mxu0 %v2170
      %v2309 = vpop.f32.mrb[0].mxu0
      %v2310 = vadd.f32 %v2134, %v2309
      %v2311 = vpop.f32.mrb[0].mxu0
      %v2312 = vpop.f32.mrb[0].mxu0
      %v2313 = vadd.f32 %v2134, %v2312
      %v2314 = vpop.f32.mrb[0].mxu0
      %2315 = vmatprep.mubr.bf16.mxu0 0
      %2316 = vmatmul.mubr.bf16.gmra.mrb[0].mxu0 %v2172
      %v2317 = vpop.f32.mrb[0].mxu0
      %v2318 = vadd.f32 %v2134, %v2317
      %v2319 = vpop.f32.mrb[0].mxu0
      %v2320 = vpop.f32.mrb[0].mxu0
      %v2321 = vadd.f32 %v2134, %v2320
      %v2322 = vpop.f32.mrb[0].mxu0
      %2323 = vmatprep.mubr.bf16.mxu0 0
      %2324 = vmatmul.mubr.bf16.gmra.mrb[0].mxu0 %v2174
      %v2325 = vpop.f32.mrb[0].mxu0
      %v2326 = vadd.f32 %v2134, %v2325
      %v2327 = vpop.f32.mrb[0].mxu0
      %v2328 = vpop.f32.mrb[0].mxu0
      %v2329 = vadd.f32 %v2134, %v2328
      %v2330 = vpop.f32.mrb[0].mxu0
      %2331 = vmatprep.mubr.bf16.mxu0 0
      %2332 = vmatmul.mubr.bf16.gmra.mrb[0].mxu0 %v2176
      %v2333 = vpop.f32.mrb[0].mxu0
      %v2334 = vadd.f32 %v2134, %v2333
      %v2335 = vpop.f32.mrb[0].mxu0
      %v2336 = vpop.f32.mrb[0].mxu0
      %v2337 = vadd.f32 %v2134, %v2336
      %v2338 = vpop.f32.mrb[0].mxu0
      %2339 = vmatprep.mubr.bf16.mxu0 0
      %2340 = vmatmul.mubr.bf16.gmra.mrb[0].mxu0 %v2178
      %v2341 = vpop.f32.mrb[0].mxu0
      %v2342 = vadd.f32 %v2134, %v2341
      %v2343 = vpop.f32.mrb[0].mxu0
      %v2344 = vpop.f32.mrb[0].mxu0
      %v2345 = vadd.f32 %v2134, %v2344
      %v2346 = vpop.f32.mrb[0].mxu0
      %2347 = vdwg.mxu0
      %v2348 = vmax.f32 %v2222, 0.0
      %v2349 = vmax.f32 %v2225, 0.0
      %v2350 = vmax.f32 %v2230, 0.0
      %v2351 = vmax.f32 %v2233, 0.0
      %v2352 = vmax.f32 %v2238, 0.0
      %v2353 = vmax.f32 %v2241, 0.0
      %v2354 = vmax.f32 %v2246, 0.0
      %v2355 = vmax.f32 %v2249, 0.0
      %v2356 = vmax.f32 %v2254, 0.0
      %v2357 = vmax.f32 %v2257, 0.0
      %v2358 = vmax.f32 %v2262, 0.0
      %v2359 = vmax.f32 %v2265, 0.0
      %v2360 = vmax.f32 %v2270, 0.0
      %v2361 = vmax.f32 %v2273, 0.0
      %v2362 = vmax.f32 %v2278, 0.0
      %v2363 = vmax.f32 %v2281, 0.0
      %v2364 = vmax.f32 %v2286, 0.0
      %v2365 = vmax.f32 %v2289, 0.0
      %v2366 = vmax.f32 %v2294, 0.0
      %v2367 = vmax.f32 %v2297, 0.0
      %v2368 = vmax.f32 %v2302, 0.0
      %v2369 = vmax.f32 %v2305, 0.0
      %v2370 = vmax.f32 %v2310, 0.0
      %v2371 = vmax.f32 %v2313, 0.0
      %v2372 = vmax.f32 %v2318, 0.0
      %v2373 = vmax.f32 %v2321, 0.0
      %v2374 = vmax.f32 %v2326, 0.0
      %v2375 = vmax.f32 %v2329, 0.0
      %v2376 = vmax.f32 %v2334, 0.0
      %v2377 = vmax.f32 %v2337, 0.0
      %v2378 = vmax.f32 %v2342, 0.0
      %v2379 = vmax.f32 %v2345, 0.0
      %v2380 = vmax.f32 %v2348, %v2350
      %v2381 = vmax.f32 %v2349, %v2351
      %v2382 = vmax.f32 %v2352, %v2354
      %v2383 = vmax.f32 %v2353, %v2355
      %v2384 = vmax.f32 %v2356, %v2358
      %v2385 = vmax.f32 %v2357, %v2359
      %v2386 = vmax.f32 %v2360, %v2362
      %v2387 = vmax.f32 %v2361, %v2363
      %v2388 = vmax.f32 %v2364, %v2366
      %v2389 = vmax.f32 %v2365, %v2367
      %v2390 = vmax.f32 %v2368, %v2370
      %v2391 = vmax.f32 %v2369, %v2371
      %v2392 = vmax.f32 %v2372, %v2374
      %v2393 = vmax.f32 %v2373, %v2375
      %v2394 = vmax.f32 %v2376, %v2378
      %v2395 = vmax.f32 %v2377, %v2379
      %vm2396 = vcmask 130048
      %2397 = vst.msk [vmem:[#allocation4] sm:$0xff] %vm2396, %v2380
      %2398 = vst.msk [vmem:[#allocation4 + $0x8] sm:$0xff] %vm2396, %v2381
      %2399 = vst.msk [vmem:[#allocation4 + $0x10] sm:$0xff] %vm2396, %v2382
      %2400 = vst.msk [vmem:[#allocation4 + $0x18] sm:$0xff] %vm2396, %v2383
      %2401 = vst.msk [vmem:[#allocation4 + $0x20] sm:$0xff] %vm2396, %v2384
      %2402 = vst.msk [vmem:[#allocation4 + $0x28] sm:$0xff] %vm2396, %v2385
      %2403 = vst.msk [vmem:[#allocation4 + $0x30] sm:$0xff] %vm2396, %v2386
      %2404 = vst.msk [vmem:[#allocation4 + $0x38] sm:$0xff] %vm2396, %v2387
      %2405 = vst.msk [vmem:[#allocation4 + $0x40] sm:$0xff] %vm2396, %v2388
      %2406 = vst.msk [vmem:[#allocation4 + $0x48] sm:$0xff] %vm2396, %v2389
      %2407 = vst.msk [vmem:[#allocation4 + $0x50] sm:$0xff] %vm2396, %v2390
      %2408 = vst.msk [vmem:[#allocation4 + $0x58] sm:$0xff] %vm2396, %v2391
      %2409 = vst.msk [vmem:[#allocation4 + $0x60] sm:$0xff] %vm2396, %v2392
      %2410 = vst.msk [vmem:[#allocation4 + $0x68] sm:$0xff] %vm2396, %v2393
      %2411 = vst.msk [vmem:[#allocation4 + $0x70] sm:$0xff] %vm2396, %v2394
      %2412 = vst.msk [vmem:[#allocation4 + $0x78] sm:$0xff] %vm2396, %v2395
      %v2413 = vld [vmem:[#allocation4] ss:$2 sm:$0xff]
      %s2414 = scalar_lea.vmem [#allocation4], 16
      %v2415 = vld [vmem:[%s2414] ss:$2 sm:$0xff]
      %s2416 = scalar_lea.vmem [#allocation4], 32
      %v2417 = vld [vmem:[%s2416] ss:$2 sm:$0xff]
      %s2418 = scalar_lea.vmem [#allocation4], 48
      %v2419 = vld [vmem:[%s2418] ss:$2 sm:$0xff]
      %s2420 = scalar_lea.vmem [#allocation4], 64
      %v2421 = vld [vmem:[%s2420] ss:$2 sm:$0xff]
      %s2422 = scalar_lea.vmem [#allocation4], 80
      %v2423 = vld [vmem:[%s2422] ss:$2 sm:$0xff]
      %s2424 = scalar_lea.vmem [#allocation4], 96
      %v2425 = vld [vmem:[%s2424] ss:$2 sm:$0xff]
      %s2426 = scalar_lea.vmem [#allocation4], 112
      %v2427 = vld [vmem:[%s2426] ss:$2 sm:$0xff]
      %s2428 = scalar_lea.vmem [#allocation4], 1
      %v2429 = vld [vmem:[%s2428] ss:$2 sm:$0xff]
      %s2430 = scalar_lea.vmem [#allocation4], 17
      %v2431 = vld [vmem:[%s2430] ss:$2 sm:$0xff]
      %s2432 = scalar_lea.vmem [#allocation4], 33
      %v2433 = vld [vmem:[%s2432] ss:$2 sm:$0xff]
      %s2434 = scalar_lea.vmem [#allocation4], 49
      %v2435 = vld [vmem:[%s2434] ss:$2 sm:$0xff]
      %s2436 = scalar_lea.vmem [#allocation4], 65
      %v2437 = vld [vmem:[%s2436] ss:$2 sm:$0xff]
      %s2438 = scalar_lea.vmem [#allocation4], 81
      %v2439 = vld [vmem:[%s2438] ss:$2 sm:$0xff]
      %s2440 = scalar_lea.vmem [#allocation4], 97
      %v2441 = vld [vmem:[%s2440] ss:$2 sm:$0xff]
      %s2442 = scalar_lea.vmem [#allocation4], 113
      %v2443 = vld [vmem:[%s2442] ss:$2 sm:$0xff]
      %v2444 = vmax.f32 %v2413, %v2429
      %v2445 = vmax.f32 %v2415, %v2431
      %v2446 = vmax.f32 %v2417, %v2433
      %v2447 = vmax.f32 %v2419, %v2435
      %v2448 = vmax.f32 %v2421, %v2437
      %v2449 = vmax.f32 %v2423, %v2439
      %v2450 = vmax.f32 %v2425, %v2441
      %v2451 = vmax.f32 %v2427, %v2443
      %vm2452 = vcmask 125952
      %2453 = vst.msk [vmem:[#allocation3] sm:$0xf] %vm2452, 0
      %vm2454 = vcmask 122880
      %2455 = vst.msk [vmem:[#allocation3 + $0x4] sm:$0x1] %vm2454, 0
      %2456 = vst.msk [vmem:[#allocation3 + $0x8] sm:$0xf] %vm2452, 0
      %2457 = vst.msk [vmem:[#allocation3 + $0xc] sm:$0x1] %vm2454, 0
      %2458 = vst.msk [vmem:[#allocation3 + $0x10] sm:$0xf] %vm2452, 0
      %2459 = vst.msk [vmem:[#allocation3 + $0x14] sm:$0x1] %vm2454, 0
      %2460 = vst.msk [vmem:[#allocation3 + $0x18] sm:$0xf] %vm2452, 0
      %2461 = vst.msk [vmem:[#allocation3 + $0x1c] sm:$0x1] %vm2454, 0
      %2462 = vst.msk [vmem:[#allocation3 + $0x20] sm:$0xf] %vm2452, 0
      %2463 = vst.msk [vmem:[#allocation3 + $0x24] sm:$0x1] %vm2454, 0
      %2464 = vst.msk [vmem:[#allocation3 + $0x28] sm:$0xf] %vm2452, 0
      %2465 = vst.msk [vmem:[#allocation3 + $0x2c] sm:$0x1] %vm2454, 0
      %2466 = vst.msk [vmem:[#allocation3 + $0x30] sm:$0xf] %vm2452, 0
      %2467 = vst.msk [vmem:[#allocation3 + $0x34] sm:$0x1] %vm2454, 0
      %2468 = vst.msk [vmem:[#allocation3 + $0x38] sm:$0xf] %vm2452, 0
      %2469 = vst.msk [vmem:[#allocation3 + $0x3c] sm:$0x1] %vm2454, 0
      %2470 = vst.msk [vmem:[#allocation3 + $0x40] sm:$0xf] %vm2452, 0
      %2471 = vst.msk [vmem:[#allocation3 + $0x44] sm:$0x1] %vm2454, 0
      %2472 = vst.msk [vmem:[#allocation3 + $0x48] sm:$0xf] %vm2452, 0
      %2473 = vst.msk [vmem:[#allocation3 + $0x4c] sm:$0x1] %vm2454, 0
      %v2474 = vpack.c.bf16 %v2444, %v2444
      %v2475 = vpack.c.bf16 %v2445, %v2445
      %v2476 = vpack.c.bf16 %v2446, %v2446
      %v2477 = vpack.c.bf16 %v2447, %v2447
      %v2478 = vpack.c.bf16 %v2448, %v2448
      %v2479 = vpack.c.bf16 %v2449, %v2449
      %v2480 = vpack.c.bf16 %v2450, %v2450
      %v2481 = vpack.c.bf16 %v2451, %v2451
      %v2490 = vunpack.c.l.b16 %v2474
      %v2491 = vunpack.c.l.b16 %v2475
      %v2492 = vunpack.c.l.b16 %v2476
      %v2493 = vunpack.c.l.b16 %v2477
      %v2494 = vunpack.c.l.b16 %v2478
      %v2495 = vunpack.c.l.b16 %v2479
      %v2496 = vunpack.c.l.b16 %v2480
      %v2497 = vunpack.c.l.b16 %v2481
      %v2498 = vpack.c.b16 %v2490, %v2490
      %v2499 = vpack.c.b16 %v2491, %v2491
      %v2500 = vpack.c.b16 %v2492, %v2492
      %v2501 = vpack.c.b16 %v2493, %v2493
      %v2502 = vpack.c.b16 %v2494, %v2494
      %v2503 = vpack.c.b16 %v2495, %v2495
      %v2504 = vpack.c.b16 %v2496, %v2496
      %v2505 = vpack.c.b16 %v2497, %v2497
      %v2507 = vshrl.u32 %v2498, 16
      %v2509 = vrot.slane %v2507, 7
      %v2510 = vshll.u32 %v2498, 16
      %v2512 = vor.u32 %v2509, %v2510
      %v2513 = vrot.slane %v2509, 4
      %v2515 = vshrl.u32 %v2499, 16
      %v2517 = vrot.slane %v2515, 7
      %v2518 = vshll.u32 %v2499, 16
      %v2520 = vor.u32 %v2517, %v2518
      %v2521 = vrot.slane %v2517, 4
      %v2523 = vshrl.u32 %v2500, 16
      %v2525 = vrot.slane %v2523, 7
      %v2526 = vshll.u32 %v2500, 16
      %v2528 = vor.u32 %v2525, %v2526
      %v2529 = vrot.slane %v2525, 4
      %v2531 = vshrl.u32 %v2501, 16
      %v2533 = vrot.slane %v2531, 7
      %v2534 = vshll.u32 %v2501, 16
      %v2536 = vor.u32 %v2533, %v2534
      %v2537 = vrot.slane %v2533, 4
      %v2539 = vshrl.u32 %v2502, 16
      %v2541 = vrot.slane %v2539, 7
      %v2542 = vshll.u32 %v2502, 16
      %v2544 = vor.u32 %v2541, %v2542
      %v2545 = vrot.slane %v2541, 4
      %v2547 = vshrl.u32 %v2503, 16
      %v2549 = vrot.slane %v2547, 7
      %v2550 = vshll.u32 %v2503, 16
      %v2552 = vor.u32 %v2549, %v2550
      %v2553 = vrot.slane %v2549, 4
      %v2555 = vshrl.u32 %v2504, 16
      %v2557 = vrot.slane %v2555, 7
      %v2558 = vshll.u32 %v2504, 16
      %v2560 = vor.u32 %v2557, %v2558
      %v2561 = vrot.slane %v2557, 4
      %v2563 = vshrl.u32 %v2505, 16
      %v2565 = vrot.slane %v2563, 7
      %v2566 = vshll.u32 %v2505, 16
      %v2568 = vor.u32 %v2565, %v2566
      %v2569 = vrot.slane %v2565, 4
      %s2586 = scalar_lea.vmem [#allocation3], 8
      %vm2587 = vcmask 125952
      %vm2588 = vmand %vm2587, %vm639
      %v2589 = vld [vmem:[%s2586] sm:$0xf]
      %v2590 = vsel %vm2588, %v2512, %v2589
      %2591 = vst [vmem:[%s2586] sm:$0xf] %v2590
      %vm2592 = vcmask 122880
      %vm2593 = vmand %vm2592, %vm314
      %v2594 = vld [vmem:[%s2586 + $0x4] sm:$0x1]
      %v2595 = vsel %vm2593, %v2513, %v2594
      %2596 = vst [vmem:[%s2586 + $0x4] sm:$0x1] %v2595
      %v2597 = vld [vmem:[%s2586 + $0x8] sm:$0xf]
      %v2598 = vsel %vm2588, %v2520, %v2597
      %2599 = vst [vmem:[%s2586 + $0x8] sm:$0xf] %v2598
      %v2600 = vld [vmem:[%s2586 + $0xc] sm:$0x1]
      %v2601 = vsel %vm2593, %v2521, %v2600
      %2602 = vst [vmem:[%s2586 + $0xc] sm:$0x1] %v2601
      %v2603 = vld [vmem:[%s2586 + $0x10] sm:$0xf]
      %v2604 = vsel %vm2588, %v2528, %v2603
      %2605 = vst [vmem:[%s2586 + $0x10] sm:$0xf] %v2604
      %v2606 = vld [vmem:[%s2586 + $0x14] sm:$0x1]
      %v2607 = vsel %vm2593, %v2529, %v2606
      %2608 = vst [vmem:[%s2586 + $0x14] sm:$0x1] %v2607
      %v2609 = vld [vmem:[%s2586 + $0x18] sm:$0xf]
      %v2610 = vsel %vm2588, %v2536, %v2609
      %2611 = vst [vmem:[%s2586 + $0x18] sm:$0xf] %v2610
      %v2612 = vld [vmem:[%s2586 + $0x1c] sm:$0x1]
      %v2613 = vsel %vm2593, %v2537, %v2612
      %2614 = vst [vmem:[%s2586 + $0x1c] sm:$0x1] %v2613
      %v2615 = vld [vmem:[%s2586 + $0x20] sm:$0xf]
      %v2616 = vsel %vm2588, %v2544, %v2615
      %2617 = vst [vmem:[%s2586 + $0x20] sm:$0xf] %v2616
      %v2618 = vld [vmem:[%s2586 + $0x24] sm:$0x1]
      %v2619 = vsel %vm2593, %v2545, %v2618
      %2620 = vst [vmem:[%s2586 + $0x24] sm:$0x1] %v2619
      %v2621 = vld [vmem:[%s2586 + $0x28] sm:$0xf]
      %v2622 = vsel %vm2588, %v2552, %v2621
      %2623 = vst [vmem:[%s2586 + $0x28] sm:$0xf] %v2622
      %v2624 = vld [vmem:[%s2586 + $0x2c] sm:$0x1]
      %v2625 = vsel %vm2593, %v2553, %v2624
      %2626 = vst [vmem:[%s2586 + $0x2c] sm:$0x1] %v2625
      %v2627 = vld [vmem:[%s2586 + $0x30] sm:$0xf]
      %v2628 = vsel %vm2588, %v2560, %v2627
      %2629 = vst [vmem:[%s2586 + $0x30] sm:$0xf] %v2628
      %v2630 = vld [vmem:[%s2586 + $0x34] sm:$0x1]
      %v2631 = vsel %vm2593, %v2561, %v2630
      %2632 = vst [vmem:[%s2586 + $0x34] sm:$0x1] %v2631
      %v2633 = vld [vmem:[%s2586 + $0x38] sm:$0xf]
      %v2634 = vsel %vm2588, %v2568, %v2633
      %2635 = vst [vmem:[%s2586 + $0x38] sm:$0xf] %v2634
      %v2636 = vld [vmem:[%s2586 + $0x3c] sm:$0x1]
      %v2637 = vsel %vm2593, %v2569, %v2636
      %2638 = vst [vmem:[%s2586 + $0x3c] sm:$0x1] %v2637
      %v2639 = vld [vmem:[#allocation3] sm:$0xf]
      %v2640 = vld [vmem:[#allocation3 + $0x4] sm:$0x1]
      %v2641 = vld [vmem:[#allocation3 + $0x8] sm:$0xf]
      %v2642 = vld [vmem:[#allocation3 + $0xc] sm:$0x1]
      %v2643 = vld [vmem:[#allocation3 + $0x10] sm:$0xf]
      %v2644 = vld [vmem:[#allocation3 + $0x14] sm:$0x1]
      %v2645 = vld [vmem:[#allocation3 + $0x18] sm:$0xf]
      %v2646 = vld [vmem:[#allocation3 + $0x1c] sm:$0x1]
      %v2647 = vld [vmem:[#allocation3 + $0x20] sm:$0xf]
      %v2648 = vld [vmem:[#allocation3 + $0x24] sm:$0x1]
      %v2649 = vld [vmem:[#allocation3 + $0x28] sm:$0xf]
      %v2650 = vld [vmem:[#allocation3 + $0x2c] sm:$0x1]
      %v2651 = vld [vmem:[#allocation3 + $0x30] sm:$0xf]
      %v2652 = vld [vmem:[#allocation3 + $0x34] sm:$0x1]
      %v2653 = vld [vmem:[#allocation3 + $0x38] sm:$0xf]
      %v2654 = vld [vmem:[#allocation3 + $0x3c] sm:$0x1]
      %v2655 = vld [vmem:[#allocation3 + $0x40] sm:$0xf]
      %v2656 = vld [vmem:[#allocation3 + $0x44] sm:$0x1]
      %v2657 = vld [vmem:[#allocation3 + $0x48] sm:$0xf]
      %v2658 = vld [vmem:[#allocation3 + $0x4c] sm:$0x1]
      %v2660 = vshrl.u32 %v2639, 16
      %v2662 = vrot.slane %v2660, 4
      %v2663 = vshll.u32 %v2639, 16
      %v2665 = vrot.slane %v2663, 5
      %v2666 = vor.u32 %v2662, %v2665
      %v2667 = vrot.slane %v2666, 4
      %v2669 = vshll.u32 %v2640, 16
      %v2671 = vrot.slane %v2669, 5
      %v2672 = vsel %vm811, %v2667, %v2671
      %v2674 = vshrl.u32 %v2641, 16
      %v2676 = vrot.slane %v2674, 4
      %v2677 = vshll.u32 %v2641, 16
      %v2679 = vrot.slane %v2677, 5
      %v2680 = vor.u32 %v2676, %v2679
      %v2681 = vrot.slane %v2680, 4
      %v2683 = vshll.u32 %v2642, 16
      %v2685 = vrot.slane %v2683, 5
      %v2686 = vsel %vm811, %v2681, %v2685
      %v2688 = vshrl.u32 %v2643, 16
      %v2690 = vrot.slane %v2688, 4
      %v2691 = vshll.u32 %v2643, 16
      %v2693 = vrot.slane %v2691, 5
      %v2694 = vor.u32 %v2690, %v2693
      %v2695 = vrot.slane %v2694, 4
      %v2697 = vshll.u32 %v2644, 16
      %v2699 = vrot.slane %v2697, 5
      %v2700 = vsel %vm811, %v2695, %v2699
      %v2702 = vshrl.u32 %v2645, 16
      %v2704 = vrot.slane %v2702, 4
      %v2705 = vshll.u32 %v2645, 16
      %v2707 = vrot.slane %v2705, 5
      %v2708 = vor.u32 %v2704, %v2707
      %v2709 = vrot.slane %v2708, 4
      %v2711 = vshll.u32 %v2646, 16
      %v2713 = vrot.slane %v2711, 5
      %v2714 = vsel %vm811, %v2709, %v2713
      %v2716 = vshrl.u32 %v2647, 16
      %v2718 = vrot.slane %v2716, 4
      %v2719 = vshll.u32 %v2647, 16
      %v2721 = vrot.slane %v2719, 5
      %v2722 = vor.u32 %v2718, %v2721
      %v2723 = vrot.slane %v2722, 4
      %v2725 = vshll.u32 %v2648, 16
      %v2727 = vrot.slane %v2725, 5
      %v2728 = vsel %vm811, %v2723, %v2727
      %v2730 = vshrl.u32 %v2649, 16
      %v2732 = vrot.slane %v2730, 4
      %v2733 = vshll.u32 %v2649, 16
      %v2735 = vrot.slane %v2733, 5
      %v2736 = vor.u32 %v2732, %v2735
      %v2737 = vrot.slane %v2736, 4
      %v2739 = vshll.u32 %v2650, 16
      %v2741 = vrot.slane %v2739, 5
      %v2742 = vsel %vm811, %v2737, %v2741
      %v2744 = vshrl.u32 %v2651, 16
      %v2746 = vrot.slane %v2744, 4
      %v2747 = vshll.u32 %v2651, 16
      %v2749 = vrot.slane %v2747, 5
      %v2750 = vor.u32 %v2746, %v2749
      %v2751 = vrot.slane %v2750, 4
      %v2753 = vshll.u32 %v2652, 16
      %v2755 = vrot.slane %v2753, 5
      %v2756 = vsel %vm811, %v2751, %v2755
      %v2758 = vshrl.u32 %v2653, 16
      %v2760 = vrot.slane %v2758, 4
      %v2761 = vshll.u32 %v2653, 16
      %v2763 = vrot.slane %v2761, 5
      %v2764 = vor.u32 %v2760, %v2763
      %v2765 = vrot.slane %v2764, 4
      %v2767 = vshll.u32 %v2654, 16
      %v2769 = vrot.slane %v2767, 5
      %v2770 = vsel %vm811, %v2765, %v2769
      %v2787 = vrot.slane %v2639, 5
      %v2788 = vrot.slane %v2787, 4
      %v2789 = vrot.slane %v2640, 5
      %v2790 = vsel %vm1246, %v2788, %v2789
      %v2791 = vrot.slane %v2641, 5
      %v2792 = vrot.slane %v2791, 4
      %v2793 = vrot.slane %v2642, 5
      %v2794 = vsel %vm1246, %v2792, %v2793
      %v2795 = vrot.slane %v2643, 5
      %v2796 = vrot.slane %v2795, 4
      %v2797 = vrot.slane %v2644, 5
      %v2798 = vsel %vm1246, %v2796, %v2797
      %v2799 = vrot.slane %v2645, 5
      %v2800 = vrot.slane %v2799, 4
      %v2801 = vrot.slane %v2646, 5
      %v2802 = vsel %vm1246, %v2800, %v2801
      %v2803 = vrot.slane %v2647, 5
      %v2804 = vrot.slane %v2803, 4
      %v2805 = vrot.slane %v2648, 5
      %v2806 = vsel %vm1246, %v2804, %v2805
      %v2807 = vrot.slane %v2649, 5
      %v2808 = vrot.slane %v2807, 4
      %v2809 = vrot.slane %v2650, 5
      %v2810 = vsel %vm1246, %v2808, %v2809
      %v2811 = vrot.slane %v2651, 5
      %v2812 = vrot.slane %v2811, 4
      %v2813 = vrot.slane %v2652, 5
      %v2814 = vsel %vm1246, %v2812, %v2813
      %v2815 = vrot.slane %v2653, 5
      %v2816 = vrot.slane %v2815, 4
      %v2817 = vrot.slane %v2654, 5
      %v2818 = vsel %vm1246, %v2816, %v2817
      %v2820 = vshrl.u32 %v2655, 16
      %v2822 = vrot.slane %v2820, 4
      %v2823 = vshll.u32 %v2655, 16
      %v2825 = vrot.slane %v2823, 5
      %v2826 = vor.u32 %v2822, %v2825
      %v2827 = vrot.slane %v2826, 4
      %v2829 = vshll.u32 %v2656, 16
      %v2831 = vrot.slane %v2829, 5
      %v2832 = vsel %vm811, %v2827, %v2831
      %v2835 = vrot.slane %v2655, 5
      %v2836 = vrot.slane %v2835, 4
      %v2837 = vrot.slane %v2656, 5
      %v2838 = vsel %vm1246, %v2836, %v2837
      %v2840 = vshrl.u32 %v2657, 16
      %v2842 = vrot.slane %v2840, 4
      %v2843 = vshll.u32 %v2657, 16
      %v2845 = vrot.slane %v2843, 5
      %v2846 = vor.u32 %v2842, %v2845
      %v2847 = vrot.slane %v2846, 4
      %v2849 = vshll.u32 %v2658, 16
      %v2851 = vrot.slane %v2849, 5
      %v2852 = vsel %vm811, %v2847, %v2851
      %v2855 = vrot.slane %v2657, 5
      %v2856 = vrot.slane %v2855, 4
      %v2857 = vrot.slane %v2658, 5
      %v2858 = vsel %vm1246, %v2856, %v2857
      %v2859 = vunpack.c.l.b16 %v2639
      %v2860 = vunpack.c.l.b16 %v2641
      %v2861 = vunpack.c.l.b16 %v2643
      %v2862 = vunpack.c.l.b16 %v2645
      %v2863 = vunpack.c.l.b16 %v2647
      %v2864 = vunpack.c.l.b16 %v2649
      %v2865 = vunpack.c.l.b16 %v2651
      %v2866 = vunpack.c.l.b16 %v2653
      %v2867 = vpack.c.b16 %v2860, %v2859
      %v2868 = vpack.c.b16 %v2862, %v2861
      %v2869 = vpack.c.b16 %v2864, %v2863
      %v2870 = vpack.c.b16 %v2866, %v2865
      %v2871 = vunpack.c.l.b16 %v2672
      %v2872 = vunpack.c.l.b16 %v2686
      %v2873 = vunpack.c.l.b16 %v2700
      %v2874 = vunpack.c.l.b16 %v2714
      %v2875 = vunpack.c.l.b16 %v2728
      %v2876 = vunpack.c.l.b16 %v2742
      %v2877 = vunpack.c.l.b16 %v2756
      %v2878 = vunpack.c.l.b16 %v2770
      %v2879 = vpack.c.b16 %v2872, %v2871
      %v2880 = vpack.c.b16 %v2874, %v2873
      %v2881 = vpack.c.b16 %v2876, %v2875
      %v2882 = vpack.c.b16 %v2878, %v2877
      %2883 = vrot.lane.b32.xlu0 %v2879, 16
      %v2884 = vpop.permute.xlu0 %2883
      %2885 = vrot.lane.b32.xlu0 %v2880, 16
      %v2886 = vpop.permute.xlu0 %2885
      %2887 = vrot.lane.b32.xlu0 %v2881, 16
      %v2888 = vpop.permute.xlu0 %2887
      %2889 = vrot.lane.b32.xlu0 %v2882, 16
      %v2890 = vpop.permute.xlu0 %2889
      %v2891 = vunpack.c.l.b16 %v2790
      %v2892 = vunpack.c.l.b16 %v2794
      %v2893 = vunpack.c.l.b16 %v2798
      %v2894 = vunpack.c.l.b16 %v2802
      %v2895 = vunpack.c.l.b16 %v2806
      %v2896 = vunpack.c.l.b16 %v2810
      %v2897 = vunpack.c.l.b16 %v2814
      %v2898 = vunpack.c.l.b16 %v2818
      %v2899 = vpack.c.b16 %v2892, %v2891
      %v2900 = vpack.c.b16 %v2894, %v2893
      %v2901 = vpack.c.b16 %v2896, %v2895
      %v2902 = vpack.c.b16 %v2898, %v2897
      %2903 = vrot.lane.b32.xlu0 %v2899, 32
      %v2904 = vpop.permute.xlu0 %2903
      %2905 = vrot.lane.b32.xlu0 %v2900, 32
      %v2906 = vpop.permute.xlu0 %2905
      %2907 = vrot.lane.b32.xlu0 %v2901, 32
      %v2908 = vpop.permute.xlu0 %2907
      %2909 = vrot.lane.b32.xlu0 %v2902, 32
      %v2910 = vpop.permute.xlu0 %2909
      %v2911 = vunpack.c.l.b16 %v2655
      %v2912 = vpack.c.b16 %v2861, %v2860
      %v2913 = vpack.c.b16 %v2863, %v2862
      %v2914 = vpack.c.b16 %v2865, %v2864
      %v2915 = vpack.c.b16 %v2911, %v2866
      %2916 = vrot.lane.b32.xlu0 %v2912, 48
      %v2917 = vpop.permute.xlu0 %2916
      %2918 = vrot.lane.b32.xlu0 %v2913, 48
      %v2919 = vpop.permute.xlu0 %2918
      %2920 = vrot.lane.b32.xlu0 %v2914, 48
      %v2921 = vpop.permute.xlu0 %2920
      %2922 = vrot.lane.b32.xlu0 %v2915, 48
      %v2923 = vpop.permute.xlu0 %2922
      %v2924 = vunpack.c.l.b16 %v2832
      %v2925 = vpack.c.b16 %v2873, %v2872
      %v2926 = vpack.c.b16 %v2875, %v2874
      %v2927 = vpack.c.b16 %v2877, %v2876
      %v2928 = vpack.c.b16 %v2924, %v2878
      %2929 = vrot.lane.b32.xlu0 %v2925, 64
      %v2930 = vpop.permute.xlu0 %2929
      %2931 = vrot.lane.b32.xlu0 %v2926, 64
      %v2932 = vpop.permute.xlu0 %2931
      %2933 = vrot.lane.b32.xlu0 %v2927, 64
      %v2934 = vpop.permute.xlu0 %2933
      %2935 = vrot.lane.b32.xlu0 %v2928, 64
      %v2936 = vpop.permute.xlu0 %2935
      %v2937 = vunpack.c.l.b16 %v2838
      %v2938 = vpack.c.b16 %v2893, %v2892
      %v2939 = vpack.c.b16 %v2895, %v2894
      %v2940 = vpack.c.b16 %v2897, %v2896
      %v2941 = vpack.c.b16 %v2937, %v2898
      %2942 = vrot.lane.b32.xlu0 %v2938, 80
      %v2943 = vpop.permute.xlu0 %2942
      %2944 = vrot.lane.b32.xlu0 %v2939, 80
      %v2945 = vpop.permute.xlu0 %2944
      %2946 = vrot.lane.b32.xlu0 %v2940, 80
      %v2947 = vpop.permute.xlu0 %2946
      %2948 = vrot.lane.b32.xlu0 %v2941, 80
      %v2949 = vpop.permute.xlu0 %2948
      %v2950 = vunpack.c.l.b16 %v2657
      %v2951 = vpack.c.b16 %v2950, %v2911
      %2952 = vrot.lane.b32.xlu0 %v2868, 96
      %v2953 = vpop.permute.xlu0 %2952
      %2954 = vrot.lane.b32.xlu0 %v2869, 96
      %v2955 = vpop.permute.xlu0 %2954
      %2956 = vrot.lane.b32.xlu0 %v2870, 96
      %v2957 = vpop.permute.xlu0 %2956
      %2958 = vrot.lane.b32.xlu0 %v2951, 96
      %v2959 = vpop.permute.xlu0 %2958
      %v2960 = vunpack.c.l.b16 %v2852
      %v2961 = vpack.c.b16 %v2960, %v2924
      %2962 = vrot.lane.b32.xlu0 %v2880, 112
      %v2963 = vpop.permute.xlu0 %2962
      %2964 = vrot.lane.b32.xlu0 %v2881, 112
      %v2965 = vpop.permute.xlu0 %2964
      %2966 = vrot.lane.b32.xlu0 %v2882, 112
      %v2967 = vpop.permute.xlu0 %2966
      %2968 = vrot.lane.b32.xlu0 %v2961, 112
      %v2969 = vpop.permute.xlu0 %2968
      %v2970 = vunpack.c.l.b16 %v2858
      %v2971 = vpack.c.b16 %v2970, %v2937
      %v2974 = vsel %vm2396, %v2867, %v2884
      %v2977 = vsel %vm2396, %v2868, %v2886
      %v2980 = vsel %vm2396, %v2869, %v2888
      %v2983 = vsel %vm2396, %v2870, %v2890
      %vm2984 = vcmask 261120
      %v2986 = vsel %vm2984, %v2974, %v2904
      %v2988 = vsel %vm2984, %v2977, %v2906
      %v2990 = vsel %vm2984, %v2980, %v2908
      %v2992 = vsel %vm2984, %v2983, %v2910
      %vm2993 = vcmask 392192
      %v2995 = vsel %vm2993, %v2986, %v2917
      %v2997 = vsel %vm2993, %v2988, %v2919
      %v2999 = vsel %vm2993, %v2990, %v2921
      %v3001 = vsel %vm2993, %v2992, %v2923
      %vm3002 = vcmask 523264
      %v3004 = vsel %vm3002, %v2995, %v2930
      %v3006 = vsel %vm3002, %v2997, %v2932
      %v3008 = vsel %vm3002, %v2999, %v2934
      %v3010 = vsel %vm3002, %v3001, %v2936
      %vm3011 = vcmask 654336
      %v3013 = vsel %vm3011, %v3004, %v2943
      %v3015 = vsel %vm3011, %v3006, %v2945
      %v3017 = vsel %vm3011, %v3008, %v2947
      %v3019 = vsel %vm3011, %v3010, %v2949
      %vm3020 = vcmask 785408
      %v3022 = vsel %vm3020, %v3013, %v2953
      %v3024 = vsel %vm3020, %v3015, %v2955
      %v3026 = vsel %vm3020, %v3017, %v2957
      %v3028 = vsel %vm3020, %v3019, %v2959
      %vm3029 = vcmask 916480
      %v3031 = vsel %vm3029, %v3022, %v2963
      %v3034 = vsel %vm3029, %v3024, %v2965
      %v3037 = vsel %vm3029, %v3026, %v2967
      %v3040 = vsel %vm3029, %v3028, %v2969
      %v3042 = vld [vmem:[%s3] sm:$0xf]
      %v3043 = vld [vmem:[%s3 + $0x4] sm:$0xf]
      %v3044 = vld [vmem:[%s3 + $0x8] sm:$0xf]
      %v3045 = vld [vmem:[%s3 + $0xc] sm:$0xf]
      %v3046 = vld [vmem:[%s3 + $0x10] sm:$0xf]
      %v3047 = vld [vmem:[%s3 + $0x14] sm:$0xf]
      %v3048 = vld [vmem:[%s3 + $0x18] sm:$0xf]
      %v3049 = vld [vmem:[%s3 + $0x1c] sm:$0xf]
      %v3050 = vld [vmem:[%s3 + $0x20] sm:$0xf]
      %v3051 = vld [vmem:[%s3 + $0x24] sm:$0xf]
      %v3052 = vld [vmem:[%s3 + $0x28] sm:$0xf]
      %v3053 = vld [vmem:[%s3 + $0x2c] sm:$0xf]
      %v3054 = vld [vmem:[%s3 + $0x30] sm:$0xf]
      %v3055 = vld [vmem:[%s3 + $0x34] sm:$0xf]
      %v3056 = vld [vmem:[%s3 + $0x38] sm:$0xf]
      %v3057 = vld [vmem:[%s3 + $0x3c] sm:$0xf]
      %v3058 = vld [vmem:[%s3 + $0x40] sm:$0xf]
      %v3059 = vld [vmem:[%s3 + $0x44] sm:$0xf]
      %v3060 = vld [vmem:[%s4] sm:$0x1]
      %v3062 = vlaneseq
      %v3063 = vshrl.u32 %v3062, 7
      %v3064 = vsub.s32 0, %v3063
      %v3065 = vrot.slane %v3060, %v3064
      %v3085 = vunpack.c.l.b16 %v3042
      %v3086 = vunpack.c.l.b16 %v3043
      %v3087 = vunpack.c.l.b16 %v3044
      %v3088 = vunpack.c.l.b16 %v3045
      %v3089 = vunpack.c.l.b16 %v3046
      %v3090 = vunpack.c.l.b16 %v3047
      %v3091 = vunpack.c.l.b16 %v3048
      %v3092 = vunpack.c.l.b16 %v3049
      %v3093 = vunpack.c.l.b16 %v3050
      %v3094 = vunpack.c.l.b16 %v3051
      %v3095 = vunpack.c.l.b16 %v3052
      %v3096 = vunpack.c.l.b16 %v3053
      %v3097 = vunpack.c.l.b16 %v3054
      %v3098 = vunpack.c.l.b16 %v3055
      %v3099 = vunpack.c.l.b16 %v3056
      %v3100 = vunpack.c.l.b16 %v3057
      %v3101 = vunpack.c.l.b16 %v3058
      %v3102 = vunpack.c.l.b16 %v3059
      %v3103 = vpack.c.b16 %v3086, %v3085
      %v3104 = vpack.c.b16 %v3088, %v3087
      %v3105 = vpack.c.b16 %v3090, %v3089
      %v3106 = vpack.c.b16 %v3092, %v3091
      %v3107 = vpack.c.b16 %v3094, %v3093
      %v3108 = vpack.c.b16 %v3096, %v3095
      %v3109 = vpack.c.b16 %v3098, %v3097
      %v3110 = vpack.c.b16 %v3100, %v3099
      %v3111 = vpack.c.b16 %v3102, %v3101
      %v3122 = vsel %vm2396, %v2900, 0
      %v3125 = vsel %vm2396, %v2901, 0
      %v3128 = vsel %vm2396, %v2902, 0
      %v3131 = vsel %vm2396, %v2971, 0
      %3133 = vmatprep.subr.bf16.mxu0 0
      %3134 = vmatpush1.bf16.msra.mxu0 %v3103
      %3135 = vmatprep.subr.bf16.mxu0 0
      %3136 = vmatpush1.bf16.msra.mxu0 %v3104
      %3137 = vmatprep.subr.bf16.mxu0 0
      %3138 = vmatpush1.bf16.msra.mxu0 %v3105
      %3139 = vmatprep.subr.bf16.mxu0 0
      %3140 = vmatpush1.bf16.msra.mxu0 %v3106
      %3141 = vmatprep.subr.bf16.mxu0 0
      %3142 = vmatpush1.bf16.msra.mxu0 %v3107
      %3143 = vmatprep.subr.bf16.mxu0 0
      %3144 = vmatpush1.bf16.msra.mxu0 %v3108
      %3145 = vmatprep.subr.bf16.mxu0 0
      %3146 = vmatpush1.bf16.msra.mxu0 %v3109
      %3147 = vmatprep.subr.bf16.mxu0 0
      %3148 = vmatpush1.bf16.msra.mxu0 %v3110
      %3149 = vmatprep.subr.bf16.mxu0 0
      %3150 = vmatpush1.bf16.msra.mxu0 %v3111
      %3151 = vmatprep.subr.bf16.mxu0 0
      %3152 = vmatpush1.bf16.msra.mxu0 0
      %3153 = vmatprep.subr.bf16.mxu0 0
      %3154 = vmatpush1.bf16.msra.mxu0 0
      %3155 = vmatprep.subr.bf16.mxu0 0
      %3156 = vmatpush1.bf16.msra.mxu0 0
      %3157 = vmatprep.subr.bf16.mxu0 0
      %3158 = vmatpush1.bf16.msra.mxu0 0
      %3159 = vmatprep.subr.bf16.mxu0 0
      %3160 = vmatpush1.bf16.msra.mxu0 0
      %3161 = vmatprep.subr.bf16.mxu0 0
      %3162 = vmatpush1.bf16.msra.mxu0 0
      %3163 = vmatprep.subr.bf16.mxu0 0
      %3164 = vmatpush1.bf16.msra.mxu0 0
      %3165 = vmatprep.mubr.bf16.mxu0 %v3122
      %3166 = vmatmul.mubr.bf16.gmra.mrb[0].mxu0 %v3031
      %v3167 = vpop.f32.mrb[0].mxu0
      %v3168 = vadd.f32 %v3065, %v3167
      %v3169 = vpop.f32.mrb[0].mxu0
      %v3170 = vpop.f32.mrb[0].mxu0
      %v3171 = vadd.f32 %v3065, %v3170
      %v3172 = vpop.f32.mrb[0].mxu0
      %3173 = vmatprep.mubr.bf16.mxu0 %v3125
      %3174 = vmatmul.mubr.bf16.gmra.mrb[0].mxu0 %v3034
      %v3175 = vpop.f32.mrb[0].mxu0
      %v3176 = vadd.f32 %v3065, %v3175
      %v3177 = vpop.f32.mrb[0].mxu0
      %v3178 = vpop.f32.mrb[0].mxu0
      %v3179 = vadd.f32 %v3065, %v3178
      %v3180 = vpop.f32.mrb[0].mxu0
      %3181 = vmatprep.mubr.bf16.mxu0 %v3128
      %3182 = vmatmul.mubr.bf16.gmra.mrb[0].mxu0 %v3037
      %v3183 = vpop.f32.mrb[0].mxu0
      %v3184 = vadd.f32 %v3065, %v3183
      %v3185 = vpop.f32.mrb[0].mxu0
      %v3186 = vpop.f32.mrb[0].mxu0
      %v3187 = vadd.f32 %v3065, %v3186
      %v3188 = vpop.f32.mrb[0].mxu0
      %3189 = vmatprep.mubr.bf16.mxu0 %v3131
      %3190 = vmatmul.mubr.bf16.gmra.mrb[0].mxu0 %v3040
      %v3191 = vpop.f32.mrb[0].mxu0
      %v3192 = vadd.f32 %v3065, %v3191
      %v3193 = vpop.f32.mrb[0].mxu0
      %v3194 = vpop.f32.mrb[0].mxu0
      %v3195 = vadd.f32 %v3065, %v3194
      %v3196 = vpop.f32.mrb[0].mxu0
      %3197 = vdwg.mxu0
      %v3198 = vmax.f32 %v3168, 0.0
      %v3199 = vmax.f32 %v3171, 0.0
      %v3200 = vmax.f32 %v3176, 0.0
      %v3201 = vmax.f32 %v3179, 0.0
      %v3202 = vmax.f32 %v3184, 0.0
      %v3203 = vmax.f32 %v3187, 0.0
      %v3204 = vmax.f32 %v3192, 0.0
      %v3205 = vmax.f32 %v3195, 0.0
      %v3206 = vmax.f32 %v3198, %v3199
      %v3207 = vmax.f32 %v3200, %v3201
      %v3208 = vmax.f32 %v3202, %v3203
      %v3209 = vmax.f32 %v3204, %v3205
      %3210 = vst.msk [vmem:[#allocation5] sm:$0xff] %vm2984, %v3206
      %3211 = vst.msk [vmem:[#allocation5 + $0x8] sm:$0xff] %vm2984, %v3207
      %3212 = vst.msk [vmem:[#allocation5 + $0x10] sm:$0xff] %vm2984, %v3208
      %3213 = vst.msk [vmem:[#allocation5 + $0x18] sm:$0xff] %vm2984, %v3209
      %v3214 = vld [vmem:[#allocation5] ss:$2 sm:$0xf]
      %s3215 = scalar_lea.vmem [#allocation5], 8
      %v3216 = vld [vmem:[%s3215] ss:$2 sm:$0xf]
      %s3217 = scalar_lea.vmem [#allocation5], 16
      %v3218 = vld [vmem:[%s3217] ss:$2 sm:$0xf]
      %s3219 = scalar_lea.vmem [#allocation5], 24
      %v3220 = vld [vmem:[%s3219] ss:$2 sm:$0xf]
      %s3221 = scalar_lea.vmem [#allocation5], 1
      %v3222 = vld [vmem:[%s3221] ss:$2 sm:$0xf]
      %s3223 = scalar_lea.vmem [#allocation5], 9
      %v3224 = vld [vmem:[%s3223] ss:$2 sm:$0xf]
      %s3225 = scalar_lea.vmem [#allocation5], 17
      %v3226 = vld [vmem:[%s3225] ss:$2 sm:$0xf]
      %s3227 = scalar_lea.vmem [#allocation5], 25
      %v3228 = vld [vmem:[%s3227] ss:$2 sm:$0xf]
      %v3229 = vmax.f32 %v3214, %v3222
      %v3230 = vmax.f32 %v3216, %v3224
      %v3231 = vmax.f32 %v3218, %v3226
      %v3232 = vmax.f32 %v3220, %v3228
      %v3237 = vcombine.low %v3229, %v3230
      %v3238 = vcombine.low %v3231, %v3232
      %v3241 = vpack.c.bf16 %v3238, %v3237
      %v3243 = vunpack.c.l.b16 %v3241
      %v3244 = vunpack.c.h.b16 %v3241
      %v3245 = vpack.c.b16 %v3243, %v3243
      %v3246 = vpack.c.b16 %v3244, %v3244
      %vm3249 = vcmask 257024
      %3250 = vst.msk [vmem:[%s224] sm:$0xf] %vm3249, %v3245
      %3251 = vst.msk [vmem:[%s224 + $0x4] sm:$0xf] %vm3249, %v3246
      %p3252 = scmp.lt.s32.totalorder %s16, 1
      %s3253 = scalar_select %p3252, %s16, 1
      %s3254 = smul.addr %s3253, 2
      %s3255 = smul.addr %s3254, 4
      %s3256 = scalar_lea.vmem %s5, %s3255
      // Predicated region
      $region41: #{e2e_forward.3} parent=39 // pred_check
        %p3257 = pneg %p144
      $region42: #{e2e_forward.3} parent=39 // pred_check_branch
        %3259 = sbr.rel (%p3257) target = $region44
      $region43: #{e2e_forward.3} parent=39 // pred_region
        _
      $region44: #{e2e_forward.3} parent=39 // pred_fallthru
        _
    $region40: #{e2e_forward.3} parent=5 // pred_fallthru
      _
    %p3260 = scmp.le.s32.totalorder 2, %s11
    // Predicated region
    $region45: #{e2e_forward.3} parent=5 // pred_check
      %p3261 = pneg %p3260
    $region46: #{e2e_forward.3} parent=5 // pred_check_branch
      %3263 = sbr.rel (%p3261) target = $region48
    $region47: #{e2e_forward.3} parent=5 // pred_region
      %s3264 = ssub.s32 %s11, 2
      // Predicated region
      $region49: #{e2e_forward.3} parent=47 // pred_check
        %p3265 = pneg %p150
      $region50: #{e2e_forward.3} parent=47 // pred_check_branch
        %3267 = sbr.rel (%p3265) target = $region52
      $region51: #{e2e_forward.3} parent=47 // pred_region
        %p3268 = scmp.lt.s32.totalorder %s17, 1
        %s3269 = scalar_select %p3268, %s17, 1
        %s3270 = smul.addr %s3269, 2
        %s3271 = smul.addr %s3270, 4
        %s3272 = scalar_lea.vmem %s5, %s3271
      $region52: #{e2e_forward.3} parent=47 // pred_fallthru
        _
    $region48: #{e2e_forward.3} parent=5 // pred_fallthru
      _
  $region6: #{e2e_forward.3} parent=0 // loop_footer
    %s15 = sadd.s32 1, %s11
  $region7: #{e2e_forward.3} parent=0 // loop_footer_branch
    %10 = sbr.rel target = $region3
  $region8: #{e2e_forward.3} parent=0 // loop_exit
    _

</llo_original>
